<compile_context>
chip_gen: v6e
topology: v6e:2x2x1
jax: 0.10.0
libtpu: 0.0.40
codegen_flags: <defaults>
</compile_context>

<pallas_src>
import functools

import jax
import jax.numpy as jnp
from jax.experimental import pallas as pl
from jax.experimental.pallas import tpu as pltpu


def _round_up(x, m):
    return (x + m - 1) // m * m


# ---------------------------------------------------------------------------
# Pallas kernels
# ---------------------------------------------------------------------------
def _mm_kernel(x_ref, w_ref, b_ref, o_ref, *, post_act):
    """bf16 matmul -> f32 acc -> +bias -> optional tanh."""
    y = jnp.dot(x_ref[...], w_ref[...], preferred_element_type=jnp.float32)
    y = y + b_ref[...]
    if post_act == "tanh":
        y = jnp.tanh(y)
    o_ref[...] = y


def _mm_bn_kernel(x_ref, w_ref, g_ref, b_ref, comb_ref, o_ref, *, inv_count, eps):
    """bf16 matmul -> f32 acc -> fused training-mode BatchNorm.

    Column sums s1/s2 over the whole resident slab give per-column stats; `comb`
    (a 0/1 matrix) pools columns belonging to the same BN channel (identity for
    regular convs, 4-phase pooling for phase-decomposed transposed convs).
    Padded rows of x are exactly zero (no bias in BN'd layers), so they do not
    perturb the sums; the true element count enters via inv_count.
    """
    y = jnp.dot(x_ref[...], w_ref[...], preferred_element_type=jnp.float32)
    s1 = jnp.sum(y, axis=0, keepdims=True)          # (1, Np)
    s2 = jnp.sum(y * y, axis=0, keepdims=True)      # (1, Np)
    stats = jnp.concatenate([s1, s2], axis=0)       # (2, Np)
    cstats = jnp.dot(stats, comb_ref[...], preferred_element_type=jnp.float32) * inv_count
    mean = cstats[0:1, :]
    var = cstats[1:2, :] - mean * mean              # biased variance (torch train mode)
    o_ref[...] = (y - mean) * jax.lax.rsqrt(var + eps) * g_ref[...] + b_ref[...]


def fused_matmul(x, w_p, b_p, n_out, *, post_act=None):
    """x:(M,K) f32 @ pre-padded bf16 w_p:(Kp,Np) + b_p:(1,Np), M-tiled & parallel."""
    M, K = x.shape
    Kp, Np = w_p.shape
    TM = min(512, _round_up(M, 8))
    Mp = _round_up(M, TM)
    xp = jnp.pad(x, ((0, Mp - M), (0, Kp - K))).astype(jnp.bfloat16)
    out = pl.pallas_call(
        functools.partial(_mm_kernel, post_act=post_act),
        out_shape=jax.ShapeDtypeStruct((Mp, Np), jnp.float32),
        grid=(Mp // TM,),
        in_specs=[
            pl.BlockSpec((TM, Kp), lambda i: (i, 0)),
            pl.BlockSpec((Kp, Np), lambda i: (0, 0)),
            pl.BlockSpec((1, Np), lambda i: (0, 0)),
        ],
        out_specs=pl.BlockSpec((TM, Np), lambda i: (i, 0)),
        compiler_params=pltpu.CompilerParams(dimension_semantics=("parallel",)),
    )(xp, w_p, b_p)
    return out[:M, :n_out]


def fused_matmul_bn(x, w_p, g_p, b_p, comb_p, n_out, count, *, eps=1e-5):
    """Matmul with BatchNorm fused in the epilogue (needs the full M in one block)."""
    M, K = x.shape
    Kp, Np = w_p.shape
    Mp = _round_up(M, 8)
    xp = jnp.pad(x, ((0, Mp - M), (0, Kp - K))).astype(jnp.bfloat16)
    out = pl.pallas_call(
        functools.partial(_mm_bn_kernel, inv_count=1.0 / float(count), eps=eps),
        out_shape=jax.ShapeDtypeStruct((Mp, Np), jnp.float32),
        grid=(1,),
        in_specs=[
            pl.BlockSpec((Mp, Kp), lambda i: (0, 0)),
            pl.BlockSpec((Kp, Np), lambda i: (0, 0)),
            pl.BlockSpec((1, Np), lambda i: (0, 0)),
            pl.BlockSpec((1, Np), lambda i: (0, 0)),
            pl.BlockSpec((Np, Np), lambda i: (0, 0)),
        ],
        out_specs=pl.BlockSpec((Mp, Np), lambda i: (0, 0)),
        compiler_params=pltpu.CompilerParams(dimension_semantics=("arbitrary",)),
    )(xp, w_p, g_p, b_p, comb_p)
    return out[:M, :n_out]


# ---------------------------------------------------------------------------
# im2col + layer wrappers (padding/activation glue in XLA, compute in Pallas)
# ---------------------------------------------------------------------------
def im2col(x_nhwc, K, stride, pad):
    """Patches (B*Ho*Wo, K*K*C), column order (ky, kx, c)."""
    B, H, W, C = x_nhwc.shape
    xp = jnp.pad(x_nhwc, ((0, 0), (pad, pad), (pad, pad), (0, 0)))
    Ho = (H + 2 * pad - K) // stride + 1
    Wo = (W + 2 * pad - K) // stride + 1
    cols = []
    for ky in range(K):
        for kx in range(K):
            cols.append(
                xp[:, ky:ky + stride * (Ho - 1) + 1:stride,
                      kx:kx + stride * (Wo - 1) + 1:stride, :]
            )
    patches = jnp.concatenate(cols, axis=-1)
    return patches.reshape(B * Ho * Wo, K * K * C), Ho, Wo


def conv_block(x, layer, cout, *, K, stride, pad, pre_act=None, post_act=None):
    if pre_act == "leaky":
        x = jnp.where(x >= 0, x, 0.2 * x)          # LeakyReLU(0.2) before im2col
    elif pre_act == "relu":
        x = jnp.maximum(x, 0.0)
    B = x.shape[0]
    patches, Ho, Wo = im2col(x, K, stride, pad)
    if "g" in layer:                                # BN fused into the matmul epilogue
        y = fused_matmul_bn(patches, layer["w"], layer["g"], layer["beta"],
                            layer["comb"], cout, count=B * Ho * Wo)
    else:
        y = fused_matmul(patches, layer["w"], layer["b"], cout, post_act=post_act)
    return y.reshape(B, Ho, Wo, cout)


def convT_block(x, layer, cout, *, post_act=None):
    """4x4/stride-2/pad-1 ConvTranspose2d via stride-phase decomposition.

    ReLU (uprelu) is fused here before im2col; a single matmul produces the 4 output
    phases as column blocks, then a depth-to-space reshape interleaves them.
    """
    x = jnp.maximum(x, 0.0)
    B, H, W, _ = x.shape
    patches, _, _ = im2col(x, 3, 1, 1)              # 3x3 neighborhood of the input
    if "g" in layer:
        y = fused_matmul_bn(patches, layer["w"], layer["g"], layer["beta"],
                            layer["comb"], 4 * cout, count=4 * B * H * W)
    else:
        y = fused_matmul(patches, layer["w"], layer["b"], 4 * cout, post_act=post_act)
    y = y.reshape(B, H, W, 2, 2, cout)              # (..., ry, rx, co)
    return jnp.transpose(y, (0, 1, 3, 2, 4, 5)).reshape(B, 2 * H, 2 * W, cout)


# ---------------------------------------------------------------------------
# One-time weight preparation (transpose / phase-compose / pad / bf16 cast)
# ---------------------------------------------------------------------------
def _pack(w2, *, bias=None, bn=None, comb=None):
    Kr, N = w2.shape
    Kp, Np = _round_up(Kr, 128), _round_up(N, 128)
    layer = {"w": jnp.pad(w2, ((0, Kp - Kr), (0, Np - N))).astype(jnp.bfloat16)}
    if bn is not None:
        g, beta = bn
        layer["g"] = jnp.pad(g, (0, Np - N)).reshape(1, Np).astype(jnp.float32)
        layer["beta"] = jnp.pad(beta, (0, Np - N)).reshape(1, Np).astype(jnp.float32)
        if comb is None:
            comb = jnp.eye(N, dtype=jnp.float32)
        layer["comb"] = jnp.pad(comb, ((0, Np - N), (0, Np - N)))
    else:
        if bias is None:
            bias = jnp.zeros((N,), jnp.float32)
        layer["b"] = jnp.pad(bias, (0, Np - N)).reshape(1, Np).astype(jnp.float32)
    return layer


def _conv_weight_matrix(w_oihw):
    Cout, Cin, K, _ = w_oihw.shape
    return jnp.transpose(w_oihw, (2, 3, 1, 0)).reshape(K * K * Cin, Cout)


# {output row/col parity r: {im2col tap (dy+1): transposed-conv kernel index}}
_PHASE_TAPS = {0: {1: 1, 0: 3}, 1: {2: 0, 1: 2}}


def _convT_phase_weight(w_iohw):
    """ConvTranspose2d(4,s=2,p=1) weight (Cin,Cout,4,4) -> (9*Cin, 4*Cout) matrix that
    acts on 3x3 im2col patches of the un-upsampled input; column block p = ry*2+rx."""
    Cin, Cout = w_iohw.shape[0], w_iohw.shape[1]
    Wp = jnp.zeros((9 * Cin, 4 * Cout), jnp.float32)
    for ry in (0, 1):
        for rx in (0, 1):
            p = ry * 2 + rx
            for ky, kty in _PHASE_TAPS[ry].items():
                for kx, ktx in _PHASE_TAPS[rx].items():
                    blk = w_iohw[:, :, kty, ktx]                    # (Cin, Cout)
                    r0 = (ky * 3 + kx) * Cin
                    Wp = Wp.at[r0:r0 + Cin, p * Cout:(p + 1) * Cout].set(blk)
    return Wp


def _zip_weight_matrix(zip_w, input_nc, c_dim):
    """Grouped 3x3 zip conv. The image channels are shared by every group, so the input
    only needs (input_nc + c_dim) channels: [image | one cond plane per group]."""
    Cin = input_nc + c_dim
    Wz = jnp.zeros((9 * Cin, c_dim), jnp.float32)
    for ky in range(3):
        for kx in range(3):
            r0 = (ky * 3 + kx) * Cin
            Wz = Wz.at[r0:r0 + input_nc, :].set(jnp.transpose(zip_w[:, :input_nc, ky, kx]))
            Wz = Wz.at[r0 + input_nc:r0 + Cin, :].set(jnp.diag(zip_w[:, input_nc, ky, kx]))
    return Wz


def _phase_comb(cout):
    """Pools per-(phase,channel) column stats across the 4 phases of one channel."""
    return jnp.tile(jnp.eye(cout, dtype=jnp.float32), (4, 4))


def prepare_layers(params, *, input_nc, c_dim, ngf):
    L = {"zip": _pack(_zip_weight_matrix(params["zip_w"], input_nc, c_dim)),
         "d0": _pack(_conv_weight_matrix(params["w_d0"])),
         "d4": _pack(_conv_weight_matrix(params["w_d4"]))}
    for name in ("d1", "d2", "d3"):
        L[name] = _pack(_conv_weight_matrix(params["w_" + name]),
                        bn=(params["g_" + name], params["b_" + name]))
    for name in ("u4", "u3", "u2", "u1"):
        cout = params["w_" + name].shape[1]
        L[name] = _pack(_convT_phase_weight(params["w_" + name]),
                        bn=(jnp.tile(params["g_" + name], 4),
                            jnp.tile(params["b_" + name], 4)),
                        comb=_phase_comb(cout))
    L["u0"] = _pack(_convT_phase_weight(params["w_u0"]),
                    bias=jnp.tile(params["bias_u0"], 4))
    return L


# ---------------------------------------------------------------------------
# Parameters (deterministic synthetic init; BatchNorm uses gamma=1, beta=0)
# ---------------------------------------------------------------------------
def init_params(key, input_nc, output_nc, c_dim, ngf):
    keys = iter(jax.random.split(key, 32))

    def w(shape, scale=0.02):
        return jax.random.normal(next(keys), shape, jnp.float32) * scale

    p = {}
    p["zip_w"] = w((c_dim, input_nc + 1, 3, 3))            # grouped zip conv, no bias
    p["w_d0"] = w((ngf, c_dim, 4, 4))                      # encoder convs (OIHW), bias=False
    p["w_d1"] = w((2 * ngf, ngf, 4, 4))
    p["w_d2"] = w((4 * ngf, 2 * ngf, 4, 4))
    p["w_d3"] = w((8 * ngf, 4 * ngf, 4, 4))
    p["w_d4"] = w((8 * ngf, 8 * ngf, 4, 4))                # innermost down (no BN)
    p["w_u4"] = w((8 * ngf, 8 * ngf, 4, 4))                # decoder transposed convs (Cin,Cout,K,K)
    p["w_u3"] = w((16 * ngf, 4 * ngf, 4, 4))
    p["w_u2"] = w((8 * ngf, 2 * ngf, 4, 4))
    p["w_u1"] = w((4 * ngf, ngf, 4, 4))
    p["w_u0"] = w((2 * ngf, output_nc, 4, 4))              # outermost up (has bias)
    p["bias_u0"] = w((output_nc,))
    for name, c in [("d1", 2 * ngf), ("d2", 4 * ngf), ("d3", 8 * ngf),
                    ("u4", 8 * ngf), ("u3", 4 * ngf), ("u2", 2 * ngf), ("u1", ngf)]:
        p["g_" + name] = jnp.ones((c,), jnp.float32)
        p["b_" + name] = jnp.zeros((c,), jnp.float32)
    return p


# ---------------------------------------------------------------------------
# Forward pass (ZipUNet, num_downs = 5)
# ---------------------------------------------------------------------------
def zip_unet_forward(layers, x_nchw, cond, *, ngf, c_dim, output_nc):
    B, Ci, H, W = x_nchw.shape
    x = jnp.transpose(x_nchw, (0, 2, 3, 1)).astype(jnp.float32)        # NHWC
    cond_planes = jnp.broadcast_to(cond[:, None, None, :], (B, H, W, c_dim))
    zin = jnp.concatenate([x, cond_planes], axis=-1)                   # (B,H,W,Ci+c_dim)

    # Zipping grouped 3x3 conv (single matmul; image channels shared across groups)
    z = conv_block(zin, layers["zip"], c_dim, K=3, stride=1, pad=1)

    # Encoder (LeakyReLU pre-activations applied once before im2col; BN fused)
    d0 = conv_block(z, layers["d0"], ngf, K=4, stride=2, pad=1)                            # (B,16,16, ngf)
    d1 = conv_block(d0, layers["d1"], 2 * ngf, K=4, stride=2, pad=1, pre_act="leaky")      # (B, 8, 8,2ngf)
    d2 = conv_block(d1, layers["d2"], 4 * ngf, K=4, stride=2, pad=1, pre_act="leaky")      # (B, 4, 4,4ngf)
    d3 = conv_block(d2, layers["d3"], 8 * ngf, K=4, stride=2, pad=1, pre_act="leaky")      # (B, 2, 2,8ngf)
    d4 = conv_block(d3, layers["d4"], 8 * ngf, K=4, stride=2, pad=1, pre_act="leaky")      # (B, 1, 1,8ngf)

    # Decoder with skip concats (ReLU + phase-decomposed ConvT + fused BN)
    u4 = convT_block(d4, layers["u4"], 8 * ngf)                                            # (B, 2, 2,8ngf)
    u3 = convT_block(jnp.concatenate([d3, u4], -1), layers["u3"], 4 * ngf)                 # (B, 4, 4,4ngf)
    u2 = convT_block(jnp.concatenate([d2, u3], -1), layers["u2"], 2 * ngf)                 # (B, 8, 8,2ngf)
    u1 = convT_block(jnp.concatenate([d1, u2], -1), layers["u1"], ngf)                     # (B,16,16, ngf)
    out = convT_block(jnp.concatenate([d0, u1], -1), layers["u0"], output_nc,
                      post_act="tanh")                                                     # (B,32,32,out_nc)

    return jnp.transpose(out, (0, 3, 1, 2))                            # back to NCHW


if __name__ == "__main__":
    input_nc, output_nc, num_downs, c_dim, ngf = 3, 3, 5, 4, 8
    B, H, W = 2, 32, 32

    kx, kc = jax.random.split(jax.random.PRNGKey(0))
    x = jax.random.normal(kx, (B, input_nc, H, W), jnp.float32)
    cond = jax.random.normal(kc, (B, c_dim), jnp.float32)

    params = init_params(jax.random.PRNGKey(42), input_nc, output_nc, c_dim, ngf)
    layers = prepare_layers(params, input_nc=input_nc, c_dim=c_dim, ngf=ngf)

    fwd = jax.jit(functools.partial(zip_unet_forward, ngf=ngf, c_dim=c_dim,
                                    output_nc=output_nc))
    out = fwd(layers, x, cond)
    jax.block_until_ready(out)

    assert out.shape == (B, output_nc, H, W), out.shape
    assert bool(jnp.all(jnp.isfinite(out)))
    print("KERNEL_OK")
</pallas_src>

<mosaic_0001>
module attributes {stable_mosaic.version = 11 : i64} {
  func.func @_mm_kernel(%arg0: i32, %arg1: memref<512x128xbf16, #tpu.memory_space<vmem>>, %arg2: memref<128x128xbf16, #tpu.memory_space<vmem>>, %arg3: memref<1x128xf32, #tpu.memory_space<vmem>>, %arg4: memref<512x128xf32, #tpu.memory_space<vmem>>) attributes {dimension_semantics = [#tpu.dimension_semantics<parallel>], iteration_bounds = array<i64: 4>, scalar_prefetch = 0 : i64, scratch_operands = 0 : i64, tpu.core_type = #tpu.core_type<tc>, window_params = [{transform_indices = @transform_0, window_bounds = array<i64: 512, 128>}, {pipeline_mode = #tpu.pipeline_mode<synchronous>, transform_indices = @transform_1, window_bounds = array<i64: 128, 128>}, {pipeline_mode = #tpu.pipeline_mode<synchronous>, transform_indices = @transform_2, window_bounds = array<i64: 1, 128>}, {transform_indices = @transform_3, window_bounds = array<i64: 512, 128>}]} {
    %c0 = arith.constant 0 : index
    %c0_0 = arith.constant 0 : index
    %0 = vector.load %arg1[%c0, %c0_0] : memref<512x128xbf16, #tpu.memory_space<vmem>>, vector<512x128xbf16>
    %c0_1 = arith.constant 0 : index
    %c0_2 = arith.constant 0 : index
    %1 = vector.load %arg2[%c0_1, %c0_2] : memref<128x128xbf16, #tpu.memory_space<vmem>>, vector<128x128xbf16>
    %cst = arith.constant dense<0.000000e+00> : vector<512x128xf32>
    %2 = tpu.matmul %0, %1, %cst {dimension_numbers = #tpu.dot_dimension_numbers<[1], [0], [0], [1], [0, 0, 1, 1], [], []>} : vector<512x128xbf16>, vector<128x128xbf16>, vector<512x128xf32> -> vector<512x128xf32>
    %c0_3 = arith.constant 0 : index
    %c0_4 = arith.constant 0 : index
    %3 = vector.load %arg3[%c0_3, %c0_4] : memref<1x128xf32, #tpu.memory_space<vmem>>, vector<1x128xf32>
    %4 = vector.broadcast %3 : vector<1x128xf32> to vector<512x128xf32>
    %5 = arith.addf %2, %4 : vector<512x128xf32>
    %c0_5 = arith.constant 0 : index
    %c0_6 = arith.constant 0 : index
    %6 = vector.load %arg4[%c0_5, %c0_6] : memref<512x128xf32, #tpu.memory_space<vmem>>, vector<512x128xf32>
    tpu.vector_store %arg4[%c0_5, %c0_6], %5 {strides = array<i32>} : memref<512x128xf32, #tpu.memory_space<vmem>>, vector<512x128xf32>,
    return
  }
  func.func @transform_0(%arg0: i32) -> (i32, i32) {
    %c0_i32 = arith.constant 0 : i32
    %c0_i32_0 = arith.constant 0 : i32
    return %arg0, %c0_i32 : i32, i32
  }
  func.func @transform_1(%arg0: i32) -> (i32, i32) {
    %c0_i32 = arith.constant 0 : i32
    %c0_i32_0 = arith.constant 0 : i32
    %c0_i32_1 = arith.constant 0 : i32
    return %c0_i32, %c0_i32_0 : i32, i32
  }
  func.func @transform_2(%arg0: i32) -> (i32, i32) {
    %c0_i32 = arith.constant 0 : i32
    %c0_i32_0 = arith.constant 0 : i32
    %c0_i32_1 = arith.constant 0 : i32
    return %c0_i32, %c0_i32_0 : i32, i32
  }
  func.func @transform_3(%arg0: i32) -> (i32, i32) {
    %c0_i32 = arith.constant 0 : i32
    %c0_i32_0 = arith.constant 0 : i32
    return %arg0, %c0_i32 : i32, i32
  }
}

module attributes {stable_mosaic.version = 11 : i64} {
  func.func @_mm_kernel(%arg0: i32, %arg1: memref<512x128xbf16, #tpu.memory_space<vmem>>, %arg2: memref<128x128xbf16, #tpu.memory_space<vmem>>, %arg3: memref<1x128xf32, #tpu.memory_space<vmem>>, %arg4: memref<512x128xf32, #tpu.memory_space<vmem>>) attributes {dimension_semantics = [#tpu.dimension_semantics<parallel>], iteration_bounds = array<i64: 1>, scalar_prefetch = 0 : i64, scratch_operands = 0 : i64, tpu.core_type = #tpu.core_type<tc>, window_params = [{transform_indices = @transform_0, window_bounds = array<i64: 512, 128>}, {pipeline_mode = #tpu.pipeline_mode<synchronous>, transform_indices = @transform_1, window_bounds = array<i64: 128, 128>}, {pipeline_mode = #tpu.pipeline_mode<synchronous>, transform_indices = @transform_2, window_bounds = array<i64: 1, 128>}, {transform_indices = @transform_3, window_bounds = array<i64: 512, 128>}]} {
    %c0 = arith.constant 0 : index
    %c0_0 = arith.constant 0 : index
    %0 = vector.load %arg1[%c0, %c0_0] : memref<512x128xbf16, #tpu.memory_space<vmem>>, vector<512x128xbf16>
    %c0_1 = arith.constant 0 : index
    %c0_2 = arith.constant 0 : index
    %1 = vector.load %arg2[%c0_1, %c0_2] : memref<128x128xbf16, #tpu.memory_space<vmem>>, vector<128x128xbf16>
    %cst = arith.constant dense<0.000000e+00> : vector<512x128xf32>
    %2 = tpu.matmul %0, %1, %cst {dimension_numbers = #tpu.dot_dimension_numbers<[1], [0], [0], [1], [0, 0, 1, 1], [], []>} : vector<512x128xbf16>, vector<128x128xbf16>, vector<512x128xf32> -> vector<512x128xf32>
    %c0_3 = arith.constant 0 : index
    %c0_4 = arith.constant 0 : index
    %3 = vector.load %arg3[%c0_3, %c0_4] : memref<1x128xf32, #tpu.memory_space<vmem>>, vector<1x128xf32>
    %4 = vector.broadcast %3 : vector<1x128xf32> to vector<512x128xf32>
    %5 = arith.addf %2, %4 : vector<512x128xf32>
    %c0_5 = arith.constant 0 : index
    %c0_6 = arith.constant 0 : index
    %6 = vector.load %arg4[%c0_5, %c0_6] : memref<512x128xf32, #tpu.memory_space<vmem>>, vector<512x128xf32>
    tpu.vector_store %arg4[%c0_5, %c0_6], %5 {strides = array<i32>} : memref<512x128xf32, #tpu.memory_space<vmem>>, vector<512x128xf32>,
    return
  }
  func.func @transform_0(%arg0: i32) -> (i32, i32) {
    %c0_i32 = arith.constant 0 : i32
    %c0_i32_0 = arith.constant 0 : i32
    return %arg0, %c0_i32 : i32, i32
  }
  func.func @transform_1(%arg0: i32) -> (i32, i32) {
    %c0_i32 = arith.constant 0 : i32
    %c0_i32_0 = arith.constant 0 : i32
    %c0_i32_1 = arith.constant 0 : i32
    return %c0_i32, %c0_i32_0 : i32, i32
  }
  func.func @transform_2(%arg0: i32) -> (i32, i32) {
    %c0_i32 = arith.constant 0 : i32
    %c0_i32_0 = arith.constant 0 : i32
    %c0_i32_1 = arith.constant 0 : i32
    return %c0_i32, %c0_i32_0 : i32, i32
  }
  func.func @transform_3(%arg0: i32) -> (i32, i32) {
    %c0_i32 = arith.constant 0 : i32
    %c0_i32_0 = arith.constant 0 : i32
    return %arg0, %c0_i32 : i32, i32
  }
}

module attributes {stable_mosaic.version = 11 : i64} {
  func.func @_mm_bn_kernel(%arg0: i32, %arg1: memref<128x128xbf16, #tpu.memory_space<vmem>>, %arg2: memref<128x128xbf16, #tpu.memory_space<vmem>>, %arg3: memref<1x128xf32, #tpu.memory_space<vmem>>, %arg4: memref<1x128xf32, #tpu.memory_space<vmem>>, %arg5: memref<128x128xf32, #tpu.memory_space<vmem>>, %arg6: memref<128x128xf32, #tpu.memory_space<vmem>>) attributes {dimension_semantics = [#tpu.dimension_semantics<arbitrary>], iteration_bounds = array<i64: 1>, scalar_prefetch = 0 : i64, scratch_operands = 0 : i64, tpu.core_type = #tpu.core_type<tc>, window_params = [{pipeline_mode = #tpu.pipeline_mode<synchronous>, transform_indices = @transform_0, window_bounds = array<i64: 128, 128>}, {pipeline_mode = #tpu.pipeline_mode<synchronous>, transform_indices = @transform_1, window_bounds = array<i64: 128, 128>}, {pipeline_mode = #tpu.pipeline_mode<synchronous>, transform_indices = @transform_2, window_bounds = array<i64: 1, 128>}, {pipeline_mode = #tpu.pipeline_mode<synchronous>, transform_indices = @transform_3, window_bounds = array<i64: 1, 128>}, {pipeline_mode = #tpu.pipeline_mode<synchronous>, transform_indices = @transform_4, window_bounds = array<i64: 128, 128>}, {pipeline_mode = #tpu.pipeline_mode<synchronous>, transform_indices = @transform_5, window_bounds = array<i64: 128, 128>}]} {
    %c0 = arith.constant 0 : index
    %c0_0 = arith.constant 0 : index
    %0 = vector.load %arg1[%c0, %c0_0] : memref<128x128xbf16, #tpu.memory_space<vmem>>, vector<128x128xbf16>
    %c0_1 = arith.constant 0 : index
    %c0_2 = arith.constant 0 : index
    %1 = vector.load %arg2[%c0_1, %c0_2] : memref<128x128xbf16, #tpu.memory_space<vmem>>, vector<128x128xbf16>
    %cst = arith.constant dense<0.000000e+00> : vector<128x128xf32>
    %2 = tpu.matmul %0, %1, %cst {dimension_numbers = #tpu.dot_dimension_numbers<[1], [0], [0], [1], [0, 0, 1, 1], [], []>} : vector<128x128xbf16>, vector<128x128xbf16>, vector<128x128xf32> -> vector<128x128xf32>
    %cst_3 = arith.constant dense<0.000000e+00> : vector<128xf32>
    %3 = vector.multi_reduction <add>, %2, %cst_3 [0] : vector<128x128xf32> to vector<128xf32>
    %4 = vector.shape_cast %3 : vector<128xf32> to vector<1x128xf32>
    %5 = arith.mulf %2, %2 : vector<128x128xf32>
    %cst_4 = arith.constant dense<0.000000e+00> : vector<128xf32>
    %6 = vector.multi_reduction <add>, %5, %cst_4 [0] : vector<128x128xf32> to vector<128xf32>
    %7 = vector.shape_cast %6 : vector<128xf32> to vector<1x128xf32>
    %8 = tpu.concatenate %4, %7 in 0 : vector<1x128xf32>, vector<1x128xf32> -> vector<2x128xf32>
    %c0_5 = arith.constant 0 : index
    %c0_6 = arith.constant 0 : index
    %9 = vector.load %arg5[%c0_5, %c0_6] : memref<128x128xf32, #tpu.memory_space<vmem>>, vector<128x128xf32>
    %cst_7 = arith.constant dense<0.000000e+00> : vector<2x128xf32>
    %10 = tpu.matmul %8, %9, %cst_7 {dimension_numbers = #tpu.dot_dimension_numbers<[1], [0], [0], [1], [0, 0, 1, 1], [], []>} : vector<2x128xf32>, vector<128x128xf32>, vector<2x128xf32> -> vector<2x128xf32>
    %cst_8 = arith.constant 7.812500e-03 : f32
    %11 = vector.broadcast %cst_8 : f32 to vector<2x128xf32>
    %12 = arith.mulf %10, %11 : vector<2x128xf32>
    %13 = vector.extract_strided_slice %12 {offsets = [0, 0], sizes = [1, 128], strides = [1, 1]} : vector<2x128xf32> to vector<1x128xf32>
    %14 = vector.extract_strided_slice %12 {offsets = [1, 0], sizes = [1, 128], strides = [1, 1]} : vector<2x128xf32> to vector<1x128xf32>
    %15 = arith.mulf %13, %13 : vector<1x128xf32>
    %16 = arith.subf %14, %15 : vector<1x128xf32>
    %17 = vector.broadcast %13 : vector<1x128xf32> to vector<128x128xf32>
    %18 = arith.subf %2, %17 : vector<128x128xf32>
    %cst_9 = arith.constant 9.99999974E-6 : f32
    %19 = vector.broadcast %cst_9 : f32 to vector<1x128xf32>
    %20 = arith.addf %16, %19 : vector<1x128xf32>
    %21 = math.rsqrt %20 : vector<1x128xf32>
    %22 = vector.broadcast %21 : vector<1x128xf32> to vector<128x128xf32>
    %23 = arith.mulf %18, %22 : vector<128x128xf32>
    %c0_10 = arith.constant 0 : index
    %c0_11 = arith.constant 0 : index
    %24 = vector.load %arg3[%c0_10, %c0_11] : memref<1x128xf32, #tpu.memory_space<vmem>>, vector<1x128xf32>
    %25 = vector.broadcast %24 : vector<1x128xf32> to vector<128x128xf32>
    %26 = arith.mulf %23, %25 : vector<128x128xf32>
    %c0_12 = arith.constant 0 : index
    %c0_13 = arith.constant 0 : index
    %27 = vector.load %arg4[%c0_12, %c0_13] : memref<1x128xf32, #tpu.memory_space<vmem>>, vector<1x128xf32>
    %28 = vector.broadcast %27 : vector<1x128xf32> to vector<128x128xf32>
    %29 = arith.addf %26, %28 : vector<128x128xf32>
    %c0_14 = arith.constant 0 : index
    %c0_15 = arith.constant 0 : index
    %30 = vector.load %arg6[%c0_14, %c0_15] : memref<128x128xf32, #tpu.memory_space<vmem>>, vector<128x128xf32>
    tpu.vector_store %arg6[%c0_14, %c0_15], %29 {strides = array<i32>} : memref<128x128xf32, #tpu.memory_space<vmem>>, vector<128x128xf32>,
    return
  }
  func.func @transform_0(%arg0: i32) -> (i32, i32) {
    %c0_i32 = arith.constant 0 : i32
    %c0_i32_0 = arith.constant 0 : i32
    %c0_i32_1 = arith.constant 0 : i32
    return %c0_i32, %c0_i32_0 : i32, i32
  }
  func.func @transform_1(%arg0: i32) -> (i32, i32) {
    %c0_i32 = arith.constant 0 : i32
    %c0_i32_0 = arith.constant 0 : i32
    %c0_i32_1 = arith.constant 0 : i32
    return %c0_i32, %c0_i32_0 : i32, i32
  }
  func.func @transform_2(%arg0: i32) -> (i32, i32) {
    %c0_i32 = arith.constant 0 : i32
    %c0_i32_0 = arith.constant 0 : i32
    %c0_i32_1 = arith.constant 0 : i32
    return %c0_i32, %c0_i32_0 : i32, i32
  }
  func.func @transform_3(%arg0: i32) -> (i32, i32) {
    %c0_i32 = arith.constant 0 : i32
    %c0_i32_0 = arith.constant 0 : i32
    %c0_i32_1 = arith.constant 0 : i32
    return %c0_i32, %c0_i32_0 : i32, i32
  }
  func.func @transform_4(%arg0: i32) -> (i32, i32) {
    %c0_i32 = arith.constant 0 : i32
    %c0_i32_0 = arith.constant 0 : i32
    %c0_i32_1 = arith.constant 0 : i32
    return %c0_i32, %c0_i32_0 : i32, i32
  }
  func.func @transform_5(%arg0: i32) -> (i32, i32) {
    %c0_i32 = arith.constant 0 : i32
    %c0_i32_0 = arith.constant 0 : i32
    %c0_i32_1 = arith.constant 0 : i32
    return %c0_i32, %c0_i32_0 : i32, i32
  }
}

module attributes {stable_mosaic.version = 11 : i64} {
  func.func @_mm_bn_kernel(%arg0: i32, %arg1: memref<32x256xbf16, #tpu.memory_space<vmem>>, %arg2: memref<256x128xbf16, #tpu.memory_space<vmem>>, %arg3: memref<1x128xf32, #tpu.memory_space<vmem>>, %arg4: memref<1x128xf32, #tpu.memory_space<vmem>>, %arg5: memref<128x128xf32, #tpu.memory_space<vmem>>, %arg6: memref<32x128xf32, #tpu.memory_space<vmem>>) attributes {dimension_semantics = [#tpu.dimension_semantics<arbitrary>], iteration_bounds = array<i64: 1>, scalar_prefetch = 0 : i64, scratch_operands = 0 : i64, tpu.core_type = #tpu.core_type<tc>, window_params = [{pipeline_mode = #tpu.pipeline_mode<synchronous>, transform_indices = @transform_0, window_bounds = array<i64: 32, 256>}, {pipeline_mode = #tpu.pipeline_mode<synchronous>, transform_indices = @transform_1, window_bounds = array<i64: 256, 128>}, {pipeline_mode = #tpu.pipeline_mode<synchronous>, transform_indices = @transform_2, window_bounds = array<i64: 1, 128>}, {pipeline_mode = #tpu.pipeline_mode<synchronous>, transform_indices = @transform_3, window_bounds = array<i64: 1, 128>}, {pipeline_mode = #tpu.pipeline_mode<synchronous>, transform_indices = @transform_4, window_bounds = array<i64: 128, 128>}, {pipeline_mode = #tpu.pipeline_mode<synchronous>, transform_indices = @transform_5, window_bounds = array<i64: 32, 128>}]} {
    %c0 = arith.constant 0 : index
    %c0_0 = arith.constant 0 : index
    %0 = vector.load %arg1[%c0, %c0_0] : memref<32x256xbf16, #tpu.memory_space<vmem>>, vector<32x256xbf16>
    %c0_1 = arith.constant 0 : index
    %c0_2 = arith.constant 0 : index
    %1 = vector.load %arg2[%c0_1, %c0_2] : memref<256x128xbf16, #tpu.memory_space<vmem>>, vector<256x128xbf16>
    %cst = arith.constant dense<0.000000e+00> : vector<32x128xf32>
    %2 = tpu.matmul %0, %1, %cst {dimension_numbers = #tpu.dot_dimension_numbers<[1], [0], [0], [1], [0, 0, 1, 1], [], []>} : vector<32x256xbf16>, vector<256x128xbf16>, vector<32x128xf32> -> vector<32x128xf32>
    %cst_3 = arith.constant dense<0.000000e+00> : vector<128xf32>
    %3 = vector.multi_reduction <add>, %2, %cst_3 [0] : vector<32x128xf32> to vector<128xf32>
    %4 = vector.shape_cast %3 : vector<128xf32> to vector<1x128xf32>
    %5 = arith.mulf %2, %2 : vector<32x128xf32>
    %cst_4 = arith.constant dense<0.000000e+00> : vector<128xf32>
    %6 = vector.multi_reduction <add>, %5, %cst_4 [0] : vector<32x128xf32> to vector<128xf32>
    %7 = vector.shape_cast %6 : vector<128xf32> to vector<1x128xf32>
    %8 = tpu.concatenate %4, %7 in 0 : vector<1x128xf32>, vector<1x128xf32> -> vector<2x128xf32>
    %c0_5 = arith.constant 0 : index
    %c0_6 = arith.constant 0 : index
    %9 = vector.load %arg5[%c0_5, %c0_6] : memref<128x128xf32, #tpu.memory_space<vmem>>, vector<128x128xf32>
    %cst_7 = arith.constant dense<0.000000e+00> : vector<2x128xf32>
    %10 = tpu.matmul %8, %9, %cst_7 {dimension_numbers = #tpu.dot_dimension_numbers<[1], [0], [0], [1], [0, 0, 1, 1], [], []>} : vector<2x128xf32>, vector<128x128xf32>, vector<2x128xf32> -> vector<2x128xf32>
    %cst_8 = arith.constant 3.125000e-02 : f32
    %11 = vector.broadcast %cst_8 : f32 to vector<2x128xf32>
    %12 = arith.mulf %10, %11 : vector<2x128xf32>
    %13 = vector.extract_strided_slice %12 {offsets = [0, 0], sizes = [1, 128], strides = [1, 1]} : vector<2x128xf32> to vector<1x128xf32>
    %14 = vector.extract_strided_slice %12 {offsets = [1, 0], sizes = [1, 128], strides = [1, 1]} : vector<2x128xf32> to vector<1x128xf32>
    %15 = arith.mulf %13, %13 : vector<1x128xf32>
    %16 = arith.subf %14, %15 : vector<1x128xf32>
    %17 = vector.broadcast %13 : vector<1x128xf32> to vector<32x128xf32>
    %18 = arith.subf %2, %17 : vector<32x128xf32>
    %cst_9 = arith.constant 9.99999974E-6 : f32
    %19 = vector.broadcast %cst_9 : f32 to vector<1x128xf32>
    %20 = arith.addf %16, %19 : vector<1x128xf32>
    %21 = math.rsqrt %20 : vector<1x128xf32>
    %22 = vector.broadcast %21 : vector<1x128xf32> to vector<32x128xf32>
    %23 = arith.mulf %18, %22 : vector<32x128xf32>
    %c0_10 = arith.constant 0 : index
    %c0_11 = arith.constant 0 : index
    %24 = vector.load %arg3[%c0_10, %c0_11] : memref<1x128xf32, #tpu.memory_space<vmem>>, vector<1x128xf32>
    %25 = vector.broadcast %24 : vector<1x128xf32> to vector<32x128xf32>
    %26 = arith.mulf %23, %25 : vector<32x128xf32>
    %c0_12 = arith.constant 0 : index
    %c0_13 = arith.constant 0 : index
    %27 = vector.load %arg4[%c0_12, %c0_13] : memref<1x128xf32, #tpu.memory_space<vmem>>, vector<1x128xf32>
    %28 = vector.broadcast %27 : vector<1x128xf32> to vector<32x128xf32>
    %29 = arith.addf %26, %28 : vector<32x128xf32>
    %c0_14 = arith.constant 0 : index
    %c0_15 = arith.constant 0 : index
    %30 = vector.load %arg6[%c0_14, %c0_15] : memref<32x128xf32, #tpu.memory_space<vmem>>, vector<32x128xf32>
    tpu.vector_store %arg6[%c0_14, %c0_15], %29 {strides = array<i32>} : memref<32x128xf32, #tpu.memory_space<vmem>>, vector<32x128xf32>,
    return
  }
  func.func @transform_0(%arg0: i32) -> (i32, i32) {
    %c0_i32 = arith.constant 0 : i32
    %c0_i32_0 = arith.constant 0 : i32
    %c0_i32_1 = arith.constant 0 : i32
    return %c0_i32, %c0_i32_0 : i32, i32
  }
  func.func @transform_1(%arg0: i32) -> (i32, i32) {
    %c0_i32 = arith.constant 0 : i32
    %c0_i32_0 = arith.constant 0 : i32
    %c0_i32_1 = arith.constant 0 : i32
    return %c0_i32, %c0_i32_0 : i32, i32
  }
  func.func @transform_2(%arg0: i32) -> (i32, i32) {
    %c0_i32 = arith.constant 0 : i32
    %c0_i32_0 = arith.constant 0 : i32
    %c0_i32_1 = arith.constant 0 : i32
    return %c0_i32, %c0_i32_0 : i32, i32
  }
  func.func @transform_3(%arg0: i32) -> (i32, i32) {
    %c0_i32 = arith.constant 0 : i32
    %c0_i32_0 = arith.constant 0 : i32
    %c0_i32_1 = arith.constant 0 : i32
    return %c0_i32, %c0_i32_0 : i32, i32
  }
  func.func @transform_4(%arg0: i32) -> (i32, i32) {
    %c0_i32 = arith.constant 0 : i32
    %c0_i32_0 = arith.constant 0 : i32
    %c0_i32_1 = arith.constant 0 : i32
    return %c0_i32, %c0_i32_0 : i32, i32
  }
  func.func @transform_5(%arg0: i32) -> (i32, i32) {
    %c0_i32 = arith.constant 0 : i32
    %c0_i32_0 = arith.constant 0 : i32
    %c0_i32_1 = arith.constant 0 : i32
    return %c0_i32, %c0_i32_0 : i32, i32
  }
}

module attributes {stable_mosaic.version = 11 : i64} {
  func.func @_mm_bn_kernel(%arg0: i32, %arg1: memref<8x512xbf16, #tpu.memory_space<vmem>>, %arg2: memref<512x128xbf16, #tpu.memory_space<vmem>>, %arg3: memref<1x128xf32, #tpu.memory_space<vmem>>, %arg4: memref<1x128xf32, #tpu.memory_space<vmem>>, %arg5: memref<128x128xf32, #tpu.memory_space<vmem>>, %arg6: memref<8x128xf32, #tpu.memory_space<vmem>>) attributes {dimension_semantics = [#tpu.dimension_semantics<arbitrary>], iteration_bounds = array<i64: 1>, scalar_prefetch = 0 : i64, scratch_operands = 0 : i64, tpu.core_type = #tpu.core_type<tc>, window_params = [{pipeline_mode = #tpu.pipeline_mode<synchronous>, transform_indices = @transform_0, window_bounds = array<i64: 8, 512>}, {pipeline_mode = #tpu.pipeline_mode<synchronous>, transform_indices = @transform_1, window_bounds = array<i64: 512, 128>}, {pipeline_mode = #tpu.pipeline_mode<synchronous>, transform_indices = @transform_2, window_bounds = array<i64: 1, 128>}, {pipeline_mode = #tpu.pipeline_mode<synchronous>, transform_indices = @transform_3, window_bounds = array<i64: 1, 128>}, {pipeline_mode = #tpu.pipeline_mode<synchronous>, transform_indices = @transform_4, window_bounds = array<i64: 128, 128>}, {pipeline_mode = #tpu.pipeline_mode<synchronous>, transform_indices = @transform_5, window_bounds = array<i64: 8, 128>}]} {
    %c0 = arith.constant 0 : index
    %c0_0 = arith.constant 0 : index
    %0 = vector.load %arg1[%c0, %c0_0] : memref<8x512xbf16, #tpu.memory_space<vmem>>, vector<8x512xbf16>
    %c0_1 = arith.constant 0 : index
    %c0_2 = arith.constant 0 : index
    %1 = vector.load %arg2[%c0_1, %c0_2] : memref<512x128xbf16, #tpu.memory_space<vmem>>, vector<512x128xbf16>
    %cst = arith.constant dense<0.000000e+00> : vector<8x128xf32>
    %2 = tpu.matmul %0, %1, %cst {dimension_numbers = #tpu.dot_dimension_numbers<[1], [0], [0], [1], [0, 0, 1, 1], [], []>} : vector<8x512xbf16>, vector<512x128xbf16>, vector<8x128xf32> -> vector<8x128xf32>
    %cst_3 = arith.constant dense<0.000000e+00> : vector<128xf32>
    %3 = vector.multi_reduction <add>, %2, %cst_3 [0] : vector<8x128xf32> to vector<128xf32>
    %4 = vector.shape_cast %3 : vector<128xf32> to vector<1x128xf32>
    %5 = arith.mulf %2, %2 : vector<8x128xf32>
    %cst_4 = arith.constant dense<0.000000e+00> : vector<128xf32>
    %6 = vector.multi_reduction <add>, %5, %cst_4 [0] : vector<8x128xf32> to vector<128xf32>
    %7 = vector.shape_cast %6 : vector<128xf32> to vector<1x128xf32>
    %8 = tpu.concatenate %4, %7 in 0 : vector<1x128xf32>, vector<1x128xf32> -> vector<2x128xf32>
    %c0_5 = arith.constant 0 : index
    %c0_6 = arith.constant 0 : index
    %9 = vector.load %arg5[%c0_5, %c0_6] : memref<128x128xf32, #tpu.memory_space<vmem>>, vector<128x128xf32>
    %cst_7 = arith.constant dense<0.000000e+00> : vector<2x128xf32>
    %10 = tpu.matmul %8, %9, %cst_7 {dimension_numbers = #tpu.dot_dimension_numbers<[1], [0], [0], [1], [0, 0, 1, 1], [], []>} : vector<2x128xf32>, vector<128x128xf32>, vector<2x128xf32> -> vector<2x128xf32>
    %cst_8 = arith.constant 1.250000e-01 : f32
    %11 = vector.broadcast %cst_8 : f32 to vector<2x128xf32>
    %12 = arith.mulf %10, %11 : vector<2x128xf32>
    %13 = vector.extract_strided_slice %12 {offsets = [0, 0], sizes = [1, 128], strides = [1, 1]} : vector<2x128xf32> to vector<1x128xf32>
    %14 = vector.extract_strided_slice %12 {offsets = [1, 0], sizes = [1, 128], strides = [1, 1]} : vector<2x128xf32> to vector<1x128xf32>
    %15 = arith.mulf %13, %13 : vector<1x128xf32>
    %16 = arith.subf %14, %15 : vector<1x128xf32>
    %17 = vector.broadcast %13 : vector<1x128xf32> to vector<8x128xf32>
    %18 = arith.subf %2, %17 : vector<8x128xf32>
    %cst_9 = arith.constant 9.99999974E-6 : f32
    %19 = vector.broadcast %cst_9 : f32 to vector<1x128xf32>
    %20 = arith.addf %16, %19 : vector<1x128xf32>
    %21 = math.rsqrt %20 : vector<1x128xf32>
    %22 = vector.broadcast %21 : vector<1x128xf32> to vector<8x128xf32>
    %23 = arith.mulf %18, %22 : vector<8x128xf32>
    %c0_10 = arith.constant 0 : index
    %c0_11 = arith.constant 0 : index
    %24 = vector.load %arg3[%c0_10, %c0_11] : memref<1x128xf32, #tpu.memory_space<vmem>>, vector<1x128xf32>
    %25 = vector.broadcast %24 : vector<1x128xf32> to vector<8x128xf32>
    %26 = arith.mulf %23, %25 : vector<8x128xf32>
    %c0_12 = arith.constant 0 : index
    %c0_13 = arith.constant 0 : index
    %27 = vector.load %arg4[%c0_12, %c0_13] : memref<1x128xf32, #tpu.memory_space<vmem>>, vector<1x128xf32>
    %28 = vector.broadcast %27 : vector<1x128xf32> to vector<8x128xf32>
    %29 = arith.addf %26, %28 : vector<8x128xf32>
    %c0_14 = arith.constant 0 : index
    %c0_15 = arith.constant 0 : index
    %30 = vector.load %arg6[%c0_14, %c0_15] : memref<8x128xf32, #tpu.memory_space<vmem>>, vector<8x128xf32>
    tpu.vector_store %arg6[%c0_14, %c0_15], %29 {strides = array<i32>} : memref<8x128xf32, #tpu.memory_space<vmem>>, vector<8x128xf32>,
    return
  }
  func.func @transform_0(%arg0: i32) -> (i32, i32) {
    %c0_i32 = arith.constant 0 : i32
    %c0_i32_0 = arith.constant 0 : i32
    %c0_i32_1 = arith.constant 0 : i32
    return %c0_i32, %c0_i32_0 : i32, i32
  }
  func.func @transform_1(%arg0: i32) -> (i32, i32) {
    %c0_i32 = arith.constant 0 : i32
    %c0_i32_0 = arith.constant 0 : i32
    %c0_i32_1 = arith.constant 0 : i32
    return %c0_i32, %c0_i32_0 : i32, i32
  }
  func.func @transform_2(%arg0: i32) -> (i32, i32) {
    %c0_i32 = arith.constant 0 : i32
    %c0_i32_0 = arith.constant 0 : i32
    %c0_i32_1 = arith.constant 0 : i32
    return %c0_i32, %c0_i32_0 : i32, i32
  }
  func.func @transform_3(%arg0: i32) -> (i32, i32) {
    %c0_i32 = arith.constant 0 : i32
    %c0_i32_0 = arith.constant 0 : i32
    %c0_i32_1 = arith.constant 0 : i32
    return %c0_i32, %c0_i32_0 : i32, i32
  }
  func.func @transform_4(%arg0: i32) -> (i32, i32) {
    %c0_i32 = arith.constant 0 : i32
    %c0_i32_0 = arith.constant 0 : i32
    %c0_i32_1 = arith.constant 0 : i32
    return %c0_i32, %c0_i32_0 : i32, i32
  }
  func.func @transform_5(%arg0: i32) -> (i32, i32) {
    %c0_i32 = arith.constant 0 : i32
    %c0_i32_0 = arith.constant 0 : i32
    %c0_i32_1 = arith.constant 0 : i32
    return %c0_i32, %c0_i32_0 : i32, i32
  }
}

module attributes {stable_mosaic.version = 11 : i64} {
  func.func @_mm_kernel(%arg0: i32, %arg1: memref<8x1024xbf16, #tpu.memory_space<vmem>>, %arg2: memref<1024x128xbf16, #tpu.memory_space<vmem>>, %arg3: memref<1x128xf32, #tpu.memory_space<vmem>>, %arg4: memref<8x128xf32, #tpu.memory_space<vmem>>) attributes {dimension_semantics = [#tpu.dimension_semantics<parallel>], iteration_bounds = array<i64: 1>, scalar_prefetch = 0 : i64, scratch_operands = 0 : i64, tpu.core_type = #tpu.core_type<tc>, window_params = [{transform_indices = @transform_0, window_bounds = array<i64: 8, 1024>}, {pipeline_mode = #tpu.pipeline_mode<synchronous>, transform_indices = @transform_1, window_bounds = array<i64: 1024, 128>}, {pipeline_mode = #tpu.pipeline_mode<synchronous>, transform_indices = @transform_2, window_bounds = array<i64: 1, 128>}, {transform_indices = @transform_3, window_bounds = array<i64: 8, 128>}]} {
    %c0 = arith.constant 0 : index
    %c0_0 = arith.constant 0 : index
    %0 = vector.load %arg1[%c0, %c0_0] : memref<8x1024xbf16, #tpu.memory_space<vmem>>, vector<8x1024xbf16>
    %c0_1 = arith.constant 0 : index
    %c0_2 = arith.constant 0 : index
    %1 = vector.load %arg2[%c0_1, %c0_2] : memref<1024x128xbf16, #tpu.memory_space<vmem>>, vector<1024x128xbf16>
    %cst = arith.constant dense<0.000000e+00> : vector<8x128xf32>
    %2 = tpu.matmul %0, %1, %cst {dimension_numbers = #tpu.dot_dimension_numbers<[1], [0], [0], [1], [0, 0, 1, 1], [], []>} : vector<8x1024xbf16>, vector<1024x128xbf16>, vector<8x128xf32> -> vector<8x128xf32>
    %c0_3 = arith.constant 0 : index
    %c0_4 = arith.constant 0 : index
    %3 = vector.load %arg3[%c0_3, %c0_4] : memref<1x128xf32, #tpu.memory_space<vmem>>, vector<1x128xf32>
    %4 = vector.broadcast %3 : vector<1x128xf32> to vector<8x128xf32>
    %5 = arith.addf %2, %4 : vector<8x128xf32>
    %c0_5 = arith.constant 0 : index
    %c0_6 = arith.constant 0 : index
    %6 = vector.load %arg4[%c0_5, %c0_6] : memref<8x128xf32, #tpu.memory_space<vmem>>, vector<8x128xf32>
    tpu.vector_store %arg4[%c0_5, %c0_6], %5 {strides = array<i32>} : memref<8x128xf32, #tpu.memory_space<vmem>>, vector<8x128xf32>,
    return
  }
  func.func @transform_0(%arg0: i32) -> (i32, i32) {
    %c0_i32 = arith.constant 0 : i32
    %c0_i32_0 = arith.constant 0 : i32
    return %arg0, %c0_i32 : i32, i32
  }
  func.func @transform_1(%arg0: i32) -> (i32, i32) {
    %c0_i32 = arith.constant 0 : i32
    %c0_i32_0 = arith.constant 0 : i32
    %c0_i32_1 = arith.constant 0 : i32
    return %c0_i32, %c0_i32_0 : i32, i32
  }
  func.func @transform_2(%arg0: i32) -> (i32, i32) {
    %c0_i32 = arith.constant 0 : i32
    %c0_i32_0 = arith.constant 0 : i32
    %c0_i32_1 = arith.constant 0 : i32
    return %c0_i32, %c0_i32_0 : i32, i32
  }
  func.func @transform_3(%arg0: i32) -> (i32, i32) {
    %c0_i32 = arith.constant 0 : i32
    %c0_i32_0 = arith.constant 0 : i32
    return %arg0, %c0_i32 : i32, i32
  }
}

module attributes {stable_mosaic.version = 11 : i64} {
  func.func @_mm_bn_kernel(%arg0: i32, %arg1: memref<8x640xbf16, #tpu.memory_space<vmem>>, %arg2: memref<640x256xbf16, #tpu.memory_space<vmem>>, %arg3: memref<1x256xf32, #tpu.memory_space<vmem>>, %arg4: memref<1x256xf32, #tpu.memory_space<vmem>>, %arg5: memref<256x256xf32, #tpu.memory_space<vmem>>, %arg6: memref<8x256xf32, #tpu.memory_space<vmem>>) attributes {dimension_semantics = [#tpu.dimension_semantics<arbitrary>], iteration_bounds = array<i64: 1>, scalar_prefetch = 0 : i64, scratch_operands = 0 : i64, tpu.core_type = #tpu.core_type<tc>, window_params = [{pipeline_mode = #tpu.pipeline_mode<synchronous>, transform_indices = @transform_0, window_bounds = array<i64: 8, 640>}, {pipeline_mode = #tpu.pipeline_mode<synchronous>, transform_indices = @transform_1, window_bounds = array<i64: 640, 256>}, {pipeline_mode = #tpu.pipeline_mode<synchronous>, transform_indices = @transform_2, window_bounds = array<i64: 1, 256>}, {pipeline_mode = #tpu.pipeline_mode<synchronous>, transform_indices = @transform_3, window_bounds = array<i64: 1, 256>}, {pipeline_mode = #tpu.pipeline_mode<synchronous>, transform_indices = @transform_4, window_bounds = array<i64: 256, 256>}, {pipeline_mode = #tpu.pipeline_mode<synchronous>, transform_indices = @transform_5, window_bounds = array<i64: 8, 256>}]} {
    %c0 = arith.constant 0 : index
    %c0_0 = arith.constant 0 : index
    %0 = vector.load %arg1[%c0, %c0_0] : memref<8x640xbf16, #tpu.memory_space<vmem>>, vector<8x640xbf16>
    %c0_1 = arith.constant 0 : index
    %c0_2 = arith.constant 0 : index
    %1 = vector.load %arg2[%c0_1, %c0_2] : memref<640x256xbf16, #tpu.memory_space<vmem>>, vector<640x256xbf16>
    %cst = arith.constant dense<0.000000e+00> : vector<8x256xf32>
    %2 = tpu.matmul %0, %1, %cst {dimension_numbers = #tpu.dot_dimension_numbers<[1], [0], [0], [1], [0, 0, 1, 1], [], []>} : vector<8x640xbf16>, vector<640x256xbf16>, vector<8x256xf32> -> vector<8x256xf32>
    %cst_3 = arith.constant dense<0.000000e+00> : vector<256xf32>
    %3 = vector.multi_reduction <add>, %2, %cst_3 [0] : vector<8x256xf32> to vector<256xf32>
    %4 = vector.shape_cast %3 : vector<256xf32> to vector<1x256xf32>
    %5 = arith.mulf %2, %2 : vector<8x256xf32>
    %cst_4 = arith.constant dense<0.000000e+00> : vector<256xf32>
    %6 = vector.multi_reduction <add>, %5, %cst_4 [0] : vector<8x256xf32> to vector<256xf32>
    %7 = vector.shape_cast %6 : vector<256xf32> to vector<1x256xf32>
    %8 = tpu.concatenate %4, %7 in 0 : vector<1x256xf32>, vector<1x256xf32> -> vector<2x256xf32>
    %c0_5 = arith.constant 0 : index
    %c0_6 = arith.constant 0 : index
    %9 = vector.load %arg5[%c0_5, %c0_6] : memref<256x256xf32, #tpu.memory_space<vmem>>, vector<256x256xf32>
    %cst_7 = arith.constant dense<0.000000e+00> : vector<2x256xf32>
    %10 = tpu.matmul %8, %9, %cst_7 {dimension_numbers = #tpu.dot_dimension_numbers<[1], [0], [0], [1], [0, 0, 1, 1], [], []>} : vector<2x256xf32>, vector<256x256xf32>, vector<2x256xf32> -> vector<2x256xf32>
    %cst_8 = arith.constant 1.250000e-01 : f32
    %11 = vector.broadcast %cst_8 : f32 to vector<2x256xf32>
    %12 = arith.mulf %10, %11 : vector<2x256xf32>
    %13 = vector.extract_strided_slice %12 {offsets = [0, 0], sizes = [1, 256], strides = [1, 1]} : vector<2x256xf32> to vector<1x256xf32>
    %14 = vector.extract_strided_slice %12 {offsets = [1, 0], sizes = [1, 256], strides = [1, 1]} : vector<2x256xf32> to vector<1x256xf32>
    %15 = arith.mulf %13, %13 : vector<1x256xf32>
    %16 = arith.subf %14, %15 : vector<1x256xf32>
    %17 = vector.broadcast %13 : vector<1x256xf32> to vector<8x256xf32>
    %18 = arith.subf %2, %17 : vector<8x256xf32>
    %cst_9 = arith.constant 9.99999974E-6 : f32
    %19 = vector.broadcast %cst_9 : f32 to vector<1x256xf32>
    %20 = arith.addf %16, %19 : vector<1x256xf32>
    %21 = math.rsqrt %20 : vector<1x256xf32>
    %22 = vector.broadcast %21 : vector<1x256xf32> to vector<8x256xf32>
    %23 = arith.mulf %18, %22 : vector<8x256xf32>
    %c0_10 = arith.constant 0 : index
    %c0_11 = arith.constant 0 : index
    %24 = vector.load %arg3[%c0_10, %c0_11] : memref<1x256xf32, #tpu.memory_space<vmem>>, vector<1x256xf32>
    %25 = vector.broadcast %24 : vector<1x256xf32> to vector<8x256xf32>
    %26 = arith.mulf %23, %25 : vector<8x256xf32>
    %c0_12 = arith.constant 0 : index
    %c0_13 = arith.constant 0 : index
    %27 = vector.load %arg4[%c0_12, %c0_13] : memref<1x256xf32, #tpu.memory_space<vmem>>, vector<1x256xf32>
    %28 = vector.broadcast %27 : vector<1x256xf32> to vector<8x256xf32>
    %29 = arith.addf %26, %28 : vector<8x256xf32>
    %c0_14 = arith.constant 0 : index
    %c0_15 = arith.constant 0 : index
    %30 = vector.load %arg6[%c0_14, %c0_15] : memref<8x256xf32, #tpu.memory_space<vmem>>, vector<8x256xf32>
    tpu.vector_store %arg6[%c0_14, %c0_15], %29 {strides = array<i32>} : memref<8x256xf32, #tpu.memory_space<vmem>>, vector<8x256xf32>,
    return
  }
  func.func @transform_0(%arg0: i32) -> (i32, i32) {
    %c0_i32 = arith.constant 0 : i32
    %c0_i32_0 = arith.constant 0 : i32
    %c0_i32_1 = arith.constant 0 : i32
    return %c0_i32, %c0_i32_0 : i32, i32
  }
  func.func @transform_1(%arg0: i32) -> (i32, i32) {
    %c0_i32 = arith.constant 0 : i32
    %c0_i32_0 = arith.constant 0 : i32
    %c0_i32_1 = arith.constant 0 : i32
    return %c0_i32, %c0_i32_0 : i32, i32
  }
  func.func @transform_2(%arg0: i32) -> (i32, i32) {
    %c0_i32 = arith.constant 0 : i32
    %c0_i32_0 = arith.constant 0 : i32
    %c0_i32_1 = arith.constant 0 : i32
    return %c0_i32, %c0_i32_0 : i32, i32
  }
  func.func @transform_3(%arg0: i32) -> (i32, i32) {
    %c0_i32 = arith.constant 0 : i32
    %c0_i32_0 = arith.constant 0 : i32
    %c0_i32_1 = arith.constant 0 : i32
    return %c0_i32, %c0_i32_0 : i32, i32
  }
  func.func @transform_4(%arg0: i32) -> (i32, i32) {
    %c0_i32 = arith.constant 0 : i32
    %c0_i32_0 = arith.constant 0 : i32
    %c0_i32_1 = arith.constant 0 : i32
    return %c0_i32, %c0_i32_0 : i32, i32
  }
  func.func @transform_5(%arg0: i32) -> (i32, i32) {
    %c0_i32 = arith.constant 0 : i32
    %c0_i32_0 = arith.constant 0 : i32
    %c0_i32_1 = arith.constant 0 : i32
    return %c0_i32, %c0_i32_0 : i32, i32
  }
}

module attributes {stable_mosaic.version = 11 : i64} {
  func.func @_mm_bn_kernel(%arg0: i32, %arg1: memref<8x1152xbf16, #tpu.memory_space<vmem>>, %arg2: memref<1152x128xbf16, #tpu.memory_space<vmem>>, %arg3: memref<1x128xf32, #tpu.memory_space<vmem>>, %arg4: memref<1x128xf32, #tpu.memory_space<vmem>>, %arg5: memref<128x128xf32, #tpu.memory_space<vmem>>, %arg6: memref<8x128xf32, #tpu.memory_space<vmem>>) attributes {dimension_semantics = [#tpu.dimension_semantics<arbitrary>], iteration_bounds = array<i64: 1>, scalar_prefetch = 0 : i64, scratch_operands = 0 : i64, tpu.core_type = #tpu.core_type<tc>, window_params = [{pipeline_mode = #tpu.pipeline_mode<synchronous>, transform_indices = @transform_0, window_bounds = array<i64: 8, 1152>}, {pipeline_mode = #tpu.pipeline_mode<synchronous>, transform_indices = @transform_1, window_bounds = array<i64: 1152, 128>}, {pipeline_mode = #tpu.pipeline_mode<synchronous>, transform_indices = @transform_2, window_bounds = array<i64: 1, 128>}, {pipeline_mode = #tpu.pipeline_mode<synchronous>, transform_indices = @transform_3, window_bounds = array<i64: 1, 128>}, {pipeline_mode = #tpu.pipeline_mode<synchronous>, transform_indices = @transform_4, window_bounds = array<i64: 128, 128>}, {pipeline_mode = #tpu.pipeline_mode<synchronous>, transform_indices = @transform_5, window_bounds = array<i64: 8, 128>}]} {
    %c0 = arith.constant 0 : index
    %c0_0 = arith.constant 0 : index
    %0 = vector.load %arg1[%c0, %c0_0] : memref<8x1152xbf16, #tpu.memory_space<vmem>>, vector<8x1152xbf16>
    %c0_1 = arith.constant 0 : index
    %c0_2 = arith.constant 0 : index
    %1 = vector.load %arg2[%c0_1, %c0_2] : memref<1152x128xbf16, #tpu.memory_space<vmem>>, vector<1152x128xbf16>
    %cst = arith.constant dense<0.000000e+00> : vector<8x128xf32>
    %2 = tpu.matmul %0, %1, %cst {dimension_numbers = #tpu.dot_dimension_numbers<[1], [0], [0], [1], [0, 0, 1, 1], [], []>} : vector<8x1152xbf16>, vector<1152x128xbf16>, vector<8x128xf32> -> vector<8x128xf32>
    %cst_3 = arith.constant dense<0.000000e+00> : vector<128xf32>
    %3 = vector.multi_reduction <add>, %2, %cst_3 [0] : vector<8x128xf32> to vector<128xf32>
    %4 = vector.shape_cast %3 : vector<128xf32> to vector<1x128xf32>
    %5 = arith.mulf %2, %2 : vector<8x128xf32>
    %cst_4 = arith.constant dense<0.000000e+00> : vector<128xf32>
    %6 = vector.multi_reduction <add>, %5, %cst_4 [0] : vector<8x128xf32> to vector<128xf32>
    %7 = vector.shape_cast %6 : vector<128xf32> to vector<1x128xf32>
    %8 = tpu.concatenate %4, %7 in 0 : vector<1x128xf32>, vector<1x128xf32> -> vector<2x128xf32>
    %c0_5 = arith.constant 0 : index
    %c0_6 = arith.constant 0 : index
    %9 = vector.load %arg5[%c0_5, %c0_6] : memref<128x128xf32, #tpu.memory_space<vmem>>, vector<128x128xf32>
    %cst_7 = arith.constant dense<0.000000e+00> : vector<2x128xf32>
    %10 = tpu.matmul %8, %9, %cst_7 {dimension_numbers = #tpu.dot_dimension_numbers<[1], [0], [0], [1], [0, 0, 1, 1], [], []>} : vector<2x128xf32>, vector<128x128xf32>, vector<2x128xf32> -> vector<2x128xf32>
    %cst_8 = arith.constant 3.125000e-02 : f32
    %11 = vector.broadcast %cst_8 : f32 to vector<2x128xf32>
    %12 = arith.mulf %10, %11 : vector<2x128xf32>
    %13 = vector.extract_strided_slice %12 {offsets = [0, 0], sizes = [1, 128], strides = [1, 1]} : vector<2x128xf32> to vector<1x128xf32>
    %14 = vector.extract_strided_slice %12 {offsets = [1, 0], sizes = [1, 128], strides = [1, 1]} : vector<2x128xf32> to vector<1x128xf32>
    %15 = arith.mulf %13, %13 : vector<1x128xf32>
    %16 = arith.subf %14, %15 : vector<1x128xf32>
    %17 = vector.broadcast %13 : vector<1x128xf32> to vector<8x128xf32>
    %18 = arith.subf %2, %17 : vector<8x128xf32>
    %cst_9 = arith.constant 9.99999974E-6 : f32
    %19 = vector.broadcast %cst_9 : f32 to vector<1x128xf32>
    %20 = arith.addf %16, %19 : vector<1x128xf32>
    %21 = math.rsqrt %20 : vector<1x128xf32>
    %22 = vector.broadcast %21 : vector<1x128xf32> to vector<8x128xf32>
    %23 = arith.mulf %18, %22 : vector<8x128xf32>
    %c0_10 = arith.constant 0 : index
    %c0_11 = arith.constant 0 : index
    %24 = vector.load %arg3[%c0_10, %c0_11] : memref<1x128xf32, #tpu.memory_space<vmem>>, vector<1x128xf32>
    %25 = vector.broadcast %24 : vector<1x128xf32> to vector<8x128xf32>
    %26 = arith.mulf %23, %25 : vector<8x128xf32>
    %c0_12 = arith.constant 0 : index
    %c0_13 = arith.constant 0 : index
    %27 = vector.load %arg4[%c0_12, %c0_13] : memref<1x128xf32, #tpu.memory_space<vmem>>, vector<1x128xf32>
    %28 = vector.broadcast %27 : vector<1x128xf32> to vector<8x128xf32>
    %29 = arith.addf %26, %28 : vector<8x128xf32>
    %c0_14 = arith.constant 0 : index
    %c0_15 = arith.constant 0 : index
    %30 = vector.load %arg6[%c0_14, %c0_15] : memref<8x128xf32, #tpu.memory_space<vmem>>, vector<8x128xf32>
    tpu.vector_store %arg6[%c0_14, %c0_15], %29 {strides = array<i32>} : memref<8x128xf32, #tpu.memory_space<vmem>>, vector<8x128xf32>,
    return
  }
  func.func @transform_0(%arg0: i32) -> (i32, i32) {
    %c0_i32 = arith.constant 0 : i32
    %c0_i32_0 = arith.constant 0 : i32
    %c0_i32_1 = arith.constant 0 : i32
    return %c0_i32, %c0_i32_0 : i32, i32
  }
  func.func @transform_1(%arg0: i32) -> (i32, i32) {
    %c0_i32 = arith.constant 0 : i32
    %c0_i32_0 = arith.constant 0 : i32
    %c0_i32_1 = arith.constant 0 : i32
    return %c0_i32, %c0_i32_0 : i32, i32
  }
  func.func @transform_2(%arg0: i32) -> (i32, i32) {
    %c0_i32 = arith.constant 0 : i32
    %c0_i32_0 = arith.constant 0 : i32
    %c0_i32_1 = arith.constant 0 : i32
    return %c0_i32, %c0_i32_0 : i32, i32
  }
  func.func @transform_3(%arg0: i32) -> (i32, i32) {
    %c0_i32 = arith.constant 0 : i32
    %c0_i32_0 = arith.constant 0 : i32
    %c0_i32_1 = arith.constant 0 : i32
    return %c0_i32, %c0_i32_0 : i32, i32
  }
  func.func @transform_4(%arg0: i32) -> (i32, i32) {
    %c0_i32 = arith.constant 0 : i32
    %c0_i32_0 = arith.constant 0 : i32
    %c0_i32_1 = arith.constant 0 : i32
    return %c0_i32, %c0_i32_0 : i32, i32
  }
  func.func @transform_5(%arg0: i32) -> (i32, i32) {
    %c0_i32 = arith.constant 0 : i32
    %c0_i32_0 = arith.constant 0 : i32
    %c0_i32_1 = arith.constant 0 : i32
    return %c0_i32, %c0_i32_0 : i32, i32
  }
}

module attributes {stable_mosaic.version = 11 : i64} {
  func.func @_mm_bn_kernel(%arg0: i32, %arg1: memref<32x640xbf16, #tpu.memory_space<vmem>>, %arg2: memref<640x128xbf16, #tpu.memory_space<vmem>>, %arg3: memref<1x128xf32, #tpu.memory_space<vmem>>, %arg4: memref<1x128xf32, #tpu.memory_space<vmem>>, %arg5: memref<128x128xf32, #tpu.memory_space<vmem>>, %arg6: memref<32x128xf32, #tpu.memory_space<vmem>>) attributes {dimension_semantics = [#tpu.dimension_semantics<arbitrary>], iteration_bounds = array<i64: 1>, scalar_prefetch = 0 : i64, scratch_operands = 0 : i64, tpu.core_type = #tpu.core_type<tc>, window_params = [{pipeline_mode = #tpu.pipeline_mode<synchronous>, transform_indices = @transform_0, window_bounds = array<i64: 32, 640>}, {pipeline_mode = #tpu.pipeline_mode<synchronous>, transform_indices = @transform_1, window_bounds = array<i64: 640, 128>}, {pipeline_mode = #tpu.pipeline_mode<synchronous>, transform_indices = @transform_2, window_bounds = array<i64: 1, 128>}, {pipeline_mode = #tpu.pipeline_mode<synchronous>, transform_indices = @transform_3, window_bounds = array<i64: 1, 128>}, {pipeline_mode = #tpu.pipeline_mode<synchronous>, transform_indices = @transform_4, window_bounds = array<i64: 128, 128>}, {pipeline_mode = #tpu.pipeline_mode<synchronous>, transform_indices = @transform_5, window_bounds = array<i64: 32, 128>}]} {
    %c0 = arith.constant 0 : index
    %c0_0 = arith.constant 0 : index
    %0 = vector.load %arg1[%c0, %c0_0] : memref<32x640xbf16, #tpu.memory_space<vmem>>, vector<32x640xbf16>
    %c0_1 = arith.constant 0 : index
    %c0_2 = arith.constant 0 : index
    %1 = vector.load %arg2[%c0_1, %c0_2] : memref<640x128xbf16, #tpu.memory_space<vmem>>, vector<640x128xbf16>
    %cst = arith.constant dense<0.000000e+00> : vector<32x128xf32>
    %2 = tpu.matmul %0, %1, %cst {dimension_numbers = #tpu.dot_dimension_numbers<[1], [0], [0], [1], [0, 0, 1, 1], [], []>} : vector<32x640xbf16>, vector<640x128xbf16>, vector<32x128xf32> -> vector<32x128xf32>
    %cst_3 = arith.constant dense<0.000000e+00> : vector<128xf32>
    %3 = vector.multi_reduction <add>, %2, %cst_3 [0] : vector<32x128xf32> to vector<128xf32>
    %4 = vector.shape_cast %3 : vector<128xf32> to vector<1x128xf32>
    %5 = arith.mulf %2, %2 : vector<32x128xf32>
    %cst_4 = arith.constant dense<0.000000e+00> : vector<128xf32>
    %6 = vector.multi_reduction <add>, %5, %cst_4 [0] : vector<32x128xf32> to vector<128xf32>
    %7 = vector.shape_cast %6 : vector<128xf32> to vector<1x128xf32>
    %8 = tpu.concatenate %4, %7 in 0 : vector<1x128xf32>, vector<1x128xf32> -> vector<2x128xf32>
    %c0_5 = arith.constant 0 : index
    %c0_6 = arith.constant 0 : index
    %9 = vector.load %arg5[%c0_5, %c0_6] : memref<128x128xf32, #tpu.memory_space<vmem>>, vector<128x128xf32>
    %cst_7 = arith.constant dense<0.000000e+00> : vector<2x128xf32>
    %10 = tpu.matmul %8, %9, %cst_7 {dimension_numbers = #tpu.dot_dimension_numbers<[1], [0], [0], [1], [0, 0, 1, 1], [], []>} : vector<2x128xf32>, vector<128x128xf32>, vector<2x128xf32> -> vector<2x128xf32>
    %cst_8 = arith.constant 7.812500e-03 : f32
    %11 = vector.broadcast %cst_8 : f32 to vector<2x128xf32>
    %12 = arith.mulf %10, %11 : vector<2x128xf32>
    %13 = vector.extract_strided_slice %12 {offsets = [0, 0], sizes = [1, 128], strides = [1, 1]} : vector<2x128xf32> to vector<1x128xf32>
    %14 = vector.extract_strided_slice %12 {offsets = [1, 0], sizes = [1, 128], strides = [1, 1]} : vector<2x128xf32> to vector<1x128xf32>
    %15 = arith.mulf %13, %13 : vector<1x128xf32>
    %16 = arith.subf %14, %15 : vector<1x128xf32>
    %17 = vector.broadcast %13 : vector<1x128xf32> to vector<32x128xf32>
    %18 = arith.subf %2, %17 : vector<32x128xf32>
    %cst_9 = arith.constant 9.99999974E-6 : f32
    %19 = vector.broadcast %cst_9 : f32 to vector<1x128xf32>
    %20 = arith.addf %16, %19 : vector<1x128xf32>
    %21 = math.rsqrt %20 : vector<1x128xf32>
    %22 = vector.broadcast %21 : vector<1x128xf32> to vector<32x128xf32>
    %23 = arith.mulf %18, %22 : vector<32x128xf32>
    %c0_10 = arith.constant 0 : index
    %c0_11 = arith.constant 0 : index
    %24 = vector.load %arg3[%c0_10, %c0_11] : memref<1x128xf32, #tpu.memory_space<vmem>>, vector<1x128xf32>
    %25 = vector.broadcast %24 : vector<1x128xf32> to vector<32x128xf32>
    %26 = arith.mulf %23, %25 : vector<32x128xf32>
    %c0_12 = arith.constant 0 : index
    %c0_13 = arith.constant 0 : index
    %27 = vector.load %arg4[%c0_12, %c0_13] : memref<1x128xf32, #tpu.memory_space<vmem>>, vector<1x128xf32>
    %28 = vector.broadcast %27 : vector<1x128xf32> to vector<32x128xf32>
    %29 = arith.addf %26, %28 : vector<32x128xf32>
    %c0_14 = arith.constant 0 : index
    %c0_15 = arith.constant 0 : index
    %30 = vector.load %arg6[%c0_14, %c0_15] : memref<32x128xf32, #tpu.memory_space<vmem>>, vector<32x128xf32>
    tpu.vector_store %arg6[%c0_14, %c0_15], %29 {strides = array<i32>} : memref<32x128xf32, #tpu.memory_space<vmem>>, vector<32x128xf32>,
    return
  }
  func.func @transform_0(%arg0: i32) -> (i32, i32) {
    %c0_i32 = arith.constant 0 : i32
    %c0_i32_0 = arith.constant 0 : i32
    %c0_i32_1 = arith.constant 0 : i32
    return %c0_i32, %c0_i32_0 : i32, i32
  }
  func.func @transform_1(%arg0: i32) -> (i32, i32) {
    %c0_i32 = arith.constant 0 : i32
    %c0_i32_0 = arith.constant 0 : i32
    %c0_i32_1 = arith.constant 0 : i32
    return %c0_i32, %c0_i32_0 : i32, i32
  }
  func.func @transform_2(%arg0: i32) -> (i32, i32) {
    %c0_i32 = arith.constant 0 : i32
    %c0_i32_0 = arith.constant 0 : i32
    %c0_i32_1 = arith.constant 0 : i32
    return %c0_i32, %c0_i32_0 : i32, i32
  }
  func.func @transform_3(%arg0: i32) -> (i32, i32) {
    %c0_i32 = arith.constant 0 : i32
    %c0_i32_0 = arith.constant 0 : i32
    %c0_i32_1 = arith.constant 0 : i32
    return %c0_i32, %c0_i32_0 : i32, i32
  }
  func.func @transform_4(%arg0: i32) -> (i32, i32) {
    %c0_i32 = arith.constant 0 : i32
    %c0_i32_0 = arith.constant 0 : i32
    %c0_i32_1 = arith.constant 0 : i32
    return %c0_i32, %c0_i32_0 : i32, i32
  }
  func.func @transform_5(%arg0: i32) -> (i32, i32) {
    %c0_i32 = arith.constant 0 : i32
    %c0_i32_0 = arith.constant 0 : i32
    %c0_i32_1 = arith.constant 0 : i32
    return %c0_i32, %c0_i32_0 : i32, i32
  }
}

module attributes {stable_mosaic.version = 11 : i64} {
  func.func @_mm_bn_kernel(%arg0: i32, %arg1: memref<128x384xbf16, #tpu.memory_space<vmem>>, %arg2: memref<384x128xbf16, #tpu.memory_space<vmem>>, %arg3: memref<1x128xf32, #tpu.memory_space<vmem>>, %arg4: memref<1x128xf32, #tpu.memory_space<vmem>>, %arg5: memref<128x128xf32, #tpu.memory_space<vmem>>, %arg6: memref<128x128xf32, #tpu.memory_space<vmem>>) attributes {dimension_semantics = [#tpu.dimension_semantics<arbitrary>], iteration_bounds = array<i64: 1>, scalar_prefetch = 0 : i64, scratch_operands = 0 : i64, tpu.core_type = #tpu.core_type<tc>, window_params = [{pipeline_mode = #tpu.pipeline_mode<synchronous>, transform_indices = @transform_0, window_bounds = array<i64: 128, 384>}, {pipeline_mode = #tpu.pipeline_mode<synchronous>, transform_indices = @transform_1, window_bounds = array<i64: 384, 128>}, {pipeline_mode = #tpu.pipeline_mode<synchronous>, transform_indices = @transform_2, window_bounds = array<i64: 1, 128>}, {pipeline_mode = #tpu.pipeline_mode<synchronous>, transform_indices = @transform_3, window_bounds = array<i64: 1, 128>}, {pipeline_mode = #tpu.pipeline_mode<synchronous>, transform_indices = @transform_4, window_bounds = array<i64: 128, 128>}, {pipeline_mode = #tpu.pipeline_mode<synchronous>, transform_indices = @transform_5, window_bounds = array<i64: 128, 128>}]} {
    %c0 = arith.constant 0 : index
    %c0_0 = arith.constant 0 : index
    %0 = vector.load %arg1[%c0, %c0_0] : memref<128x384xbf16, #tpu.memory_space<vmem>>, vector<128x384xbf16>
    %c0_1 = arith.constant 0 : index
    %c0_2 = arith.constant 0 : index
    %1 = vector.load %arg2[%c0_1, %c0_2] : memref<384x128xbf16, #tpu.memory_space<vmem>>, vector<384x128xbf16>
    %cst = arith.constant dense<0.000000e+00> : vector<128x128xf32>
    %2 = tpu.matmul %0, %1, %cst {dimension_numbers = #tpu.dot_dimension_numbers<[1], [0], [0], [1], [0, 0, 1, 1], [], []>} : vector<128x384xbf16>, vector<384x128xbf16>, vector<128x128xf32> -> vector<128x128xf32>
    %cst_3 = arith.constant dense<0.000000e+00> : vector<128xf32>
    %3 = vector.multi_reduction <add>, %2, %cst_3 [0] : vector<128x128xf32> to vector<128xf32>
    %4 = vector.shape_cast %3 : vector<128xf32> to vector<1x128xf32>
    %5 = arith.mulf %2, %2 : vector<128x128xf32>
    %cst_4 = arith.constant dense<0.000000e+00> : vector<128xf32>
    %6 = vector.multi_reduction <add>, %5, %cst_4 [0] : vector<128x128xf32> to vector<128xf32>
    %7 = vector.shape_cast %6 : vector<128xf32> to vector<1x128xf32>
    %8 = tpu.concatenate %4, %7 in 0 : vector<1x128xf32>, vector<1x128xf32> -> vector<2x128xf32>
    %c0_5 = arith.constant 0 : index
    %c0_6 = arith.constant 0 : index
    %9 = vector.load %arg5[%c0_5, %c0_6] : memref<128x128xf32, #tpu.memory_space<vmem>>, vector<128x128xf32>
    %cst_7 = arith.constant dense<0.000000e+00> : vector<2x128xf32>
    %10 = tpu.matmul %8, %9, %cst_7 {dimension_numbers = #tpu.dot_dimension_numbers<[1], [0], [0], [1], [0, 0, 1, 1], [], []>} : vector<2x128xf32>, vector<128x128xf32>, vector<2x128xf32> -> vector<2x128xf32>
    %cst_8 = arith.constant 0.001953125 : f32
    %11 = vector.broadcast %cst_8 : f32 to vector<2x128xf32>
    %12 = arith.mulf %10, %11 : vector<2x128xf32>
    %13 = vector.extract_strided_slice %12 {offsets = [0, 0], sizes = [1, 128], strides = [1, 1]} : vector<2x128xf32> to vector<1x128xf32>
    %14 = vector.extract_strided_slice %12 {offsets = [1, 0], sizes = [1, 128], strides = [1, 1]} : vector<2x128xf32> to vector<1x128xf32>
    %15 = arith.mulf %13, %13 : vector<1x128xf32>
    %16 = arith.subf %14, %15 : vector<1x128xf32>
    %17 = vector.broadcast %13 : vector<1x128xf32> to vector<128x128xf32>
    %18 = arith.subf %2, %17 : vector<128x128xf32>
    %cst_9 = arith.constant 9.99999974E-6 : f32
    %19 = vector.broadcast %cst_9 : f32 to vector<1x128xf32>
    %20 = arith.addf %16, %19 : vector<1x128xf32>
    %21 = math.rsqrt %20 : vector<1x128xf32>
    %22 = vector.broadcast %21 : vector<1x128xf32> to vector<128x128xf32>
    %23 = arith.mulf %18, %22 : vector<128x128xf32>
    %c0_10 = arith.constant 0 : index
    %c0_11 = arith.constant 0 : index
    %24 = vector.load %arg3[%c0_10, %c0_11] : memref<1x128xf32, #tpu.memory_space<vmem>>, vector<1x128xf32>
    %25 = vector.broadcast %24 : vector<1x128xf32> to vector<128x128xf32>
    %26 = arith.mulf %23, %25 : vector<128x128xf32>
    %c0_12 = arith.constant 0 : index
    %c0_13 = arith.constant 0 : index
    %27 = vector.load %arg4[%c0_12, %c0_13] : memref<1x128xf32, #tpu.memory_space<vmem>>, vector<1x128xf32>
    %28 = vector.broadcast %27 : vector<1x128xf32> to vector<128x128xf32>
    %29 = arith.addf %26, %28 : vector<128x128xf32>
    %c0_14 = arith.constant 0 : index
    %c0_15 = arith.constant 0 : index
    %30 = vector.load %arg6[%c0_14, %c0_15] : memref<128x128xf32, #tpu.memory_space<vmem>>, vector<128x128xf32>
    tpu.vector_store %arg6[%c0_14, %c0_15], %29 {strides = array<i32>} : memref<128x128xf32, #tpu.memory_space<vmem>>, vector<128x128xf32>,
    return
  }
  func.func @transform_0(%arg0: i32) -> (i32, i32) {
    %c0_i32 = arith.constant 0 : i32
    %c0_i32_0 = arith.constant 0 : i32
    %c0_i32_1 = arith.constant 0 : i32
    return %c0_i32, %c0_i32_0 : i32, i32
  }
  func.func @transform_1(%arg0: i32) -> (i32, i32) {
    %c0_i32 = arith.constant 0 : i32
    %c0_i32_0 = arith.constant 0 : i32
    %c0_i32_1 = arith.constant 0 : i32
    return %c0_i32, %c0_i32_0 : i32, i32
  }
  func.func @transform_2(%arg0: i32) -> (i32, i32) {
    %c0_i32 = arith.constant 0 : i32
    %c0_i32_0 = arith.constant 0 : i32
    %c0_i32_1 = arith.constant 0 : i32
    return %c0_i32, %c0_i32_0 : i32, i32
  }
  func.func @transform_3(%arg0: i32) -> (i32, i32) {
    %c0_i32 = arith.constant 0 : i32
    %c0_i32_0 = arith.constant 0 : i32
    %c0_i32_1 = arith.constant 0 : i32
    return %c0_i32, %c0_i32_0 : i32, i32
  }
  func.func @transform_4(%arg0: i32) -> (i32, i32) {
    %c0_i32 = arith.constant 0 : i32
    %c0_i32_0 = arith.constant 0 : i32
    %c0_i32_1 = arith.constant 0 : i32
    return %c0_i32, %c0_i32_0 : i32, i32
  }
  func.func @transform_5(%arg0: i32) -> (i32, i32) {
    %c0_i32 = arith.constant 0 : i32
    %c0_i32_0 = arith.constant 0 : i32
    %c0_i32_1 = arith.constant 0 : i32
    return %c0_i32, %c0_i32_0 : i32, i32
  }
}

module attributes {stable_mosaic.version = 11 : i64} {
  func.func @_mm_kernel(%arg0: i32, %arg1: memref<512x256xbf16, #tpu.memory_space<vmem>>, %arg2: memref<256x128xbf16, #tpu.memory_space<vmem>>, %arg3: memref<1x128xf32, #tpu.memory_space<vmem>>, %arg4: memref<512x128xf32, #tpu.memory_space<vmem>>) attributes {dimension_semantics = [#tpu.dimension_semantics<parallel>], iteration_bounds = array<i64: 1>, scalar_prefetch = 0 : i64, scratch_operands = 0 : i64, tpu.core_type = #tpu.core_type<tc>, window_params = [{transform_indices = @transform_0, window_bounds = array<i64: 512, 256>}, {pipeline_mode = #tpu.pipeline_mode<synchronous>, transform_indices = @transform_1, window_bounds = array<i64: 256, 128>}, {pipeline_mode = #tpu.pipeline_mode<synchronous>, transform_indices = @transform_2, window_bounds = array<i64: 1, 128>}, {transform_indices = @transform_3, window_bounds = array<i64: 512, 128>}]} {
    %c0 = arith.constant 0 : index
    %c0_0 = arith.constant 0 : index
    %0 = vector.load %arg1[%c0, %c0_0] : memref<512x256xbf16, #tpu.memory_space<vmem>>, vector<512x256xbf16>
    %c0_1 = arith.constant 0 : index
    %c0_2 = arith.constant 0 : index
    %1 = vector.load %arg2[%c0_1, %c0_2] : memref<256x128xbf16, #tpu.memory_space<vmem>>, vector<256x128xbf16>
    %cst = arith.constant dense<0.000000e+00> : vector<512x128xf32>
    %2 = tpu.matmul %0, %1, %cst {dimension_numbers = #tpu.dot_dimension_numbers<[1], [0], [0], [1], [0, 0, 1, 1], [], []>} : vector<512x256xbf16>, vector<256x128xbf16>, vector<512x128xf32> -> vector<512x128xf32>
    %c0_3 = arith.constant 0 : index
    %c0_4 = arith.constant 0 : index
    %3 = vector.load %arg3[%c0_3, %c0_4] : memref<1x128xf32, #tpu.memory_space<vmem>>, vector<1x128xf32>
    %4 = vector.broadcast %3 : vector<1x128xf32> to vector<512x128xf32>
    %5 = arith.addf %2, %4 : vector<512x128xf32>
    %6 = math.tanh %5 : vector<512x128xf32>
    %c0_5 = arith.constant 0 : index
    %c0_6 = arith.constant 0 : index
    %7 = vector.load %arg4[%c0_5, %c0_6] : memref<512x128xf32, #tpu.memory_space<vmem>>, vector<512x128xf32>
    tpu.vector_store %arg4[%c0_5, %c0_6], %6 {strides = array<i32>} : memref<512x128xf32, #tpu.memory_space<vmem>>, vector<512x128xf32>,
    return
  }
  func.func @transform_0(%arg0: i32) -> (i32, i32) {
    %c0_i32 = arith.constant 0 : i32
    %c0_i32_0 = arith.constant 0 : i32
    return %arg0, %c0_i32 : i32, i32
  }
  func.func @transform_1(%arg0: i32) -> (i32, i32) {
    %c0_i32 = arith.constant 0 : i32
    %c0_i32_0 = arith.constant 0 : i32
    %c0_i32_1 = arith.constant 0 : i32
    return %c0_i32, %c0_i32_0 : i32, i32
  }
  func.func @transform_2(%arg0: i32) -> (i32, i32) {
    %c0_i32 = arith.constant 0 : i32
    %c0_i32_0 = arith.constant 0 : i32
    %c0_i32_1 = arith.constant 0 : i32
    return %c0_i32, %c0_i32_0 : i32, i32
  }
  func.func @transform_3(%arg0: i32) -> (i32, i32) {
    %c0_i32 = arith.constant 0 : i32
    %c0_i32_0 = arith.constant 0 : i32
    return %arg0, %c0_i32 : i32, i32
  }
}

</mosaic_0001>

<llo_original>
// kernel: zip_unet_forward.11
$region0: #{zip_unet_forward.11}
  #allocation0 [shape = 'u32[]', space=smem, size = 0x4, offset = 0x4, fixed_abs, tag = 'smem constant byte address 0x4 - core index']
  #allocation1 [shape = 'u32[144,128]{1,0:T(1,128)}', space=vmem, size = 0x12000, scoped, tag = 'internal scratch']
  %s0 = inlined_call_operand.vmem [shape: bf16[2048,128], index: 0, kind: input, shape index: {}]
  %s1 = inlined_call_operand.vmem [shape: bf16[128,128], index: 1, kind: input, shape index: {}]
  %s2 = inlined_call_operand.vmem [shape: f32[1,128], index: 2, kind: input, shape index: {}]
  %s3 = inlined_call_operand.vmem [shape: f32[2048,128], index: 3, kind: output, shape index: {}]
  %s4 = sld [smem:[#allocation0]]
  $region45: #{zip_unet_forward.11} parent=0
    _
  %s6 = ssub.s32 1, %s4
  %s7 = scalar_select 0, %s6, %s4
  loop: start=0, step=1, limit=6
  $region2: #{zip_unet_forward.11} parent=0 // loop_pre_header
    _
  $region3: #{zip_unet_forward.11} parent=0 // loop_header
    %s9 = sphi 0, %s13
    %p10 = scmp.ge.s32.totalorder %s9, 6
    %s19 = sphi 0, %s21
    %s22 = sphi 0, %s19
    %s23 = sphi 0, %s22
    %s39 = sphi 0, %s23
    %s43 = sphi 0, %s43
    %s45 = sphi 0, %s43
    %s46 = sphi 0, %s45
    %s60 = sphi 0, %s46
    %s64 = sphi 0, %s64
    %s66 = sphi 0, %s64
    %s67 = sphi 0, %s66
    %s81 = sphi 0, %s67
    %s87 = sphi 0, %s89
    %s90 = sphi 0, %s87
    %s91 = sphi 0, %s90
    %s107 = sphi 0, %s91
  $region4: #{zip_unet_forward.11} parent=0 // loop_header_branch
    %12 = sbr.rel (%p10) target = $region8
  $region5: #{zip_unet_forward.11} parent=0 // loop_body
    %s14 = ssub.s32 %s9, 1
    %s15 = ssub.s32 %s9, 2
    %s16 = sadd.s32 %s9, 1
    %s17 = ssub.s32 %s9, %s16
    %p18 = scmp.eq.s32.totalorder %s17, 0
    %s20 = sadd.s32 %s19, 1
    %s21 = scalar_select %p18, %s19, %s20
    %p24 = pneg %p18
    %p25 = scmp.eq.s32.totalorder %s9, 3
    %p26 = por %p24, %p25
    %p27 = scmp.ne.s32.totalorder %s19, %s22
    %p28 = scmp.eq.s32.totalorder %s9, 0
    %p29 = por %p27, %p28
    %p30 = scmp.ne.s32.totalorder %s19, %s22
    %p31 = scmp.eq.s32.totalorder %s14, 3
    %p32 = por %p30, %p31
    %p33 = scmp.ne.s32.totalorder %s22, %s23
    %p34 = scmp.eq.s32.totalorder %s14, 0
    %p35 = por %p33, %p34
    %p36 = scmp.ne.s32.totalorder %s22, %s23
    %p37 = scmp.eq.s32.totalorder %s15, 3
    %p38 = por %p36, %p37
    %p40 = scmp.ne.s32.totalorder %s23, %s39
    %p41 = scmp.eq.s32.totalorder %s15, 0
    %p42 = por %p40, %p41
    %s44 = sadd.s32 %s43, 1
    %p47 = scmp.eq.s32.totalorder %s9, 3
    %p48 = scmp.ne.s32.totalorder %s43, %s45
    %p49 = scmp.eq.s32.totalorder %s9, 0
    %p50 = por %p48, %p49
    %p51 = scmp.ne.s32.totalorder %s43, %s45
    %p52 = scmp.eq.s32.totalorder %s14, 3
    %p53 = por %p51, %p52
    %p54 = scmp.ne.s32.totalorder %s45, %s46
    %p55 = scmp.eq.s32.totalorder %s14, 0
    %p56 = por %p54, %p55
    %p57 = scmp.ne.s32.totalorder %s45, %s46
    %p58 = scmp.eq.s32.totalorder %s15, 3
    %p59 = por %p57, %p58
    %p61 = scmp.ne.s32.totalorder %s46, %s60
    %p62 = scmp.eq.s32.totalorder %s15, 0
    %p63 = por %p61, %p62
    %s65 = sadd.s32 %s64, 1
    %p68 = scmp.eq.s32.totalorder %s9, 3
    %p69 = scmp.ne.s32.totalorder %s64, %s66
    %p70 = scmp.eq.s32.totalorder %s9, 0
    %p71 = por %p69, %p70
    %p72 = scmp.ne.s32.totalorder %s64, %s66
    %p73 = scmp.eq.s32.totalorder %s14, 3
    %p74 = por %p72, %p73
    %p75 = scmp.ne.s32.totalorder %s66, %s67
    %p76 = scmp.eq.s32.totalorder %s14, 0
    %p77 = por %p75, %p76
    %p78 = scmp.ne.s32.totalorder %s66, %s67
    %p79 = scmp.eq.s32.totalorder %s15, 3
    %p80 = por %p78, %p79
    %p82 = scmp.ne.s32.totalorder %s67, %s81
    %p83 = scmp.eq.s32.totalorder %s15, 0
    %p84 = por %p82, %p83
    %s85 = ssub.s32 %s9, %s16
    %p86 = scmp.eq.s32.totalorder %s85, 0
    %s88 = sadd.s32 %s87, 1
    %s89 = scalar_select %p86, %s87, %s88
    %p92 = pneg %p86
    %p93 = scmp.eq.s32.totalorder %s9, 3
    %p94 = por %p92, %p93
    %p95 = scmp.ne.s32.totalorder %s87, %s90
    %p96 = scmp.eq.s32.totalorder %s9, 0
    %p97 = por %p95, %p96
    %p98 = scmp.ne.s32.totalorder %s87, %s90
    %p99 = scmp.eq.s32.totalorder %s14, 3
    %p100 = por %p98, %p99
    %p101 = scmp.ne.s32.totalorder %s90, %s91
    %p102 = scmp.eq.s32.totalorder %s14, 0
    %p103 = por %p101, %p102
    %p104 = scmp.ne.s32.totalorder %s90, %s91
    %p105 = scmp.eq.s32.totalorder %s15, 3
    %p106 = por %p104, %p105
    %p108 = scmp.ne.s32.totalorder %s91, %s107
    %p109 = scmp.eq.s32.totalorder %s15, 0
    %p110 = por %p108, %p109
    %p111 = scmp.le.s32.totalorder 1, %s9
    %p112 = scmp.lt.s32.totalorder %s9, 5
    %p113 = pnand %p111, %p112
    %p114 = pneg %p113
    // Predicated region
    $region9: #{zip_unet_forward.11} parent=5 // pred_check
      _
    $region10: #{zip_unet_forward.11} parent=5 // pred_check_branch
      %116 = sbr.rel (%p113) target = $region12
    $region11: #{zip_unet_forward.11} parent=5 // pred_region
      %s117 = ssub.s32 %s9, 1
      // Predicated region
      $region13: #{zip_unet_forward.11} parent=11 // pred_check
        %p118 = pneg %p56
      $region14: #{zip_unet_forward.11} parent=11 // pred_check_branch
        %120 = sbr.rel (%p118) target = $region16
      $region15: #{zip_unet_forward.11} parent=11 // pred_region
        _
      $region16: #{zip_unet_forward.11} parent=11 // pred_fallthru
        _
      // Predicated region
      $region17: #{zip_unet_forward.11} parent=11 // pred_check
        %p121 = pneg %p77
      $region18: #{zip_unet_forward.11} parent=11 // pred_check_branch
        %123 = sbr.rel (%p121) target = $region20
      $region19: #{zip_unet_forward.11} parent=11 // pred_region
        _
      $region20: #{zip_unet_forward.11} parent=11 // pred_fallthru
        _
    $region12: #{zip_unet_forward.11} parent=5 // pred_fallthru
      _
    %p124 = scmp.lt.s32.totalorder %s9, 4
    // Predicated region
    $region21: #{zip_unet_forward.11} parent=5 // pred_check
      %p125 = pneg %p124
    $region22: #{zip_unet_forward.11} parent=5 // pred_check_branch
      %127 = sbr.rel (%p125) target = $region24
    $region23: #{zip_unet_forward.11} parent=5 // pred_region
      // Predicated region
      $region25: #{zip_unet_forward.11} parent=23 // pred_check
        %p128 = pneg %p29
      $region26: #{zip_unet_forward.11} parent=23 // pred_check_branch
        %130 = sbr.rel (%p128) target = $region28
      $region27: #{zip_unet_forward.11} parent=23 // pred_region
        %s131 = smul.u32 64, %s9
        %p132 = scmp.lt.s32.totalorder %s131, 255
        %s133 = scalar_select %p132, %s131, 255
        %s134 = smul.addr %s133, 4
        %s135 = scalar_lea.vmem %s0, %s134
        %s136 = smul.u32 64, %s9
      $region28: #{zip_unet_forward.11} parent=23 // pred_fallthru
        _
    $region24: #{zip_unet_forward.11} parent=5 // pred_fallthru
      _
    %p137 = scmp.le.s32.totalorder 1, %s9
    %p138 = scmp.lt.s32.totalorder %s9, 5
    %p139 = pnand %p137, %p138
    %p140 = pneg %p139
    // Predicated region
    $region29: #{zip_unet_forward.11} parent=5 // pred_check
      _
    $region30: #{zip_unet_forward.11} parent=5 // pred_check_branch
      %142 = sbr.rel (%p139) target = $region32
    $region31: #{zip_unet_forward.11} parent=5 // pred_region
      %s143 = ssub.s32 %s9, 1
      %s144 = smul.u32 64, %s14
      %p145 = scmp.lt.s32.totalorder %s144, 255
      %s146 = scalar_select %p145, %s144, 255
      %s147 = smul.addr %s146, 4
      %s148 = scalar_lea.vmem %s0, %s147
      %p149 = pneg %p35
      %p150 = pneg %p32
      %p151 = pneg %p56
      %p152 = pneg %p53
      %p153 = pneg %p77
      %p154 = pneg %p74
      %p155 = pneg %p103
      %p156 = pneg %p100
      %s157 = smul.u32 64, %s14
      %p158 = scmp.lt.s32.totalorder %s157, 255
      %s159 = scalar_select %p158, %s157, 255
      %s160 = smul.addr %s159, 8
      %s161 = scalar_lea.vmem %s3, %s160
      %s162 = smul.u32 64, %s14
      %p163 = scmp.lt.s32.totalorder %s162, 255
      %s164 = scalar_select %p163, %s162, 255
      %s165 = smul.addr %s164, 4
      %s166 = scalar_lea.vmem %s0, %s165
      %s167 = smul.u32 64, %s14
      %s168 = smul.u32 64, %s14
      %p169 = scmp.lt.s32.totalorder %s168, 255
      %s170 = scalar_select %p169, %s168, 255
      %s171 = smul.addr %s170, 8
      %s172 = scalar_lea.vmem %s3, %s171
      %s173 = smul.u32 64, %s14
      %v175 = vld [vmem:[%s166] sm:$0xf]
      %v176 = vld [vmem:[%s166 + $0x4] sm:$0xf]
      %v177 = vld [vmem:[%s166 + $0x8] sm:$0xf]
      %v178 = vld [vmem:[%s166 + $0xc] sm:$0xf]
      %v179 = vld [vmem:[%s166 + $0x10] sm:$0xf]
      %v180 = vld [vmem:[%s166 + $0x14] sm:$0xf]
      %v181 = vld [vmem:[%s166 + $0x18] sm:$0xf]
      %v182 = vld [vmem:[%s166 + $0x1c] sm:$0xf]
      %v183 = vld [vmem:[%s166 + $0x20] sm:$0xf]
      %v184 = vld [vmem:[%s166 + $0x24] sm:$0xf]
      %v185 = vld [vmem:[%s166 + $0x28] sm:$0xf]
      %v186 = vld [vmem:[%s166 + $0x2c] sm:$0xf]
      %v187 = vld [vmem:[%s166 + $0x30] sm:$0xf]
      %v188 = vld [vmem:[%s166 + $0x34] sm:$0xf]
      %v189 = vld [vmem:[%s166 + $0x38] sm:$0xf]
      %v190 = vld [vmem:[%s166 + $0x3c] sm:$0xf]
      %v191 = vld [vmem:[%s166 + $0x40] sm:$0xf]
      %v192 = vld [vmem:[%s166 + $0x44] sm:$0xf]
      %v193 = vld [vmem:[%s166 + $0x48] sm:$0xf]
      %v194 = vld [vmem:[%s166 + $0x4c] sm:$0xf]
      %v195 = vld [vmem:[%s166 + $0x50] sm:$0xf]
      %v196 = vld [vmem:[%s166 + $0x54] sm:$0xf]
      %v197 = vld [vmem:[%s166 + $0x58] sm:$0xf]
      %v198 = vld [vmem:[%s166 + $0x5c] sm:$0xf]
      %v199 = vld [vmem:[%s166 + $0x60] sm:$0xf]
      %v200 = vld [vmem:[%s166 + $0x64] sm:$0xf]
      %v201 = vld [vmem:[%s166 + $0x68] sm:$0xf]
      %v202 = vld [vmem:[%s166 + $0x6c] sm:$0xf]
      %v203 = vld [vmem:[%s166 + $0x70] sm:$0xf]
      %v204 = vld [vmem:[%s166 + $0x74] sm:$0xf]
      %v205 = vld [vmem:[%s166 + $0x78] sm:$0xf]
      %v206 = vld [vmem:[%s166 + $0x7c] sm:$0xf]
      %v207 = vld [vmem:[%s166 + $0x80] sm:$0xf]
      %v208 = vld [vmem:[%s166 + $0x84] sm:$0xf]
      %v209 = vld [vmem:[%s166 + $0x88] sm:$0xf]
      %v210 = vld [vmem:[%s166 + $0x8c] sm:$0xf]
      %v211 = vld [vmem:[%s166 + $0x90] sm:$0xf]
      %v212 = vld [vmem:[%s166 + $0x94] sm:$0xf]
      %v213 = vld [vmem:[%s166 + $0x98] sm:$0xf]
      %v214 = vld [vmem:[%s166 + $0x9c] sm:$0xf]
      %v215 = vld [vmem:[%s166 + $0xa0] sm:$0xf]
      %v216 = vld [vmem:[%s166 + $0xa4] sm:$0xf]
      %v217 = vld [vmem:[%s166 + $0xa8] sm:$0xf]
      %v218 = vld [vmem:[%s166 + $0xac] sm:$0xf]
      %v219 = vld [vmem:[%s166 + $0xb0] sm:$0xf]
      %v220 = vld [vmem:[%s166 + $0xb4] sm:$0xf]
      %v221 = vld [vmem:[%s166 + $0xb8] sm:$0xf]
      %v222 = vld [vmem:[%s166 + $0xbc] sm:$0xf]
      %v223 = vld [vmem:[%s166 + $0xc0] sm:$0xf]
      %v224 = vld [vmem:[%s166 + $0xc4] sm:$0xf]
      %v225 = vld [vmem:[%s166 + $0xc8] sm:$0xf]
      %v226 = vld [vmem:[%s166 + $0xcc] sm:$0xf]
      %v227 = vld [vmem:[%s166 + $0xd0] sm:$0xf]
      %v228 = vld [vmem:[%s166 + $0xd4] sm:$0xf]
      %v229 = vld [vmem:[%s166 + $0xd8] sm:$0xf]
      %v230 = vld [vmem:[%s166 + $0xdc] sm:$0xf]
      %v231 = vld [vmem:[%s166 + $0xe0] sm:$0xf]
      %v232 = vld [vmem:[%s166 + $0xe4] sm:$0xf]
      %v233 = vld [vmem:[%s166 + $0xe8] sm:$0xf]
      %v234 = vld [vmem:[%s166 + $0xec] sm:$0xf]
      %v235 = vld [vmem:[%s166 + $0xf0] sm:$0xf]
      %v236 = vld [vmem:[%s166 + $0xf4] sm:$0xf]
      %v237 = vld [vmem:[%s166 + $0xf8] sm:$0xf]
      %v238 = vld [vmem:[%s166 + $0xfc] sm:$0xf]
      %v239 = vld [vmem:[%s1] sm:$0xf]
      %v240 = vld [vmem:[%s1 + $0x4] sm:$0xf]
      %v241 = vld [vmem:[%s1 + $0x8] sm:$0xf]
      %v242 = vld [vmem:[%s1 + $0xc] sm:$0xf]
      %v243 = vld [vmem:[%s1 + $0x10] sm:$0xf]
      %v244 = vld [vmem:[%s1 + $0x14] sm:$0xf]
      %v245 = vld [vmem:[%s1 + $0x18] sm:$0xf]
      %v246 = vld [vmem:[%s1 + $0x1c] sm:$0xf]
      %v247 = vld [vmem:[%s1 + $0x20] sm:$0xf]
      %v248 = vld [vmem:[%s1 + $0x24] sm:$0xf]
      %v249 = vld [vmem:[%s1 + $0x28] sm:$0xf]
      %v250 = vld [vmem:[%s1 + $0x2c] sm:$0xf]
      %v251 = vld [vmem:[%s1 + $0x30] sm:$0xf]
      %v252 = vld [vmem:[%s1 + $0x34] sm:$0xf]
      %v253 = vld [vmem:[%s1 + $0x38] sm:$0xf]
      %v254 = vld [vmem:[%s1 + $0x3c] sm:$0xf]
      %v255 = vld [vmem:[%s2] sm:$0x1]
      %v257 = vlaneseq
      %v258 = vshrl.u32 %v257, 7
      %v259 = vsub.s32 0, %v258
      %v260 = vrot.slane %v255, %v259
      %v326 = vunpack.c.l.b16 %v175
      %v327 = vunpack.c.l.b16 %v176
      %v328 = vunpack.c.l.b16 %v177
      %v329 = vunpack.c.l.b16 %v178
      %v330 = vunpack.c.l.b16 %v179
      %v331 = vunpack.c.l.b16 %v180
      %v332 = vunpack.c.l.b16 %v181
      %v333 = vunpack.c.l.b16 %v182
      %v334 = vunpack.c.l.b16 %v183
      %v335 = vunpack.c.l.b16 %v184
      %v336 = vunpack.c.l.b16 %v185
      %v337 = vunpack.c.l.b16 %v186
      %v338 = vunpack.c.l.b16 %v187
      %v339 = vunpack.c.l.b16 %v188
      %v340 = vunpack.c.l.b16 %v189
      %v341 = vunpack.c.l.b16 %v190
      %v342 = vunpack.c.l.b16 %v191
      %v343 = vunpack.c.l.b16 %v192
      %v344 = vunpack.c.l.b16 %v193
      %v345 = vunpack.c.l.b16 %v194
      %v346 = vunpack.c.l.b16 %v195
      %v347 = vunpack.c.l.b16 %v196
      %v348 = vunpack.c.l.b16 %v197
      %v349 = vunpack.c.l.b16 %v198
      %v350 = vunpack.c.l.b16 %v199
      %v351 = vunpack.c.l.b16 %v200
      %v352 = vunpack.c.l.b16 %v201
      %v353 = vunpack.c.l.b16 %v202
      %v354 = vunpack.c.l.b16 %v203
      %v355 = vunpack.c.l.b16 %v204
      %v356 = vunpack.c.l.b16 %v205
      %v357 = vunpack.c.l.b16 %v206
      %v358 = vunpack.c.l.b16 %v207
      %v359 = vunpack.c.l.b16 %v208
      %v360 = vunpack.c.l.b16 %v209
      %v361 = vunpack.c.l.b16 %v210
      %v362 = vunpack.c.l.b16 %v211
      %v363 = vunpack.c.l.b16 %v212
      %v364 = vunpack.c.l.b16 %v213
      %v365 = vunpack.c.l.b16 %v214
      %v366 = vunpack.c.l.b16 %v215
      %v367 = vunpack.c.l.b16 %v216
      %v368 = vunpack.c.l.b16 %v217
      %v369 = vunpack.c.l.b16 %v218
      %v370 = vunpack.c.l.b16 %v219
      %v371 = vunpack.c.l.b16 %v220
      %v372 = vunpack.c.l.b16 %v221
      %v373 = vunpack.c.l.b16 %v222
      %v374 = vunpack.c.l.b16 %v223
      %v375 = vunpack.c.l.b16 %v224
      %v376 = vunpack.c.l.b16 %v225
      %v377 = vunpack.c.l.b16 %v226
      %v378 = vunpack.c.l.b16 %v227
      %v379 = vunpack.c.l.b16 %v228
      %v380 = vunpack.c.l.b16 %v229
      %v381 = vunpack.c.l.b16 %v230
      %v382 = vunpack.c.l.b16 %v231
      %v383 = vunpack.c.l.b16 %v232
      %v384 = vunpack.c.l.b16 %v233
      %v385 = vunpack.c.l.b16 %v234
      %v386 = vunpack.c.l.b16 %v235
      %v387 = vunpack.c.l.b16 %v236
      %v388 = vunpack.c.l.b16 %v237
      %v389 = vunpack.c.l.b16 %v238
      %v390 = vpack.c.b16 %v327, %v326
      %v391 = vpack.c.b16 %v329, %v328
      %v392 = vpack.c.b16 %v331, %v330
      %v393 = vpack.c.b16 %v333, %v332
      %v394 = vpack.c.b16 %v335, %v334
      %v395 = vpack.c.b16 %v337, %v336
      %v396 = vpack.c.b16 %v339, %v338
      %v397 = vpack.c.b16 %v341, %v340
      %v398 = vpack.c.b16 %v343, %v342
      %v399 = vpack.c.b16 %v345, %v344
      %v400 = vpack.c.b16 %v347, %v346
      %v401 = vpack.c.b16 %v349, %v348
      %v402 = vpack.c.b16 %v351, %v350
      %v403 = vpack.c.b16 %v353, %v352
      %v404 = vpack.c.b16 %v355, %v354
      %v405 = vpack.c.b16 %v357, %v356
      %v406 = vpack.c.b16 %v359, %v358
      %v407 = vpack.c.b16 %v361, %v360
      %v408 = vpack.c.b16 %v363, %v362
      %v409 = vpack.c.b16 %v365, %v364
      %v410 = vpack.c.b16 %v367, %v366
      %v411 = vpack.c.b16 %v369, %v368
      %v412 = vpack.c.b16 %v371, %v370
      %v413 = vpack.c.b16 %v373, %v372
      %v414 = vpack.c.b16 %v375, %v374
      %v415 = vpack.c.b16 %v377, %v376
      %v416 = vpack.c.b16 %v379, %v378
      %v417 = vpack.c.b16 %v381, %v380
      %v418 = vpack.c.b16 %v383, %v382
      %v419 = vpack.c.b16 %v385, %v384
      %v420 = vpack.c.b16 %v387, %v386
      %v421 = vpack.c.b16 %v389, %v388
      %v470 = vunpack.c.l.b16 %v239
      %v471 = vunpack.c.l.b16 %v240
      %v472 = vunpack.c.l.b16 %v241
      %v473 = vunpack.c.l.b16 %v242
      %v474 = vunpack.c.l.b16 %v243
      %v475 = vunpack.c.l.b16 %v244
      %v476 = vunpack.c.l.b16 %v245
      %v477 = vunpack.c.l.b16 %v246
      %v478 = vunpack.c.l.b16 %v247
      %v479 = vunpack.c.l.b16 %v248
      %v480 = vunpack.c.l.b16 %v249
      %v481 = vunpack.c.l.b16 %v250
      %v482 = vunpack.c.l.b16 %v251
      %v483 = vunpack.c.l.b16 %v252
      %v484 = vunpack.c.l.b16 %v253
      %v485 = vunpack.c.l.b16 %v254
      %v486 = vpack.c.b16 %v471, %v470
      %v487 = vpack.c.b16 %v473, %v472
      %v488 = vpack.c.b16 %v475, %v474
      %v489 = vpack.c.b16 %v477, %v476
      %v490 = vpack.c.b16 %v479, %v478
      %v491 = vpack.c.b16 %v481, %v480
      %v492 = vpack.c.b16 %v483, %v482
      %v493 = vpack.c.b16 %v485, %v484
      %502 = vmatprep.subr.bf16.mxu0 0
      %503 = vmatpush1.bf16.msra.mxu0 %v493
      %504 = vmatprep.subr.bf16.mxu0 0
      %505 = vmatpush1.bf16.msra.mxu0 %v492
      %506 = vmatprep.subr.bf16.mxu0 0
      %507 = vmatpush1.bf16.msra.mxu0 %v491
      %508 = vmatprep.subr.bf16.mxu0 0
      %509 = vmatpush1.bf16.msra.mxu0 %v490
      %510 = vmatprep.subr.bf16.mxu0 0
      %511 = vmatpush1.bf16.msra.mxu0 %v489
      %512 = vmatprep.subr.bf16.mxu0 0
      %513 = vmatpush1.bf16.msra.mxu0 %v488
      %514 = vmatprep.subr.bf16.mxu0 0
      %515 = vmatpush1.bf16.msra.mxu0 %v487
      %516 = vmatprep.subr.bf16.mxu0 0
      %517 = vmatpush1.bf16.msra.mxu0 %v486
      %518 = vmatprep.subr.bf16.mxu0 0
      %519 = vmatpush2.bf16.msra.mxu0 0
      %520 = vmatprep.subr.bf16.mxu0 0
      %521 = vmatpush2.bf16.msra.mxu0 0
      %522 = vmatprep.subr.bf16.mxu0 0
      %523 = vmatpush2.bf16.msra.mxu0 0
      %524 = vmatprep.subr.bf16.mxu0 0
      %525 = vmatpush2.bf16.msra.mxu0 0
      %526 = vmatprep.subr.bf16.mxu0 0
      %527 = vmatpush2.bf16.msra.mxu0 0
      %528 = vmatprep.subr.bf16.mxu0 0
      %529 = vmatpush2.bf16.msra.mxu0 0
      %530 = vmatprep.subr.bf16.mxu0 0
      %531 = vmatpush2.bf16.msra.mxu0 0
      %532 = vmatprep.subr.bf16.mxu0 0
      %533 = vmatpush2.bf16.msra.mxu0 0
      %534 = vmatprep.mubr.bf16.mxu0 0
      %535 = vmatmul.mubr.bf16.gmra.mxu0 %v390
      %v536 = vpop.f32.mrf.mxu0
      %v537 = vadd.f32 %v260, %v536
      %v538 = vpop.f32.mrf.mxu0
      %v539 = vpop.f32.mrf.mxu0
      %v540 = vadd.f32 %v260, %v539
      %v541 = vpop.f32.mrf.mxu0
      %542 = vmatprep.mubr.bf16.mxu0 0
      %543 = vmatmul.mubr.bf16.gmra.mxu0 %v391
      %v544 = vpop.f32.mrf.mxu0
      %v545 = vadd.f32 %v260, %v544
      %v546 = vpop.f32.mrf.mxu0
      %v547 = vpop.f32.mrf.mxu0
      %v548 = vadd.f32 %v260, %v547
      %v549 = vpop.f32.mrf.mxu0
      %550 = vmatprep.mubr.bf16.mxu0 0
      %551 = vmatmul.mubr.bf16.gmra.mxu0 %v392
      %v552 = vpop.f32.mrf.mxu0
      %v553 = vadd.f32 %v260, %v552
      %v554 = vpop.f32.mrf.mxu0
      %v555 = vpop.f32.mrf.mxu0
      %v556 = vadd.f32 %v260, %v555
      %v557 = vpop.f32.mrf.mxu0
      %558 = vmatprep.mubr.bf16.mxu0 0
      %559 = vmatmul.mubr.bf16.gmra.mxu0 %v393
      %v560 = vpop.f32.mrf.mxu0
      %v561 = vadd.f32 %v260, %v560
      %v562 = vpop.f32.mrf.mxu0
      %v563 = vpop.f32.mrf.mxu0
      %v564 = vadd.f32 %v260, %v563
      %v565 = vpop.f32.mrf.mxu0
      %566 = vmatprep.mubr.bf16.mxu0 0
      %567 = vmatmul.mubr.bf16.gmra.mxu0 %v394
      %v568 = vpop.f32.mrf.mxu0
      %v569 = vadd.f32 %v260, %v568
      %v570 = vpop.f32.mrf.mxu0
      %v571 = vpop.f32.mrf.mxu0
      %v572 = vadd.f32 %v260, %v571
      %v573 = vpop.f32.mrf.mxu0
      %574 = vmatprep.mubr.bf16.mxu0 0
      %575 = vmatmul.mubr.bf16.gmra.mxu0 %v395
      %v576 = vpop.f32.mrf.mxu0
      %v577 = vadd.f32 %v260, %v576
      %v578 = vpop.f32.mrf.mxu0
      %v579 = vpop.f32.mrf.mxu0
      %v580 = vadd.f32 %v260, %v579
      %v581 = vpop.f32.mrf.mxu0
      %582 = vmatprep.mubr.bf16.mxu0 0
      %583 = vmatmul.mubr.bf16.gmra.mxu0 %v396
      %v584 = vpop.f32.mrf.mxu0
      %v585 = vadd.f32 %v260, %v584
      %v586 = vpop.f32.mrf.mxu0
      %v587 = vpop.f32.mrf.mxu0
      %v588 = vadd.f32 %v260, %v587
      %v589 = vpop.f32.mrf.mxu0
      %590 = vmatprep.mubr.bf16.mxu0 0
      %591 = vmatmul.mubr.bf16.gmra.mxu0 %v397
      %v592 = vpop.f32.mrf.mxu0
      %v593 = vadd.f32 %v260, %v592
      %v594 = vpop.f32.mrf.mxu0
      %v595 = vpop.f32.mrf.mxu0
      %v596 = vadd.f32 %v260, %v595
      %v597 = vpop.f32.mrf.mxu0
      %598 = vmatprep.mubr.bf16.mxu0 0
      %599 = vmatmul.mubr.bf16.gmra.mxu0 %v398
      %v600 = vpop.f32.mrf.mxu0
      %v601 = vadd.f32 %v260, %v600
      %v602 = vpop.f32.mrf.mxu0
      %v603 = vpop.f32.mrf.mxu0
      %v604 = vadd.f32 %v260, %v603
      %v605 = vpop.f32.mrf.mxu0
      %606 = vmatprep.mubr.bf16.mxu0 0
      %607 = vmatmul.mubr.bf16.gmra.mxu0 %v399
      %v608 = vpop.f32.mrf.mxu0
      %v609 = vadd.f32 %v260, %v608
      %v610 = vpop.f32.mrf.mxu0
      %v611 = vpop.f32.mrf.mxu0
      %v612 = vadd.f32 %v260, %v611
      %v613 = vpop.f32.mrf.mxu0
      %614 = vmatprep.mubr.bf16.mxu0 0
      %615 = vmatmul.mubr.bf16.gmra.mxu0 %v400
      %v616 = vpop.f32.mrf.mxu0
      %v617 = vadd.f32 %v260, %v616
      %v618 = vpop.f32.mrf.mxu0
      %v619 = vpop.f32.mrf.mxu0
      %v620 = vadd.f32 %v260, %v619
      %v621 = vpop.f32.mrf.mxu0
      %622 = vmatprep.mubr.bf16.mxu0 0
      %623 = vmatmul.mubr.bf16.gmra.mxu0 %v401
      %v624 = vpop.f32.mrf.mxu0
      %v625 = vadd.f32 %v260, %v624
      %v626 = vpop.f32.mrf.mxu0
      %v627 = vpop.f32.mrf.mxu0
      %v628 = vadd.f32 %v260, %v627
      %v629 = vpop.f32.mrf.mxu0
      %630 = vmatprep.mubr.bf16.mxu0 0
      %631 = vmatmul.mubr.bf16.gmra.mxu0 %v402
      %v632 = vpop.f32.mrf.mxu0
      %v633 = vadd.f32 %v260, %v632
      %v634 = vpop.f32.mrf.mxu0
      %v635 = vpop.f32.mrf.mxu0
      %v636 = vadd.f32 %v260, %v635
      %v637 = vpop.f32.mrf.mxu0
      %638 = vmatprep.mubr.bf16.mxu0 0
      %639 = vmatmul.mubr.bf16.gmra.mxu0 %v403
      %v640 = vpop.f32.mrf.mxu0
      %v641 = vadd.f32 %v260, %v640
      %v642 = vpop.f32.mrf.mxu0
      %v643 = vpop.f32.mrf.mxu0
      %v644 = vadd.f32 %v260, %v643
      %v645 = vpop.f32.mrf.mxu0
      %646 = vmatprep.mubr.bf16.mxu0 0
      %647 = vmatmul.mubr.bf16.gmra.mxu0 %v404
      %v648 = vpop.f32.mrf.mxu0
      %v649 = vadd.f32 %v260, %v648
      %v650 = vpop.f32.mrf.mxu0
      %v651 = vpop.f32.mrf.mxu0
      %v652 = vadd.f32 %v260, %v651
      %v653 = vpop.f32.mrf.mxu0
      %654 = vmatprep.mubr.bf16.mxu0 0
      %655 = vmatmul.mubr.bf16.gmra.mxu0 %v405
      %v656 = vpop.f32.mrf.mxu0
      %v657 = vadd.f32 %v260, %v656
      %v658 = vpop.f32.mrf.mxu0
      %v659 = vpop.f32.mrf.mxu0
      %v660 = vadd.f32 %v260, %v659
      %v661 = vpop.f32.mrf.mxu0
      %662 = vmatprep.mubr.bf16.mxu0 0
      %663 = vmatmul.mubr.bf16.gmra.mxu0 %v406
      %v664 = vpop.f32.mrf.mxu0
      %v665 = vadd.f32 %v260, %v664
      %v666 = vpop.f32.mrf.mxu0
      %v667 = vpop.f32.mrf.mxu0
      %v668 = vadd.f32 %v260, %v667
      %v669 = vpop.f32.mrf.mxu0
      %670 = vmatprep.mubr.bf16.mxu0 0
      %671 = vmatmul.mubr.bf16.gmra.mxu0 %v407
      %v672 = vpop.f32.mrf.mxu0
      %v673 = vadd.f32 %v260, %v672
      %v674 = vpop.f32.mrf.mxu0
      %v675 = vpop.f32.mrf.mxu0
      %v676 = vadd.f32 %v260, %v675
      %v677 = vpop.f32.mrf.mxu0
      %678 = vmatprep.mubr.bf16.mxu0 0
      %679 = vmatmul.mubr.bf16.gmra.mxu0 %v408
      %v680 = vpop.f32.mrf.mxu0
      %v681 = vadd.f32 %v260, %v680
      %v682 = vpop.f32.mrf.mxu0
      %v683 = vpop.f32.mrf.mxu0
      %v684 = vadd.f32 %v260, %v683
      %v685 = vpop.f32.mrf.mxu0
      %686 = vmatprep.mubr.bf16.mxu0 0
      %687 = vmatmul.mubr.bf16.gmra.mxu0 %v409
      %v688 = vpop.f32.mrf.mxu0
      %v689 = vadd.f32 %v260, %v688
      %v690 = vpop.f32.mrf.mxu0
      %v691 = vpop.f32.mrf.mxu0
      %v692 = vadd.f32 %v260, %v691
      %v693 = vpop.f32.mrf.mxu0
      %694 = vmatprep.mubr.bf16.mxu0 0
      %695 = vmatmul.mubr.bf16.gmra.mxu0 %v410
      %v696 = vpop.f32.mrf.mxu0
      %v697 = vadd.f32 %v260, %v696
      %v698 = vpop.f32.mrf.mxu0
      %v699 = vpop.f32.mrf.mxu0
      %v700 = vadd.f32 %v260, %v699
      %v701 = vpop.f32.mrf.mxu0
      %702 = vmatprep.mubr.bf16.mxu0 0
      %703 = vmatmul.mubr.bf16.gmra.mxu0 %v411
      %v704 = vpop.f32.mrf.mxu0
      %v705 = vadd.f32 %v260, %v704
      %v706 = vpop.f32.mrf.mxu0
      %v707 = vpop.f32.mrf.mxu0
      %v708 = vadd.f32 %v260, %v707
      %v709 = vpop.f32.mrf.mxu0
      %710 = vmatprep.mubr.bf16.mxu0 0
      %711 = vmatmul.mubr.bf16.gmra.mxu0 %v412
      %v712 = vpop.f32.mrf.mxu0
      %v713 = vadd.f32 %v260, %v712
      %v714 = vpop.f32.mrf.mxu0
      %v715 = vpop.f32.mrf.mxu0
      %v716 = vadd.f32 %v260, %v715
      %v717 = vpop.f32.mrf.mxu0
      %718 = vmatprep.mubr.bf16.mxu0 0
      %719 = vmatmul.mubr.bf16.gmra.mxu0 %v413
      %v720 = vpop.f32.mrf.mxu0
      %v721 = vadd.f32 %v260, %v720
      %v722 = vpop.f32.mrf.mxu0
      %v723 = vpop.f32.mrf.mxu0
      %v724 = vadd.f32 %v260, %v723
      %v725 = vpop.f32.mrf.mxu0
      %726 = vmatprep.mubr.bf16.mxu0 0
      %727 = vmatmul.mubr.bf16.gmra.mxu0 %v414
      %v728 = vpop.f32.mrf.mxu0
      %v729 = vadd.f32 %v260, %v728
      %v730 = vpop.f32.mrf.mxu0
      %v731 = vpop.f32.mrf.mxu0
      %v732 = vadd.f32 %v260, %v731
      %v733 = vpop.f32.mrf.mxu0
      %734 = vmatprep.mubr.bf16.mxu0 0
      %735 = vmatmul.mubr.bf16.gmra.mxu0 %v415
      %v736 = vpop.f32.mrf.mxu0
      %v737 = vadd.f32 %v260, %v736
      %v738 = vpop.f32.mrf.mxu0
      %v739 = vpop.f32.mrf.mxu0
      %v740 = vadd.f32 %v260, %v739
      %v741 = vpop.f32.mrf.mxu0
      %742 = vmatprep.mubr.bf16.mxu0 0
      %743 = vmatmul.mubr.bf16.gmra.mxu0 %v416
      %v744 = vpop.f32.mrf.mxu0
      %v745 = vadd.f32 %v260, %v744
      %v746 = vpop.f32.mrf.mxu0
      %v747 = vpop.f32.mrf.mxu0
      %v748 = vadd.f32 %v260, %v747
      %v749 = vpop.f32.mrf.mxu0
      %750 = vmatprep.mubr.bf16.mxu0 0
      %751 = vmatmul.mubr.bf16.gmra.mxu0 %v417
      %v752 = vpop.f32.mrf.mxu0
      %v753 = vadd.f32 %v260, %v752
      %v754 = vpop.f32.mrf.mxu0
      %v755 = vpop.f32.mrf.mxu0
      %v756 = vadd.f32 %v260, %v755
      %v757 = vpop.f32.mrf.mxu0
      %758 = vmatprep.mubr.bf16.mxu0 0
      %759 = vmatmul.mubr.bf16.gmra.mxu0 %v418
      %v760 = vpop.f32.mrf.mxu0
      %v761 = vadd.f32 %v260, %v760
      %v762 = vpop.f32.mrf.mxu0
      %v763 = vpop.f32.mrf.mxu0
      %v764 = vadd.f32 %v260, %v763
      %v765 = vpop.f32.mrf.mxu0
      %766 = vmatprep.mubr.bf16.mxu0 0
      %767 = vmatmul.mubr.bf16.gmra.mxu0 %v419
      %v768 = vpop.f32.mrf.mxu0
      %v769 = vadd.f32 %v260, %v768
      %v770 = vpop.f32.mrf.mxu0
      %v771 = vpop.f32.mrf.mxu0
      %v772 = vadd.f32 %v260, %v771
      %v773 = vpop.f32.mrf.mxu0
      %774 = vmatprep.mubr.bf16.mxu0 0
      %775 = vmatmul.mubr.bf16.gmra.mxu0 %v420
      %v776 = vpop.f32.mrf.mxu0
      %v777 = vadd.f32 %v260, %v776
      %v778 = vpop.f32.mrf.mxu0
      %v779 = vpop.f32.mrf.mxu0
      %v780 = vadd.f32 %v260, %v779
      %v781 = vpop.f32.mrf.mxu0
      %782 = vmatprep.mubr.bf16.mxu0 0
      %783 = vmatmul.mubr.bf16.gmra.mxu0 %v421
      %v784 = vpop.f32.mrf.mxu0
      %v785 = vadd.f32 %v260, %v784
      %v786 = vpop.f32.mrf.mxu0
      %v787 = vpop.f32.mrf.mxu0
      %v788 = vadd.f32 %v260, %v787
      %v789 = vpop.f32.mrf.mxu0
      %790 = vdwg.mxu0
      %791 = vst [vmem:[%s172] sm:$0xff] %v537
      %792 = vst [vmem:[%s172 + $0x8] sm:$0xff] %v540
      %793 = vst [vmem:[%s172 + $0x10] sm:$0xff] %v545
      %794 = vst [vmem:[%s172 + $0x18] sm:$0xff] %v548
      %795 = vst [vmem:[%s172 + $0x20] sm:$0xff] %v553
      %796 = vst [vmem:[%s172 + $0x28] sm:$0xff] %v556
      %797 = vst [vmem:[%s172 + $0x30] sm:$0xff] %v561
      %798 = vst [vmem:[%s172 + $0x38] sm:$0xff] %v564
      %799 = vst [vmem:[%s172 + $0x40] sm:$0xff] %v569
      %800 = vst [vmem:[%s172 + $0x48] sm:$0xff] %v572
      %801 = vst [vmem:[%s172 + $0x50] sm:$0xff] %v577
      %802 = vst [vmem:[%s172 + $0x58] sm:$0xff] %v580
      %803 = vst [vmem:[%s172 + $0x60] sm:$0xff] %v585
      %804 = vst [vmem:[%s172 + $0x68] sm:$0xff] %v588
      %805 = vst [vmem:[%s172 + $0x70] sm:$0xff] %v593
      %806 = vst [vmem:[%s172 + $0x78] sm:$0xff] %v596
      %807 = vst [vmem:[%s172 + $0x80] sm:$0xff] %v601
      %808 = vst [vmem:[%s172 + $0x88] sm:$0xff] %v604
      %809 = vst [vmem:[%s172 + $0x90] sm:$0xff] %v609
      %810 = vst [vmem:[%s172 + $0x98] sm:$0xff] %v612
      %811 = vst [vmem:[%s172 + $0xa0] sm:$0xff] %v617
      %812 = vst [vmem:[%s172 + $0xa8] sm:$0xff] %v620
      %813 = vst [vmem:[%s172 + $0xb0] sm:$0xff] %v625
      %814 = vst [vmem:[%s172 + $0xb8] sm:$0xff] %v628
      %815 = vst [vmem:[%s172 + $0xc0] sm:$0xff] %v633
      %816 = vst [vmem:[%s172 + $0xc8] sm:$0xff] %v636
      %817 = vst [vmem:[%s172 + $0xd0] sm:$0xff] %v641
      %818 = vst [vmem:[%s172 + $0xd8] sm:$0xff] %v644
      %819 = vst [vmem:[%s172 + $0xe0] sm:$0xff] %v649
      %820 = vst [vmem:[%s172 + $0xe8] sm:$0xff] %v652
      %821 = vst [vmem:[%s172 + $0xf0] sm:$0xff] %v657
      %822 = vst [vmem:[%s172 + $0xf8] sm:$0xff] %v660
      %823 = vst [vmem:[%s172 + $0x100] sm:$0xff] %v665
      %824 = vst [vmem:[%s172 + $0x108] sm:$0xff] %v668
      %825 = vst [vmem:[%s172 + $0x110] sm:$0xff] %v673
      %826 = vst [vmem:[%s172 + $0x118] sm:$0xff] %v676
      %827 = vst [vmem:[%s172 + $0x120] sm:$0xff] %v681
      %828 = vst [vmem:[%s172 + $0x128] sm:$0xff] %v684
      %829 = vst [vmem:[%s172 + $0x130] sm:$0xff] %v689
      %830 = vst [vmem:[%s172 + $0x138] sm:$0xff] %v692
      %831 = vst [vmem:[%s172 + $0x140] sm:$0xff] %v697
      %832 = vst [vmem:[%s172 + $0x148] sm:$0xff] %v700
      %833 = vst [vmem:[%s172 + $0x150] sm:$0xff] %v705
      %834 = vst [vmem:[%s172 + $0x158] sm:$0xff] %v708
      %835 = vst [vmem:[%s172 + $0x160] sm:$0xff] %v713
      %836 = vst [vmem:[%s172 + $0x168] sm:$0xff] %v716
      %837 = vst [vmem:[%s172 + $0x170] sm:$0xff] %v721
      %838 = vst [vmem:[%s172 + $0x178] sm:$0xff] %v724
      %839 = vst [vmem:[%s172 + $0x180] sm:$0xff] %v729
      %840 = vst [vmem:[%s172 + $0x188] sm:$0xff] %v732
      %841 = vst [vmem:[%s172 + $0x190] sm:$0xff] %v737
      %842 = vst [vmem:[%s172 + $0x198] sm:$0xff] %v740
      %843 = vst [vmem:[%s172 + $0x1a0] sm:$0xff] %v745
      %844 = vst [vmem:[%s172 + $0x1a8] sm:$0xff] %v748
      %845 = vst [vmem:[%s172 + $0x1b0] sm:$0xff] %v753
      %846 = vst [vmem:[%s172 + $0x1b8] sm:$0xff] %v756
      %847 = vst [vmem:[%s172 + $0x1c0] sm:$0xff] %v761
      %848 = vst [vmem:[%s172 + $0x1c8] sm:$0xff] %v764
      %849 = vst [vmem:[%s172 + $0x1d0] sm:$0xff] %v769
      %850 = vst [vmem:[%s172 + $0x1d8] sm:$0xff] %v772
      %851 = vst [vmem:[%s172 + $0x1e0] sm:$0xff] %v777
      %852 = vst [vmem:[%s172 + $0x1e8] sm:$0xff] %v780
      %853 = vst [vmem:[%s172 + $0x1f0] sm:$0xff] %v785
      %854 = vst [vmem:[%s172 + $0x1f8] sm:$0xff] %v788
      %s855 = smul.u32 64, %s14
      %p856 = scmp.lt.s32.totalorder %s855, 255
      %s857 = scalar_select %p856, %s855, 255
      %s858 = smul.addr %s857, 8
      %s859 = scalar_lea.vmem %s3, %s858
      // Predicated region
      $region33: #{zip_unet_forward.11} parent=31 // pred_check
        %p860 = pneg %p100
      $region34: #{zip_unet_forward.11} parent=31 // pred_check_branch
        %862 = sbr.rel (%p860) target = $region36
      $region35: #{zip_unet_forward.11} parent=31 // pred_region
        %s863 = smul.u32 64, %s14
      $region36: #{zip_unet_forward.11} parent=31 // pred_fallthru
        _
    $region32: #{zip_unet_forward.11} parent=5 // pred_fallthru
      _
    %p864 = scmp.le.s32.totalorder 2, %s9
    // Predicated region
    $region37: #{zip_unet_forward.11} parent=5 // pred_check
      %p865 = pneg %p864
    $region38: #{zip_unet_forward.11} parent=5 // pred_check_branch
      %867 = sbr.rel (%p865) target = $region40
    $region39: #{zip_unet_forward.11} parent=5 // pred_region
      %s868 = ssub.s32 %s9, 2
      // Predicated region
      $region41: #{zip_unet_forward.11} parent=39 // pred_check
        %p869 = pneg %p106
      $region42: #{zip_unet_forward.11} parent=39 // pred_check_branch
        %871 = sbr.rel (%p869) target = $region44
      $region43: #{zip_unet_forward.11} parent=39 // pred_region
        %s872 = smul.u32 64, %s15
        %p873 = scmp.lt.s32.totalorder %s872, 255
        %s874 = scalar_select %p873, %s872, 255
        %s875 = smul.addr %s874, 8
        %s876 = scalar_lea.vmem %s3, %s875
      $region44: #{zip_unet_forward.11} parent=39 // pred_fallthru
        _
    $region40: #{zip_unet_forward.11} parent=5 // pred_fallthru
      _
  $region6: #{zip_unet_forward.11} parent=0 // loop_footer
    %s13 = sadd.s32 1, %s9
  $region7: #{zip_unet_forward.11} parent=0 // loop_footer_branch
    %8 = sbr.rel target = $region3
  $region8: #{zip_unet_forward.11} parent=0 // loop_exit
    _

// kernel: zip_unet_forward.12
$region0: #{zip_unet_forward.12}
  #allocation0 [shape = 'u32[]', space=smem, size = 0x4, offset = 0x4, fixed_abs, tag = 'smem constant byte address 0x4 - core index']
  #allocation1 [shape = 'u32[144,128]{1,0:T(1,128)}', space=vmem, size = 0x12000, scoped, tag = 'internal scratch']
  %s0 = inlined_call_operand.vmem [shape: bf16[512,128], index: 0, kind: input, shape index: {}]
  %s1 = inlined_call_operand.vmem [shape: bf16[128,128], index: 1, kind: input, shape index: {}]
  %s2 = inlined_call_operand.vmem [shape: f32[1,128], index: 2, kind: input, shape index: {}]
  %s3 = inlined_call_operand.vmem [shape: f32[512,128], index: 3, kind: output, shape index: {}]
  %s4 = sld [smem:[#allocation0]]
  $region22: #{zip_unet_forward.12} parent=0
    _
  %s6 = ssub.s32 1, %s4
  %s7 = scalar_select 0, %s6, %s4
  // Predicated region
  $region2: #{zip_unet_forward.12} parent=0 // pred_check
    _
  $region3: #{zip_unet_forward.12} parent=0 // pred_check_branch
    %9 = sbr.rel (0) target = $region5
  $region4: #{zip_unet_forward.12} parent=0 // pred_region
    _
  $region5: #{zip_unet_forward.12} parent=0 // pred_fallthru
    _
  // Predicated region
  $region6: #{zip_unet_forward.12} parent=0 // pred_check
    _
  $region7: #{zip_unet_forward.12} parent=0 // pred_check_branch
    %11 = sbr.rel (0) target = $region9
  $region8: #{zip_unet_forward.12} parent=0 // pred_region
    _
  $region9: #{zip_unet_forward.12} parent=0 // pred_fallthru
    _
  // Predicated region
  $region10: #{zip_unet_forward.12} parent=0 // pred_check
    _
  $region11: #{zip_unet_forward.12} parent=0 // pred_check_branch
    %13 = sbr.rel (0) target = $region13
  $region12: #{zip_unet_forward.12} parent=0 // pred_region
    _
  $region13: #{zip_unet_forward.12} parent=0 // pred_fallthru
    _
  %v15 = vld [vmem:[%s0] sm:$0xf]
  %v16 = vld [vmem:[%s0 + $0x4] sm:$0xf]
  %v17 = vld [vmem:[%s0 + $0x8] sm:$0xf]
  %v18 = vld [vmem:[%s0 + $0xc] sm:$0xf]
  %v19 = vld [vmem:[%s0 + $0x10] sm:$0xf]
  %v20 = vld [vmem:[%s0 + $0x14] sm:$0xf]
  %v21 = vld [vmem:[%s0 + $0x18] sm:$0xf]
  %v22 = vld [vmem:[%s0 + $0x1c] sm:$0xf]
  %v23 = vld [vmem:[%s0 + $0x20] sm:$0xf]
  %v24 = vld [vmem:[%s0 + $0x24] sm:$0xf]
  %v25 = vld [vmem:[%s0 + $0x28] sm:$0xf]
  %v26 = vld [vmem:[%s0 + $0x2c] sm:$0xf]
  %v27 = vld [vmem:[%s0 + $0x30] sm:$0xf]
  %v28 = vld [vmem:[%s0 + $0x34] sm:$0xf]
  %v29 = vld [vmem:[%s0 + $0x38] sm:$0xf]
  %v30 = vld [vmem:[%s0 + $0x3c] sm:$0xf]
  %v31 = vld [vmem:[%s0 + $0x40] sm:$0xf]
  %v32 = vld [vmem:[%s0 + $0x44] sm:$0xf]
  %v33 = vld [vmem:[%s0 + $0x48] sm:$0xf]
  %v34 = vld [vmem:[%s0 + $0x4c] sm:$0xf]
  %v35 = vld [vmem:[%s0 + $0x50] sm:$0xf]
  %v36 = vld [vmem:[%s0 + $0x54] sm:$0xf]
  %v37 = vld [vmem:[%s0 + $0x58] sm:$0xf]
  %v38 = vld [vmem:[%s0 + $0x5c] sm:$0xf]
  %v39 = vld [vmem:[%s0 + $0x60] sm:$0xf]
  %v40 = vld [vmem:[%s0 + $0x64] sm:$0xf]
  %v41 = vld [vmem:[%s0 + $0x68] sm:$0xf]
  %v42 = vld [vmem:[%s0 + $0x6c] sm:$0xf]
  %v43 = vld [vmem:[%s0 + $0x70] sm:$0xf]
  %v44 = vld [vmem:[%s0 + $0x74] sm:$0xf]
  %v45 = vld [vmem:[%s0 + $0x78] sm:$0xf]
  %v46 = vld [vmem:[%s0 + $0x7c] sm:$0xf]
  %v47 = vld [vmem:[%s0 + $0x80] sm:$0xf]
  %v48 = vld [vmem:[%s0 + $0x84] sm:$0xf]
  %v49 = vld [vmem:[%s0 + $0x88] sm:$0xf]
  %v50 = vld [vmem:[%s0 + $0x8c] sm:$0xf]
  %v51 = vld [vmem:[%s0 + $0x90] sm:$0xf]
  %v52 = vld [vmem:[%s0 + $0x94] sm:$0xf]
  %v53 = vld [vmem:[%s0 + $0x98] sm:$0xf]
  %v54 = vld [vmem:[%s0 + $0x9c] sm:$0xf]
  %v55 = vld [vmem:[%s0 + $0xa0] sm:$0xf]
  %v56 = vld [vmem:[%s0 + $0xa4] sm:$0xf]
  %v57 = vld [vmem:[%s0 + $0xa8] sm:$0xf]
  %v58 = vld [vmem:[%s0 + $0xac] sm:$0xf]
  %v59 = vld [vmem:[%s0 + $0xb0] sm:$0xf]
  %v60 = vld [vmem:[%s0 + $0xb4] sm:$0xf]
  %v61 = vld [vmem:[%s0 + $0xb8] sm:$0xf]
  %v62 = vld [vmem:[%s0 + $0xbc] sm:$0xf]
  %v63 = vld [vmem:[%s0 + $0xc0] sm:$0xf]
  %v64 = vld [vmem:[%s0 + $0xc4] sm:$0xf]
  %v65 = vld [vmem:[%s0 + $0xc8] sm:$0xf]
  %v66 = vld [vmem:[%s0 + $0xcc] sm:$0xf]
  %v67 = vld [vmem:[%s0 + $0xd0] sm:$0xf]
  %v68 = vld [vmem:[%s0 + $0xd4] sm:$0xf]
  %v69 = vld [vmem:[%s0 + $0xd8] sm:$0xf]
  %v70 = vld [vmem:[%s0 + $0xdc] sm:$0xf]
  %v71 = vld [vmem:[%s0 + $0xe0] sm:$0xf]
  %v72 = vld [vmem:[%s0 + $0xe4] sm:$0xf]
  %v73 = vld [vmem:[%s0 + $0xe8] sm:$0xf]
  %v74 = vld [vmem:[%s0 + $0xec] sm:$0xf]
  %v75 = vld [vmem:[%s0 + $0xf0] sm:$0xf]
  %v76 = vld [vmem:[%s0 + $0xf4] sm:$0xf]
  %v77 = vld [vmem:[%s0 + $0xf8] sm:$0xf]
  %v78 = vld [vmem:[%s0 + $0xfc] sm:$0xf]
  %v79 = vld [vmem:[%s1] sm:$0xf]
  %v80 = vld [vmem:[%s1 + $0x4] sm:$0xf]
  %v81 = vld [vmem:[%s1 + $0x8] sm:$0xf]
  %v82 = vld [vmem:[%s1 + $0xc] sm:$0xf]
  %v83 = vld [vmem:[%s1 + $0x10] sm:$0xf]
  %v84 = vld [vmem:[%s1 + $0x14] sm:$0xf]
  %v85 = vld [vmem:[%s1 + $0x18] sm:$0xf]
  %v86 = vld [vmem:[%s1 + $0x1c] sm:$0xf]
  %v87 = vld [vmem:[%s1 + $0x20] sm:$0xf]
  %v88 = vld [vmem:[%s1 + $0x24] sm:$0xf]
  %v89 = vld [vmem:[%s1 + $0x28] sm:$0xf]
  %v90 = vld [vmem:[%s1 + $0x2c] sm:$0xf]
  %v91 = vld [vmem:[%s1 + $0x30] sm:$0xf]
  %v92 = vld [vmem:[%s1 + $0x34] sm:$0xf]
  %v93 = vld [vmem:[%s1 + $0x38] sm:$0xf]
  %v94 = vld [vmem:[%s1 + $0x3c] sm:$0xf]
  %v95 = vld [vmem:[%s2] sm:$0x1]
  %v97 = vlaneseq
  %v98 = vshrl.u32 %v97, 7
  %v99 = vsub.s32 0, %v98
  %v100 = vrot.slane %v95, %v99
  %v166 = vunpack.c.l.b16 %v15
  %v167 = vunpack.c.l.b16 %v16
  %v168 = vunpack.c.l.b16 %v17
  %v169 = vunpack.c.l.b16 %v18
  %v170 = vunpack.c.l.b16 %v19
  %v171 = vunpack.c.l.b16 %v20
  %v172 = vunpack.c.l.b16 %v21
  %v173 = vunpack.c.l.b16 %v22
  %v174 = vunpack.c.l.b16 %v23
  %v175 = vunpack.c.l.b16 %v24
  %v176 = vunpack.c.l.b16 %v25
  %v177 = vunpack.c.l.b16 %v26
  %v178 = vunpack.c.l.b16 %v27
  %v179 = vunpack.c.l.b16 %v28
  %v180 = vunpack.c.l.b16 %v29
  %v181 = vunpack.c.l.b16 %v30
  %v182 = vunpack.c.l.b16 %v31
  %v183 = vunpack.c.l.b16 %v32
  %v184 = vunpack.c.l.b16 %v33
  %v185 = vunpack.c.l.b16 %v34
  %v186 = vunpack.c.l.b16 %v35
  %v187 = vunpack.c.l.b16 %v36
  %v188 = vunpack.c.l.b16 %v37
  %v189 = vunpack.c.l.b16 %v38
  %v190 = vunpack.c.l.b16 %v39
  %v191 = vunpack.c.l.b16 %v40
  %v192 = vunpack.c.l.b16 %v41
  %v193 = vunpack.c.l.b16 %v42
  %v194 = vunpack.c.l.b16 %v43
  %v195 = vunpack.c.l.b16 %v44
  %v196 = vunpack.c.l.b16 %v45
  %v197 = vunpack.c.l.b16 %v46
  %v198 = vunpack.c.l.b16 %v47
  %v199 = vunpack.c.l.b16 %v48
  %v200 = vunpack.c.l.b16 %v49
  %v201 = vunpack.c.l.b16 %v50
  %v202 = vunpack.c.l.b16 %v51
  %v203 = vunpack.c.l.b16 %v52
  %v204 = vunpack.c.l.b16 %v53
  %v205 = vunpack.c.l.b16 %v54
  %v206 = vunpack.c.l.b16 %v55
  %v207 = vunpack.c.l.b16 %v56
  %v208 = vunpack.c.l.b16 %v57
  %v209 = vunpack.c.l.b16 %v58
  %v210 = vunpack.c.l.b16 %v59
  %v211 = vunpack.c.l.b16 %v60
  %v212 = vunpack.c.l.b16 %v61
  %v213 = vunpack.c.l.b16 %v62
  %v214 = vunpack.c.l.b16 %v63
  %v215 = vunpack.c.l.b16 %v64
  %v216 = vunpack.c.l.b16 %v65
  %v217 = vunpack.c.l.b16 %v66
  %v218 = vunpack.c.l.b16 %v67
  %v219 = vunpack.c.l.b16 %v68
  %v220 = vunpack.c.l.b16 %v69
  %v221 = vunpack.c.l.b16 %v70
  %v222 = vunpack.c.l.b16 %v71
  %v223 = vunpack.c.l.b16 %v72
  %v224 = vunpack.c.l.b16 %v73
  %v225 = vunpack.c.l.b16 %v74
  %v226 = vunpack.c.l.b16 %v75
  %v227 = vunpack.c.l.b16 %v76
  %v228 = vunpack.c.l.b16 %v77
  %v229 = vunpack.c.l.b16 %v78
  %v230 = vpack.c.b16 %v167, %v166
  %v231 = vpack.c.b16 %v169, %v168
  %v232 = vpack.c.b16 %v171, %v170
  %v233 = vpack.c.b16 %v173, %v172
  %v234 = vpack.c.b16 %v175, %v174
  %v235 = vpack.c.b16 %v177, %v176
  %v236 = vpack.c.b16 %v179, %v178
  %v237 = vpack.c.b16 %v181, %v180
  %v238 = vpack.c.b16 %v183, %v182
  %v239 = vpack.c.b16 %v185, %v184
  %v240 = vpack.c.b16 %v187, %v186
  %v241 = vpack.c.b16 %v189, %v188
  %v242 = vpack.c.b16 %v191, %v190
  %v243 = vpack.c.b16 %v193, %v192
  %v244 = vpack.c.b16 %v195, %v194
  %v245 = vpack.c.b16 %v197, %v196
  %v246 = vpack.c.b16 %v199, %v198
  %v247 = vpack.c.b16 %v201, %v200
  %v248 = vpack.c.b16 %v203, %v202
  %v249 = vpack.c.b16 %v205, %v204
  %v250 = vpack.c.b16 %v207, %v206
  %v251 = vpack.c.b16 %v209, %v208
  %v252 = vpack.c.b16 %v211, %v210
  %v253 = vpack.c.b16 %v213, %v212
  %v254 = vpack.c.b16 %v215, %v214
  %v255 = vpack.c.b16 %v217, %v216
  %v256 = vpack.c.b16 %v219, %v218
  %v257 = vpack.c.b16 %v221, %v220
  %v258 = vpack.c.b16 %v223, %v222
  %v259 = vpack.c.b16 %v225, %v224
  %v260 = vpack.c.b16 %v227, %v226
  %v261 = vpack.c.b16 %v229, %v228
  %v310 = vunpack.c.l.b16 %v79
  %v311 = vunpack.c.l.b16 %v80
  %v312 = vunpack.c.l.b16 %v81
  %v313 = vunpack.c.l.b16 %v82
  %v314 = vunpack.c.l.b16 %v83
  %v315 = vunpack.c.l.b16 %v84
  %v316 = vunpack.c.l.b16 %v85
  %v317 = vunpack.c.l.b16 %v86
  %v318 = vunpack.c.l.b16 %v87
  %v319 = vunpack.c.l.b16 %v88
  %v320 = vunpack.c.l.b16 %v89
  %v321 = vunpack.c.l.b16 %v90
  %v322 = vunpack.c.l.b16 %v91
  %v323 = vunpack.c.l.b16 %v92
  %v324 = vunpack.c.l.b16 %v93
  %v325 = vunpack.c.l.b16 %v94
  %v326 = vpack.c.b16 %v311, %v310
  %v327 = vpack.c.b16 %v313, %v312
  %v328 = vpack.c.b16 %v315, %v314
  %v329 = vpack.c.b16 %v317, %v316
  %v330 = vpack.c.b16 %v319, %v318
  %v331 = vpack.c.b16 %v321, %v320
  %v332 = vpack.c.b16 %v323, %v322
  %v333 = vpack.c.b16 %v325, %v324
  %342 = vmatprep.subr.bf16.mxu0 0
  %343 = vmatpush1.bf16.msra.mxu0 %v333
  %344 = vmatprep.subr.bf16.mxu0 0
  %345 = vmatpush1.bf16.msra.mxu0 %v332
  %346 = vmatprep.subr.bf16.mxu0 0
  %347 = vmatpush1.bf16.msra.mxu0 %v331
  %348 = vmatprep.subr.bf16.mxu0 0
  %349 = vmatpush1.bf16.msra.mxu0 %v330
  %350 = vmatprep.subr.bf16.mxu0 0
  %351 = vmatpush1.bf16.msra.mxu0 %v329
  %352 = vmatprep.subr.bf16.mxu0 0
  %353 = vmatpush1.bf16.msra.mxu0 %v328
  %354 = vmatprep.subr.bf16.mxu0 0
  %355 = vmatpush1.bf16.msra.mxu0 %v327
  %356 = vmatprep.subr.bf16.mxu0 0
  %357 = vmatpush1.bf16.msra.mxu0 %v326
  %358 = vmatprep.subr.bf16.mxu0 0
  %359 = vmatpush2.bf16.msra.mxu0 0
  %360 = vmatprep.subr.bf16.mxu0 0
  %361 = vmatpush2.bf16.msra.mxu0 0
  %362 = vmatprep.subr.bf16.mxu0 0
  %363 = vmatpush2.bf16.msra.mxu0 0
  %364 = vmatprep.subr.bf16.mxu0 0
  %365 = vmatpush2.bf16.msra.mxu0 0
  %366 = vmatprep.subr.bf16.mxu0 0
  %367 = vmatpush2.bf16.msra.mxu0 0
  %368 = vmatprep.subr.bf16.mxu0 0
  %369 = vmatpush2.bf16.msra.mxu0 0
  %370 = vmatprep.subr.bf16.mxu0 0
  %371 = vmatpush2.bf16.msra.mxu0 0
  %372 = vmatprep.subr.bf16.mxu0 0
  %373 = vmatpush2.bf16.msra.mxu0 0
  %374 = vmatprep.mubr.bf16.mxu0 0
  %375 = vmatmul.mubr.bf16.gmra.mxu0 %v230
  %v376 = vpop.f32.mrf.mxu0
  %v377 = vadd.f32 %v100, %v376
  %v378 = vpop.f32.mrf.mxu0
  %v379 = vpop.f32.mrf.mxu0
  %v380 = vadd.f32 %v100, %v379
  %v381 = vpop.f32.mrf.mxu0
  %382 = vmatprep.mubr.bf16.mxu0 0
  %383 = vmatmul.mubr.bf16.gmra.mxu0 %v231
  %v384 = vpop.f32.mrf.mxu0
  %v385 = vadd.f32 %v100, %v384
  %v386 = vpop.f32.mrf.mxu0
  %v387 = vpop.f32.mrf.mxu0
  %v388 = vadd.f32 %v100, %v387
  %v389 = vpop.f32.mrf.mxu0
  %390 = vmatprep.mubr.bf16.mxu0 0
  %391 = vmatmul.mubr.bf16.gmra.mxu0 %v232
  %v392 = vpop.f32.mrf.mxu0
  %v393 = vadd.f32 %v100, %v392
  %v394 = vpop.f32.mrf.mxu0
  %v395 = vpop.f32.mrf.mxu0
  %v396 = vadd.f32 %v100, %v395
  %v397 = vpop.f32.mrf.mxu0
  %398 = vmatprep.mubr.bf16.mxu0 0
  %399 = vmatmul.mubr.bf16.gmra.mxu0 %v233
  %v400 = vpop.f32.mrf.mxu0
  %v401 = vadd.f32 %v100, %v400
  %v402 = vpop.f32.mrf.mxu0
  %v403 = vpop.f32.mrf.mxu0
  %v404 = vadd.f32 %v100, %v403
  %v405 = vpop.f32.mrf.mxu0
  %406 = vmatprep.mubr.bf16.mxu0 0
  %407 = vmatmul.mubr.bf16.gmra.mxu0 %v234
  %v408 = vpop.f32.mrf.mxu0
  %v409 = vadd.f32 %v100, %v408
  %v410 = vpop.f32.mrf.mxu0
  %v411 = vpop.f32.mrf.mxu0
  %v412 = vadd.f32 %v100, %v411
  %v413 = vpop.f32.mrf.mxu0
  %414 = vmatprep.mubr.bf16.mxu0 0
  %415 = vmatmul.mubr.bf16.gmra.mxu0 %v235
  %v416 = vpop.f32.mrf.mxu0
  %v417 = vadd.f32 %v100, %v416
  %v418 = vpop.f32.mrf.mxu0
  %v419 = vpop.f32.mrf.mxu0
  %v420 = vadd.f32 %v100, %v419
  %v421 = vpop.f32.mrf.mxu0
  %422 = vmatprep.mubr.bf16.mxu0 0
  %423 = vmatmul.mubr.bf16.gmra.mxu0 %v236
  %v424 = vpop.f32.mrf.mxu0
  %v425 = vadd.f32 %v100, %v424
  %v426 = vpop.f32.mrf.mxu0
  %v427 = vpop.f32.mrf.mxu0
  %v428 = vadd.f32 %v100, %v427
  %v429 = vpop.f32.mrf.mxu0
  %430 = vmatprep.mubr.bf16.mxu0 0
  %431 = vmatmul.mubr.bf16.gmra.mxu0 %v237
  %v432 = vpop.f32.mrf.mxu0
  %v433 = vadd.f32 %v100, %v432
  %v434 = vpop.f32.mrf.mxu0
  %v435 = vpop.f32.mrf.mxu0
  %v436 = vadd.f32 %v100, %v435
  %v437 = vpop.f32.mrf.mxu0
  %438 = vmatprep.mubr.bf16.mxu0 0
  %439 = vmatmul.mubr.bf16.gmra.mxu0 %v238
  %v440 = vpop.f32.mrf.mxu0
  %v441 = vadd.f32 %v100, %v440
  %v442 = vpop.f32.mrf.mxu0
  %v443 = vpop.f32.mrf.mxu0
  %v444 = vadd.f32 %v100, %v443
  %v445 = vpop.f32.mrf.mxu0
  %446 = vmatprep.mubr.bf16.mxu0 0
  %447 = vmatmul.mubr.bf16.gmra.mxu0 %v239
  %v448 = vpop.f32.mrf.mxu0
  %v449 = vadd.f32 %v100, %v448
  %v450 = vpop.f32.mrf.mxu0
  %v451 = vpop.f32.mrf.mxu0
  %v452 = vadd.f32 %v100, %v451
  %v453 = vpop.f32.mrf.mxu0
  %454 = vmatprep.mubr.bf16.mxu0 0
  %455 = vmatmul.mubr.bf16.gmra.mxu0 %v240
  %v456 = vpop.f32.mrf.mxu0
  %v457 = vadd.f32 %v100, %v456
  %v458 = vpop.f32.mrf.mxu0
  %v459 = vpop.f32.mrf.mxu0
  %v460 = vadd.f32 %v100, %v459
  %v461 = vpop.f32.mrf.mxu0
  %462 = vmatprep.mubr.bf16.mxu0 0
  %463 = vmatmul.mubr.bf16.gmra.mxu0 %v241
  %v464 = vpop.f32.mrf.mxu0
  %v465 = vadd.f32 %v100, %v464
  %v466 = vpop.f32.mrf.mxu0
  %v467 = vpop.f32.mrf.mxu0
  %v468 = vadd.f32 %v100, %v467
  %v469 = vpop.f32.mrf.mxu0
  %470 = vmatprep.mubr.bf16.mxu0 0
  %471 = vmatmul.mubr.bf16.gmra.mxu0 %v242
  %v472 = vpop.f32.mrf.mxu0
  %v473 = vadd.f32 %v100, %v472
  %v474 = vpop.f32.mrf.mxu0
  %v475 = vpop.f32.mrf.mxu0
  %v476 = vadd.f32 %v100, %v475
  %v477 = vpop.f32.mrf.mxu0
  %478 = vmatprep.mubr.bf16.mxu0 0
  %479 = vmatmul.mubr.bf16.gmra.mxu0 %v243
  %v480 = vpop.f32.mrf.mxu0
  %v481 = vadd.f32 %v100, %v480
  %v482 = vpop.f32.mrf.mxu0
  %v483 = vpop.f32.mrf.mxu0
  %v484 = vadd.f32 %v100, %v483
  %v485 = vpop.f32.mrf.mxu0
  %486 = vmatprep.mubr.bf16.mxu0 0
  %487 = vmatmul.mubr.bf16.gmra.mxu0 %v244
  %v488 = vpop.f32.mrf.mxu0
  %v489 = vadd.f32 %v100, %v488
  %v490 = vpop.f32.mrf.mxu0
  %v491 = vpop.f32.mrf.mxu0
  %v492 = vadd.f32 %v100, %v491
  %v493 = vpop.f32.mrf.mxu0
  %494 = vmatprep.mubr.bf16.mxu0 0
  %495 = vmatmul.mubr.bf16.gmra.mxu0 %v245
  %v496 = vpop.f32.mrf.mxu0
  %v497 = vadd.f32 %v100, %v496
  %v498 = vpop.f32.mrf.mxu0
  %v499 = vpop.f32.mrf.mxu0
  %v500 = vadd.f32 %v100, %v499
  %v501 = vpop.f32.mrf.mxu0
  %502 = vmatprep.mubr.bf16.mxu0 0
  %503 = vmatmul.mubr.bf16.gmra.mxu0 %v246
  %v504 = vpop.f32.mrf.mxu0
  %v505 = vadd.f32 %v100, %v504
  %v506 = vpop.f32.mrf.mxu0
  %v507 = vpop.f32.mrf.mxu0
  %v508 = vadd.f32 %v100, %v507
  %v509 = vpop.f32.mrf.mxu0
  %510 = vmatprep.mubr.bf16.mxu0 0
  %511 = vmatmul.mubr.bf16.gmra.mxu0 %v247
  %v512 = vpop.f32.mrf.mxu0
  %v513 = vadd.f32 %v100, %v512
  %v514 = vpop.f32.mrf.mxu0
  %v515 = vpop.f32.mrf.mxu0
  %v516 = vadd.f32 %v100, %v515
  %v517 = vpop.f32.mrf.mxu0
  %518 = vmatprep.mubr.bf16.mxu0 0
  %519 = vmatmul.mubr.bf16.gmra.mxu0 %v248
  %v520 = vpop.f32.mrf.mxu0
  %v521 = vadd.f32 %v100, %v520
  %v522 = vpop.f32.mrf.mxu0
  %v523 = vpop.f32.mrf.mxu0
  %v524 = vadd.f32 %v100, %v523
  %v525 = vpop.f32.mrf.mxu0
  %526 = vmatprep.mubr.bf16.mxu0 0
  %527 = vmatmul.mubr.bf16.gmra.mxu0 %v249
  %v528 = vpop.f32.mrf.mxu0
  %v529 = vadd.f32 %v100, %v528
  %v530 = vpop.f32.mrf.mxu0
  %v531 = vpop.f32.mrf.mxu0
  %v532 = vadd.f32 %v100, %v531
  %v533 = vpop.f32.mrf.mxu0
  %534 = vmatprep.mubr.bf16.mxu0 0
  %535 = vmatmul.mubr.bf16.gmra.mxu0 %v250
  %v536 = vpop.f32.mrf.mxu0
  %v537 = vadd.f32 %v100, %v536
  %v538 = vpop.f32.mrf.mxu0
  %v539 = vpop.f32.mrf.mxu0
  %v540 = vadd.f32 %v100, %v539
  %v541 = vpop.f32.mrf.mxu0
  %542 = vmatprep.mubr.bf16.mxu0 0
  %543 = vmatmul.mubr.bf16.gmra.mxu0 %v251
  %v544 = vpop.f32.mrf.mxu0
  %v545 = vadd.f32 %v100, %v544
  %v546 = vpop.f32.mrf.mxu0
  %v547 = vpop.f32.mrf.mxu0
  %v548 = vadd.f32 %v100, %v547
  %v549 = vpop.f32.mrf.mxu0
  %550 = vmatprep.mubr.bf16.mxu0 0
  %551 = vmatmul.mubr.bf16.gmra.mxu0 %v252
  %v552 = vpop.f32.mrf.mxu0
  %v553 = vadd.f32 %v100, %v552
  %v554 = vpop.f32.mrf.mxu0
  %v555 = vpop.f32.mrf.mxu0
  %v556 = vadd.f32 %v100, %v555
  %v557 = vpop.f32.mrf.mxu0
  %558 = vmatprep.mubr.bf16.mxu0 0
  %559 = vmatmul.mubr.bf16.gmra.mxu0 %v253
  %v560 = vpop.f32.mrf.mxu0
  %v561 = vadd.f32 %v100, %v560
  %v562 = vpop.f32.mrf.mxu0
  %v563 = vpop.f32.mrf.mxu0
  %v564 = vadd.f32 %v100, %v563
  %v565 = vpop.f32.mrf.mxu0
  %566 = vmatprep.mubr.bf16.mxu0 0
  %567 = vmatmul.mubr.bf16.gmra.mxu0 %v254
  %v568 = vpop.f32.mrf.mxu0
  %v569 = vadd.f32 %v100, %v568
  %v570 = vpop.f32.mrf.mxu0
  %v571 = vpop.f32.mrf.mxu0
  %v572 = vadd.f32 %v100, %v571
  %v573 = vpop.f32.mrf.mxu0
  %574 = vmatprep.mubr.bf16.mxu0 0
  %575 = vmatmul.mubr.bf16.gmra.mxu0 %v255
  %v576 = vpop.f32.mrf.mxu0
  %v577 = vadd.f32 %v100, %v576
  %v578 = vpop.f32.mrf.mxu0
  %v579 = vpop.f32.mrf.mxu0
  %v580 = vadd.f32 %v100, %v579
  %v581 = vpop.f32.mrf.mxu0
  %582 = vmatprep.mubr.bf16.mxu0 0
  %583 = vmatmul.mubr.bf16.gmra.mxu0 %v256
  %v584 = vpop.f32.mrf.mxu0
  %v585 = vadd.f32 %v100, %v584
  %v586 = vpop.f32.mrf.mxu0
  %v587 = vpop.f32.mrf.mxu0
  %v588 = vadd.f32 %v100, %v587
  %v589 = vpop.f32.mrf.mxu0
  %590 = vmatprep.mubr.bf16.mxu0 0
  %591 = vmatmul.mubr.bf16.gmra.mxu0 %v257
  %v592 = vpop.f32.mrf.mxu0
  %v593 = vadd.f32 %v100, %v592
  %v594 = vpop.f32.mrf.mxu0
  %v595 = vpop.f32.mrf.mxu0
  %v596 = vadd.f32 %v100, %v595
  %v597 = vpop.f32.mrf.mxu0
  %598 = vmatprep.mubr.bf16.mxu0 0
  %599 = vmatmul.mubr.bf16.gmra.mxu0 %v258
  %v600 = vpop.f32.mrf.mxu0
  %v601 = vadd.f32 %v100, %v600
  %v602 = vpop.f32.mrf.mxu0
  %v603 = vpop.f32.mrf.mxu0
  %v604 = vadd.f32 %v100, %v603
  %v605 = vpop.f32.mrf.mxu0
  %606 = vmatprep.mubr.bf16.mxu0 0
  %607 = vmatmul.mubr.bf16.gmra.mxu0 %v259
  %v608 = vpop.f32.mrf.mxu0
  %v609 = vadd.f32 %v100, %v608
  %v610 = vpop.f32.mrf.mxu0
  %v611 = vpop.f32.mrf.mxu0
  %v612 = vadd.f32 %v100, %v611
  %v613 = vpop.f32.mrf.mxu0
  %614 = vmatprep.mubr.bf16.mxu0 0
  %615 = vmatmul.mubr.bf16.gmra.mxu0 %v260
  %v616 = vpop.f32.mrf.mxu0
  %v617 = vadd.f32 %v100, %v616
  %v618 = vpop.f32.mrf.mxu0
  %v619 = vpop.f32.mrf.mxu0
  %v620 = vadd.f32 %v100, %v619
  %v621 = vpop.f32.mrf.mxu0
  %622 = vmatprep.mubr.bf16.mxu0 0
  %623 = vmatmul.mubr.bf16.gmra.mxu0 %v261
  %v624 = vpop.f32.mrf.mxu0
  %v625 = vadd.f32 %v100, %v624
  %v626 = vpop.f32.mrf.mxu0
  %v627 = vpop.f32.mrf.mxu0
  %v628 = vadd.f32 %v100, %v627
  %v629 = vpop.f32.mrf.mxu0
  %630 = vdwg.mxu0
  %631 = vst [vmem:[%s3] sm:$0xff] %v377
  %632 = vst [vmem:[%s3 + $0x8] sm:$0xff] %v380
  %633 = vst [vmem:[%s3 + $0x10] sm:$0xff] %v385
  %634 = vst [vmem:[%s3 + $0x18] sm:$0xff] %v388
  %635 = vst [vmem:[%s3 + $0x20] sm:$0xff] %v393
  %636 = vst [vmem:[%s3 + $0x28] sm:$0xff] %v396
  %637 = vst [vmem:[%s3 + $0x30] sm:$0xff] %v401
  %638 = vst [vmem:[%s3 + $0x38] sm:$0xff] %v404
  %639 = vst [vmem:[%s3 + $0x40] sm:$0xff] %v409
  %640 = vst [vmem:[%s3 + $0x48] sm:$0xff] %v412
  %641 = vst [vmem:[%s3 + $0x50] sm:$0xff] %v417
  %642 = vst [vmem:[%s3 + $0x58] sm:$0xff] %v420
  %643 = vst [vmem:[%s3 + $0x60] sm:$0xff] %v425
  %644 = vst [vmem:[%s3 + $0x68] sm:$0xff] %v428
  %645 = vst [vmem:[%s3 + $0x70] sm:$0xff] %v433
  %646 = vst [vmem:[%s3 + $0x78] sm:$0xff] %v436
  %647 = vst [vmem:[%s3 + $0x80] sm:$0xff] %v441
  %648 = vst [vmem:[%s3 + $0x88] sm:$0xff] %v444
  %649 = vst [vmem:[%s3 + $0x90] sm:$0xff] %v449
  %650 = vst [vmem:[%s3 + $0x98] sm:$0xff] %v452
  %651 = vst [vmem:[%s3 + $0xa0] sm:$0xff] %v457
  %652 = vst [vmem:[%s3 + $0xa8] sm:$0xff] %v460
  %653 = vst [vmem:[%s3 + $0xb0] sm:$0xff] %v465
  %654 = vst [vmem:[%s3 + $0xb8] sm:$0xff] %v468
  %655 = vst [vmem:[%s3 + $0xc0] sm:$0xff] %v473
  %656 = vst [vmem:[%s3 + $0xc8] sm:$0xff] %v476
  %657 = vst [vmem:[%s3 + $0xd0] sm:$0xff] %v481
  %658 = vst [vmem:[%s3 + $0xd8] sm:$0xff] %v484
  %659 = vst [vmem:[%s3 + $0xe0] sm:$0xff] %v489
  %660 = vst [vmem:[%s3 + $0xe8] sm:$0xff] %v492
  %661 = vst [vmem:[%s3 + $0xf0] sm:$0xff] %v497
  %662 = vst [vmem:[%s3 + $0xf8] sm:$0xff] %v500
  %663 = vst [vmem:[%s3 + $0x100] sm:$0xff] %v505
  %664 = vst [vmem:[%s3 + $0x108] sm:$0xff] %v508
  %665 = vst [vmem:[%s3 + $0x110] sm:$0xff] %v513
  %666 = vst [vmem:[%s3 + $0x118] sm:$0xff] %v516
  %667 = vst [vmem:[%s3 + $0x120] sm:$0xff] %v521
  %668 = vst [vmem:[%s3 + $0x128] sm:$0xff] %v524
  %669 = vst [vmem:[%s3 + $0x130] sm:$0xff] %v529
  %670 = vst [vmem:[%s3 + $0x138] sm:$0xff] %v532
  %671 = vst [vmem:[%s3 + $0x140] sm:$0xff] %v537
  %672 = vst [vmem:[%s3 + $0x148] sm:$0xff] %v540
  %673 = vst [vmem:[%s3 + $0x150] sm:$0xff] %v545
  %674 = vst [vmem:[%s3 + $0x158] sm:$0xff] %v548
  %675 = vst [vmem:[%s3 + $0x160] sm:$0xff] %v553
  %676 = vst [vmem:[%s3 + $0x168] sm:$0xff] %v556
  %677 = vst [vmem:[%s3 + $0x170] sm:$0xff] %v561
  %678 = vst [vmem:[%s3 + $0x178] sm:$0xff] %v564
  %679 = vst [vmem:[%s3 + $0x180] sm:$0xff] %v569
  %680 = vst [vmem:[%s3 + $0x188] sm:$0xff] %v572
  %681 = vst [vmem:[%s3 + $0x190] sm:$0xff] %v577
  %682 = vst [vmem:[%s3 + $0x198] sm:$0xff] %v580
  %683 = vst [vmem:[%s3 + $0x1a0] sm:$0xff] %v585
  %684 = vst [vmem:[%s3 + $0x1a8] sm:$0xff] %v588
  %685 = vst [vmem:[%s3 + $0x1b0] sm:$0xff] %v593
  %686 = vst [vmem:[%s3 + $0x1b8] sm:$0xff] %v596
  %687 = vst [vmem:[%s3 + $0x1c0] sm:$0xff] %v601
  %688 = vst [vmem:[%s3 + $0x1c8] sm:$0xff] %v604
  %689 = vst [vmem:[%s3 + $0x1d0] sm:$0xff] %v609
  %690 = vst [vmem:[%s3 + $0x1d8] sm:$0xff] %v612
  %691 = vst [vmem:[%s3 + $0x1e0] sm:$0xff] %v617
  %692 = vst [vmem:[%s3 + $0x1e8] sm:$0xff] %v620
  %693 = vst [vmem:[%s3 + $0x1f0] sm:$0xff] %v625
  %694 = vst [vmem:[%s3 + $0x1f8] sm:$0xff] %v628
  // Predicated region
  $region14: #{zip_unet_forward.12} parent=0 // pred_check
    _
  $region15: #{zip_unet_forward.12} parent=0 // pred_check_branch
    %696 = sbr.rel (0) target = $region17
  $region16: #{zip_unet_forward.12} parent=0 // pred_region
    _
  $region17: #{zip_unet_forward.12} parent=0 // pred_fallthru
    _
  // Predicated region
  $region18: #{zip_unet_forward.12} parent=0 // pred_check
    _
  $region19: #{zip_unet_forward.12} parent=0 // pred_check_branch
    %698 = sbr.rel (0) target = $region21
  $region20: #{zip_unet_forward.12} parent=0 // pred_region
    _
  $region21: #{zip_unet_forward.12} parent=0 // pred_fallthru
    _

// kernel: zip_unet_forward.13
$region0: #{zip_unet_forward.13}
  #allocation0 [shape = 'u32[]', space=smem, size = 0x4, offset = 0x4, fixed_abs, tag = 'smem constant byte address 0x4 - core index']
  #allocation1 [shape = 'u32[144,128]{1,0:T(1,128)}', space=vmem, size = 0x12000, scoped, tag = 'internal scratch']
  %s0 = inlined_call_operand.vmem [shape: bf16[128,128], index: 0, kind: input, shape index: {}]
  %s1 = inlined_call_operand.vmem [shape: bf16[128,128], index: 1, kind: input, shape index: {}]
  %s2 = inlined_call_operand.vmem [shape: f32[1,128], index: 2, kind: input, shape index: {}]
  %s3 = inlined_call_operand.vmem [shape: f32[1,128], index: 3, kind: input, shape index: {}]
  %s4 = inlined_call_operand.vmem [shape: f32[128,128], index: 4, kind: input, shape index: {}]
  %s5 = inlined_call_operand.vmem [shape: f32[128,128], index: 5, kind: output, shape index: {}]
  %s6 = sld [smem:[#allocation0]]
  $region30: #{zip_unet_forward.13} parent=0
    _
  %s8 = ssub.s32 1, %s6
  %s9 = scalar_select 0, %s8, %s6
  // Predicated region
  $region2: #{zip_unet_forward.13} parent=0 // pred_check
    _
  $region3: #{zip_unet_forward.13} parent=0 // pred_check_branch
    %11 = sbr.rel (0) target = $region5
  $region4: #{zip_unet_forward.13} parent=0 // pred_region
    _
  $region5: #{zip_unet_forward.13} parent=0 // pred_fallthru
    _
  // Predicated region
  $region6: #{zip_unet_forward.13} parent=0 // pred_check
    _
  $region7: #{zip_unet_forward.13} parent=0 // pred_check_branch
    %13 = sbr.rel (0) target = $region9
  $region8: #{zip_unet_forward.13} parent=0 // pred_region
    _
  $region9: #{zip_unet_forward.13} parent=0 // pred_fallthru
    _
  // Predicated region
  $region10: #{zip_unet_forward.13} parent=0 // pred_check
    _
  $region11: #{zip_unet_forward.13} parent=0 // pred_check_branch
    %15 = sbr.rel (0) target = $region13
  $region12: #{zip_unet_forward.13} parent=0 // pred_region
    _
  $region13: #{zip_unet_forward.13} parent=0 // pred_fallthru
    _
  // Predicated region
  $region14: #{zip_unet_forward.13} parent=0 // pred_check
    _
  $region15: #{zip_unet_forward.13} parent=0 // pred_check_branch
    %17 = sbr.rel (0) target = $region17
  $region16: #{zip_unet_forward.13} parent=0 // pred_region
    _
  $region17: #{zip_unet_forward.13} parent=0 // pred_fallthru
    _
  // Predicated region
  $region18: #{zip_unet_forward.13} parent=0 // pred_check
    _
  $region19: #{zip_unet_forward.13} parent=0 // pred_check_branch
    %19 = sbr.rel (0) target = $region21
  $region20: #{zip_unet_forward.13} parent=0 // pred_region
    _
  $region21: #{zip_unet_forward.13} parent=0 // pred_fallthru
    _
  %v21 = vld [vmem:[%s0] sm:$0xf]
  %v22 = vld [vmem:[%s0 + $0x4] sm:$0xf]
  %v23 = vld [vmem:[%s0 + $0x8] sm:$0xf]
  %v24 = vld [vmem:[%s0 + $0xc] sm:$0xf]
  %v25 = vld [vmem:[%s0 + $0x10] sm:$0xf]
  %v26 = vld [vmem:[%s0 + $0x14] sm:$0xf]
  %v27 = vld [vmem:[%s0 + $0x18] sm:$0xf]
  %v28 = vld [vmem:[%s0 + $0x1c] sm:$0xf]
  %v29 = vld [vmem:[%s0 + $0x20] sm:$0xf]
  %v30 = vld [vmem:[%s0 + $0x24] sm:$0xf]
  %v31 = vld [vmem:[%s0 + $0x28] sm:$0xf]
  %v32 = vld [vmem:[%s0 + $0x2c] sm:$0xf]
  %v33 = vld [vmem:[%s0 + $0x30] sm:$0xf]
  %v34 = vld [vmem:[%s0 + $0x34] sm:$0xf]
  %v35 = vld [vmem:[%s0 + $0x38] sm:$0xf]
  %v36 = vld [vmem:[%s0 + $0x3c] sm:$0xf]
  %v37 = vld [vmem:[%s1] sm:$0xf]
  %v38 = vld [vmem:[%s1 + $0x4] sm:$0xf]
  %v39 = vld [vmem:[%s1 + $0x8] sm:$0xf]
  %v40 = vld [vmem:[%s1 + $0xc] sm:$0xf]
  %v41 = vld [vmem:[%s1 + $0x10] sm:$0xf]
  %v42 = vld [vmem:[%s1 + $0x14] sm:$0xf]
  %v43 = vld [vmem:[%s1 + $0x18] sm:$0xf]
  %v44 = vld [vmem:[%s1 + $0x1c] sm:$0xf]
  %v45 = vld [vmem:[%s1 + $0x20] sm:$0xf]
  %v46 = vld [vmem:[%s1 + $0x24] sm:$0xf]
  %v47 = vld [vmem:[%s1 + $0x28] sm:$0xf]
  %v48 = vld [vmem:[%s1 + $0x2c] sm:$0xf]
  %v49 = vld [vmem:[%s1 + $0x30] sm:$0xf]
  %v50 = vld [vmem:[%s1 + $0x34] sm:$0xf]
  %v51 = vld [vmem:[%s1 + $0x38] sm:$0xf]
  %v52 = vld [vmem:[%s1 + $0x3c] sm:$0xf]
  %v69 = vunpack.c.l.b16 %v21
  %v70 = vunpack.c.l.b16 %v22
  %v71 = vunpack.c.l.b16 %v23
  %v72 = vunpack.c.l.b16 %v24
  %v73 = vunpack.c.l.b16 %v25
  %v74 = vunpack.c.l.b16 %v26
  %v75 = vunpack.c.l.b16 %v27
  %v76 = vunpack.c.l.b16 %v28
  %v77 = vunpack.c.l.b16 %v29
  %v78 = vunpack.c.l.b16 %v30
  %v79 = vunpack.c.l.b16 %v31
  %v80 = vunpack.c.l.b16 %v32
  %v81 = vunpack.c.l.b16 %v33
  %v82 = vunpack.c.l.b16 %v34
  %v83 = vunpack.c.l.b16 %v35
  %v84 = vunpack.c.l.b16 %v36
  %v85 = vpack.c.b16 %v70, %v69
  %v86 = vpack.c.b16 %v72, %v71
  %v87 = vpack.c.b16 %v74, %v73
  %v88 = vpack.c.b16 %v76, %v75
  %v89 = vpack.c.b16 %v78, %v77
  %v90 = vpack.c.b16 %v80, %v79
  %v91 = vpack.c.b16 %v82, %v81
  %v92 = vpack.c.b16 %v84, %v83
  %v117 = vunpack.c.l.b16 %v37
  %v118 = vunpack.c.l.b16 %v38
  %v119 = vunpack.c.l.b16 %v39
  %v120 = vunpack.c.l.b16 %v40
  %v121 = vunpack.c.l.b16 %v41
  %v122 = vunpack.c.l.b16 %v42
  %v123 = vunpack.c.l.b16 %v43
  %v124 = vunpack.c.l.b16 %v44
  %v125 = vunpack.c.l.b16 %v45
  %v126 = vunpack.c.l.b16 %v46
  %v127 = vunpack.c.l.b16 %v47
  %v128 = vunpack.c.l.b16 %v48
  %v129 = vunpack.c.l.b16 %v49
  %v130 = vunpack.c.l.b16 %v50
  %v131 = vunpack.c.l.b16 %v51
  %v132 = vunpack.c.l.b16 %v52
  %v133 = vpack.c.b16 %v118, %v117
  %v134 = vpack.c.b16 %v120, %v119
  %v135 = vpack.c.b16 %v122, %v121
  %v136 = vpack.c.b16 %v124, %v123
  %v137 = vpack.c.b16 %v126, %v125
  %v138 = vpack.c.b16 %v128, %v127
  %v139 = vpack.c.b16 %v130, %v129
  %v140 = vpack.c.b16 %v132, %v131
  %149 = vmatprep.subr.bf16.mxu0 0
  %150 = vmatpush1.bf16.msra.mxu0 %v140
  %151 = vmatprep.subr.bf16.mxu0 0
  %152 = vmatpush1.bf16.msra.mxu0 %v139
  %153 = vmatprep.subr.bf16.mxu0 0
  %154 = vmatpush1.bf16.msra.mxu0 %v138
  %155 = vmatprep.subr.bf16.mxu0 0
  %156 = vmatpush1.bf16.msra.mxu0 %v137
  %157 = vmatprep.subr.bf16.mxu0 0
  %158 = vmatpush1.bf16.msra.mxu0 %v136
  %159 = vmatprep.subr.bf16.mxu0 0
  %160 = vmatpush1.bf16.msra.mxu0 %v135
  %161 = vmatprep.subr.bf16.mxu0 0
  %162 = vmatpush1.bf16.msra.mxu0 %v134
  %163 = vmatprep.subr.bf16.mxu0 0
  %164 = vmatpush1.bf16.msra.mxu0 %v133
  %165 = vmatprep.subr.bf16.mxu0 0
  %166 = vmatpush2.bf16.msra.mxu0 0
  %167 = vmatprep.subr.bf16.mxu0 0
  %168 = vmatpush2.bf16.msra.mxu0 0
  %169 = vmatprep.subr.bf16.mxu0 0
  %170 = vmatpush2.bf16.msra.mxu0 0
  %171 = vmatprep.subr.bf16.mxu0 0
  %172 = vmatpush2.bf16.msra.mxu0 0
  %173 = vmatprep.subr.bf16.mxu0 0
  %174 = vmatpush2.bf16.msra.mxu0 0
  %175 = vmatprep.subr.bf16.mxu0 0
  %176 = vmatpush2.bf16.msra.mxu0 0
  %177 = vmatprep.subr.bf16.mxu0 0
  %178 = vmatpush2.bf16.msra.mxu0 0
  %179 = vmatprep.subr.bf16.mxu0 0
  %180 = vmatpush2.bf16.msra.mxu0 0
  %181 = vmatprep.mubr.bf16.mxu0 0
  %182 = vmatmul.mubr.bf16.gmra.mxu0 %v85
  %v183 = vpop.f32.mrf.mxu0
  %v184 = vadd.f32 0.0, %v183
  %v185 = vpop.f32.mrf.mxu0
  %v186 = vpop.f32.mrf.mxu0
  %v187 = vadd.f32 0.0, %v186
  %v188 = vpop.f32.mrf.mxu0
  %189 = vmatprep.mubr.bf16.mxu0 0
  %190 = vmatmul.mubr.bf16.gmra.mxu0 %v86
  %v191 = vpop.f32.mrf.mxu0
  %v192 = vadd.f32 0.0, %v191
  %v193 = vpop.f32.mrf.mxu0
  %v194 = vpop.f32.mrf.mxu0
  %v195 = vadd.f32 0.0, %v194
  %v196 = vpop.f32.mrf.mxu0
  %197 = vmatprep.mubr.bf16.mxu0 0
  %198 = vmatmul.mubr.bf16.gmra.mxu0 %v87
  %v199 = vpop.f32.mrf.mxu0
  %v200 = vadd.f32 0.0, %v199
  %v201 = vpop.f32.mrf.mxu0
  %v202 = vpop.f32.mrf.mxu0
  %v203 = vadd.f32 0.0, %v202
  %v204 = vpop.f32.mrf.mxu0
  %205 = vmatprep.mubr.bf16.mxu0 0
  %206 = vmatmul.mubr.bf16.gmra.mxu0 %v88
  %v207 = vpop.f32.mrf.mxu0
  %v208 = vadd.f32 0.0, %v207
  %v209 = vpop.f32.mrf.mxu0
  %v210 = vpop.f32.mrf.mxu0
  %v211 = vadd.f32 0.0, %v210
  %v212 = vpop.f32.mrf.mxu0
  %213 = vmatprep.mubr.bf16.mxu0 0
  %214 = vmatmul.mubr.bf16.gmra.mxu0 %v89
  %v215 = vpop.f32.mrf.mxu0
  %v216 = vadd.f32 0.0, %v215
  %v217 = vpop.f32.mrf.mxu0
  %v218 = vpop.f32.mrf.mxu0
  %v219 = vadd.f32 0.0, %v218
  %v220 = vpop.f32.mrf.mxu0
  %221 = vmatprep.mubr.bf16.mxu0 0
  %222 = vmatmul.mubr.bf16.gmra.mxu0 %v90
  %v223 = vpop.f32.mrf.mxu0
  %v224 = vadd.f32 0.0, %v223
  %v225 = vpop.f32.mrf.mxu0
  %v226 = vpop.f32.mrf.mxu0
  %v227 = vadd.f32 0.0, %v226
  %v228 = vpop.f32.mrf.mxu0
  %229 = vmatprep.mubr.bf16.mxu0 0
  %230 = vmatmul.mubr.bf16.gmra.mxu0 %v91
  %v231 = vpop.f32.mrf.mxu0
  %v232 = vadd.f32 0.0, %v231
  %v233 = vpop.f32.mrf.mxu0
  %v234 = vpop.f32.mrf.mxu0
  %v235 = vadd.f32 0.0, %v234
  %v236 = vpop.f32.mrf.mxu0
  %237 = vmatprep.mubr.bf16.mxu0 0
  %238 = vmatmul.mubr.bf16.gmra.mxu0 %v92
  %v239 = vpop.f32.mrf.mxu0
  %v240 = vadd.f32 0.0, %v239
  %v241 = vpop.f32.mrf.mxu0
  %v242 = vpop.f32.mrf.mxu0
  %v243 = vadd.f32 0.0, %v242
  %v244 = vpop.f32.mrf.mxu0
  %245 = vdwg.mxu0
  %v246 = vadd.f32 %v184, %v187
  %v247 = vadd.f32 %v246, %v192
  %v248 = vadd.f32 %v247, %v195
  %v249 = vadd.f32 %v248, %v200
  %v250 = vadd.f32 %v249, %v203
  %v251 = vadd.f32 %v250, %v208
  %v252 = vadd.f32 %v251, %v211
  %v253 = vadd.f32 %v252, %v216
  %v254 = vadd.f32 %v253, %v219
  %v255 = vadd.f32 %v254, %v224
  %v256 = vadd.f32 %v255, %v227
  %v257 = vadd.f32 %v256, %v232
  %v258 = vadd.f32 %v257, %v235
  %v259 = vadd.f32 %v258, %v240
  %v260 = vadd.f32 %v259, %v243
  %v261 = vrot.slane %v260, 4
  %v262 = vadd.f32 %v260, %v261
  %v263 = vrot.slane %v262, 2
  %v264 = vadd.f32 %v262, %v263
  %v265 = vrot.slane %v264, 1
  %v266 = vadd.f32 %v264, %v265
  %v267 = vmul.f32 %v184, %v184
  %v268 = vmul.f32 %v187, %v187
  %v269 = vmul.f32 %v192, %v192
  %v270 = vmul.f32 %v195, %v195
  %v271 = vmul.f32 %v200, %v200
  %v272 = vmul.f32 %v203, %v203
  %v273 = vmul.f32 %v208, %v208
  %v274 = vmul.f32 %v211, %v211
  %v275 = vmul.f32 %v216, %v216
  %v276 = vmul.f32 %v219, %v219
  %v277 = vmul.f32 %v224, %v224
  %v278 = vmul.f32 %v227, %v227
  %v279 = vmul.f32 %v232, %v232
  %v280 = vmul.f32 %v235, %v235
  %v281 = vmul.f32 %v240, %v240
  %v282 = vmul.f32 %v243, %v243
  %v283 = vadd.f32 %v267, %v268
  %v284 = vadd.f32 %v283, %v269
  %v285 = vadd.f32 %v284, %v270
  %v286 = vadd.f32 %v285, %v271
  %v287 = vadd.f32 %v286, %v272
  %v288 = vadd.f32 %v287, %v273
  %v289 = vadd.f32 %v288, %v274
  %v290 = vadd.f32 %v289, %v275
  %v291 = vadd.f32 %v290, %v276
  %v292 = vadd.f32 %v291, %v277
  %v293 = vadd.f32 %v292, %v278
  %v294 = vadd.f32 %v293, %v279
  %v295 = vadd.f32 %v294, %v280
  %v296 = vadd.f32 %v295, %v281
  %v297 = vadd.f32 %v296, %v282
  %v298 = vrot.slane %v297, 4
  %v299 = vadd.f32 %v297, %v298
  %v300 = vrot.slane %v299, 2
  %v301 = vadd.f32 %v299, %v300
  %v302 = vrot.slane %v301, 1
  %v303 = vadd.f32 %v301, %v302
  %vm304 = vcmask 1040384
  %v305 = vsel %vm304, %v266, %v303
  %v306 = vld [vmem:[%s4] sm:$0xff]
  %v307 = vld [vmem:[%s4 + $0x8] sm:$0xff]
  %v308 = vld [vmem:[%s4 + $0x10] sm:$0xff]
  %v309 = vld [vmem:[%s4 + $0x18] sm:$0xff]
  %v310 = vld [vmem:[%s4 + $0x20] sm:$0xff]
  %v311 = vld [vmem:[%s4 + $0x28] sm:$0xff]
  %v312 = vld [vmem:[%s4 + $0x30] sm:$0xff]
  %v313 = vld [vmem:[%s4 + $0x38] sm:$0xff]
  %v314 = vld [vmem:[%s4 + $0x40] sm:$0xff]
  %v315 = vld [vmem:[%s4 + $0x48] sm:$0xff]
  %v316 = vld [vmem:[%s4 + $0x50] sm:$0xff]
  %v317 = vld [vmem:[%s4 + $0x58] sm:$0xff]
  %v318 = vld [vmem:[%s4 + $0x60] sm:$0xff]
  %v319 = vld [vmem:[%s4 + $0x68] sm:$0xff]
  %v320 = vld [vmem:[%s4 + $0x70] sm:$0xff]
  %v321 = vld [vmem:[%s4 + $0x78] sm:$0xff]
  %322 = vmatprep.subr.mxu0 0.0
  %323 = vmatpush1.msra.mxu0 %v321
  %324 = vmatprep.subr.mxu0 0.0
  %325 = vmatpush1.msra.mxu0 %v320
  %326 = vmatprep.subr.mxu0 0.0
  %327 = vmatpush1.msra.mxu0 %v319
  %328 = vmatprep.subr.mxu0 0.0
  %329 = vmatpush1.msra.mxu0 %v318
  %330 = vmatprep.subr.mxu0 0.0
  %331 = vmatpush1.msra.mxu0 %v317
  %332 = vmatprep.subr.mxu0 0.0
  %333 = vmatpush1.msra.mxu0 %v316
  %334 = vmatprep.subr.mxu0 0.0
  %335 = vmatpush1.msra.mxu0 %v315
  %336 = vmatprep.subr.mxu0 0.0
  %337 = vmatpush1.msra.mxu0 %v314
  %338 = vmatprep.subr.mxu0 0.0
  %339 = vmatpush1.msra.mxu0 %v313
  %340 = vmatprep.subr.mxu0 0.0
  %341 = vmatpush1.msra.mxu0 %v312
  %342 = vmatprep.subr.mxu0 0.0
  %343 = vmatpush1.msra.mxu0 %v311
  %344 = vmatprep.subr.mxu0 0.0
  %345 = vmatpush1.msra.mxu0 %v310
  %346 = vmatprep.subr.mxu0 0.0
  %347 = vmatpush1.msra.mxu0 %v309
  %348 = vmatprep.subr.mxu0 0.0
  %349 = vmatpush1.msra.mxu0 %v308
  %350 = vmatprep.subr.mxu0 0.0
  %351 = vmatpush1.msra.mxu0 %v307
  %352 = vmatprep.subr.mxu0 0.0
  %353 = vmatpush1.msra.mxu0 %v306
  %354 = vmatprep.subr.mxu0 0.0
  %355 = vmatpush2.msra.mxu0 0.0
  %356 = vmatprep.subr.mxu0 0.0
  %357 = vmatpush2.msra.mxu0 0.0
  %358 = vmatprep.subr.mxu0 0.0
  %359 = vmatpush2.msra.mxu0 0.0
  %360 = vmatprep.subr.mxu0 0.0
  %361 = vmatpush2.msra.mxu0 0.0
  %362 = vmatprep.subr.mxu0 0.0
  %363 = vmatpush2.msra.mxu0 0.0
  %364 = vmatprep.subr.mxu0 0.0
  %365 = vmatpush2.msra.mxu0 0.0
  %366 = vmatprep.subr.mxu0 0.0
  %367 = vmatpush2.msra.mxu0 0.0
  %368 = vmatprep.subr.mxu0 0.0
  %369 = vmatpush2.msra.mxu0 0.0
  %370 = vmatprep.subr.mxu0 0.0
  %371 = vmatpush2.msra.mxu0 0.0
  %372 = vmatprep.subr.mxu0 0.0
  %373 = vmatpush2.msra.mxu0 0.0
  %374 = vmatprep.subr.mxu0 0.0
  %375 = vmatpush2.msra.mxu0 0.0
  %376 = vmatprep.subr.mxu0 0.0
  %377 = vmatpush2.msra.mxu0 0.0
  %378 = vmatprep.subr.mxu0 0.0
  %379 = vmatpush2.msra.mxu0 0.0
  %380 = vmatprep.subr.mxu0 0.0
  %381 = vmatpush2.msra.mxu0 0.0
  %382 = vmatprep.subr.mxu0 0.0
  %383 = vmatpush2.msra.mxu0 0.0
  %384 = vmatprep.subr.mxu0 0.0
  %385 = vmatpush2.msra.mxu0 0.0
  %386 = vmatprep.mubr.f32.mxu0 0.0
  %387 = vmatmul.mubr.f32.gmra.mxu0 %v305
  %v388 = vpop.f32.mrf.mxu0
  %v389 = vadd.f32 0.0, %v388
  %v390 = vpop.f32.mrf.mxu0
  %391 = vdwg.mxu0
  %v392 = vmul.f32 %v389, 0.0078125
  %v393 = vmul.f32 %v392, %v392
  %v395 = vrot.slane %v393, 7
  %v397 = vsub.f32 %v392, %v395
  %v398 = vlaneseq
  %v399 = vshrl.u32 %v398, 7
  %v400 = vsub.s32 0, %v399
  %v401 = vrot.slane %v392, %v400
  %v402 = vsub.f32 %v184, %v401
  %v403 = vsub.f32 %v187, %v401
  %v404 = vsub.f32 %v192, %v401
  %v405 = vsub.f32 %v195, %v401
  %v406 = vsub.f32 %v200, %v401
  %v407 = vsub.f32 %v203, %v401
  %v408 = vsub.f32 %v208, %v401
  %v409 = vsub.f32 %v211, %v401
  %v410 = vsub.f32 %v216, %v401
  %v411 = vsub.f32 %v219, %v401
  %v412 = vsub.f32 %v224, %v401
  %v413 = vsub.f32 %v227, %v401
  %v414 = vsub.f32 %v232, %v401
  %v415 = vsub.f32 %v235, %v401
  %v416 = vsub.f32 %v240, %v401
  %v417 = vsub.f32 %v243, %v401
  %v418 = vadd.f32 %v397, 1e-05
  %v419 = vrsqrt.pop %v418
  %v420 = vlaneseq
  %v421 = vshrl.u32 %v420, 7
  %v422 = vsub.s32 1, %v421
  %v423 = vrot.slane %v419, %v422
  %v424 = vmul.f32 %v402, %v423
  %v425 = vmul.f32 %v403, %v423
  %v426 = vmul.f32 %v404, %v423
  %v427 = vmul.f32 %v405, %v423
  %v428 = vmul.f32 %v406, %v423
  %v429 = vmul.f32 %v407, %v423
  %v430 = vmul.f32 %v408, %v423
  %v431 = vmul.f32 %v409, %v423
  %v432 = vmul.f32 %v410, %v423
  %v433 = vmul.f32 %v411, %v423
  %v434 = vmul.f32 %v412, %v423
  %v435 = vmul.f32 %v413, %v423
  %v436 = vmul.f32 %v414, %v423
  %v437 = vmul.f32 %v415, %v423
  %v438 = vmul.f32 %v416, %v423
  %v439 = vmul.f32 %v417, %v423
  %v440 = vld [vmem:[%s2] sm:$0x1]
  %v442 = vlaneseq
  %v443 = vshrl.u32 %v442, 7
  %v444 = vsub.s32 0, %v443
  %v445 = vrot.slane %v440, %v444
  %v447 = vmul.f32 %v424, %v445
  %v448 = vmul.f32 %v425, %v445
  %v449 = vmul.f32 %v426, %v445
  %v450 = vmul.f32 %v427, %v445
  %v451 = vmul.f32 %v428, %v445
  %v452 = vmul.f32 %v429, %v445
  %v453 = vmul.f32 %v430, %v445
  %v454 = vmul.f32 %v431, %v445
  %v455 = vmul.f32 %v432, %v445
  %v456 = vmul.f32 %v433, %v445
  %v457 = vmul.f32 %v434, %v445
  %v458 = vmul.f32 %v435, %v445
  %v459 = vmul.f32 %v436, %v445
  %v460 = vmul.f32 %v437, %v445
  %v461 = vmul.f32 %v438, %v445
  %v462 = vmul.f32 %v439, %v445
  %v463 = vld [vmem:[%s3] sm:$0x1]
  %v465 = vlaneseq
  %v466 = vshrl.u32 %v465, 7
  %v467 = vsub.s32 0, %v466
  %v468 = vrot.slane %v463, %v467
  %v470 = vadd.f32 %v447, %v468
  %v471 = vadd.f32 %v448, %v468
  %v472 = vadd.f32 %v449, %v468
  %v473 = vadd.f32 %v450, %v468
  %v474 = vadd.f32 %v451, %v468
  %v475 = vadd.f32 %v452, %v468
  %v476 = vadd.f32 %v453, %v468
  %v477 = vadd.f32 %v454, %v468
  %v478 = vadd.f32 %v455, %v468
  %v479 = vadd.f32 %v456, %v468
  %v480 = vadd.f32 %v457, %v468
  %v481 = vadd.f32 %v458, %v468
  %v482 = vadd.f32 %v459, %v468
  %v483 = vadd.f32 %v460, %v468
  %v484 = vadd.f32 %v461, %v468
  %v485 = vadd.f32 %v462, %v468
  %486 = vst [vmem:[%s5] sm:$0xff] %v470
  %487 = vst [vmem:[%s5 + $0x8] sm:$0xff] %v471
  %488 = vst [vmem:[%s5 + $0x10] sm:$0xff] %v472
  %489 = vst [vmem:[%s5 + $0x18] sm:$0xff] %v473
  %490 = vst [vmem:[%s5 + $0x20] sm:$0xff] %v474
  %491 = vst [vmem:[%s5 + $0x28] sm:$0xff] %v475
  %492 = vst [vmem:[%s5 + $0x30] sm:$0xff] %v476
  %493 = vst [vmem:[%s5 + $0x38] sm:$0xff] %v477
  %494 = vst [vmem:[%s5 + $0x40] sm:$0xff] %v478
  %495 = vst [vmem:[%s5 + $0x48] sm:$0xff] %v479
  %496 = vst [vmem:[%s5 + $0x50] sm:$0xff] %v480
  %497 = vst [vmem:[%s5 + $0x58] sm:$0xff] %v481
  %498 = vst [vmem:[%s5 + $0x60] sm:$0xff] %v482
  %499 = vst [vmem:[%s5 + $0x68] sm:$0xff] %v483
  %500 = vst [vmem:[%s5 + $0x70] sm:$0xff] %v484
  %501 = vst [vmem:[%s5 + $0x78] sm:$0xff] %v485
  // Predicated region
  $region22: #{zip_unet_forward.13} parent=0 // pred_check
    _
  $region23: #{zip_unet_forward.13} parent=0 // pred_check_branch
    %503 = sbr.rel (0) target = $region25
  $region24: #{zip_unet_forward.13} parent=0 // pred_region
    _
  $region25: #{zip_unet_forward.13} parent=0 // pred_fallthru
    _
  // Predicated region
  $region26: #{zip_unet_forward.13} parent=0 // pred_check
    _
  $region27: #{zip_unet_forward.13} parent=0 // pred_check_branch
    %505 = sbr.rel (0) target = $region29
  $region28: #{zip_unet_forward.13} parent=0 // pred_region
    _
  $region29: #{zip_unet_forward.13} parent=0 // pred_fallthru
    _

// kernel: zip_unet_forward.14
$region0: #{zip_unet_forward.14}
  #allocation0 [shape = 'u32[]', space=smem, size = 0x4, offset = 0x4, fixed_abs, tag = 'smem constant byte address 0x4 - core index']
  #allocation1 [shape = 'u32[144,128]{1,0:T(1,128)}', space=vmem, size = 0x12000, scoped, tag = 'internal scratch']
  %s0 = inlined_call_operand.vmem [shape: bf16[32,256], index: 0, kind: input, shape index: {}]
  %s1 = inlined_call_operand.vmem [shape: bf16[256,128], index: 1, kind: input, shape index: {}]
  %s2 = inlined_call_operand.vmem [shape: f32[1,128], index: 2, kind: input, shape index: {}]
  %s3 = inlined_call_operand.vmem [shape: f32[1,128], index: 3, kind: input, shape index: {}]
  %s4 = inlined_call_operand.vmem [shape: f32[128,128], index: 4, kind: input, shape index: {}]
  %s5 = inlined_call_operand.vmem [shape: f32[32,128], index: 5, kind: output, shape index: {}]
  %s6 = sld [smem:[#allocation0]]
  $region30: #{zip_unet_forward.14} parent=0
    _
  %s8 = ssub.s32 1, %s6
  %s9 = scalar_select 0, %s8, %s6
  // Predicated region
  $region2: #{zip_unet_forward.14} parent=0 // pred_check
    _
  $region3: #{zip_unet_forward.14} parent=0 // pred_check_branch
    %11 = sbr.rel (0) target = $region5
  $region4: #{zip_unet_forward.14} parent=0 // pred_region
    _
  $region5: #{zip_unet_forward.14} parent=0 // pred_fallthru
    _
  // Predicated region
  $region6: #{zip_unet_forward.14} parent=0 // pred_check
    _
  $region7: #{zip_unet_forward.14} parent=0 // pred_check_branch
    %13 = sbr.rel (0) target = $region9
  $region8: #{zip_unet_forward.14} parent=0 // pred_region
    _
  $region9: #{zip_unet_forward.14} parent=0 // pred_fallthru
    _
  // Predicated region
  $region10: #{zip_unet_forward.14} parent=0 // pred_check
    _
  $region11: #{zip_unet_forward.14} parent=0 // pred_check_branch
    %15 = sbr.rel (0) target = $region13
  $region12: #{zip_unet_forward.14} parent=0 // pred_region
    _
  $region13: #{zip_unet_forward.14} parent=0 // pred_fallthru
    _
  // Predicated region
  $region14: #{zip_unet_forward.14} parent=0 // pred_check
    _
  $region15: #{zip_unet_forward.14} parent=0 // pred_check_branch
    %17 = sbr.rel (0) target = $region17
  $region16: #{zip_unet_forward.14} parent=0 // pred_region
    _
  $region17: #{zip_unet_forward.14} parent=0 // pred_fallthru
    _
  // Predicated region
  $region18: #{zip_unet_forward.14} parent=0 // pred_check
    _
  $region19: #{zip_unet_forward.14} parent=0 // pred_check_branch
    %19 = sbr.rel (0) target = $region21
  $region20: #{zip_unet_forward.14} parent=0 // pred_region
    _
  $region21: #{zip_unet_forward.14} parent=0 // pred_fallthru
    _
  %v21 = vld [vmem:[%s0] sm:$0xff]
  %v22 = vld [vmem:[%s0 + $0x8] sm:$0xff]
  %v23 = vld [vmem:[%s0 + $0x10] sm:$0xff]
  %v24 = vld [vmem:[%s0 + $0x18] sm:$0xff]
  %v25 = vld [vmem:[%s1] sm:$0xf]
  %v26 = vld [vmem:[%s1 + $0x4] sm:$0xf]
  %v27 = vld [vmem:[%s1 + $0x8] sm:$0xf]
  %v28 = vld [vmem:[%s1 + $0xc] sm:$0xf]
  %v29 = vld [vmem:[%s1 + $0x10] sm:$0xf]
  %v30 = vld [vmem:[%s1 + $0x14] sm:$0xf]
  %v31 = vld [vmem:[%s1 + $0x18] sm:$0xf]
  %v32 = vld [vmem:[%s1 + $0x1c] sm:$0xf]
  %v33 = vld [vmem:[%s1 + $0x20] sm:$0xf]
  %v34 = vld [vmem:[%s1 + $0x24] sm:$0xf]
  %v35 = vld [vmem:[%s1 + $0x28] sm:$0xf]
  %v36 = vld [vmem:[%s1 + $0x2c] sm:$0xf]
  %v37 = vld [vmem:[%s1 + $0x30] sm:$0xf]
  %v38 = vld [vmem:[%s1 + $0x34] sm:$0xf]
  %v39 = vld [vmem:[%s1 + $0x38] sm:$0xf]
  %v40 = vld [vmem:[%s1 + $0x3c] sm:$0xf]
  %v41 = vld [vmem:[%s1 + $0x40] sm:$0xf]
  %v42 = vld [vmem:[%s1 + $0x44] sm:$0xf]
  %v43 = vld [vmem:[%s1 + $0x48] sm:$0xf]
  %v44 = vld [vmem:[%s1 + $0x4c] sm:$0xf]
  %v45 = vld [vmem:[%s1 + $0x50] sm:$0xf]
  %v46 = vld [vmem:[%s1 + $0x54] sm:$0xf]
  %v47 = vld [vmem:[%s1 + $0x58] sm:$0xf]
  %v48 = vld [vmem:[%s1 + $0x5c] sm:$0xf]
  %v49 = vld [vmem:[%s1 + $0x60] sm:$0xf]
  %v50 = vld [vmem:[%s1 + $0x64] sm:$0xf]
  %v51 = vld [vmem:[%s1 + $0x68] sm:$0xf]
  %v52 = vld [vmem:[%s1 + $0x6c] sm:$0xf]
  %v53 = vld [vmem:[%s1 + $0x70] sm:$0xf]
  %v54 = vld [vmem:[%s1 + $0x74] sm:$0xf]
  %v55 = vld [vmem:[%s1 + $0x78] sm:$0xf]
  %v56 = vld [vmem:[%s1 + $0x7c] sm:$0xf]
  %v61 = vunpack.c.l.b16 %v21
  %v62 = vunpack.c.h.b16 %v21
  %v63 = vunpack.c.l.b16 %v22
  %v64 = vunpack.c.h.b16 %v22
  %v65 = vunpack.c.l.b16 %v23
  %v66 = vunpack.c.h.b16 %v23
  %v67 = vunpack.c.l.b16 %v24
  %v68 = vunpack.c.h.b16 %v24
  %v69 = vpack.c.b16 %v63, %v61
  %v70 = vpack.c.b16 %v64, %v62
  %v71 = vpack.c.b16 %v67, %v65
  %v72 = vpack.c.b16 %v68, %v66
  %v109 = vunpack.c.l.b16 %v25
  %v110 = vunpack.c.l.b16 %v26
  %v111 = vunpack.c.l.b16 %v27
  %v112 = vunpack.c.l.b16 %v28
  %v113 = vunpack.c.l.b16 %v29
  %v114 = vunpack.c.l.b16 %v30
  %v115 = vunpack.c.l.b16 %v31
  %v116 = vunpack.c.l.b16 %v32
  %v117 = vunpack.c.l.b16 %v33
  %v118 = vunpack.c.l.b16 %v34
  %v119 = vunpack.c.l.b16 %v35
  %v120 = vunpack.c.l.b16 %v36
  %v121 = vunpack.c.l.b16 %v37
  %v122 = vunpack.c.l.b16 %v38
  %v123 = vunpack.c.l.b16 %v39
  %v124 = vunpack.c.l.b16 %v40
  %v125 = vunpack.c.l.b16 %v41
  %v126 = vunpack.c.l.b16 %v42
  %v127 = vunpack.c.l.b16 %v43
  %v128 = vunpack.c.l.b16 %v44
  %v129 = vunpack.c.l.b16 %v45
  %v130 = vunpack.c.l.b16 %v46
  %v131 = vunpack.c.l.b16 %v47
  %v132 = vunpack.c.l.b16 %v48
  %v133 = vunpack.c.l.b16 %v49
  %v134 = vunpack.c.l.b16 %v50
  %v135 = vunpack.c.l.b16 %v51
  %v136 = vunpack.c.l.b16 %v52
  %v137 = vunpack.c.l.b16 %v53
  %v138 = vunpack.c.l.b16 %v54
  %v139 = vunpack.c.l.b16 %v55
  %v140 = vunpack.c.l.b16 %v56
  %v141 = vpack.c.b16 %v110, %v109
  %v142 = vpack.c.b16 %v112, %v111
  %v143 = vpack.c.b16 %v114, %v113
  %v144 = vpack.c.b16 %v116, %v115
  %v145 = vpack.c.b16 %v118, %v117
  %v146 = vpack.c.b16 %v120, %v119
  %v147 = vpack.c.b16 %v122, %v121
  %v148 = vpack.c.b16 %v124, %v123
  %v149 = vpack.c.b16 %v126, %v125
  %v150 = vpack.c.b16 %v128, %v127
  %v151 = vpack.c.b16 %v130, %v129
  %v152 = vpack.c.b16 %v132, %v131
  %v153 = vpack.c.b16 %v134, %v133
  %v154 = vpack.c.b16 %v136, %v135
  %v155 = vpack.c.b16 %v138, %v137
  %v156 = vpack.c.b16 %v140, %v139
  %173 = vmatprep.subr.bf16.mxu0 0
  %174 = vmatpush1.bf16.msra.mxu0 %v148
  %175 = vmatprep.subr.bf16.mxu0 0
  %176 = vmatpush1.bf16.msra.mxu0 %v147
  %177 = vmatprep.subr.bf16.mxu0 0
  %178 = vmatpush1.bf16.msra.mxu0 %v146
  %179 = vmatprep.subr.bf16.mxu0 0
  %180 = vmatpush1.bf16.msra.mxu0 %v145
  %181 = vmatprep.subr.bf16.mxu0 0
  %182 = vmatpush1.bf16.msra.mxu0 %v144
  %183 = vmatprep.subr.bf16.mxu0 0
  %184 = vmatpush1.bf16.msra.mxu0 %v143
  %185 = vmatprep.subr.bf16.mxu0 0
  %186 = vmatpush1.bf16.msra.mxu0 %v142
  %187 = vmatprep.subr.bf16.mxu0 0
  %188 = vmatpush1.bf16.msra.mxu0 %v141
  %189 = vmatprep.subr.bf16.mxu0 0
  %190 = vmatpush2.bf16.msra.mxu0 %v156
  %191 = vmatprep.subr.bf16.mxu0 0
  %192 = vmatpush2.bf16.msra.mxu0 %v155
  %193 = vmatprep.subr.bf16.mxu0 0
  %194 = vmatpush2.bf16.msra.mxu0 %v154
  %195 = vmatprep.subr.bf16.mxu0 0
  %196 = vmatpush2.bf16.msra.mxu0 %v153
  %197 = vmatprep.subr.bf16.mxu0 0
  %198 = vmatpush2.bf16.msra.mxu0 %v152
  %199 = vmatprep.subr.bf16.mxu0 0
  %200 = vmatpush2.bf16.msra.mxu0 %v151
  %201 = vmatprep.subr.bf16.mxu0 0
  %202 = vmatpush2.bf16.msra.mxu0 %v150
  %203 = vmatprep.subr.bf16.mxu0 0
  %204 = vmatpush2.bf16.msra.mxu0 %v149
  %205 = vmatprep.mubr.bf16.mxu0 %v70
  %206 = vmatmul.mubr.bf16.gmra.mxu0 %v69
  %v207 = vpop.f32.mrf.mxu0
  %v208 = vadd.f32 0.0, %v207
  %v209 = vpop.f32.mrf.mxu0
  %v210 = vpop.f32.mrf.mxu0
  %v211 = vadd.f32 0.0, %v210
  %v212 = vpop.f32.mrf.mxu0
  %213 = vmatprep.mubr.bf16.mxu0 %v72
  %214 = vmatmul.mubr.bf16.gmra.mxu0 %v71
  %v215 = vpop.f32.mrf.mxu0
  %v216 = vadd.f32 0.0, %v215
  %v217 = vpop.f32.mrf.mxu0
  %v218 = vpop.f32.mrf.mxu0
  %v219 = vadd.f32 0.0, %v218
  %v220 = vpop.f32.mrf.mxu0
  %221 = vdwg.mxu0
  %v222 = vadd.f32 %v208, %v211
  %v223 = vadd.f32 %v222, %v216
  %v224 = vadd.f32 %v223, %v219
  %v225 = vrot.slane %v224, 4
  %v226 = vadd.f32 %v224, %v225
  %v227 = vrot.slane %v226, 2
  %v228 = vadd.f32 %v226, %v227
  %v229 = vrot.slane %v228, 1
  %v230 = vadd.f32 %v228, %v229
  %v231 = vmul.f32 %v208, %v208
  %v232 = vmul.f32 %v211, %v211
  %v233 = vmul.f32 %v216, %v216
  %v234 = vmul.f32 %v219, %v219
  %v235 = vadd.f32 %v231, %v232
  %v236 = vadd.f32 %v235, %v233
  %v237 = vadd.f32 %v236, %v234
  %v238 = vrot.slane %v237, 4
  %v239 = vadd.f32 %v237, %v238
  %v240 = vrot.slane %v239, 2
  %v241 = vadd.f32 %v239, %v240
  %v242 = vrot.slane %v241, 1
  %v243 = vadd.f32 %v241, %v242
  %vm244 = vcmask 1040384
  %v245 = vsel %vm244, %v230, %v243
  %v246 = vld [vmem:[%s4] sm:$0xff]
  %v247 = vld [vmem:[%s4 + $0x8] sm:$0xff]
  %v248 = vld [vmem:[%s4 + $0x10] sm:$0xff]
  %v249 = vld [vmem:[%s4 + $0x18] sm:$0xff]
  %v250 = vld [vmem:[%s4 + $0x20] sm:$0xff]
  %v251 = vld [vmem:[%s4 + $0x28] sm:$0xff]
  %v252 = vld [vmem:[%s4 + $0x30] sm:$0xff]
  %v253 = vld [vmem:[%s4 + $0x38] sm:$0xff]
  %v254 = vld [vmem:[%s4 + $0x40] sm:$0xff]
  %v255 = vld [vmem:[%s4 + $0x48] sm:$0xff]
  %v256 = vld [vmem:[%s4 + $0x50] sm:$0xff]
  %v257 = vld [vmem:[%s4 + $0x58] sm:$0xff]
  %v258 = vld [vmem:[%s4 + $0x60] sm:$0xff]
  %v259 = vld [vmem:[%s4 + $0x68] sm:$0xff]
  %v260 = vld [vmem:[%s4 + $0x70] sm:$0xff]
  %v261 = vld [vmem:[%s4 + $0x78] sm:$0xff]
  %262 = vmatprep.subr.mxu0 0.0
  %263 = vmatpush1.msra.mxu0 %v261
  %264 = vmatprep.subr.mxu0 0.0
  %265 = vmatpush1.msra.mxu0 %v260
  %266 = vmatprep.subr.mxu0 0.0
  %267 = vmatpush1.msra.mxu0 %v259
  %268 = vmatprep.subr.mxu0 0.0
  %269 = vmatpush1.msra.mxu0 %v258
  %270 = vmatprep.subr.mxu0 0.0
  %271 = vmatpush1.msra.mxu0 %v257
  %272 = vmatprep.subr.mxu0 0.0
  %273 = vmatpush1.msra.mxu0 %v256
  %274 = vmatprep.subr.mxu0 0.0
  %275 = vmatpush1.msra.mxu0 %v255
  %276 = vmatprep.subr.mxu0 0.0
  %277 = vmatpush1.msra.mxu0 %v254
  %278 = vmatprep.subr.mxu0 0.0
  %279 = vmatpush1.msra.mxu0 %v253
  %280 = vmatprep.subr.mxu0 0.0
  %281 = vmatpush1.msra.mxu0 %v252
  %282 = vmatprep.subr.mxu0 0.0
  %283 = vmatpush1.msra.mxu0 %v251
  %284 = vmatprep.subr.mxu0 0.0
  %285 = vmatpush1.msra.mxu0 %v250
  %286 = vmatprep.subr.mxu0 0.0
  %287 = vmatpush1.msra.mxu0 %v249
  %288 = vmatprep.subr.mxu0 0.0
  %289 = vmatpush1.msra.mxu0 %v248
  %290 = vmatprep.subr.mxu0 0.0
  %291 = vmatpush1.msra.mxu0 %v247
  %292 = vmatprep.subr.mxu0 0.0
  %293 = vmatpush1.msra.mxu0 %v246
  %294 = vmatprep.subr.mxu0 0.0
  %295 = vmatpush2.msra.mxu0 0.0
  %296 = vmatprep.subr.mxu0 0.0
  %297 = vmatpush2.msra.mxu0 0.0
  %298 = vmatprep.subr.mxu0 0.0
  %299 = vmatpush2.msra.mxu0 0.0
  %300 = vmatprep.subr.mxu0 0.0
  %301 = vmatpush2.msra.mxu0 0.0
  %302 = vmatprep.subr.mxu0 0.0
  %303 = vmatpush2.msra.mxu0 0.0
  %304 = vmatprep.subr.mxu0 0.0
  %305 = vmatpush2.msra.mxu0 0.0
  %306 = vmatprep.subr.mxu0 0.0
  %307 = vmatpush2.msra.mxu0 0.0
  %308 = vmatprep.subr.mxu0 0.0
  %309 = vmatpush2.msra.mxu0 0.0
  %310 = vmatprep.subr.mxu0 0.0
  %311 = vmatpush2.msra.mxu0 0.0
  %312 = vmatprep.subr.mxu0 0.0
  %313 = vmatpush2.msra.mxu0 0.0
  %314 = vmatprep.subr.mxu0 0.0
  %315 = vmatpush2.msra.mxu0 0.0
  %316 = vmatprep.subr.mxu0 0.0
  %317 = vmatpush2.msra.mxu0 0.0
  %318 = vmatprep.subr.mxu0 0.0
  %319 = vmatpush2.msra.mxu0 0.0
  %320 = vmatprep.subr.mxu0 0.0
  %321 = vmatpush2.msra.mxu0 0.0
  %322 = vmatprep.subr.mxu0 0.0
  %323 = vmatpush2.msra.mxu0 0.0
  %324 = vmatprep.subr.mxu0 0.0
  %325 = vmatpush2.msra.mxu0 0.0
  %326 = vmatprep.mubr.f32.mxu0 0.0
  %327 = vmatmul.mubr.f32.gmra.mxu0 %v245
  %v328 = vpop.f32.mrf.mxu0
  %v329 = vadd.f32 0.0, %v328
  %v330 = vpop.f32.mrf.mxu0
  %331 = vdwg.mxu0
  %v332 = vmul.f32 %v329, 0.03125
  %v333 = vmul.f32 %v332, %v332
  %v335 = vrot.slane %v333, 7
  %v337 = vsub.f32 %v332, %v335
  %v338 = vlaneseq
  %v339 = vshrl.u32 %v338, 7
  %v340 = vsub.s32 0, %v339
  %v341 = vrot.slane %v332, %v340
  %v342 = vsub.f32 %v208, %v341
  %v343 = vsub.f32 %v211, %v341
  %v344 = vsub.f32 %v216, %v341
  %v345 = vsub.f32 %v219, %v341
  %v346 = vadd.f32 %v337, 1e-05
  %v347 = vrsqrt.pop %v346
  %v348 = vlaneseq
  %v349 = vshrl.u32 %v348, 7
  %v350 = vsub.s32 1, %v349
  %v351 = vrot.slane %v347, %v350
  %v352 = vmul.f32 %v342, %v351
  %v353 = vmul.f32 %v343, %v351
  %v354 = vmul.f32 %v344, %v351
  %v355 = vmul.f32 %v345, %v351
  %v356 = vld [vmem:[%s2] sm:$0x1]
  %v358 = vlaneseq
  %v359 = vshrl.u32 %v358, 7
  %v360 = vsub.s32 0, %v359
  %v361 = vrot.slane %v356, %v360
  %v363 = vmul.f32 %v352, %v361
  %v364 = vmul.f32 %v353, %v361
  %v365 = vmul.f32 %v354, %v361
  %v366 = vmul.f32 %v355, %v361
  %v367 = vld [vmem:[%s3] sm:$0x1]
  %v369 = vlaneseq
  %v370 = vshrl.u32 %v369, 7
  %v371 = vsub.s32 0, %v370
  %v372 = vrot.slane %v367, %v371
  %v374 = vadd.f32 %v363, %v372
  %v375 = vadd.f32 %v364, %v372
  %v376 = vadd.f32 %v365, %v372
  %v377 = vadd.f32 %v366, %v372
  %378 = vst [vmem:[%s5] sm:$0xff] %v374
  %379 = vst [vmem:[%s5 + $0x8] sm:$0xff] %v375
  %380 = vst [vmem:[%s5 + $0x10] sm:$0xff] %v376
  %381 = vst [vmem:[%s5 + $0x18] sm:$0xff] %v377
  // Predicated region
  $region22: #{zip_unet_forward.14} parent=0 // pred_check
    _
  $region23: #{zip_unet_forward.14} parent=0 // pred_check_branch
    %383 = sbr.rel (0) target = $region25
  $region24: #{zip_unet_forward.14} parent=0 // pred_region
    _
  $region25: #{zip_unet_forward.14} parent=0 // pred_fallthru
    _
  // Predicated region
  $region26: #{zip_unet_forward.14} parent=0 // pred_check
    _
  $region27: #{zip_unet_forward.14} parent=0 // pred_check_branch
    %385 = sbr.rel (0) target = $region29
  $region28: #{zip_unet_forward.14} parent=0 // pred_region
    _
  $region29: #{zip_unet_forward.14} parent=0 // pred_fallthru
    _

// kernel: zip_unet_forward.15
$region0: #{zip_unet_forward.15}
  #allocation0 [shape = 'u32[]', space=smem, size = 0x4, offset = 0x4, fixed_abs, tag = 'smem constant byte address 0x4 - core index']
  #allocation1 [shape = 'u32[144,128]{1,0:T(1,128)}', space=vmem, size = 0x12000, scoped, tag = 'internal scratch']
  %s0 = inlined_call_operand.vmem [shape: bf16[8,512], index: 0, kind: input, shape index: {}]
  %s1 = inlined_call_operand.vmem [shape: bf16[512,128], index: 1, kind: input, shape index: {}]
  %s2 = inlined_call_operand.vmem [shape: f32[1,128], index: 2, kind: input, shape index: {}]
  %s3 = inlined_call_operand.vmem [shape: f32[1,128], index: 3, kind: input, shape index: {}]
  %s4 = inlined_call_operand.vmem [shape: f32[128,128], index: 4, kind: input, shape index: {}]
  %s5 = inlined_call_operand.vmem [shape: f32[8,128], index: 5, kind: output, shape index: {}]
  %s6 = sld [smem:[#allocation0]]
  $region30: #{zip_unet_forward.15} parent=0
    _
  %s8 = ssub.s32 1, %s6
  %s9 = scalar_select 0, %s8, %s6
  // Predicated region
  $region2: #{zip_unet_forward.15} parent=0 // pred_check
    _
  $region3: #{zip_unet_forward.15} parent=0 // pred_check_branch
    %11 = sbr.rel (0) target = $region5
  $region4: #{zip_unet_forward.15} parent=0 // pred_region
    _
  $region5: #{zip_unet_forward.15} parent=0 // pred_fallthru
    _
  // Predicated region
  $region6: #{zip_unet_forward.15} parent=0 // pred_check
    _
  $region7: #{zip_unet_forward.15} parent=0 // pred_check_branch
    %13 = sbr.rel (0) target = $region9
  $region8: #{zip_unet_forward.15} parent=0 // pred_region
    _
  $region9: #{zip_unet_forward.15} parent=0 // pred_fallthru
    _
  // Predicated region
  $region10: #{zip_unet_forward.15} parent=0 // pred_check
    _
  $region11: #{zip_unet_forward.15} parent=0 // pred_check_branch
    %15 = sbr.rel (0) target = $region13
  $region12: #{zip_unet_forward.15} parent=0 // pred_region
    _
  $region13: #{zip_unet_forward.15} parent=0 // pred_fallthru
    _
  // Predicated region
  $region14: #{zip_unet_forward.15} parent=0 // pred_check
    _
  $region15: #{zip_unet_forward.15} parent=0 // pred_check_branch
    %17 = sbr.rel (0) target = $region17
  $region16: #{zip_unet_forward.15} parent=0 // pred_region
    _
  $region17: #{zip_unet_forward.15} parent=0 // pred_fallthru
    _
  // Predicated region
  $region18: #{zip_unet_forward.15} parent=0 // pred_check
    _
  $region19: #{zip_unet_forward.15} parent=0 // pred_check_branch
    %19 = sbr.rel (0) target = $region21
  $region20: #{zip_unet_forward.15} parent=0 // pred_region
    _
  $region21: #{zip_unet_forward.15} parent=0 // pred_fallthru
    _
  %v21 = vld [vmem:[%s0] sm:$0xff]
  %v22 = vld [vmem:[%s0 + $0x8] sm:$0xff]
  %v23 = vld [vmem:[%s1] sm:$0xf]
  %v24 = vld [vmem:[%s1 + $0x4] sm:$0xf]
  %v25 = vld [vmem:[%s1 + $0x8] sm:$0xf]
  %v26 = vld [vmem:[%s1 + $0xc] sm:$0xf]
  %v27 = vld [vmem:[%s1 + $0x10] sm:$0xf]
  %v28 = vld [vmem:[%s1 + $0x14] sm:$0xf]
  %v29 = vld [vmem:[%s1 + $0x18] sm:$0xf]
  %v30 = vld [vmem:[%s1 + $0x1c] sm:$0xf]
  %v31 = vld [vmem:[%s1 + $0x20] sm:$0xf]
  %v32 = vld [vmem:[%s1 + $0x24] sm:$0xf]
  %v33 = vld [vmem:[%s1 + $0x28] sm:$0xf]
  %v34 = vld [vmem:[%s1 + $0x2c] sm:$0xf]
  %v35 = vld [vmem:[%s1 + $0x30] sm:$0xf]
  %v36 = vld [vmem:[%s1 + $0x34] sm:$0xf]
  %v37 = vld [vmem:[%s1 + $0x38] sm:$0xf]
  %v38 = vld [vmem:[%s1 + $0x3c] sm:$0xf]
  %v39 = vld [vmem:[%s1 + $0x40] sm:$0xf]
  %v40 = vld [vmem:[%s1 + $0x44] sm:$0xf]
  %v41 = vld [vmem:[%s1 + $0x48] sm:$0xf]
  %v42 = vld [vmem:[%s1 + $0x4c] sm:$0xf]
  %v43 = vld [vmem:[%s1 + $0x50] sm:$0xf]
  %v44 = vld [vmem:[%s1 + $0x54] sm:$0xf]
  %v45 = vld [vmem:[%s1 + $0x58] sm:$0xf]
  %v46 = vld [vmem:[%s1 + $0x5c] sm:$0xf]
  %v47 = vld [vmem:[%s1 + $0x60] sm:$0xf]
  %v48 = vld [vmem:[%s1 + $0x64] sm:$0xf]
  %v49 = vld [vmem:[%s1 + $0x68] sm:$0xf]
  %v50 = vld [vmem:[%s1 + $0x6c] sm:$0xf]
  %v51 = vld [vmem:[%s1 + $0x70] sm:$0xf]
  %v52 = vld [vmem:[%s1 + $0x74] sm:$0xf]
  %v53 = vld [vmem:[%s1 + $0x78] sm:$0xf]
  %v54 = vld [vmem:[%s1 + $0x7c] sm:$0xf]
  %v55 = vld [vmem:[%s1 + $0x80] sm:$0xf]
  %v56 = vld [vmem:[%s1 + $0x84] sm:$0xf]
  %v57 = vld [vmem:[%s1 + $0x88] sm:$0xf]
  %v58 = vld [vmem:[%s1 + $0x8c] sm:$0xf]
  %v59 = vld [vmem:[%s1 + $0x90] sm:$0xf]
  %v60 = vld [vmem:[%s1 + $0x94] sm:$0xf]
  %v61 = vld [vmem:[%s1 + $0x98] sm:$0xf]
  %v62 = vld [vmem:[%s1 + $0x9c] sm:$0xf]
  %v63 = vld [vmem:[%s1 + $0xa0] sm:$0xf]
  %v64 = vld [vmem:[%s1 + $0xa4] sm:$0xf]
  %v65 = vld [vmem:[%s1 + $0xa8] sm:$0xf]
  %v66 = vld [vmem:[%s1 + $0xac] sm:$0xf]
  %v67 = vld [vmem:[%s1 + $0xb0] sm:$0xf]
  %v68 = vld [vmem:[%s1 + $0xb4] sm:$0xf]
  %v69 = vld [vmem:[%s1 + $0xb8] sm:$0xf]
  %v70 = vld [vmem:[%s1 + $0xbc] sm:$0xf]
  %v71 = vld [vmem:[%s1 + $0xc0] sm:$0xf]
  %v72 = vld [vmem:[%s1 + $0xc4] sm:$0xf]
  %v73 = vld [vmem:[%s1 + $0xc8] sm:$0xf]
  %v74 = vld [vmem:[%s1 + $0xcc] sm:$0xf]
  %v75 = vld [vmem:[%s1 + $0xd0] sm:$0xf]
  %v76 = vld [vmem:[%s1 + $0xd4] sm:$0xf]
  %v77 = vld [vmem:[%s1 + $0xd8] sm:$0xf]
  %v78 = vld [vmem:[%s1 + $0xdc] sm:$0xf]
  %v79 = vld [vmem:[%s1 + $0xe0] sm:$0xf]
  %v80 = vld [vmem:[%s1 + $0xe4] sm:$0xf]
  %v81 = vld [vmem:[%s1 + $0xe8] sm:$0xf]
  %v82 = vld [vmem:[%s1 + $0xec] sm:$0xf]
  %v83 = vld [vmem:[%s1 + $0xf0] sm:$0xf]
  %v84 = vld [vmem:[%s1 + $0xf4] sm:$0xf]
  %v85 = vld [vmem:[%s1 + $0xf8] sm:$0xf]
  %v86 = vld [vmem:[%s1 + $0xfc] sm:$0xf]
  %v89 = vunpack.c.l.b16 %v21
  %v90 = vunpack.c.h.b16 %v21
  %v91 = vunpack.c.l.b16 %v22
  %v92 = vunpack.c.h.b16 %v22
  %v93 = vpack.c.b16 %v89, %v89
  %v94 = vpack.c.b16 %v90, %v90
  %v95 = vpack.c.b16 %v91, %v91
  %v96 = vpack.c.b16 %v92, %v92
  %v165 = vunpack.c.l.b16 %v23
  %v166 = vunpack.c.l.b16 %v24
  %v167 = vunpack.c.l.b16 %v25
  %v168 = vunpack.c.l.b16 %v26
  %v169 = vunpack.c.l.b16 %v27
  %v170 = vunpack.c.l.b16 %v28
  %v171 = vunpack.c.l.b16 %v29
  %v172 = vunpack.c.l.b16 %v30
  %v173 = vunpack.c.l.b16 %v31
  %v174 = vunpack.c.l.b16 %v32
  %v175 = vunpack.c.l.b16 %v33
  %v176 = vunpack.c.l.b16 %v34
  %v177 = vunpack.c.l.b16 %v35
  %v178 = vunpack.c.l.b16 %v36
  %v179 = vunpack.c.l.b16 %v37
  %v180 = vunpack.c.l.b16 %v38
  %v181 = vunpack.c.l.b16 %v39
  %v182 = vunpack.c.l.b16 %v40
  %v183 = vunpack.c.l.b16 %v41
  %v184 = vunpack.c.l.b16 %v42
  %v185 = vunpack.c.l.b16 %v43
  %v186 = vunpack.c.l.b16 %v44
  %v187 = vunpack.c.l.b16 %v45
  %v188 = vunpack.c.l.b16 %v46
  %v189 = vunpack.c.l.b16 %v47
  %v190 = vunpack.c.l.b16 %v48
  %v191 = vunpack.c.l.b16 %v49
  %v192 = vunpack.c.l.b16 %v50
  %v193 = vunpack.c.l.b16 %v51
  %v194 = vunpack.c.l.b16 %v52
  %v195 = vunpack.c.l.b16 %v53
  %v196 = vunpack.c.l.b16 %v54
  %v197 = vunpack.c.l.b16 %v55
  %v198 = vunpack.c.l.b16 %v56
  %v199 = vunpack.c.l.b16 %v57
  %v200 = vunpack.c.l.b16 %v58
  %v201 = vunpack.c.l.b16 %v59
  %v202 = vunpack.c.l.b16 %v60
  %v203 = vunpack.c.l.b16 %v61
  %v204 = vunpack.c.l.b16 %v62
  %v205 = vunpack.c.l.b16 %v63
  %v206 = vunpack.c.l.b16 %v64
  %v207 = vunpack.c.l.b16 %v65
  %v208 = vunpack.c.l.b16 %v66
  %v209 = vunpack.c.l.b16 %v67
  %v210 = vunpack.c.l.b16 %v68
  %v211 = vunpack.c.l.b16 %v69
  %v212 = vunpack.c.l.b16 %v70
  %v213 = vunpack.c.l.b16 %v71
  %v214 = vunpack.c.l.b16 %v72
  %v215 = vunpack.c.l.b16 %v73
  %v216 = vunpack.c.l.b16 %v74
  %v217 = vunpack.c.l.b16 %v75
  %v218 = vunpack.c.l.b16 %v76
  %v219 = vunpack.c.l.b16 %v77
  %v220 = vunpack.c.l.b16 %v78
  %v221 = vunpack.c.l.b16 %v79
  %v222 = vunpack.c.l.b16 %v80
  %v223 = vunpack.c.l.b16 %v81
  %v224 = vunpack.c.l.b16 %v82
  %v225 = vunpack.c.l.b16 %v83
  %v226 = vunpack.c.l.b16 %v84
  %v227 = vunpack.c.l.b16 %v85
  %v228 = vunpack.c.l.b16 %v86
  %v229 = vpack.c.b16 %v166, %v165
  %v230 = vpack.c.b16 %v168, %v167
  %v231 = vpack.c.b16 %v170, %v169
  %v232 = vpack.c.b16 %v172, %v171
  %v233 = vpack.c.b16 %v174, %v173
  %v234 = vpack.c.b16 %v176, %v175
  %v235 = vpack.c.b16 %v178, %v177
  %v236 = vpack.c.b16 %v180, %v179
  %v237 = vpack.c.b16 %v182, %v181
  %v238 = vpack.c.b16 %v184, %v183
  %v239 = vpack.c.b16 %v186, %v185
  %v240 = vpack.c.b16 %v188, %v187
  %v241 = vpack.c.b16 %v190, %v189
  %v242 = vpack.c.b16 %v192, %v191
  %v243 = vpack.c.b16 %v194, %v193
  %v244 = vpack.c.b16 %v196, %v195
  %v245 = vpack.c.b16 %v198, %v197
  %v246 = vpack.c.b16 %v200, %v199
  %v247 = vpack.c.b16 %v202, %v201
  %v248 = vpack.c.b16 %v204, %v203
  %v249 = vpack.c.b16 %v206, %v205
  %v250 = vpack.c.b16 %v208, %v207
  %v251 = vpack.c.b16 %v210, %v209
  %v252 = vpack.c.b16 %v212, %v211
  %v253 = vpack.c.b16 %v214, %v213
  %v254 = vpack.c.b16 %v216, %v215
  %v255 = vpack.c.b16 %v218, %v217
  %v256 = vpack.c.b16 %v220, %v219
  %v257 = vpack.c.b16 %v222, %v221
  %v258 = vpack.c.b16 %v224, %v223
  %v259 = vpack.c.b16 %v226, %v225
  %v260 = vpack.c.b16 %v228, %v227
  %293 = vmatprep.subr.bf16.mxu0 0
  %294 = vmatpush1.bf16.msra.mxu0 %v236
  %295 = vmatprep.subr.bf16.mxu0 0
  %296 = vmatpush1.bf16.msra.mxu0 %v235
  %297 = vmatprep.subr.bf16.mxu0 0
  %298 = vmatpush1.bf16.msra.mxu0 %v234
  %299 = vmatprep.subr.bf16.mxu0 0
  %300 = vmatpush1.bf16.msra.mxu0 %v233
  %301 = vmatprep.subr.bf16.mxu0 0
  %302 = vmatpush1.bf16.msra.mxu0 %v232
  %303 = vmatprep.subr.bf16.mxu0 0
  %304 = vmatpush1.bf16.msra.mxu0 %v231
  %305 = vmatprep.subr.bf16.mxu0 0
  %306 = vmatpush1.bf16.msra.mxu0 %v230
  %307 = vmatprep.subr.bf16.mxu0 0
  %308 = vmatpush1.bf16.msra.mxu0 %v229
  %309 = vmatprep.subr.bf16.mxu0 0
  %310 = vmatpush2.bf16.msra.mxu0 %v244
  %311 = vmatprep.subr.bf16.mxu0 0
  %312 = vmatpush2.bf16.msra.mxu0 %v243
  %313 = vmatprep.subr.bf16.mxu0 0
  %314 = vmatpush2.bf16.msra.mxu0 %v242
  %315 = vmatprep.subr.bf16.mxu0 0
  %316 = vmatpush2.bf16.msra.mxu0 %v241
  %317 = vmatprep.subr.bf16.mxu0 0
  %318 = vmatpush2.bf16.msra.mxu0 %v240
  %319 = vmatprep.subr.bf16.mxu0 0
  %320 = vmatpush2.bf16.msra.mxu0 %v239
  %321 = vmatprep.subr.bf16.mxu0 0
  %322 = vmatpush2.bf16.msra.mxu0 %v238
  %323 = vmatprep.subr.bf16.mxu0 0
  %324 = vmatpush2.bf16.msra.mxu0 %v237
  %325 = vmatprep.mubr.bf16.mxu0 %v94
  %326 = vmatmul.mubr.bf16.gmra.mxu0 %v93
  %v327 = vpop.f32.mrf.mxu0
  %v328 = vadd.f32 0.0, %v327
  %v329 = vpop.f32.mrf.mxu0
  %v330 = vpop.f32.mrf.mxu0
  %v331 = vpop.f32.mrf.mxu0
  %332 = vdwg.mxu0
  %333 = vmatprep.subr.bf16.mxu0 0
  %334 = vmatpush1.bf16.msra.mxu0 %v252
  %335 = vmatprep.subr.bf16.mxu0 0
  %336 = vmatpush1.bf16.msra.mxu0 %v251
  %337 = vmatprep.subr.bf16.mxu0 0
  %338 = vmatpush1.bf16.msra.mxu0 %v250
  %339 = vmatprep.subr.bf16.mxu0 0
  %340 = vmatpush1.bf16.msra.mxu0 %v249
  %341 = vmatprep.subr.bf16.mxu0 0
  %342 = vmatpush1.bf16.msra.mxu0 %v248
  %343 = vmatprep.subr.bf16.mxu0 0
  %344 = vmatpush1.bf16.msra.mxu0 %v247
  %345 = vmatprep.subr.bf16.mxu0 0
  %346 = vmatpush1.bf16.msra.mxu0 %v246
  %347 = vmatprep.subr.bf16.mxu0 0
  %348 = vmatpush1.bf16.msra.mxu0 %v245
  %349 = vmatprep.subr.bf16.mxu0 0
  %350 = vmatpush2.bf16.msra.mxu0 %v260
  %351 = vmatprep.subr.bf16.mxu0 0
  %352 = vmatpush2.bf16.msra.mxu0 %v259
  %353 = vmatprep.subr.bf16.mxu0 0
  %354 = vmatpush2.bf16.msra.mxu0 %v258
  %355 = vmatprep.subr.bf16.mxu0 0
  %356 = vmatpush2.bf16.msra.mxu0 %v257
  %357 = vmatprep.subr.bf16.mxu0 0
  %358 = vmatpush2.bf16.msra.mxu0 %v256
  %359 = vmatprep.subr.bf16.mxu0 0
  %360 = vmatpush2.bf16.msra.mxu0 %v255
  %361 = vmatprep.subr.bf16.mxu0 0
  %362 = vmatpush2.bf16.msra.mxu0 %v254
  %363 = vmatprep.subr.bf16.mxu0 0
  %364 = vmatpush2.bf16.msra.mxu0 %v253
  %365 = vmatprep.mubr.bf16.mxu0 %v96
  %366 = vmatmul.mubr.bf16.gmra.mxu0 %v95
  %v367 = vpop.f32.mrf.mxu0
  %v368 = vadd.f32 %v328, %v367
  %v369 = vpop.f32.mrf.mxu0
  %v370 = vpop.f32.mrf.mxu0
  %v371 = vpop.f32.mrf.mxu0
  %372 = vdwg.mxu0
  %v373 = vrot.slane %v368, 4
  %v374 = vadd.f32 %v368, %v373
  %v375 = vrot.slane %v374, 2
  %v376 = vadd.f32 %v374, %v375
  %v377 = vrot.slane %v376, 1
  %v378 = vadd.f32 %v376, %v377
  %v379 = vmul.f32 %v368, %v368
  %v380 = vrot.slane %v379, 4
  %v381 = vadd.f32 %v379, %v380
  %v382 = vrot.slane %v381, 2
  %v383 = vadd.f32 %v381, %v382
  %v384 = vrot.slane %v383, 1
  %v385 = vadd.f32 %v383, %v384
  %vm386 = vcmask 1040384
  %v387 = vsel %vm386, %v378, %v385
  %v388 = vld [vmem:[%s4] sm:$0xff]
  %v389 = vld [vmem:[%s4 + $0x8] sm:$0xff]
  %v390 = vld [vmem:[%s4 + $0x10] sm:$0xff]
  %v391 = vld [vmem:[%s4 + $0x18] sm:$0xff]
  %v392 = vld [vmem:[%s4 + $0x20] sm:$0xff]
  %v393 = vld [vmem:[%s4 + $0x28] sm:$0xff]
  %v394 = vld [vmem:[%s4 + $0x30] sm:$0xff]
  %v395 = vld [vmem:[%s4 + $0x38] sm:$0xff]
  %v396 = vld [vmem:[%s4 + $0x40] sm:$0xff]
  %v397 = vld [vmem:[%s4 + $0x48] sm:$0xff]
  %v398 = vld [vmem:[%s4 + $0x50] sm:$0xff]
  %v399 = vld [vmem:[%s4 + $0x58] sm:$0xff]
  %v400 = vld [vmem:[%s4 + $0x60] sm:$0xff]
  %v401 = vld [vmem:[%s4 + $0x68] sm:$0xff]
  %v402 = vld [vmem:[%s4 + $0x70] sm:$0xff]
  %v403 = vld [vmem:[%s4 + $0x78] sm:$0xff]
  %404 = vmatprep.subr.mxu0 0.0
  %405 = vmatpush1.msra.mxu0 %v403
  %406 = vmatprep.subr.mxu0 0.0
  %407 = vmatpush1.msra.mxu0 %v402
  %408 = vmatprep.subr.mxu0 0.0
  %409 = vmatpush1.msra.mxu0 %v401
  %410 = vmatprep.subr.mxu0 0.0
  %411 = vmatpush1.msra.mxu0 %v400
  %412 = vmatprep.subr.mxu0 0.0
  %413 = vmatpush1.msra.mxu0 %v399
  %414 = vmatprep.subr.mxu0 0.0
  %415 = vmatpush1.msra.mxu0 %v398
  %416 = vmatprep.subr.mxu0 0.0
  %417 = vmatpush1.msra.mxu0 %v397
  %418 = vmatprep.subr.mxu0 0.0
  %419 = vmatpush1.msra.mxu0 %v396
  %420 = vmatprep.subr.mxu0 0.0
  %421 = vmatpush1.msra.mxu0 %v395
  %422 = vmatprep.subr.mxu0 0.0
  %423 = vmatpush1.msra.mxu0 %v394
  %424 = vmatprep.subr.mxu0 0.0
  %425 = vmatpush1.msra.mxu0 %v393
  %426 = vmatprep.subr.mxu0 0.0
  %427 = vmatpush1.msra.mxu0 %v392
  %428 = vmatprep.subr.mxu0 0.0
  %429 = vmatpush1.msra.mxu0 %v391
  %430 = vmatprep.subr.mxu0 0.0
  %431 = vmatpush1.msra.mxu0 %v390
  %432 = vmatprep.subr.mxu0 0.0
  %433 = vmatpush1.msra.mxu0 %v389
  %434 = vmatprep.subr.mxu0 0.0
  %435 = vmatpush1.msra.mxu0 %v388
  %436 = vmatprep.subr.mxu0 0.0
  %437 = vmatpush2.msra.mxu0 0.0
  %438 = vmatprep.subr.mxu0 0.0
  %439 = vmatpush2.msra.mxu0 0.0
  %440 = vmatprep.subr.mxu0 0.0
  %441 = vmatpush2.msra.mxu0 0.0
  %442 = vmatprep.subr.mxu0 0.0
  %443 = vmatpush2.msra.mxu0 0.0
  %444 = vmatprep.subr.mxu0 0.0
  %445 = vmatpush2.msra.mxu0 0.0
  %446 = vmatprep.subr.mxu0 0.0
  %447 = vmatpush2.msra.mxu0 0.0
  %448 = vmatprep.subr.mxu0 0.0
  %449 = vmatpush2.msra.mxu0 0.0
  %450 = vmatprep.subr.mxu0 0.0
  %451 = vmatpush2.msra.mxu0 0.0
  %452 = vmatprep.subr.mxu0 0.0
  %453 = vmatpush2.msra.mxu0 0.0
  %454 = vmatprep.subr.mxu0 0.0
  %455 = vmatpush2.msra.mxu0 0.0
  %456 = vmatprep.subr.mxu0 0.0
  %457 = vmatpush2.msra.mxu0 0.0
  %458 = vmatprep.subr.mxu0 0.0
  %459 = vmatpush2.msra.mxu0 0.0
  %460 = vmatprep.subr.mxu0 0.0
  %461 = vmatpush2.msra.mxu0 0.0
  %462 = vmatprep.subr.mxu0 0.0
  %463 = vmatpush2.msra.mxu0 0.0
  %464 = vmatprep.subr.mxu0 0.0
  %465 = vmatpush2.msra.mxu0 0.0
  %466 = vmatprep.subr.mxu0 0.0
  %467 = vmatpush2.msra.mxu0 0.0
  %468 = vmatprep.mubr.f32.mxu0 0.0
  %469 = vmatmul.mubr.f32.gmra.mxu0 %v387
  %v470 = vpop.f32.mrf.mxu0
  %v471 = vadd.f32 0.0, %v470
  %v472 = vpop.f32.mrf.mxu0
  %473 = vdwg.mxu0
  %v474 = vmul.f32 %v471, 0.125
  %v475 = vmul.f32 %v474, %v474
  %v477 = vrot.slane %v475, 7
  %v479 = vsub.f32 %v474, %v477
  %v480 = vlaneseq
  %v481 = vshrl.u32 %v480, 7
  %v482 = vsub.s32 0, %v481
  %v483 = vrot.slane %v474, %v482
  %v484 = vsub.f32 %v368, %v483
  %v485 = vadd.f32 %v479, 1e-05
  %v486 = vrsqrt.pop %v485
  %v487 = vlaneseq
  %v488 = vshrl.u32 %v487, 7
  %v489 = vsub.s32 1, %v488
  %v490 = vrot.slane %v486, %v489
  %v491 = vmul.f32 %v484, %v490
  %v492 = vld [vmem:[%s2] sm:$0x1]
  %v494 = vlaneseq
  %v495 = vshrl.u32 %v494, 7
  %v496 = vsub.s32 0, %v495
  %v497 = vrot.slane %v492, %v496
  %v499 = vmul.f32 %v491, %v497
  %v500 = vld [vmem:[%s3] sm:$0x1]
  %v502 = vlaneseq
  %v503 = vshrl.u32 %v502, 7
  %v504 = vsub.s32 0, %v503
  %v505 = vrot.slane %v500, %v504
  %v507 = vadd.f32 %v499, %v505
  %508 = vst [vmem:[%s5] sm:$0xff] %v507
  // Predicated region
  $region22: #{zip_unet_forward.15} parent=0 // pred_check
    _
  $region23: #{zip_unet_forward.15} parent=0 // pred_check_branch
    %510 = sbr.rel (0) target = $region25
  $region24: #{zip_unet_forward.15} parent=0 // pred_region
    _
  $region25: #{zip_unet_forward.15} parent=0 // pred_fallthru
    _
  // Predicated region
  $region26: #{zip_unet_forward.15} parent=0 // pred_check
    _
  $region27: #{zip_unet_forward.15} parent=0 // pred_check_branch
    %512 = sbr.rel (0) target = $region29
  $region28: #{zip_unet_forward.15} parent=0 // pred_region
    _
  $region29: #{zip_unet_forward.15} parent=0 // pred_fallthru
    _

// kernel: zip_unet_forward.16
$region0: #{zip_unet_forward.16}
  #allocation0 [shape = 'u32[]', space=smem, size = 0x4, offset = 0x4, fixed_abs, tag = 'smem constant byte address 0x4 - core index']
  #allocation1 [shape = 'u32[144,128]{1,0:T(1,128)}', space=vmem, size = 0x12000, scoped, tag = 'internal scratch']
  %s0 = inlined_call_operand.vmem [shape: bf16[8,1024], index: 0, kind: input, shape index: {}]
  %s1 = inlined_call_operand.vmem [shape: bf16[1024,128], index: 1, kind: input, shape index: {}]
  %s2 = inlined_call_operand.vmem [shape: f32[1,128], index: 2, kind: input, shape index: {}]
  %s3 = inlined_call_operand.vmem [shape: f32[8,128], index: 3, kind: output, shape index: {}]
  %s4 = sld [smem:[#allocation0]]
  $region22: #{zip_unet_forward.16} parent=0
    _
  %s6 = ssub.s32 1, %s4
  %s7 = scalar_select 0, %s6, %s4
  // Predicated region
  $region2: #{zip_unet_forward.16} parent=0 // pred_check
    _
  $region3: #{zip_unet_forward.16} parent=0 // pred_check_branch
    %9 = sbr.rel (0) target = $region5
  $region4: #{zip_unet_forward.16} parent=0 // pred_region
    _
  $region5: #{zip_unet_forward.16} parent=0 // pred_fallthru
    _
  // Predicated region
  $region6: #{zip_unet_forward.16} parent=0 // pred_check
    _
  $region7: #{zip_unet_forward.16} parent=0 // pred_check_branch
    %11 = sbr.rel (0) target = $region9
  $region8: #{zip_unet_forward.16} parent=0 // pred_region
    _
  $region9: #{zip_unet_forward.16} parent=0 // pred_fallthru
    _
  // Predicated region
  $region10: #{zip_unet_forward.16} parent=0 // pred_check
    _
  $region11: #{zip_unet_forward.16} parent=0 // pred_check_branch
    %13 = sbr.rel (0) target = $region13
  $region12: #{zip_unet_forward.16} parent=0 // pred_region
    _
  $region13: #{zip_unet_forward.16} parent=0 // pred_fallthru
    _
  %v15 = vld [vmem:[%s0] sm:$0xff]
  %v16 = vld [vmem:[%s0 + $0x8] sm:$0xff]
  %v17 = vld [vmem:[%s0 + $0x10] sm:$0xff]
  %v18 = vld [vmem:[%s0 + $0x18] sm:$0xff]
  %v19 = vld [vmem:[%s1] sm:$0xf]
  %v20 = vld [vmem:[%s1 + $0x4] sm:$0xf]
  %v21 = vld [vmem:[%s1 + $0x8] sm:$0xf]
  %v22 = vld [vmem:[%s1 + $0xc] sm:$0xf]
  %v23 = vld [vmem:[%s1 + $0x10] sm:$0xf]
  %v24 = vld [vmem:[%s1 + $0x14] sm:$0xf]
  %v25 = vld [vmem:[%s1 + $0x18] sm:$0xf]
  %v26 = vld [vmem:[%s1 + $0x1c] sm:$0xf]
  %v27 = vld [vmem:[%s1 + $0x20] sm:$0xf]
  %v28 = vld [vmem:[%s1 + $0x24] sm:$0xf]
  %v29 = vld [vmem:[%s1 + $0x28] sm:$0xf]
  %v30 = vld [vmem:[%s1 + $0x2c] sm:$0xf]
  %v31 = vld [vmem:[%s1 + $0x30] sm:$0xf]
  %v32 = vld [vmem:[%s1 + $0x34] sm:$0xf]
  %v33 = vld [vmem:[%s1 + $0x38] sm:$0xf]
  %v34 = vld [vmem:[%s1 + $0x3c] sm:$0xf]
  %v35 = vld [vmem:[%s1 + $0x40] sm:$0xf]
  %v36 = vld [vmem:[%s1 + $0x44] sm:$0xf]
  %v37 = vld [vmem:[%s1 + $0x48] sm:$0xf]
  %v38 = vld [vmem:[%s1 + $0x4c] sm:$0xf]
  %v39 = vld [vmem:[%s1 + $0x50] sm:$0xf]
  %v40 = vld [vmem:[%s1 + $0x54] sm:$0xf]
  %v41 = vld [vmem:[%s1 + $0x58] sm:$0xf]
  %v42 = vld [vmem:[%s1 + $0x5c] sm:$0xf]
  %v43 = vld [vmem:[%s1 + $0x60] sm:$0xf]
  %v44 = vld [vmem:[%s1 + $0x64] sm:$0xf]
  %v45 = vld [vmem:[%s1 + $0x68] sm:$0xf]
  %v46 = vld [vmem:[%s1 + $0x6c] sm:$0xf]
  %v47 = vld [vmem:[%s1 + $0x70] sm:$0xf]
  %v48 = vld [vmem:[%s1 + $0x74] sm:$0xf]
  %v49 = vld [vmem:[%s1 + $0x78] sm:$0xf]
  %v50 = vld [vmem:[%s1 + $0x7c] sm:$0xf]
  %v51 = vld [vmem:[%s1 + $0x80] sm:$0xf]
  %v52 = vld [vmem:[%s1 + $0x84] sm:$0xf]
  %v53 = vld [vmem:[%s1 + $0x88] sm:$0xf]
  %v54 = vld [vmem:[%s1 + $0x8c] sm:$0xf]
  %v55 = vld [vmem:[%s1 + $0x90] sm:$0xf]
  %v56 = vld [vmem:[%s1 + $0x94] sm:$0xf]
  %v57 = vld [vmem:[%s1 + $0x98] sm:$0xf]
  %v58 = vld [vmem:[%s1 + $0x9c] sm:$0xf]
  %v59 = vld [vmem:[%s1 + $0xa0] sm:$0xf]
  %v60 = vld [vmem:[%s1 + $0xa4] sm:$0xf]
  %v61 = vld [vmem:[%s1 + $0xa8] sm:$0xf]
  %v62 = vld [vmem:[%s1 + $0xac] sm:$0xf]
  %v63 = vld [vmem:[%s1 + $0xb0] sm:$0xf]
  %v64 = vld [vmem:[%s1 + $0xb4] sm:$0xf]
  %v65 = vld [vmem:[%s1 + $0xb8] sm:$0xf]
  %v66 = vld [vmem:[%s1 + $0xbc] sm:$0xf]
  %v67 = vld [vmem:[%s1 + $0xc0] sm:$0xf]
  %v68 = vld [vmem:[%s1 + $0xc4] sm:$0xf]
  %v69 = vld [vmem:[%s1 + $0xc8] sm:$0xf]
  %v70 = vld [vmem:[%s1 + $0xcc] sm:$0xf]
  %v71 = vld [vmem:[%s1 + $0xd0] sm:$0xf]
  %v72 = vld [vmem:[%s1 + $0xd4] sm:$0xf]
  %v73 = vld [vmem:[%s1 + $0xd8] sm:$0xf]
  %v74 = vld [vmem:[%s1 + $0xdc] sm:$0xf]
  %v75 = vld [vmem:[%s1 + $0xe0] sm:$0xf]
  %v76 = vld [vmem:[%s1 + $0xe4] sm:$0xf]
  %v77 = vld [vmem:[%s1 + $0xe8] sm:$0xf]
  %v78 = vld [vmem:[%s1 + $0xec] sm:$0xf]
  %v79 = vld [vmem:[%s1 + $0xf0] sm:$0xf]
  %v80 = vld [vmem:[%s1 + $0xf4] sm:$0xf]
  %v81 = vld [vmem:[%s1 + $0xf8] sm:$0xf]
  %v82 = vld [vmem:[%s1 + $0xfc] sm:$0xf]
  %v83 = vld [vmem:[%s1 + $0x100] sm:$0xf]
  %v84 = vld [vmem:[%s1 + $0x104] sm:$0xf]
  %v85 = vld [vmem:[%s1 + $0x108] sm:$0xf]
  %v86 = vld [vmem:[%s1 + $0x10c] sm:$0xf]
  %v87 = vld [vmem:[%s1 + $0x110] sm:$0xf]
  %v88 = vld [vmem:[%s1 + $0x114] sm:$0xf]
  %v89 = vld [vmem:[%s1 + $0x118] sm:$0xf]
  %v90 = vld [vmem:[%s1 + $0x11c] sm:$0xf]
  %v91 = vld [vmem:[%s1 + $0x120] sm:$0xf]
  %v92 = vld [vmem:[%s1 + $0x124] sm:$0xf]
  %v93 = vld [vmem:[%s1 + $0x128] sm:$0xf]
  %v94 = vld [vmem:[%s1 + $0x12c] sm:$0xf]
  %v95 = vld [vmem:[%s1 + $0x130] sm:$0xf]
  %v96 = vld [vmem:[%s1 + $0x134] sm:$0xf]
  %v97 = vld [vmem:[%s1 + $0x138] sm:$0xf]
  %v98 = vld [vmem:[%s1 + $0x13c] sm:$0xf]
  %v99 = vld [vmem:[%s1 + $0x140] sm:$0xf]
  %v100 = vld [vmem:[%s1 + $0x144] sm:$0xf]
  %v101 = vld [vmem:[%s1 + $0x148] sm:$0xf]
  %v102 = vld [vmem:[%s1 + $0x14c] sm:$0xf]
  %v103 = vld [vmem:[%s1 + $0x150] sm:$0xf]
  %v104 = vld [vmem:[%s1 + $0x154] sm:$0xf]
  %v105 = vld [vmem:[%s1 + $0x158] sm:$0xf]
  %v106 = vld [vmem:[%s1 + $0x15c] sm:$0xf]
  %v107 = vld [vmem:[%s1 + $0x160] sm:$0xf]
  %v108 = vld [vmem:[%s1 + $0x164] sm:$0xf]
  %v109 = vld [vmem:[%s1 + $0x168] sm:$0xf]
  %v110 = vld [vmem:[%s1 + $0x16c] sm:$0xf]
  %v111 = vld [vmem:[%s1 + $0x170] sm:$0xf]
  %v112 = vld [vmem:[%s1 + $0x174] sm:$0xf]
  %v113 = vld [vmem:[%s1 + $0x178] sm:$0xf]
  %v114 = vld [vmem:[%s1 + $0x17c] sm:$0xf]
  %v115 = vld [vmem:[%s1 + $0x180] sm:$0xf]
  %v116 = vld [vmem:[%s1 + $0x184] sm:$0xf]
  %v117 = vld [vmem:[%s1 + $0x188] sm:$0xf]
  %v118 = vld [vmem:[%s1 + $0x18c] sm:$0xf]
  %v119 = vld [vmem:[%s1 + $0x190] sm:$0xf]
  %v120 = vld [vmem:[%s1 + $0x194] sm:$0xf]
  %v121 = vld [vmem:[%s1 + $0x198] sm:$0xf]
  %v122 = vld [vmem:[%s1 + $0x19c] sm:$0xf]
  %v123 = vld [vmem:[%s1 + $0x1a0] sm:$0xf]
  %v124 = vld [vmem:[%s1 + $0x1a4] sm:$0xf]
  %v125 = vld [vmem:[%s1 + $0x1a8] sm:$0xf]
  %v126 = vld [vmem:[%s1 + $0x1ac] sm:$0xf]
  %v127 = vld [vmem:[%s1 + $0x1b0] sm:$0xf]
  %v128 = vld [vmem:[%s1 + $0x1b4] sm:$0xf]
  %v129 = vld [vmem:[%s1 + $0x1b8] sm:$0xf]
  %v130 = vld [vmem:[%s1 + $0x1bc] sm:$0xf]
  %v131 = vld [vmem:[%s1 + $0x1c0] sm:$0xf]
  %v132 = vld [vmem:[%s1 + $0x1c4] sm:$0xf]
  %v133 = vld [vmem:[%s1 + $0x1c8] sm:$0xf]
  %v134 = vld [vmem:[%s1 + $0x1cc] sm:$0xf]
  %v135 = vld [vmem:[%s1 + $0x1d0] sm:$0xf]
  %v136 = vld [vmem:[%s1 + $0x1d4] sm:$0xf]
  %v137 = vld [vmem:[%s1 + $0x1d8] sm:$0xf]
  %v138 = vld [vmem:[%s1 + $0x1dc] sm:$0xf]
  %v139 = vld [vmem:[%s1 + $0x1e0] sm:$0xf]
  %v140 = vld [vmem:[%s1 + $0x1e4] sm:$0xf]
  %v141 = vld [vmem:[%s1 + $0x1e8] sm:$0xf]
  %v142 = vld [vmem:[%s1 + $0x1ec] sm:$0xf]
  %v143 = vld [vmem:[%s1 + $0x1f0] sm:$0xf]
  %v144 = vld [vmem:[%s1 + $0x1f4] sm:$0xf]
  %v145 = vld [vmem:[%s1 + $0x1f8] sm:$0xf]
  %v146 = vld [vmem:[%s1 + $0x1fc] sm:$0xf]
  %v147 = vld [vmem:[%s2] sm:$0x1]
  %v149 = vlaneseq
  %v150 = vshrl.u32 %v149, 7
  %v151 = vsub.s32 0, %v150
  %v152 = vrot.slane %v147, %v151
  %v158 = vunpack.c.l.b16 %v15
  %v159 = vunpack.c.h.b16 %v15
  %v160 = vunpack.c.l.b16 %v16
  %v161 = vunpack.c.h.b16 %v16
  %v162 = vunpack.c.l.b16 %v17
  %v163 = vunpack.c.h.b16 %v17
  %v164 = vunpack.c.l.b16 %v18
  %v165 = vunpack.c.h.b16 %v18
  %v166 = vpack.c.b16 %v158, %v158
  %v167 = vpack.c.b16 %v159, %v159
  %v168 = vpack.c.b16 %v160, %v160
  %v169 = vpack.c.b16 %v161, %v161
  %v170 = vpack.c.b16 %v162, %v162
  %v171 = vpack.c.b16 %v163, %v163
  %v172 = vpack.c.b16 %v164, %v164
  %v173 = vpack.c.b16 %v165, %v165
  %v310 = vunpack.c.l.b16 %v19
  %v311 = vunpack.c.l.b16 %v20
  %v312 = vunpack.c.l.b16 %v21
  %v313 = vunpack.c.l.b16 %v22
  %v314 = vunpack.c.l.b16 %v23
  %v315 = vunpack.c.l.b16 %v24
  %v316 = vunpack.c.l.b16 %v25
  %v317 = vunpack.c.l.b16 %v26
  %v318 = vunpack.c.l.b16 %v27
  %v319 = vunpack.c.l.b16 %v28
  %v320 = vunpack.c.l.b16 %v29
  %v321 = vunpack.c.l.b16 %v30
  %v322 = vunpack.c.l.b16 %v31
  %v323 = vunpack.c.l.b16 %v32
  %v324 = vunpack.c.l.b16 %v33
  %v325 = vunpack.c.l.b16 %v34
  %v326 = vunpack.c.l.b16 %v35
  %v327 = vunpack.c.l.b16 %v36
  %v328 = vunpack.c.l.b16 %v37
  %v329 = vunpack.c.l.b16 %v38
  %v330 = vunpack.c.l.b16 %v39
  %v331 = vunpack.c.l.b16 %v40
  %v332 = vunpack.c.l.b16 %v41
  %v333 = vunpack.c.l.b16 %v42
  %v334 = vunpack.c.l.b16 %v43
  %v335 = vunpack.c.l.b16 %v44
  %v336 = vunpack.c.l.b16 %v45
  %v337 = vunpack.c.l.b16 %v46
  %v338 = vunpack.c.l.b16 %v47
  %v339 = vunpack.c.l.b16 %v48
  %v340 = vunpack.c.l.b16 %v49
  %v341 = vunpack.c.l.b16 %v50
  %v342 = vunpack.c.l.b16 %v51
  %v343 = vunpack.c.l.b16 %v52
  %v344 = vunpack.c.l.b16 %v53
  %v345 = vunpack.c.l.b16 %v54
  %v346 = vunpack.c.l.b16 %v55
  %v347 = vunpack.c.l.b16 %v56
  %v348 = vunpack.c.l.b16 %v57
  %v349 = vunpack.c.l.b16 %v58
  %v350 = vunpack.c.l.b16 %v59
  %v351 = vunpack.c.l.b16 %v60
  %v352 = vunpack.c.l.b16 %v61
  %v353 = vunpack.c.l.b16 %v62
  %v354 = vunpack.c.l.b16 %v63
  %v355 = vunpack.c.l.b16 %v64
  %v356 = vunpack.c.l.b16 %v65
  %v357 = vunpack.c.l.b16 %v66
  %v358 = vunpack.c.l.b16 %v67
  %v359 = vunpack.c.l.b16 %v68
  %v360 = vunpack.c.l.b16 %v69
  %v361 = vunpack.c.l.b16 %v70
  %v362 = vunpack.c.l.b16 %v71
  %v363 = vunpack.c.l.b16 %v72
  %v364 = vunpack.c.l.b16 %v73
  %v365 = vunpack.c.l.b16 %v74
  %v366 = vunpack.c.l.b16 %v75
  %v367 = vunpack.c.l.b16 %v76
  %v368 = vunpack.c.l.b16 %v77
  %v369 = vunpack.c.l.b16 %v78
  %v370 = vunpack.c.l.b16 %v79
  %v371 = vunpack.c.l.b16 %v80
  %v372 = vunpack.c.l.b16 %v81
  %v373 = vunpack.c.l.b16 %v82
  %v374 = vunpack.c.l.b16 %v83
  %v375 = vunpack.c.l.b16 %v84
  %v376 = vunpack.c.l.b16 %v85
  %v377 = vunpack.c.l.b16 %v86
  %v378 = vunpack.c.l.b16 %v87
  %v379 = vunpack.c.l.b16 %v88
  %v380 = vunpack.c.l.b16 %v89
  %v381 = vunpack.c.l.b16 %v90
  %v382 = vunpack.c.l.b16 %v91
  %v383 = vunpack.c.l.b16 %v92
  %v384 = vunpack.c.l.b16 %v93
  %v385 = vunpack.c.l.b16 %v94
  %v386 = vunpack.c.l.b16 %v95
  %v387 = vunpack.c.l.b16 %v96
  %v388 = vunpack.c.l.b16 %v97
  %v389 = vunpack.c.l.b16 %v98
  %v390 = vunpack.c.l.b16 %v99
  %v391 = vunpack.c.l.b16 %v100
  %v392 = vunpack.c.l.b16 %v101
  %v393 = vunpack.c.l.b16 %v102
  %v394 = vunpack.c.l.b16 %v103
  %v395 = vunpack.c.l.b16 %v104
  %v396 = vunpack.c.l.b16 %v105
  %v397 = vunpack.c.l.b16 %v106
  %v398 = vunpack.c.l.b16 %v107
  %v399 = vunpack.c.l.b16 %v108
  %v400 = vunpack.c.l.b16 %v109
  %v401 = vunpack.c.l.b16 %v110
  %v402 = vunpack.c.l.b16 %v111
  %v403 = vunpack.c.l.b16 %v112
  %v404 = vunpack.c.l.b16 %v113
  %v405 = vunpack.c.l.b16 %v114
  %v406 = vunpack.c.l.b16 %v115
  %v407 = vunpack.c.l.b16 %v116
  %v408 = vunpack.c.l.b16 %v117
  %v409 = vunpack.c.l.b16 %v118
  %v410 = vunpack.c.l.b16 %v119
  %v411 = vunpack.c.l.b16 %v120
  %v412 = vunpack.c.l.b16 %v121
  %v413 = vunpack.c.l.b16 %v122
  %v414 = vunpack.c.l.b16 %v123
  %v415 = vunpack.c.l.b16 %v124
  %v416 = vunpack.c.l.b16 %v125
  %v417 = vunpack.c.l.b16 %v126
  %v418 = vunpack.c.l.b16 %v127
  %v419 = vunpack.c.l.b16 %v128
  %v420 = vunpack.c.l.b16 %v129
  %v421 = vunpack.c.l.b16 %v130
  %v422 = vunpack.c.l.b16 %v131
  %v423 = vunpack.c.l.b16 %v132
  %v424 = vunpack.c.l.b16 %v133
  %v425 = vunpack.c.l.b16 %v134
  %v426 = vunpack.c.l.b16 %v135
  %v427 = vunpack.c.l.b16 %v136
  %v428 = vunpack.c.l.b16 %v137
  %v429 = vunpack.c.l.b16 %v138
  %v430 = vunpack.c.l.b16 %v139
  %v431 = vunpack.c.l.b16 %v140
  %v432 = vunpack.c.l.b16 %v141
  %v433 = vunpack.c.l.b16 %v142
  %v434 = vunpack.c.l.b16 %v143
  %v435 = vunpack.c.l.b16 %v144
  %v436 = vunpack.c.l.b16 %v145
  %v437 = vunpack.c.l.b16 %v146
  %v438 = vpack.c.b16 %v311, %v310
  %v439 = vpack.c.b16 %v313, %v312
  %v440 = vpack.c.b16 %v315, %v314
  %v441 = vpack.c.b16 %v317, %v316
  %v442 = vpack.c.b16 %v319, %v318
  %v443 = vpack.c.b16 %v321, %v320
  %v444 = vpack.c.b16 %v323, %v322
  %v445 = vpack.c.b16 %v325, %v324
  %v446 = vpack.c.b16 %v327, %v326
  %v447 = vpack.c.b16 %v329, %v328
  %v448 = vpack.c.b16 %v331, %v330
  %v449 = vpack.c.b16 %v333, %v332
  %v450 = vpack.c.b16 %v335, %v334
  %v451 = vpack.c.b16 %v337, %v336
  %v452 = vpack.c.b16 %v339, %v338
  %v453 = vpack.c.b16 %v341, %v340
  %v454 = vpack.c.b16 %v343, %v342
  %v455 = vpack.c.b16 %v345, %v344
  %v456 = vpack.c.b16 %v347, %v346
  %v457 = vpack.c.b16 %v349, %v348
  %v458 = vpack.c.b16 %v351, %v350
  %v459 = vpack.c.b16 %v353, %v352
  %v460 = vpack.c.b16 %v355, %v354
  %v461 = vpack.c.b16 %v357, %v356
  %v462 = vpack.c.b16 %v359, %v358
  %v463 = vpack.c.b16 %v361, %v360
  %v464 = vpack.c.b16 %v363, %v362
  %v465 = vpack.c.b16 %v365, %v364
  %v466 = vpack.c.b16 %v367, %v366
  %v467 = vpack.c.b16 %v369, %v368
  %v468 = vpack.c.b16 %v371, %v370
  %v469 = vpack.c.b16 %v373, %v372
  %v470 = vpack.c.b16 %v375, %v374
  %v471 = vpack.c.b16 %v377, %v376
  %v472 = vpack.c.b16 %v379, %v378
  %v473 = vpack.c.b16 %v381, %v380
  %v474 = vpack.c.b16 %v383, %v382
  %v475 = vpack.c.b16 %v385, %v384
  %v476 = vpack.c.b16 %v387, %v386
  %v477 = vpack.c.b16 %v389, %v388
  %v478 = vpack.c.b16 %v391, %v390
  %v479 = vpack.c.b16 %v393, %v392
  %v480 = vpack.c.b16 %v395, %v394
  %v481 = vpack.c.b16 %v397, %v396
  %v482 = vpack.c.b16 %v399, %v398
  %v483 = vpack.c.b16 %v401, %v400
  %v484 = vpack.c.b16 %v403, %v402
  %v485 = vpack.c.b16 %v405, %v404
  %v486 = vpack.c.b16 %v407, %v406
  %v487 = vpack.c.b16 %v409, %v408
  %v488 = vpack.c.b16 %v411, %v410
  %v489 = vpack.c.b16 %v413, %v412
  %v490 = vpack.c.b16 %v415, %v414
  %v491 = vpack.c.b16 %v417, %v416
  %v492 = vpack.c.b16 %v419, %v418
  %v493 = vpack.c.b16 %v421, %v420
  %v494 = vpack.c.b16 %v423, %v422
  %v495 = vpack.c.b16 %v425, %v424
  %v496 = vpack.c.b16 %v427, %v426
  %v497 = vpack.c.b16 %v429, %v428
  %v498 = vpack.c.b16 %v431, %v430
  %v499 = vpack.c.b16 %v433, %v432
  %v500 = vpack.c.b16 %v435, %v434
  %v501 = vpack.c.b16 %v437, %v436
  %566 = vmatprep.subr.bf16.mxu0 0
  %567 = vmatpush1.bf16.msra.mxu0 %v445
  %568 = vmatprep.subr.bf16.mxu0 0
  %569 = vmatpush1.bf16.msra.mxu0 %v444
  %570 = vmatprep.subr.bf16.mxu0 0
  %571 = vmatpush1.bf16.msra.mxu0 %v443
  %572 = vmatprep.subr.bf16.mxu0 0
  %573 = vmatpush1.bf16.msra.mxu0 %v442
  %574 = vmatprep.subr.bf16.mxu0 0
  %575 = vmatpush1.bf16.msra.mxu0 %v441
  %576 = vmatprep.subr.bf16.mxu0 0
  %577 = vmatpush1.bf16.msra.mxu0 %v440
  %578 = vmatprep.subr.bf16.mxu0 0
  %579 = vmatpush1.bf16.msra.mxu0 %v439
  %580 = vmatprep.subr.bf16.mxu0 0
  %581 = vmatpush1.bf16.msra.mxu0 %v438
  %582 = vmatprep.subr.bf16.mxu0 0
  %583 = vmatpush2.bf16.msra.mxu0 %v453
  %584 = vmatprep.subr.bf16.mxu0 0
  %585 = vmatpush2.bf16.msra.mxu0 %v452
  %586 = vmatprep.subr.bf16.mxu0 0
  %587 = vmatpush2.bf16.msra.mxu0 %v451
  %588 = vmatprep.subr.bf16.mxu0 0
  %589 = vmatpush2.bf16.msra.mxu0 %v450
  %590 = vmatprep.subr.bf16.mxu0 0
  %591 = vmatpush2.bf16.msra.mxu0 %v449
  %592 = vmatprep.subr.bf16.mxu0 0
  %593 = vmatpush2.bf16.msra.mxu0 %v448
  %594 = vmatprep.subr.bf16.mxu0 0
  %595 = vmatpush2.bf16.msra.mxu0 %v447
  %596 = vmatprep.subr.bf16.mxu0 0
  %597 = vmatpush2.bf16.msra.mxu0 %v446
  %598 = vmatprep.mubr.bf16.mxu0 %v167
  %599 = vmatmul.mubr.bf16.gmra.mxu0 %v166
  %v600 = vpop.f32.mrf.mxu0
  %v601 = vadd.f32 %v152, %v600
  %v602 = vpop.f32.mrf.mxu0
  %v603 = vpop.f32.mrf.mxu0
  %v604 = vpop.f32.mrf.mxu0
  %605 = vdwg.mxu0
  %606 = vmatprep.subr.bf16.mxu0 0
  %607 = vmatpush1.bf16.msra.mxu0 %v461
  %608 = vmatprep.subr.bf16.mxu0 0
  %609 = vmatpush1.bf16.msra.mxu0 %v460
  %610 = vmatprep.subr.bf16.mxu0 0
  %611 = vmatpush1.bf16.msra.mxu0 %v459
  %612 = vmatprep.subr.bf16.mxu0 0
  %613 = vmatpush1.bf16.msra.mxu0 %v458
  %614 = vmatprep.subr.bf16.mxu0 0
  %615 = vmatpush1.bf16.msra.mxu0 %v457
  %616 = vmatprep.subr.bf16.mxu0 0
  %617 = vmatpush1.bf16.msra.mxu0 %v456
  %618 = vmatprep.subr.bf16.mxu0 0
  %619 = vmatpush1.bf16.msra.mxu0 %v455
  %620 = vmatprep.subr.bf16.mxu0 0
  %621 = vmatpush1.bf16.msra.mxu0 %v454
  %622 = vmatprep.subr.bf16.mxu0 0
  %623 = vmatpush2.bf16.msra.mxu0 %v469
  %624 = vmatprep.subr.bf16.mxu0 0
  %625 = vmatpush2.bf16.msra.mxu0 %v468
  %626 = vmatprep.subr.bf16.mxu0 0
  %627 = vmatpush2.bf16.msra.mxu0 %v467
  %628 = vmatprep.subr.bf16.mxu0 0
  %629 = vmatpush2.bf16.msra.mxu0 %v466
  %630 = vmatprep.subr.bf16.mxu0 0
  %631 = vmatpush2.bf16.msra.mxu0 %v465
  %632 = vmatprep.subr.bf16.mxu0 0
  %633 = vmatpush2.bf16.msra.mxu0 %v464
  %634 = vmatprep.subr.bf16.mxu0 0
  %635 = vmatpush2.bf16.msra.mxu0 %v463
  %636 = vmatprep.subr.bf16.mxu0 0
  %637 = vmatpush2.bf16.msra.mxu0 %v462
  %638 = vmatprep.mubr.bf16.mxu0 %v169
  %639 = vmatmul.mubr.bf16.gmra.mxu0 %v168
  %v640 = vpop.f32.mrf.mxu0
  %v641 = vadd.f32 %v601, %v640
  %v642 = vpop.f32.mrf.mxu0
  %v643 = vpop.f32.mrf.mxu0
  %v644 = vpop.f32.mrf.mxu0
  %645 = vdwg.mxu0
  %646 = vmatprep.subr.bf16.mxu0 0
  %647 = vmatpush1.bf16.msra.mxu0 %v477
  %648 = vmatprep.subr.bf16.mxu0 0
  %649 = vmatpush1.bf16.msra.mxu0 %v476
  %650 = vmatprep.subr.bf16.mxu0 0
  %651 = vmatpush1.bf16.msra.mxu0 %v475
  %652 = vmatprep.subr.bf16.mxu0 0
  %653 = vmatpush1.bf16.msra.mxu0 %v474
  %654 = vmatprep.subr.bf16.mxu0 0
  %655 = vmatpush1.bf16.msra.mxu0 %v473
  %656 = vmatprep.subr.bf16.mxu0 0
  %657 = vmatpush1.bf16.msra.mxu0 %v472
  %658 = vmatprep.subr.bf16.mxu0 0
  %659 = vmatpush1.bf16.msra.mxu0 %v471
  %660 = vmatprep.subr.bf16.mxu0 0
  %661 = vmatpush1.bf16.msra.mxu0 %v470
  %662 = vmatprep.subr.bf16.mxu0 0
  %663 = vmatpush2.bf16.msra.mxu0 %v485
  %664 = vmatprep.subr.bf16.mxu0 0
  %665 = vmatpush2.bf16.msra.mxu0 %v484
  %666 = vmatprep.subr.bf16.mxu0 0
  %667 = vmatpush2.bf16.msra.mxu0 %v483
  %668 = vmatprep.subr.bf16.mxu0 0
  %669 = vmatpush2.bf16.msra.mxu0 %v482
  %670 = vmatprep.subr.bf16.mxu0 0
  %671 = vmatpush2.bf16.msra.mxu0 %v481
  %672 = vmatprep.subr.bf16.mxu0 0
  %673 = vmatpush2.bf16.msra.mxu0 %v480
  %674 = vmatprep.subr.bf16.mxu0 0
  %675 = vmatpush2.bf16.msra.mxu0 %v479
  %676 = vmatprep.subr.bf16.mxu0 0
  %677 = vmatpush2.bf16.msra.mxu0 %v478
  %678 = vmatprep.mubr.bf16.mxu0 %v171
  %679 = vmatmul.mubr.bf16.gmra.mxu0 %v170
  %v680 = vpop.f32.mrf.mxu0
  %v681 = vadd.f32 %v641, %v680
  %v682 = vpop.f32.mrf.mxu0
  %v683 = vpop.f32.mrf.mxu0
  %v684 = vpop.f32.mrf.mxu0
  %685 = vdwg.mxu0
  %686 = vmatprep.subr.bf16.mxu0 0
  %687 = vmatpush1.bf16.msra.mxu0 %v493
  %688 = vmatprep.subr.bf16.mxu0 0
  %689 = vmatpush1.bf16.msra.mxu0 %v492
  %690 = vmatprep.subr.bf16.mxu0 0
  %691 = vmatpush1.bf16.msra.mxu0 %v491
  %692 = vmatprep.subr.bf16.mxu0 0
  %693 = vmatpush1.bf16.msra.mxu0 %v490
  %694 = vmatprep.subr.bf16.mxu0 0
  %695 = vmatpush1.bf16.msra.mxu0 %v489
  %696 = vmatprep.subr.bf16.mxu0 0
  %697 = vmatpush1.bf16.msra.mxu0 %v488
  %698 = vmatprep.subr.bf16.mxu0 0
  %699 = vmatpush1.bf16.msra.mxu0 %v487
  %700 = vmatprep.subr.bf16.mxu0 0
  %701 = vmatpush1.bf16.msra.mxu0 %v486
  %702 = vmatprep.subr.bf16.mxu0 0
  %703 = vmatpush2.bf16.msra.mxu0 %v501
  %704 = vmatprep.subr.bf16.mxu0 0
  %705 = vmatpush2.bf16.msra.mxu0 %v500
  %706 = vmatprep.subr.bf16.mxu0 0
  %707 = vmatpush2.bf16.msra.mxu0 %v499
  %708 = vmatprep.subr.bf16.mxu0 0
  %709 = vmatpush2.bf16.msra.mxu0 %v498
  %710 = vmatprep.subr.bf16.mxu0 0
  %711 = vmatpush2.bf16.msra.mxu0 %v497
  %712 = vmatprep.subr.bf16.mxu0 0
  %713 = vmatpush2.bf16.msra.mxu0 %v496
  %714 = vmatprep.subr.bf16.mxu0 0
  %715 = vmatpush2.bf16.msra.mxu0 %v495
  %716 = vmatprep.subr.bf16.mxu0 0
  %717 = vmatpush2.bf16.msra.mxu0 %v494
  %718 = vmatprep.mubr.bf16.mxu0 %v173
  %719 = vmatmul.mubr.bf16.gmra.mxu0 %v172
  %v720 = vpop.f32.mrf.mxu0
  %v721 = vadd.f32 %v681, %v720
  %v722 = vpop.f32.mrf.mxu0
  %v723 = vpop.f32.mrf.mxu0
  %v724 = vpop.f32.mrf.mxu0
  %725 = vdwg.mxu0
  %726 = vst [vmem:[%s3] sm:$0xff] %v721
  // Predicated region
  $region14: #{zip_unet_forward.16} parent=0 // pred_check
    _
  $region15: #{zip_unet_forward.16} parent=0 // pred_check_branch
    %728 = sbr.rel (0) target = $region17
  $region16: #{zip_unet_forward.16} parent=0 // pred_region
    _
  $region17: #{zip_unet_forward.16} parent=0 // pred_fallthru
    _
  // Predicated region
  $region18: #{zip_unet_forward.16} parent=0 // pred_check
    _
  $region19: #{zip_unet_forward.16} parent=0 // pred_check_branch
    %730 = sbr.rel (0) target = $region21
  $region20: #{zip_unet_forward.16} parent=0 // pred_region
    _
  $region21: #{zip_unet_forward.16} parent=0 // pred_fallthru
    _

// kernel: zip_unet_forward.17
$region0: #{zip_unet_forward.17}
  #allocation0 [shape = 'u32[]', space=smem, size = 0x4, offset = 0x4, fixed_abs, tag = 'smem constant byte address 0x4 - core index']
  #allocation1 [shape = 'u32[144,128]{1,0:T(1,128)}', space=vmem, size = 0x12000, scoped, tag = 'internal scratch']
  %s0 = inlined_call_operand.vmem [shape: bf16[8,640], index: 0, kind: input, shape index: {}]
  %s1 = inlined_call_operand.vmem [shape: bf16[640,256], index: 1, kind: input, shape index: {}]
  %s2 = inlined_call_operand.vmem [shape: f32[1,256], index: 2, kind: input, shape index: {}]
  %s3 = inlined_call_operand.vmem [shape: f32[1,256], index: 3, kind: input, shape index: {}]
  %s4 = inlined_call_operand.vmem [shape: f32[256,256], index: 4, kind: input, shape index: {}]
  %s5 = inlined_call_operand.vmem [shape: f32[8,256], index: 5, kind: output, shape index: {}]
  %s6 = sld [smem:[#allocation0]]
  $region30: #{zip_unet_forward.17} parent=0
    _
  %s8 = ssub.s32 1, %s6
  %s9 = scalar_select 0, %s8, %s6
  // Predicated region
  $region2: #{zip_unet_forward.17} parent=0 // pred_check
    _
  $region3: #{zip_unet_forward.17} parent=0 // pred_check_branch
    %11 = sbr.rel (0) target = $region5
  $region4: #{zip_unet_forward.17} parent=0 // pred_region
    _
  $region5: #{zip_unet_forward.17} parent=0 // pred_fallthru
    _
  // Predicated region
  $region6: #{zip_unet_forward.17} parent=0 // pred_check
    _
  $region7: #{zip_unet_forward.17} parent=0 // pred_check_branch
    %13 = sbr.rel (0) target = $region9
  $region8: #{zip_unet_forward.17} parent=0 // pred_region
    _
  $region9: #{zip_unet_forward.17} parent=0 // pred_fallthru
    _
  // Predicated region
  $region10: #{zip_unet_forward.17} parent=0 // pred_check
    _
  $region11: #{zip_unet_forward.17} parent=0 // pred_check_branch
    %15 = sbr.rel (0) target = $region13
  $region12: #{zip_unet_forward.17} parent=0 // pred_region
    _
  $region13: #{zip_unet_forward.17} parent=0 // pred_fallthru
    _
  // Predicated region
  $region14: #{zip_unet_forward.17} parent=0 // pred_check
    _
  $region15: #{zip_unet_forward.17} parent=0 // pred_check_branch
    %17 = sbr.rel (0) target = $region17
  $region16: #{zip_unet_forward.17} parent=0 // pred_region
    _
  $region17: #{zip_unet_forward.17} parent=0 // pred_fallthru
    _
  // Predicated region
  $region18: #{zip_unet_forward.17} parent=0 // pred_check
    _
  $region19: #{zip_unet_forward.17} parent=0 // pred_check_branch
    %19 = sbr.rel (0) target = $region21
  $region20: #{zip_unet_forward.17} parent=0 // pred_region
    _
  $region21: #{zip_unet_forward.17} parent=0 // pred_fallthru
    _
  %v21 = vld [vmem:[%s0] sm:$0xff]
  %v22 = vld [vmem:[%s0 + $0x8] sm:$0xff]
  %v23 = vld [vmem:[%s0 + $0x10] sm:$0xf]
  %v24 = vld [vmem:[%s1] sm:$0xff]
  %v25 = vld [vmem:[%s1 + $0x8] sm:$0xff]
  %v26 = vld [vmem:[%s1 + $0x10] sm:$0xff]
  %v27 = vld [vmem:[%s1 + $0x18] sm:$0xff]
  %v28 = vld [vmem:[%s1 + $0x20] sm:$0xff]
  %v29 = vld [vmem:[%s1 + $0x28] sm:$0xff]
  %v30 = vld [vmem:[%s1 + $0x30] sm:$0xff]
  %v31 = vld [vmem:[%s1 + $0x38] sm:$0xff]
  %v32 = vld [vmem:[%s1 + $0x40] sm:$0xff]
  %v33 = vld [vmem:[%s1 + $0x48] sm:$0xff]
  %v34 = vld [vmem:[%s1 + $0x50] sm:$0xff]
  %v35 = vld [vmem:[%s1 + $0x58] sm:$0xff]
  %v36 = vld [vmem:[%s1 + $0x60] sm:$0xff]
  %v37 = vld [vmem:[%s1 + $0x68] sm:$0xff]
  %v38 = vld [vmem:[%s1 + $0x70] sm:$0xff]
  %v39 = vld [vmem:[%s1 + $0x78] sm:$0xff]
  %v40 = vld [vmem:[%s1 + $0x80] sm:$0xff]
  %v41 = vld [vmem:[%s1 + $0x88] sm:$0xff]
  %v42 = vld [vmem:[%s1 + $0x90] sm:$0xff]
  %v43 = vld [vmem:[%s1 + $0x98] sm:$0xff]
  %v44 = vld [vmem:[%s1 + $0xa0] sm:$0xff]
  %v45 = vld [vmem:[%s1 + $0xa8] sm:$0xff]
  %v46 = vld [vmem:[%s1 + $0xb0] sm:$0xff]
  %v47 = vld [vmem:[%s1 + $0xb8] sm:$0xff]
  %v48 = vld [vmem:[%s1 + $0xc0] sm:$0xff]
  %v49 = vld [vmem:[%s1 + $0xc8] sm:$0xff]
  %v50 = vld [vmem:[%s1 + $0xd0] sm:$0xff]
  %v51 = vld [vmem:[%s1 + $0xd8] sm:$0xff]
  %v52 = vld [vmem:[%s1 + $0xe0] sm:$0xff]
  %v53 = vld [vmem:[%s1 + $0xe8] sm:$0xff]
  %v54 = vld [vmem:[%s1 + $0xf0] sm:$0xff]
  %v55 = vld [vmem:[%s1 + $0xf8] sm:$0xff]
  %v56 = vld [vmem:[%s1 + $0x100] sm:$0xff]
  %v57 = vld [vmem:[%s1 + $0x108] sm:$0xff]
  %v58 = vld [vmem:[%s1 + $0x110] sm:$0xff]
  %v59 = vld [vmem:[%s1 + $0x118] sm:$0xff]
  %v60 = vld [vmem:[%s1 + $0x120] sm:$0xff]
  %v61 = vld [vmem:[%s1 + $0x128] sm:$0xff]
  %v62 = vld [vmem:[%s1 + $0x130] sm:$0xff]
  %v63 = vld [vmem:[%s1 + $0x138] sm:$0xff]
  %v64 = vld [vmem:[%s1 + $0x140] sm:$0xff]
  %v65 = vld [vmem:[%s1 + $0x148] sm:$0xff]
  %v66 = vld [vmem:[%s1 + $0x150] sm:$0xff]
  %v67 = vld [vmem:[%s1 + $0x158] sm:$0xff]
  %v68 = vld [vmem:[%s1 + $0x160] sm:$0xff]
  %v69 = vld [vmem:[%s1 + $0x168] sm:$0xff]
  %v70 = vld [vmem:[%s1 + $0x170] sm:$0xff]
  %v71 = vld [vmem:[%s1 + $0x178] sm:$0xff]
  %v72 = vld [vmem:[%s1 + $0x180] sm:$0xff]
  %v73 = vld [vmem:[%s1 + $0x188] sm:$0xff]
  %v74 = vld [vmem:[%s1 + $0x190] sm:$0xff]
  %v75 = vld [vmem:[%s1 + $0x198] sm:$0xff]
  %v76 = vld [vmem:[%s1 + $0x1a0] sm:$0xff]
  %v77 = vld [vmem:[%s1 + $0x1a8] sm:$0xff]
  %v78 = vld [vmem:[%s1 + $0x1b0] sm:$0xff]
  %v79 = vld [vmem:[%s1 + $0x1b8] sm:$0xff]
  %v80 = vld [vmem:[%s1 + $0x1c0] sm:$0xff]
  %v81 = vld [vmem:[%s1 + $0x1c8] sm:$0xff]
  %v82 = vld [vmem:[%s1 + $0x1d0] sm:$0xff]
  %v83 = vld [vmem:[%s1 + $0x1d8] sm:$0xff]
  %v84 = vld [vmem:[%s1 + $0x1e0] sm:$0xff]
  %v85 = vld [vmem:[%s1 + $0x1e8] sm:$0xff]
  %v86 = vld [vmem:[%s1 + $0x1f0] sm:$0xff]
  %v87 = vld [vmem:[%s1 + $0x1f8] sm:$0xff]
  %v88 = vld [vmem:[%s1 + $0x200] sm:$0xff]
  %v89 = vld [vmem:[%s1 + $0x208] sm:$0xff]
  %v90 = vld [vmem:[%s1 + $0x210] sm:$0xff]
  %v91 = vld [vmem:[%s1 + $0x218] sm:$0xff]
  %v92 = vld [vmem:[%s1 + $0x220] sm:$0xff]
  %v93 = vld [vmem:[%s1 + $0x228] sm:$0xff]
  %v94 = vld [vmem:[%s1 + $0x230] sm:$0xff]
  %v95 = vld [vmem:[%s1 + $0x238] sm:$0xff]
  %v96 = vld [vmem:[%s1 + $0x240] sm:$0xff]
  %v97 = vld [vmem:[%s1 + $0x248] sm:$0xff]
  %v98 = vld [vmem:[%s1 + $0x250] sm:$0xff]
  %v99 = vld [vmem:[%s1 + $0x258] sm:$0xff]
  %v100 = vld [vmem:[%s1 + $0x260] sm:$0xff]
  %v101 = vld [vmem:[%s1 + $0x268] sm:$0xff]
  %v102 = vld [vmem:[%s1 + $0x270] sm:$0xff]
  %v103 = vld [vmem:[%s1 + $0x278] sm:$0xff]
  %v107 = vunpack.c.l.b16 %v21
  %v108 = vunpack.c.h.b16 %v21
  %v109 = vunpack.c.l.b16 %v22
  %v110 = vunpack.c.h.b16 %v22
  %v111 = vunpack.c.l.b16 %v23
  %v112 = vpack.c.b16 %v107, %v107
  %v113 = vpack.c.b16 %v108, %v108
  %v114 = vpack.c.b16 %v109, %v109
  %v115 = vpack.c.b16 %v110, %v110
  %v116 = vpack.c.b16 %v111, %v111
  %v202 = vunpack.c.l.b16 %v24
  %v203 = vunpack.c.h.b16 %v24
  %v204 = vunpack.c.l.b16 %v25
  %v205 = vunpack.c.h.b16 %v25
  %v206 = vunpack.c.l.b16 %v26
  %v207 = vunpack.c.h.b16 %v26
  %v208 = vunpack.c.l.b16 %v27
  %v209 = vunpack.c.h.b16 %v27
  %v210 = vunpack.c.l.b16 %v28
  %v211 = vunpack.c.h.b16 %v28
  %v212 = vunpack.c.l.b16 %v29
  %v213 = vunpack.c.h.b16 %v29
  %v214 = vunpack.c.l.b16 %v30
  %v215 = vunpack.c.h.b16 %v30
  %v216 = vunpack.c.l.b16 %v31
  %v217 = vunpack.c.h.b16 %v31
  %v218 = vunpack.c.l.b16 %v32
  %v219 = vunpack.c.h.b16 %v32
  %v220 = vunpack.c.l.b16 %v33
  %v221 = vunpack.c.h.b16 %v33
  %v222 = vunpack.c.l.b16 %v34
  %v223 = vunpack.c.h.b16 %v34
  %v224 = vunpack.c.l.b16 %v35
  %v225 = vunpack.c.h.b16 %v35
  %v226 = vunpack.c.l.b16 %v36
  %v227 = vunpack.c.h.b16 %v36
  %v228 = vunpack.c.l.b16 %v37
  %v229 = vunpack.c.h.b16 %v37
  %v230 = vunpack.c.l.b16 %v38
  %v231 = vunpack.c.h.b16 %v38
  %v232 = vunpack.c.l.b16 %v39
  %v233 = vunpack.c.h.b16 %v39
  %v234 = vunpack.c.l.b16 %v40
  %v235 = vunpack.c.h.b16 %v40
  %v236 = vunpack.c.l.b16 %v41
  %v237 = vunpack.c.h.b16 %v41
  %v238 = vunpack.c.l.b16 %v42
  %v239 = vunpack.c.h.b16 %v42
  %v240 = vunpack.c.l.b16 %v43
  %v241 = vunpack.c.h.b16 %v43
  %v242 = vunpack.c.l.b16 %v44
  %v243 = vunpack.c.h.b16 %v44
  %v244 = vunpack.c.l.b16 %v45
  %v245 = vunpack.c.h.b16 %v45
  %v246 = vunpack.c.l.b16 %v46
  %v247 = vunpack.c.h.b16 %v46
  %v248 = vunpack.c.l.b16 %v47
  %v249 = vunpack.c.h.b16 %v47
  %v250 = vunpack.c.l.b16 %v48
  %v251 = vunpack.c.h.b16 %v48
  %v252 = vunpack.c.l.b16 %v49
  %v253 = vunpack.c.h.b16 %v49
  %v254 = vunpack.c.l.b16 %v50
  %v255 = vunpack.c.h.b16 %v50
  %v256 = vunpack.c.l.b16 %v51
  %v257 = vunpack.c.h.b16 %v51
  %v258 = vunpack.c.l.b16 %v52
  %v259 = vunpack.c.h.b16 %v52
  %v260 = vunpack.c.l.b16 %v53
  %v261 = vunpack.c.h.b16 %v53
  %v262 = vunpack.c.l.b16 %v54
  %v263 = vunpack.c.h.b16 %v54
  %v264 = vunpack.c.l.b16 %v55
  %v265 = vunpack.c.h.b16 %v55
  %v266 = vunpack.c.l.b16 %v56
  %v267 = vunpack.c.h.b16 %v56
  %v268 = vunpack.c.l.b16 %v57
  %v269 = vunpack.c.h.b16 %v57
  %v270 = vunpack.c.l.b16 %v58
  %v271 = vunpack.c.h.b16 %v58
  %v272 = vunpack.c.l.b16 %v59
  %v273 = vunpack.c.h.b16 %v59
  %v274 = vunpack.c.l.b16 %v60
  %v275 = vunpack.c.h.b16 %v60
  %v276 = vunpack.c.l.b16 %v61
  %v277 = vunpack.c.h.b16 %v61
  %v278 = vunpack.c.l.b16 %v62
  %v279 = vunpack.c.h.b16 %v62
  %v280 = vunpack.c.l.b16 %v63
  %v281 = vunpack.c.h.b16 %v63
  %v282 = vunpack.c.l.b16 %v64
  %v283 = vunpack.c.h.b16 %v64
  %v284 = vunpack.c.l.b16 %v65
  %v285 = vunpack.c.h.b16 %v65
  %v286 = vunpack.c.l.b16 %v66
  %v287 = vunpack.c.h.b16 %v66
  %v288 = vunpack.c.l.b16 %v67
  %v289 = vunpack.c.h.b16 %v67
  %v290 = vunpack.c.l.b16 %v68
  %v291 = vunpack.c.h.b16 %v68
  %v292 = vunpack.c.l.b16 %v69
  %v293 = vunpack.c.h.b16 %v69
  %v294 = vunpack.c.l.b16 %v70
  %v295 = vunpack.c.h.b16 %v70
  %v296 = vunpack.c.l.b16 %v71
  %v297 = vunpack.c.h.b16 %v71
  %v298 = vunpack.c.l.b16 %v72
  %v299 = vunpack.c.h.b16 %v72
  %v300 = vunpack.c.l.b16 %v73
  %v301 = vunpack.c.h.b16 %v73
  %v302 = vunpack.c.l.b16 %v74
  %v303 = vunpack.c.h.b16 %v74
  %v304 = vunpack.c.l.b16 %v75
  %v305 = vunpack.c.h.b16 %v75
  %v306 = vunpack.c.l.b16 %v76
  %v307 = vunpack.c.h.b16 %v76
  %v308 = vunpack.c.l.b16 %v77
  %v309 = vunpack.c.h.b16 %v77
  %v310 = vunpack.c.l.b16 %v78
  %v311 = vunpack.c.h.b16 %v78
  %v312 = vunpack.c.l.b16 %v79
  %v313 = vunpack.c.h.b16 %v79
  %v314 = vunpack.c.l.b16 %v80
  %v315 = vunpack.c.h.b16 %v80
  %v316 = vunpack.c.l.b16 %v81
  %v317 = vunpack.c.h.b16 %v81
  %v318 = vunpack.c.l.b16 %v82
  %v319 = vunpack.c.h.b16 %v82
  %v320 = vunpack.c.l.b16 %v83
  %v321 = vunpack.c.h.b16 %v83
  %v322 = vunpack.c.l.b16 %v84
  %v323 = vunpack.c.h.b16 %v84
  %v324 = vunpack.c.l.b16 %v85
  %v325 = vunpack.c.h.b16 %v85
  %v326 = vunpack.c.l.b16 %v86
  %v327 = vunpack.c.h.b16 %v86
  %v328 = vunpack.c.l.b16 %v87
  %v329 = vunpack.c.h.b16 %v87
  %v330 = vunpack.c.l.b16 %v88
  %v331 = vunpack.c.h.b16 %v88
  %v332 = vunpack.c.l.b16 %v89
  %v333 = vunpack.c.h.b16 %v89
  %v334 = vunpack.c.l.b16 %v90
  %v335 = vunpack.c.h.b16 %v90
  %v336 = vunpack.c.l.b16 %v91
  %v337 = vunpack.c.h.b16 %v91
  %v338 = vunpack.c.l.b16 %v92
  %v339 = vunpack.c.h.b16 %v92
  %v340 = vunpack.c.l.b16 %v93
  %v341 = vunpack.c.h.b16 %v93
  %v342 = vunpack.c.l.b16 %v94
  %v343 = vunpack.c.h.b16 %v94
  %v344 = vunpack.c.l.b16 %v95
  %v345 = vunpack.c.h.b16 %v95
  %v346 = vunpack.c.l.b16 %v96
  %v347 = vunpack.c.h.b16 %v96
  %v348 = vunpack.c.l.b16 %v97
  %v349 = vunpack.c.h.b16 %v97
  %v350 = vunpack.c.l.b16 %v98
  %v351 = vunpack.c.h.b16 %v98
  %v352 = vunpack.c.l.b16 %v99
  %v353 = vunpack.c.h.b16 %v99
  %v354 = vunpack.c.l.b16 %v100
  %v355 = vunpack.c.h.b16 %v100
  %v356 = vunpack.c.l.b16 %v101
  %v357 = vunpack.c.h.b16 %v101
  %v358 = vunpack.c.l.b16 %v102
  %v359 = vunpack.c.h.b16 %v102
  %v360 = vunpack.c.l.b16 %v103
  %v361 = vunpack.c.h.b16 %v103
  %v362 = vpack.c.b16 %v204, %v202
  %v363 = vpack.c.b16 %v205, %v203
  %v364 = vpack.c.b16 %v208, %v206
  %v365 = vpack.c.b16 %v209, %v207
  %v366 = vpack.c.b16 %v212, %v210
  %v367 = vpack.c.b16 %v213, %v211
  %v368 = vpack.c.b16 %v216, %v214
  %v369 = vpack.c.b16 %v217, %v215
  %v370 = vpack.c.b16 %v220, %v218
  %v371 = vpack.c.b16 %v221, %v219
  %v372 = vpack.c.b16 %v224, %v222
  %v373 = vpack.c.b16 %v225, %v223
  %v374 = vpack.c.b16 %v228, %v226
  %v375 = vpack.c.b16 %v229, %v227
  %v376 = vpack.c.b16 %v232, %v230
  %v377 = vpack.c.b16 %v233, %v231
  %v378 = vpack.c.b16 %v236, %v234
  %v379 = vpack.c.b16 %v237, %v235
  %v380 = vpack.c.b16 %v240, %v238
  %v381 = vpack.c.b16 %v241, %v239
  %v382 = vpack.c.b16 %v244, %v242
  %v383 = vpack.c.b16 %v245, %v243
  %v384 = vpack.c.b16 %v248, %v246
  %v385 = vpack.c.b16 %v249, %v247
  %v386 = vpack.c.b16 %v252, %v250
  %v387 = vpack.c.b16 %v253, %v251
  %v388 = vpack.c.b16 %v256, %v254
  %v389 = vpack.c.b16 %v257, %v255
  %v390 = vpack.c.b16 %v260, %v258
  %v391 = vpack.c.b16 %v261, %v259
  %v392 = vpack.c.b16 %v264, %v262
  %v393 = vpack.c.b16 %v265, %v263
  %v394 = vpack.c.b16 %v268, %v266
  %v395 = vpack.c.b16 %v269, %v267
  %v396 = vpack.c.b16 %v272, %v270
  %v397 = vpack.c.b16 %v273, %v271
  %v398 = vpack.c.b16 %v276, %v274
  %v399 = vpack.c.b16 %v277, %v275
  %v400 = vpack.c.b16 %v280, %v278
  %v401 = vpack.c.b16 %v281, %v279
  %v402 = vpack.c.b16 %v284, %v282
  %v403 = vpack.c.b16 %v285, %v283
  %v404 = vpack.c.b16 %v288, %v286
  %v405 = vpack.c.b16 %v289, %v287
  %v406 = vpack.c.b16 %v292, %v290
  %v407 = vpack.c.b16 %v293, %v291
  %v408 = vpack.c.b16 %v296, %v294
  %v409 = vpack.c.b16 %v297, %v295
  %v410 = vpack.c.b16 %v300, %v298
  %v411 = vpack.c.b16 %v301, %v299
  %v412 = vpack.c.b16 %v304, %v302
  %v413 = vpack.c.b16 %v305, %v303
  %v414 = vpack.c.b16 %v308, %v306
  %v415 = vpack.c.b16 %v309, %v307
  %v416 = vpack.c.b16 %v312, %v310
  %v417 = vpack.c.b16 %v313, %v311
  %v418 = vpack.c.b16 %v316, %v314
  %v419 = vpack.c.b16 %v317, %v315
  %v420 = vpack.c.b16 %v320, %v318
  %v421 = vpack.c.b16 %v321, %v319
  %v422 = vpack.c.b16 %v324, %v322
  %v423 = vpack.c.b16 %v325, %v323
  %v424 = vpack.c.b16 %v328, %v326
  %v425 = vpack.c.b16 %v329, %v327
  %v426 = vpack.c.b16 %v332, %v330
  %v427 = vpack.c.b16 %v333, %v331
  %v428 = vpack.c.b16 %v336, %v334
  %v429 = vpack.c.b16 %v337, %v335
  %v430 = vpack.c.b16 %v340, %v338
  %v431 = vpack.c.b16 %v341, %v339
  %v432 = vpack.c.b16 %v344, %v342
  %v433 = vpack.c.b16 %v345, %v343
  %v434 = vpack.c.b16 %v348, %v346
  %v435 = vpack.c.b16 %v349, %v347
  %v436 = vpack.c.b16 %v352, %v350
  %v437 = vpack.c.b16 %v353, %v351
  %v438 = vpack.c.b16 %v356, %v354
  %v439 = vpack.c.b16 %v357, %v355
  %v440 = vpack.c.b16 %v360, %v358
  %v441 = vpack.c.b16 %v361, %v359
  %522 = vmatprep.subr.bf16.mxu0 %v377
  %523 = vmatpush1.bf16.msra.mxu0 %v376
  %524 = vmatprep.subr.bf16.mxu0 %v375
  %525 = vmatpush1.bf16.msra.mxu0 %v374
  %526 = vmatprep.subr.bf16.mxu0 %v373
  %527 = vmatpush1.bf16.msra.mxu0 %v372
  %528 = vmatprep.subr.bf16.mxu0 %v371
  %529 = vmatpush1.bf16.msra.mxu0 %v370
  %530 = vmatprep.subr.bf16.mxu0 %v369
  %531 = vmatpush1.bf16.msra.mxu0 %v368
  %532 = vmatprep.subr.bf16.mxu0 %v367
  %533 = vmatpush1.bf16.msra.mxu0 %v366
  %534 = vmatprep.subr.bf16.mxu0 %v365
  %535 = vmatpush1.bf16.msra.mxu0 %v364
  %536 = vmatprep.subr.bf16.mxu0 %v363
  %537 = vmatpush1.bf16.msra.mxu0 %v362
  %538 = vmatprep.subr.bf16.mxu0 %v393
  %539 = vmatpush2.bf16.msra.mxu0 %v392
  %540 = vmatprep.subr.bf16.mxu0 %v391
  %541 = vmatpush2.bf16.msra.mxu0 %v390
  %542 = vmatprep.subr.bf16.mxu0 %v389
  %543 = vmatpush2.bf16.msra.mxu0 %v388
  %544 = vmatprep.subr.bf16.mxu0 %v387
  %545 = vmatpush2.bf16.msra.mxu0 %v386
  %546 = vmatprep.subr.bf16.mxu0 %v385
  %547 = vmatpush2.bf16.msra.mxu0 %v384
  %548 = vmatprep.subr.bf16.mxu0 %v383
  %549 = vmatpush2.bf16.msra.mxu0 %v382
  %550 = vmatprep.subr.bf16.mxu0 %v381
  %551 = vmatpush2.bf16.msra.mxu0 %v380
  %552 = vmatprep.subr.bf16.mxu0 %v379
  %553 = vmatpush2.bf16.msra.mxu0 %v378
  %554 = vmatprep.mubr.bf16.mxu0 %v113
  %555 = vmatmul.mubr.bf16.gmra.mxu0 %v112
  %v556 = vpop.f32.mrf.mxu0
  %v557 = vadd.f32 0.0, %v556
  %v558 = vpop.f32.mrf.mxu0
  %v559 = vadd.f32 0.0, %v558
  %v560 = vpop.f32.mrf.mxu0
  %v561 = vpop.f32.mrf.mxu0
  %562 = vdwg.mxu0
  %563 = vmatprep.subr.bf16.mxu0 %v409
  %564 = vmatpush1.bf16.msra.mxu0 %v408
  %565 = vmatprep.subr.bf16.mxu0 %v407
  %566 = vmatpush1.bf16.msra.mxu0 %v406
  %567 = vmatprep.subr.bf16.mxu0 %v405
  %568 = vmatpush1.bf16.msra.mxu0 %v404
  %569 = vmatprep.subr.bf16.mxu0 %v403
  %570 = vmatpush1.bf16.msra.mxu0 %v402
  %571 = vmatprep.subr.bf16.mxu0 %v401
  %572 = vmatpush1.bf16.msra.mxu0 %v400
  %573 = vmatprep.subr.bf16.mxu0 %v399
  %574 = vmatpush1.bf16.msra.mxu0 %v398
  %575 = vmatprep.subr.bf16.mxu0 %v397
  %576 = vmatpush1.bf16.msra.mxu0 %v396
  %577 = vmatprep.subr.bf16.mxu0 %v395
  %578 = vmatpush1.bf16.msra.mxu0 %v394
  %579 = vmatprep.subr.bf16.mxu0 %v425
  %580 = vmatpush2.bf16.msra.mxu0 %v424
  %581 = vmatprep.subr.bf16.mxu0 %v423
  %582 = vmatpush2.bf16.msra.mxu0 %v422
  %583 = vmatprep.subr.bf16.mxu0 %v421
  %584 = vmatpush2.bf16.msra.mxu0 %v420
  %585 = vmatprep.subr.bf16.mxu0 %v419
  %586 = vmatpush2.bf16.msra.mxu0 %v418
  %587 = vmatprep.subr.bf16.mxu0 %v417
  %588 = vmatpush2.bf16.msra.mxu0 %v416
  %589 = vmatprep.subr.bf16.mxu0 %v415
  %590 = vmatpush2.bf16.msra.mxu0 %v414
  %591 = vmatprep.subr.bf16.mxu0 %v413
  %592 = vmatpush2.bf16.msra.mxu0 %v412
  %593 = vmatprep.subr.bf16.mxu0 %v411
  %594 = vmatpush2.bf16.msra.mxu0 %v410
  %595 = vmatprep.mubr.bf16.mxu0 %v115
  %596 = vmatmul.mubr.bf16.gmra.mxu0 %v114
  %v597 = vpop.f32.mrf.mxu0
  %v598 = vadd.f32 %v557, %v597
  %v599 = vpop.f32.mrf.mxu0
  %v600 = vadd.f32 %v559, %v599
  %v601 = vpop.f32.mrf.mxu0
  %v602 = vpop.f32.mrf.mxu0
  %603 = vdwg.mxu0
  %604 = vmatprep.subr.bf16.mxu0 %v441
  %605 = vmatpush1.bf16.msra.mxu0 %v440
  %606 = vmatprep.subr.bf16.mxu0 %v439
  %607 = vmatpush1.bf16.msra.mxu0 %v438
  %608 = vmatprep.subr.bf16.mxu0 %v437
  %609 = vmatpush1.bf16.msra.mxu0 %v436
  %610 = vmatprep.subr.bf16.mxu0 %v435
  %611 = vmatpush1.bf16.msra.mxu0 %v434
  %612 = vmatprep.subr.bf16.mxu0 %v433
  %613 = vmatpush1.bf16.msra.mxu0 %v432
  %614 = vmatprep.subr.bf16.mxu0 %v431
  %615 = vmatpush1.bf16.msra.mxu0 %v430
  %616 = vmatprep.subr.bf16.mxu0 %v429
  %617 = vmatpush1.bf16.msra.mxu0 %v428
  %618 = vmatprep.subr.bf16.mxu0 %v427
  %619 = vmatpush1.bf16.msra.mxu0 %v426
  %620 = vmatprep.subr.bf16.mxu0 0
  %621 = vmatpush2.bf16.msra.mxu0 0
  %622 = vmatprep.subr.bf16.mxu0 0
  %623 = vmatpush2.bf16.msra.mxu0 0
  %624 = vmatprep.subr.bf16.mxu0 0
  %625 = vmatpush2.bf16.msra.mxu0 0
  %626 = vmatprep.subr.bf16.mxu0 0
  %627 = vmatpush2.bf16.msra.mxu0 0
  %628 = vmatprep.subr.bf16.mxu0 0
  %629 = vmatpush2.bf16.msra.mxu0 0
  %630 = vmatprep.subr.bf16.mxu0 0
  %631 = vmatpush2.bf16.msra.mxu0 0
  %632 = vmatprep.subr.bf16.mxu0 0
  %633 = vmatpush2.bf16.msra.mxu0 0
  %634 = vmatprep.subr.bf16.mxu0 0
  %635 = vmatpush2.bf16.msra.mxu0 0
  %636 = vmatprep.mubr.bf16.mxu0 0
  %637 = vmatmul.mubr.bf16.gmra.mxu0 %v116
  %v638 = vpop.f32.mrf.mxu0
  %v639 = vadd.f32 %v598, %v638
  %v640 = vpop.f32.mrf.mxu0
  %v641 = vadd.f32 %v600, %v640
  %v642 = vpop.f32.mrf.mxu0
  %v643 = vpop.f32.mrf.mxu0
  %644 = vdwg.mxu0
  %v645 = vrot.slane %v639, 4
  %v646 = vadd.f32 %v639, %v645
  %v647 = vrot.slane %v646, 2
  %v648 = vadd.f32 %v646, %v647
  %v649 = vrot.slane %v648, 1
  %v650 = vadd.f32 %v648, %v649
  %v651 = vrot.slane %v641, 4
  %v652 = vadd.f32 %v641, %v651
  %v653 = vrot.slane %v652, 2
  %v654 = vadd.f32 %v652, %v653
  %v655 = vrot.slane %v654, 1
  %v656 = vadd.f32 %v654, %v655
  %v657 = vmul.f32 %v639, %v639
  %v658 = vmul.f32 %v641, %v641
  %v659 = vrot.slane %v657, 4
  %v660 = vadd.f32 %v657, %v659
  %v661 = vrot.slane %v660, 2
  %v662 = vadd.f32 %v660, %v661
  %v663 = vrot.slane %v662, 1
  %v664 = vadd.f32 %v662, %v663
  %v665 = vrot.slane %v658, 4
  %v666 = vadd.f32 %v658, %v665
  %v667 = vrot.slane %v666, 2
  %v668 = vadd.f32 %v666, %v667
  %v669 = vrot.slane %v668, 1
  %v670 = vadd.f32 %v668, %v669
  %vm671 = vcmask 1040384
  %v672 = vsel %vm671, %v650, %v664
  %v673 = vsel %vm671, %v656, %v670
  %v674 = vld [vmem:[%s4] sm:$0xff]
  %v675 = vld [vmem:[%s4 + $0x8] sm:$0xff]
  %v676 = vld [vmem:[%s4 + $0x10] sm:$0xff]
  %v677 = vld [vmem:[%s4 + $0x18] sm:$0xff]
  %v678 = vld [vmem:[%s4 + $0x20] sm:$0xff]
  %v679 = vld [vmem:[%s4 + $0x28] sm:$0xff]
  %v680 = vld [vmem:[%s4 + $0x30] sm:$0xff]
  %v681 = vld [vmem:[%s4 + $0x38] sm:$0xff]
  %v682 = vld [vmem:[%s4 + $0x40] sm:$0xff]
  %v683 = vld [vmem:[%s4 + $0x48] sm:$0xff]
  %v684 = vld [vmem:[%s4 + $0x50] sm:$0xff]
  %v685 = vld [vmem:[%s4 + $0x58] sm:$0xff]
  %v686 = vld [vmem:[%s4 + $0x60] sm:$0xff]
  %v687 = vld [vmem:[%s4 + $0x68] sm:$0xff]
  %v688 = vld [vmem:[%s4 + $0x70] sm:$0xff]
  %v689 = vld [vmem:[%s4 + $0x78] sm:$0xff]
  %v690 = vld [vmem:[%s4 + $0x80] sm:$0xff]
  %v691 = vld [vmem:[%s4 + $0x88] sm:$0xff]
  %v692 = vld [vmem:[%s4 + $0x90] sm:$0xff]
  %v693 = vld [vmem:[%s4 + $0x98] sm:$0xff]
  %v694 = vld [vmem:[%s4 + $0xa0] sm:$0xff]
  %v695 = vld [vmem:[%s4 + $0xa8] sm:$0xff]
  %v696 = vld [vmem:[%s4 + $0xb0] sm:$0xff]
  %v697 = vld [vmem:[%s4 + $0xb8] sm:$0xff]
  %v698 = vld [vmem:[%s4 + $0xc0] sm:$0xff]
  %v699 = vld [vmem:[%s4 + $0xc8] sm:$0xff]
  %v700 = vld [vmem:[%s4 + $0xd0] sm:$0xff]
  %v701 = vld [vmem:[%s4 + $0xd8] sm:$0xff]
  %v702 = vld [vmem:[%s4 + $0xe0] sm:$0xff]
  %v703 = vld [vmem:[%s4 + $0xe8] sm:$0xff]
  %v704 = vld [vmem:[%s4 + $0xf0] sm:$0xff]
  %v705 = vld [vmem:[%s4 + $0xf8] sm:$0xff]
  %v706 = vld [vmem:[%s4 + $0x100] sm:$0xff]
  %v707 = vld [vmem:[%s4 + $0x108] sm:$0xff]
  %v708 = vld [vmem:[%s4 + $0x110] sm:$0xff]
  %v709 = vld [vmem:[%s4 + $0x118] sm:$0xff]
  %v710 = vld [vmem:[%s4 + $0x120] sm:$0xff]
  %v711 = vld [vmem:[%s4 + $0x128] sm:$0xff]
  %v712 = vld [vmem:[%s4 + $0x130] sm:$0xff]
  %v713 = vld [vmem:[%s4 + $0x138] sm:$0xff]
  %v714 = vld [vmem:[%s4 + $0x140] sm:$0xff]
  %v715 = vld [vmem:[%s4 + $0x148] sm:$0xff]
  %v716 = vld [vmem:[%s4 + $0x150] sm:$0xff]
  %v717 = vld [vmem:[%s4 + $0x158] sm:$0xff]
  %v718 = vld [vmem:[%s4 + $0x160] sm:$0xff]
  %v719 = vld [vmem:[%s4 + $0x168] sm:$0xff]
  %v720 = vld [vmem:[%s4 + $0x170] sm:$0xff]
  %v721 = vld [vmem:[%s4 + $0x178] sm:$0xff]
  %v722 = vld [vmem:[%s4 + $0x180] sm:$0xff]
  %v723 = vld [vmem:[%s4 + $0x188] sm:$0xff]
  %v724 = vld [vmem:[%s4 + $0x190] sm:$0xff]
  %v725 = vld [vmem:[%s4 + $0x198] sm:$0xff]
  %v726 = vld [vmem:[%s4 + $0x1a0] sm:$0xff]
  %v727 = vld [vmem:[%s4 + $0x1a8] sm:$0xff]
  %v728 = vld [vmem:[%s4 + $0x1b0] sm:$0xff]
  %v729 = vld [vmem:[%s4 + $0x1b8] sm:$0xff]
  %v730 = vld [vmem:[%s4 + $0x1c0] sm:$0xff]
  %v731 = vld [vmem:[%s4 + $0x1c8] sm:$0xff]
  %v732 = vld [vmem:[%s4 + $0x1d0] sm:$0xff]
  %v733 = vld [vmem:[%s4 + $0x1d8] sm:$0xff]
  %v734 = vld [vmem:[%s4 + $0x1e0] sm:$0xff]
  %v735 = vld [vmem:[%s4 + $0x1e8] sm:$0xff]
  %v736 = vld [vmem:[%s4 + $0x1f0] sm:$0xff]
  %v737 = vld [vmem:[%s4 + $0x1f8] sm:$0xff]
  %738 = vmatprep.subr.mxu0 %v705
  %739 = vmatpush1.msra.mxu0 %v704
  %740 = vmatprep.subr.mxu0 %v703
  %741 = vmatpush1.msra.mxu0 %v702
  %742 = vmatprep.subr.mxu0 %v701
  %743 = vmatpush1.msra.mxu0 %v700
  %744 = vmatprep.subr.mxu0 %v699
  %745 = vmatpush1.msra.mxu0 %v698
  %746 = vmatprep.subr.mxu0 %v697
  %747 = vmatpush1.msra.mxu0 %v696
  %748 = vmatprep.subr.mxu0 %v695
  %749 = vmatpush1.msra.mxu0 %v694
  %750 = vmatprep.subr.mxu0 %v693
  %751 = vmatpush1.msra.mxu0 %v692
  %752 = vmatprep.subr.mxu0 %v691
  %753 = vmatpush1.msra.mxu0 %v690
  %754 = vmatprep.subr.mxu0 %v689
  %755 = vmatpush1.msra.mxu0 %v688
  %756 = vmatprep.subr.mxu0 %v687
  %757 = vmatpush1.msra.mxu0 %v686
  %758 = vmatprep.subr.mxu0 %v685
  %759 = vmatpush1.msra.mxu0 %v684
  %760 = vmatprep.subr.mxu0 %v683
  %761 = vmatpush1.msra.mxu0 %v682
  %762 = vmatprep.subr.mxu0 %v681
  %763 = vmatpush1.msra.mxu0 %v680
  %764 = vmatprep.subr.mxu0 %v679
  %765 = vmatpush1.msra.mxu0 %v678
  %766 = vmatprep.subr.mxu0 %v677
  %767 = vmatpush1.msra.mxu0 %v676
  %768 = vmatprep.subr.mxu0 %v675
  %769 = vmatpush1.msra.mxu0 %v674
  %770 = vmatprep.subr.mxu0 %v737
  %771 = vmatpush2.msra.mxu0 %v736
  %772 = vmatprep.subr.mxu0 %v735
  %773 = vmatpush2.msra.mxu0 %v734
  %774 = vmatprep.subr.mxu0 %v733
  %775 = vmatpush2.msra.mxu0 %v732
  %776 = vmatprep.subr.mxu0 %v731
  %777 = vmatpush2.msra.mxu0 %v730
  %778 = vmatprep.subr.mxu0 %v729
  %779 = vmatpush2.msra.mxu0 %v728
  %780 = vmatprep.subr.mxu0 %v727
  %781 = vmatpush2.msra.mxu0 %v726
  %782 = vmatprep.subr.mxu0 %v725
  %783 = vmatpush2.msra.mxu0 %v724
  %784 = vmatprep.subr.mxu0 %v723
  %785 = vmatpush2.msra.mxu0 %v722
  %786 = vmatprep.subr.mxu0 %v721
  %787 = vmatpush2.msra.mxu0 %v720
  %788 = vmatprep.subr.mxu0 %v719
  %789 = vmatpush2.msra.mxu0 %v718
  %790 = vmatprep.subr.mxu0 %v717
  %791 = vmatpush2.msra.mxu0 %v716
  %792 = vmatprep.subr.mxu0 %v715
  %793 = vmatpush2.msra.mxu0 %v714
  %794 = vmatprep.subr.mxu0 %v713
  %795 = vmatpush2.msra.mxu0 %v712
  %796 = vmatprep.subr.mxu0 %v711
  %797 = vmatpush2.msra.mxu0 %v710
  %798 = vmatprep.subr.mxu0 %v709
  %799 = vmatpush2.msra.mxu0 %v708
  %800 = vmatprep.subr.mxu0 %v707
  %801 = vmatpush2.msra.mxu0 %v706
  %802 = vmatprep.mubr.f32.mxu0 %v673
  %803 = vmatmul.mubr.f32.gmra.mxu0 %v672
  %v804 = vpop.f32.mrf.mxu0
  %v805 = vadd.f32 0.0, %v804
  %v806 = vpop.f32.mrf.mxu0
  %v807 = vadd.f32 0.0, %v806
  %808 = vdwg.mxu0
  %v809 = vmul.f32 %v805, 0.125
  %v810 = vmul.f32 %v807, 0.125
  %v811 = vmul.f32 %v809, %v809
  %v812 = vmul.f32 %v810, %v810
  %v815 = vrot.slane %v811, 7
  %v816 = vrot.slane %v812, 7
  %v819 = vsub.f32 %v809, %v815
  %v820 = vsub.f32 %v810, %v816
  %v821 = vlaneseq
  %v822 = vshrl.u32 %v821, 7
  %v823 = vsub.s32 0, %v822
  %v824 = vrot.slane %v809, %v823
  %v825 = vlaneseq
  %v826 = vshrl.u32 %v825, 7
  %v827 = vsub.s32 0, %v826
  %v828 = vrot.slane %v810, %v827
  %v829 = vsub.f32 %v639, %v824
  %v830 = vsub.f32 %v641, %v828
  %v831 = vadd.f32 %v819, 1e-05
  %v832 = vadd.f32 %v820, 1e-05
  %v833 = vrsqrt.pop %v831
  %v834 = vrsqrt.pop %v832
  %v835 = vlaneseq
  %v836 = vshrl.u32 %v835, 7
  %v837 = vsub.s32 1, %v836
  %v838 = vrot.slane %v833, %v837
  %v839 = vlaneseq
  %v840 = vshrl.u32 %v839, 7
  %v841 = vsub.s32 1, %v840
  %v842 = vrot.slane %v834, %v841
  %v843 = vmul.f32 %v829, %v838
  %v844 = vmul.f32 %v830, %v842
  %v845 = vld [vmem:[%s2] sm:$0x3]
  %v847 = vlaneseq
  %v848 = vshrl.u32 %v847, 7
  %v849 = vsub.s32 0, %v848
  %v850 = vrot.slane %v845, %v849
  %v851 = vlaneseq
  %v852 = vshrl.u32 %v851, 7
  %v853 = vsub.s32 1, %v852
  %v854 = vrot.slane %v845, %v853
  %v857 = vmul.f32 %v843, %v850
  %v858 = vmul.f32 %v844, %v854
  %v859 = vld [vmem:[%s3] sm:$0x3]
  %v861 = vlaneseq
  %v862 = vshrl.u32 %v861, 7
  %v863 = vsub.s32 0, %v862
  %v864 = vrot.slane %v859, %v863
  %v865 = vlaneseq
  %v866 = vshrl.u32 %v865, 7
  %v867 = vsub.s32 1, %v866
  %v868 = vrot.slane %v859, %v867
  %v871 = vadd.f32 %v857, %v864
  %v872 = vadd.f32 %v858, %v868
  %873 = vst [vmem:[%s5] sm:$0xff] %v871
  %874 = vst [vmem:[%s5 + $0x8] sm:$0xff] %v872
  // Predicated region
  $region22: #{zip_unet_forward.17} parent=0 // pred_check
    _
  $region23: #{zip_unet_forward.17} parent=0 // pred_check_branch
    %876 = sbr.rel (0) target = $region25
  $region24: #{zip_unet_forward.17} parent=0 // pred_region
    _
  $region25: #{zip_unet_forward.17} parent=0 // pred_fallthru
    _
  // Predicated region
  $region26: #{zip_unet_forward.17} parent=0 // pred_check
    _
  $region27: #{zip_unet_forward.17} parent=0 // pred_check_branch
    %878 = sbr.rel (0) target = $region29
  $region28: #{zip_unet_forward.17} parent=0 // pred_region
    _
  $region29: #{zip_unet_forward.17} parent=0 // pred_fallthru
    _

// kernel: zip_unet_forward.18
$region0: #{zip_unet_forward.18}
  #allocation0 [shape = 'u32[]', space=smem, size = 0x4, offset = 0x4, fixed_abs, tag = 'smem constant byte address 0x4 - core index']
  #allocation1 [shape = 'u32[144,128]{1,0:T(1,128)}', space=vmem, size = 0x12000, scoped, tag = 'internal scratch']
  %s0 = inlined_call_operand.vmem [shape: bf16[8,1152], index: 0, kind: input, shape index: {}]
  %s1 = inlined_call_operand.vmem [shape: bf16[1152,128], index: 1, kind: input, shape index: {}]
  %s2 = inlined_call_operand.vmem [shape: f32[1,128], index: 2, kind: input, shape index: {}]
  %s3 = inlined_call_operand.vmem [shape: f32[1,128], index: 3, kind: input, shape index: {}]
  %s4 = inlined_call_operand.vmem [shape: f32[128,128], index: 4, kind: input, shape index: {}]
  %s5 = inlined_call_operand.vmem [shape: f32[8,128], index: 5, kind: output, shape index: {}]
  %s6 = sld [smem:[#allocation0]]
  $region30: #{zip_unet_forward.18} parent=0
    _
  %s8 = ssub.s32 1, %s6
  %s9 = scalar_select 0, %s8, %s6
  // Predicated region
  $region2: #{zip_unet_forward.18} parent=0 // pred_check
    _
  $region3: #{zip_unet_forward.18} parent=0 // pred_check_branch
    %11 = sbr.rel (0) target = $region5
  $region4: #{zip_unet_forward.18} parent=0 // pred_region
    _
  $region5: #{zip_unet_forward.18} parent=0 // pred_fallthru
    _
  // Predicated region
  $region6: #{zip_unet_forward.18} parent=0 // pred_check
    _
  $region7: #{zip_unet_forward.18} parent=0 // pred_check_branch
    %13 = sbr.rel (0) target = $region9
  $region8: #{zip_unet_forward.18} parent=0 // pred_region
    _
  $region9: #{zip_unet_forward.18} parent=0 // pred_fallthru
    _
  // Predicated region
  $region10: #{zip_unet_forward.18} parent=0 // pred_check
    _
  $region11: #{zip_unet_forward.18} parent=0 // pred_check_branch
    %15 = sbr.rel (0) target = $region13
  $region12: #{zip_unet_forward.18} parent=0 // pred_region
    _
  $region13: #{zip_unet_forward.18} parent=0 // pred_fallthru
    _
  // Predicated region
  $region14: #{zip_unet_forward.18} parent=0 // pred_check
    _
  $region15: #{zip_unet_forward.18} parent=0 // pred_check_branch
    %17 = sbr.rel (0) target = $region17
  $region16: #{zip_unet_forward.18} parent=0 // pred_region
    _
  $region17: #{zip_unet_forward.18} parent=0 // pred_fallthru
    _
  // Predicated region
  $region18: #{zip_unet_forward.18} parent=0 // pred_check
    _
  $region19: #{zip_unet_forward.18} parent=0 // pred_check_branch
    %19 = sbr.rel (0) target = $region21
  $region20: #{zip_unet_forward.18} parent=0 // pred_region
    _
  $region21: #{zip_unet_forward.18} parent=0 // pred_fallthru
    _
  %v21 = vld [vmem:[%s0] sm:$0xff]
  %v22 = vld [vmem:[%s0 + $0x8] sm:$0xff]
  %v23 = vld [vmem:[%s0 + $0x10] sm:$0xff]
  %v24 = vld [vmem:[%s0 + $0x18] sm:$0xff]
  %v25 = vld [vmem:[%s0 + $0x20] sm:$0xf]
  %v26 = vld [vmem:[%s1] sm:$0xf]
  %v27 = vld [vmem:[%s1 + $0x4] sm:$0xf]
  %v28 = vld [vmem:[%s1 + $0x8] sm:$0xf]
  %v29 = vld [vmem:[%s1 + $0xc] sm:$0xf]
  %v30 = vld [vmem:[%s1 + $0x10] sm:$0xf]
  %v31 = vld [vmem:[%s1 + $0x14] sm:$0xf]
  %v32 = vld [vmem:[%s1 + $0x18] sm:$0xf]
  %v33 = vld [vmem:[%s1 + $0x1c] sm:$0xf]
  %v34 = vld [vmem:[%s1 + $0x20] sm:$0xf]
  %v35 = vld [vmem:[%s1 + $0x24] sm:$0xf]
  %v36 = vld [vmem:[%s1 + $0x28] sm:$0xf]
  %v37 = vld [vmem:[%s1 + $0x2c] sm:$0xf]
  %v38 = vld [vmem:[%s1 + $0x30] sm:$0xf]
  %v39 = vld [vmem:[%s1 + $0x34] sm:$0xf]
  %v40 = vld [vmem:[%s1 + $0x38] sm:$0xf]
  %v41 = vld [vmem:[%s1 + $0x3c] sm:$0xf]
  %v42 = vld [vmem:[%s1 + $0x40] sm:$0xf]
  %v43 = vld [vmem:[%s1 + $0x44] sm:$0xf]
  %v44 = vld [vmem:[%s1 + $0x48] sm:$0xf]
  %v45 = vld [vmem:[%s1 + $0x4c] sm:$0xf]
  %v46 = vld [vmem:[%s1 + $0x50] sm:$0xf]
  %v47 = vld [vmem:[%s1 + $0x54] sm:$0xf]
  %v48 = vld [vmem:[%s1 + $0x58] sm:$0xf]
  %v49 = vld [vmem:[%s1 + $0x5c] sm:$0xf]
  %v50 = vld [vmem:[%s1 + $0x60] sm:$0xf]
  %v51 = vld [vmem:[%s1 + $0x64] sm:$0xf]
  %v52 = vld [vmem:[%s1 + $0x68] sm:$0xf]
  %v53 = vld [vmem:[%s1 + $0x6c] sm:$0xf]
  %v54 = vld [vmem:[%s1 + $0x70] sm:$0xf]
  %v55 = vld [vmem:[%s1 + $0x74] sm:$0xf]
  %v56 = vld [vmem:[%s1 + $0x78] sm:$0xf]
  %v57 = vld [vmem:[%s1 + $0x7c] sm:$0xf]
  %v58 = vld [vmem:[%s1 + $0x80] sm:$0xf]
  %v59 = vld [vmem:[%s1 + $0x84] sm:$0xf]
  %v60 = vld [vmem:[%s1 + $0x88] sm:$0xf]
  %v61 = vld [vmem:[%s1 + $0x8c] sm:$0xf]
  %v62 = vld [vmem:[%s1 + $0x90] sm:$0xf]
  %v63 = vld [vmem:[%s1 + $0x94] sm:$0xf]
  %v64 = vld [vmem:[%s1 + $0x98] sm:$0xf]
  %v65 = vld [vmem:[%s1 + $0x9c] sm:$0xf]
  %v66 = vld [vmem:[%s1 + $0xa0] sm:$0xf]
  %v67 = vld [vmem:[%s1 + $0xa4] sm:$0xf]
  %v68 = vld [vmem:[%s1 + $0xa8] sm:$0xf]
  %v69 = vld [vmem:[%s1 + $0xac] sm:$0xf]
  %v70 = vld [vmem:[%s1 + $0xb0] sm:$0xf]
  %v71 = vld [vmem:[%s1 + $0xb4] sm:$0xf]
  %v72 = vld [vmem:[%s1 + $0xb8] sm:$0xf]
  %v73 = vld [vmem:[%s1 + $0xbc] sm:$0xf]
  %v74 = vld [vmem:[%s1 + $0xc0] sm:$0xf]
  %v75 = vld [vmem:[%s1 + $0xc4] sm:$0xf]
  %v76 = vld [vmem:[%s1 + $0xc8] sm:$0xf]
  %v77 = vld [vmem:[%s1 + $0xcc] sm:$0xf]
  %v78 = vld [vmem:[%s1 + $0xd0] sm:$0xf]
  %v79 = vld [vmem:[%s1 + $0xd4] sm:$0xf]
  %v80 = vld [vmem:[%s1 + $0xd8] sm:$0xf]
  %v81 = vld [vmem:[%s1 + $0xdc] sm:$0xf]
  %v82 = vld [vmem:[%s1 + $0xe0] sm:$0xf]
  %v83 = vld [vmem:[%s1 + $0xe4] sm:$0xf]
  %v84 = vld [vmem:[%s1 + $0xe8] sm:$0xf]
  %v85 = vld [vmem:[%s1 + $0xec] sm:$0xf]
  %v86 = vld [vmem:[%s1 + $0xf0] sm:$0xf]
  %v87 = vld [vmem:[%s1 + $0xf4] sm:$0xf]
  %v88 = vld [vmem:[%s1 + $0xf8] sm:$0xf]
  %v89 = vld [vmem:[%s1 + $0xfc] sm:$0xf]
  %v90 = vld [vmem:[%s1 + $0x100] sm:$0xf]
  %v91 = vld [vmem:[%s1 + $0x104] sm:$0xf]
  %v92 = vld [vmem:[%s1 + $0x108] sm:$0xf]
  %v93 = vld [vmem:[%s1 + $0x10c] sm:$0xf]
  %v94 = vld [vmem:[%s1 + $0x110] sm:$0xf]
  %v95 = vld [vmem:[%s1 + $0x114] sm:$0xf]
  %v96 = vld [vmem:[%s1 + $0x118] sm:$0xf]
  %v97 = vld [vmem:[%s1 + $0x11c] sm:$0xf]
  %v98 = vld [vmem:[%s1 + $0x120] sm:$0xf]
  %v99 = vld [vmem:[%s1 + $0x124] sm:$0xf]
  %v100 = vld [vmem:[%s1 + $0x128] sm:$0xf]
  %v101 = vld [vmem:[%s1 + $0x12c] sm:$0xf]
  %v102 = vld [vmem:[%s1 + $0x130] sm:$0xf]
  %v103 = vld [vmem:[%s1 + $0x134] sm:$0xf]
  %v104 = vld [vmem:[%s1 + $0x138] sm:$0xf]
  %v105 = vld [vmem:[%s1 + $0x13c] sm:$0xf]
  %v106 = vld [vmem:[%s1 + $0x140] sm:$0xf]
  %v107 = vld [vmem:[%s1 + $0x144] sm:$0xf]
  %v108 = vld [vmem:[%s1 + $0x148] sm:$0xf]
  %v109 = vld [vmem:[%s1 + $0x14c] sm:$0xf]
  %v110 = vld [vmem:[%s1 + $0x150] sm:$0xf]
  %v111 = vld [vmem:[%s1 + $0x154] sm:$0xf]
  %v112 = vld [vmem:[%s1 + $0x158] sm:$0xf]
  %v113 = vld [vmem:[%s1 + $0x15c] sm:$0xf]
  %v114 = vld [vmem:[%s1 + $0x160] sm:$0xf]
  %v115 = vld [vmem:[%s1 + $0x164] sm:$0xf]
  %v116 = vld [vmem:[%s1 + $0x168] sm:$0xf]
  %v117 = vld [vmem:[%s1 + $0x16c] sm:$0xf]
  %v118 = vld [vmem:[%s1 + $0x170] sm:$0xf]
  %v119 = vld [vmem:[%s1 + $0x174] sm:$0xf]
  %v120 = vld [vmem:[%s1 + $0x178] sm:$0xf]
  %v121 = vld [vmem:[%s1 + $0x17c] sm:$0xf]
  %v122 = vld [vmem:[%s1 + $0x180] sm:$0xf]
  %v123 = vld [vmem:[%s1 + $0x184] sm:$0xf]
  %v124 = vld [vmem:[%s1 + $0x188] sm:$0xf]
  %v125 = vld [vmem:[%s1 + $0x18c] sm:$0xf]
  %v126 = vld [vmem:[%s1 + $0x190] sm:$0xf]
  %v127 = vld [vmem:[%s1 + $0x194] sm:$0xf]
  %v128 = vld [vmem:[%s1 + $0x198] sm:$0xf]
  %v129 = vld [vmem:[%s1 + $0x19c] sm:$0xf]
  %v130 = vld [vmem:[%s1 + $0x1a0] sm:$0xf]
  %v131 = vld [vmem:[%s1 + $0x1a4] sm:$0xf]
  %v132 = vld [vmem:[%s1 + $0x1a8] sm:$0xf]
  %v133 = vld [vmem:[%s1 + $0x1ac] sm:$0xf]
  %v134 = vld [vmem:[%s1 + $0x1b0] sm:$0xf]
  %v135 = vld [vmem:[%s1 + $0x1b4] sm:$0xf]
  %v136 = vld [vmem:[%s1 + $0x1b8] sm:$0xf]
  %v137 = vld [vmem:[%s1 + $0x1bc] sm:$0xf]
  %v138 = vld [vmem:[%s1 + $0x1c0] sm:$0xf]
  %v139 = vld [vmem:[%s1 + $0x1c4] sm:$0xf]
  %v140 = vld [vmem:[%s1 + $0x1c8] sm:$0xf]
  %v141 = vld [vmem:[%s1 + $0x1cc] sm:$0xf]
  %v142 = vld [vmem:[%s1 + $0x1d0] sm:$0xf]
  %v143 = vld [vmem:[%s1 + $0x1d4] sm:$0xf]
  %v144 = vld [vmem:[%s1 + $0x1d8] sm:$0xf]
  %v145 = vld [vmem:[%s1 + $0x1dc] sm:$0xf]
  %v146 = vld [vmem:[%s1 + $0x1e0] sm:$0xf]
  %v147 = vld [vmem:[%s1 + $0x1e4] sm:$0xf]
  %v148 = vld [vmem:[%s1 + $0x1e8] sm:$0xf]
  %v149 = vld [vmem:[%s1 + $0x1ec] sm:$0xf]
  %v150 = vld [vmem:[%s1 + $0x1f0] sm:$0xf]
  %v151 = vld [vmem:[%s1 + $0x1f4] sm:$0xf]
  %v152 = vld [vmem:[%s1 + $0x1f8] sm:$0xf]
  %v153 = vld [vmem:[%s1 + $0x1fc] sm:$0xf]
  %v154 = vld [vmem:[%s1 + $0x200] sm:$0xf]
  %v155 = vld [vmem:[%s1 + $0x204] sm:$0xf]
  %v156 = vld [vmem:[%s1 + $0x208] sm:$0xf]
  %v157 = vld [vmem:[%s1 + $0x20c] sm:$0xf]
  %v158 = vld [vmem:[%s1 + $0x210] sm:$0xf]
  %v159 = vld [vmem:[%s1 + $0x214] sm:$0xf]
  %v160 = vld [vmem:[%s1 + $0x218] sm:$0xf]
  %v161 = vld [vmem:[%s1 + $0x21c] sm:$0xf]
  %v162 = vld [vmem:[%s1 + $0x220] sm:$0xf]
  %v163 = vld [vmem:[%s1 + $0x224] sm:$0xf]
  %v164 = vld [vmem:[%s1 + $0x228] sm:$0xf]
  %v165 = vld [vmem:[%s1 + $0x22c] sm:$0xf]
  %v166 = vld [vmem:[%s1 + $0x230] sm:$0xf]
  %v167 = vld [vmem:[%s1 + $0x234] sm:$0xf]
  %v168 = vld [vmem:[%s1 + $0x238] sm:$0xf]
  %v169 = vld [vmem:[%s1 + $0x23c] sm:$0xf]
  %v175 = vunpack.c.l.b16 %v21
  %v176 = vunpack.c.h.b16 %v21
  %v177 = vunpack.c.l.b16 %v22
  %v178 = vunpack.c.h.b16 %v22
  %v179 = vunpack.c.l.b16 %v23
  %v180 = vunpack.c.h.b16 %v23
  %v181 = vunpack.c.l.b16 %v24
  %v182 = vunpack.c.h.b16 %v24
  %v183 = vunpack.c.l.b16 %v25
  %v184 = vpack.c.b16 %v175, %v175
  %v185 = vpack.c.b16 %v176, %v176
  %v186 = vpack.c.b16 %v177, %v177
  %v187 = vpack.c.b16 %v178, %v178
  %v188 = vpack.c.b16 %v179, %v179
  %v189 = vpack.c.b16 %v180, %v180
  %v190 = vpack.c.b16 %v181, %v181
  %v191 = vpack.c.b16 %v182, %v182
  %v192 = vpack.c.b16 %v183, %v183
  %v346 = vunpack.c.l.b16 %v26
  %v347 = vunpack.c.l.b16 %v27
  %v348 = vunpack.c.l.b16 %v28
  %v349 = vunpack.c.l.b16 %v29
  %v350 = vunpack.c.l.b16 %v30
  %v351 = vunpack.c.l.b16 %v31
  %v352 = vunpack.c.l.b16 %v32
  %v353 = vunpack.c.l.b16 %v33
  %v354 = vunpack.c.l.b16 %v34
  %v355 = vunpack.c.l.b16 %v35
  %v356 = vunpack.c.l.b16 %v36
  %v357 = vunpack.c.l.b16 %v37
  %v358 = vunpack.c.l.b16 %v38
  %v359 = vunpack.c.l.b16 %v39
  %v360 = vunpack.c.l.b16 %v40
  %v361 = vunpack.c.l.b16 %v41
  %v362 = vunpack.c.l.b16 %v42
  %v363 = vunpack.c.l.b16 %v43
  %v364 = vunpack.c.l.b16 %v44
  %v365 = vunpack.c.l.b16 %v45
  %v366 = vunpack.c.l.b16 %v46
  %v367 = vunpack.c.l.b16 %v47
  %v368 = vunpack.c.l.b16 %v48
  %v369 = vunpack.c.l.b16 %v49
  %v370 = vunpack.c.l.b16 %v50
  %v371 = vunpack.c.l.b16 %v51
  %v372 = vunpack.c.l.b16 %v52
  %v373 = vunpack.c.l.b16 %v53
  %v374 = vunpack.c.l.b16 %v54
  %v375 = vunpack.c.l.b16 %v55
  %v376 = vunpack.c.l.b16 %v56
  %v377 = vunpack.c.l.b16 %v57
  %v378 = vunpack.c.l.b16 %v58
  %v379 = vunpack.c.l.b16 %v59
  %v380 = vunpack.c.l.b16 %v60
  %v381 = vunpack.c.l.b16 %v61
  %v382 = vunpack.c.l.b16 %v62
  %v383 = vunpack.c.l.b16 %v63
  %v384 = vunpack.c.l.b16 %v64
  %v385 = vunpack.c.l.b16 %v65
  %v386 = vunpack.c.l.b16 %v66
  %v387 = vunpack.c.l.b16 %v67
  %v388 = vunpack.c.l.b16 %v68
  %v389 = vunpack.c.l.b16 %v69
  %v390 = vunpack.c.l.b16 %v70
  %v391 = vunpack.c.l.b16 %v71
  %v392 = vunpack.c.l.b16 %v72
  %v393 = vunpack.c.l.b16 %v73
  %v394 = vunpack.c.l.b16 %v74
  %v395 = vunpack.c.l.b16 %v75
  %v396 = vunpack.c.l.b16 %v76
  %v397 = vunpack.c.l.b16 %v77
  %v398 = vunpack.c.l.b16 %v78
  %v399 = vunpack.c.l.b16 %v79
  %v400 = vunpack.c.l.b16 %v80
  %v401 = vunpack.c.l.b16 %v81
  %v402 = vunpack.c.l.b16 %v82
  %v403 = vunpack.c.l.b16 %v83
  %v404 = vunpack.c.l.b16 %v84
  %v405 = vunpack.c.l.b16 %v85
  %v406 = vunpack.c.l.b16 %v86
  %v407 = vunpack.c.l.b16 %v87
  %v408 = vunpack.c.l.b16 %v88
  %v409 = vunpack.c.l.b16 %v89
  %v410 = vunpack.c.l.b16 %v90
  %v411 = vunpack.c.l.b16 %v91
  %v412 = vunpack.c.l.b16 %v92
  %v413 = vunpack.c.l.b16 %v93
  %v414 = vunpack.c.l.b16 %v94
  %v415 = vunpack.c.l.b16 %v95
  %v416 = vunpack.c.l.b16 %v96
  %v417 = vunpack.c.l.b16 %v97
  %v418 = vunpack.c.l.b16 %v98
  %v419 = vunpack.c.l.b16 %v99
  %v420 = vunpack.c.l.b16 %v100
  %v421 = vunpack.c.l.b16 %v101
  %v422 = vunpack.c.l.b16 %v102
  %v423 = vunpack.c.l.b16 %v103
  %v424 = vunpack.c.l.b16 %v104
  %v425 = vunpack.c.l.b16 %v105
  %v426 = vunpack.c.l.b16 %v106
  %v427 = vunpack.c.l.b16 %v107
  %v428 = vunpack.c.l.b16 %v108
  %v429 = vunpack.c.l.b16 %v109
  %v430 = vunpack.c.l.b16 %v110
  %v431 = vunpack.c.l.b16 %v111
  %v432 = vunpack.c.l.b16 %v112
  %v433 = vunpack.c.l.b16 %v113
  %v434 = vunpack.c.l.b16 %v114
  %v435 = vunpack.c.l.b16 %v115
  %v436 = vunpack.c.l.b16 %v116
  %v437 = vunpack.c.l.b16 %v117
  %v438 = vunpack.c.l.b16 %v118
  %v439 = vunpack.c.l.b16 %v119
  %v440 = vunpack.c.l.b16 %v120
  %v441 = vunpack.c.l.b16 %v121
  %v442 = vunpack.c.l.b16 %v122
  %v443 = vunpack.c.l.b16 %v123
  %v444 = vunpack.c.l.b16 %v124
  %v445 = vunpack.c.l.b16 %v125
  %v446 = vunpack.c.l.b16 %v126
  %v447 = vunpack.c.l.b16 %v127
  %v448 = vunpack.c.l.b16 %v128
  %v449 = vunpack.c.l.b16 %v129
  %v450 = vunpack.c.l.b16 %v130
  %v451 = vunpack.c.l.b16 %v131
  %v452 = vunpack.c.l.b16 %v132
  %v453 = vunpack.c.l.b16 %v133
  %v454 = vunpack.c.l.b16 %v134
  %v455 = vunpack.c.l.b16 %v135
  %v456 = vunpack.c.l.b16 %v136
  %v457 = vunpack.c.l.b16 %v137
  %v458 = vunpack.c.l.b16 %v138
  %v459 = vunpack.c.l.b16 %v139
  %v460 = vunpack.c.l.b16 %v140
  %v461 = vunpack.c.l.b16 %v141
  %v462 = vunpack.c.l.b16 %v142
  %v463 = vunpack.c.l.b16 %v143
  %v464 = vunpack.c.l.b16 %v144
  %v465 = vunpack.c.l.b16 %v145
  %v466 = vunpack.c.l.b16 %v146
  %v467 = vunpack.c.l.b16 %v147
  %v468 = vunpack.c.l.b16 %v148
  %v469 = vunpack.c.l.b16 %v149
  %v470 = vunpack.c.l.b16 %v150
  %v471 = vunpack.c.l.b16 %v151
  %v472 = vunpack.c.l.b16 %v152
  %v473 = vunpack.c.l.b16 %v153
  %v474 = vunpack.c.l.b16 %v154
  %v475 = vunpack.c.l.b16 %v155
  %v476 = vunpack.c.l.b16 %v156
  %v477 = vunpack.c.l.b16 %v157
  %v478 = vunpack.c.l.b16 %v158
  %v479 = vunpack.c.l.b16 %v159
  %v480 = vunpack.c.l.b16 %v160
  %v481 = vunpack.c.l.b16 %v161
  %v482 = vunpack.c.l.b16 %v162
  %v483 = vunpack.c.l.b16 %v163
  %v484 = vunpack.c.l.b16 %v164
  %v485 = vunpack.c.l.b16 %v165
  %v486 = vunpack.c.l.b16 %v166
  %v487 = vunpack.c.l.b16 %v167
  %v488 = vunpack.c.l.b16 %v168
  %v489 = vunpack.c.l.b16 %v169
  %v490 = vpack.c.b16 %v347, %v346
  %v491 = vpack.c.b16 %v349, %v348
  %v492 = vpack.c.b16 %v351, %v350
  %v493 = vpack.c.b16 %v353, %v352
  %v494 = vpack.c.b16 %v355, %v354
  %v495 = vpack.c.b16 %v357, %v356
  %v496 = vpack.c.b16 %v359, %v358
  %v497 = vpack.c.b16 %v361, %v360
  %v498 = vpack.c.b16 %v363, %v362
  %v499 = vpack.c.b16 %v365, %v364
  %v500 = vpack.c.b16 %v367, %v366
  %v501 = vpack.c.b16 %v369, %v368
  %v502 = vpack.c.b16 %v371, %v370
  %v503 = vpack.c.b16 %v373, %v372
  %v504 = vpack.c.b16 %v375, %v374
  %v505 = vpack.c.b16 %v377, %v376
  %v506 = vpack.c.b16 %v379, %v378
  %v507 = vpack.c.b16 %v381, %v380
  %v508 = vpack.c.b16 %v383, %v382
  %v509 = vpack.c.b16 %v385, %v384
  %v510 = vpack.c.b16 %v387, %v386
  %v511 = vpack.c.b16 %v389, %v388
  %v512 = vpack.c.b16 %v391, %v390
  %v513 = vpack.c.b16 %v393, %v392
  %v514 = vpack.c.b16 %v395, %v394
  %v515 = vpack.c.b16 %v397, %v396
  %v516 = vpack.c.b16 %v399, %v398
  %v517 = vpack.c.b16 %v401, %v400
  %v518 = vpack.c.b16 %v403, %v402
  %v519 = vpack.c.b16 %v405, %v404
  %v520 = vpack.c.b16 %v407, %v406
  %v521 = vpack.c.b16 %v409, %v408
  %v522 = vpack.c.b16 %v411, %v410
  %v523 = vpack.c.b16 %v413, %v412
  %v524 = vpack.c.b16 %v415, %v414
  %v525 = vpack.c.b16 %v417, %v416
  %v526 = vpack.c.b16 %v419, %v418
  %v527 = vpack.c.b16 %v421, %v420
  %v528 = vpack.c.b16 %v423, %v422
  %v529 = vpack.c.b16 %v425, %v424
  %v530 = vpack.c.b16 %v427, %v426
  %v531 = vpack.c.b16 %v429, %v428
  %v532 = vpack.c.b16 %v431, %v430
  %v533 = vpack.c.b16 %v433, %v432
  %v534 = vpack.c.b16 %v435, %v434
  %v535 = vpack.c.b16 %v437, %v436
  %v536 = vpack.c.b16 %v439, %v438
  %v537 = vpack.c.b16 %v441, %v440
  %v538 = vpack.c.b16 %v443, %v442
  %v539 = vpack.c.b16 %v445, %v444
  %v540 = vpack.c.b16 %v447, %v446
  %v541 = vpack.c.b16 %v449, %v448
  %v542 = vpack.c.b16 %v451, %v450
  %v543 = vpack.c.b16 %v453, %v452
  %v544 = vpack.c.b16 %v455, %v454
  %v545 = vpack.c.b16 %v457, %v456
  %v546 = vpack.c.b16 %v459, %v458
  %v547 = vpack.c.b16 %v461, %v460
  %v548 = vpack.c.b16 %v463, %v462
  %v549 = vpack.c.b16 %v465, %v464
  %v550 = vpack.c.b16 %v467, %v466
  %v551 = vpack.c.b16 %v469, %v468
  %v552 = vpack.c.b16 %v471, %v470
  %v553 = vpack.c.b16 %v473, %v472
  %v554 = vpack.c.b16 %v475, %v474
  %v555 = vpack.c.b16 %v477, %v476
  %v556 = vpack.c.b16 %v479, %v478
  %v557 = vpack.c.b16 %v481, %v480
  %v558 = vpack.c.b16 %v483, %v482
  %v559 = vpack.c.b16 %v485, %v484
  %v560 = vpack.c.b16 %v487, %v486
  %v561 = vpack.c.b16 %v489, %v488
  %634 = vmatprep.subr.bf16.mxu0 0
  %635 = vmatpush1.bf16.msra.mxu0 %v497
  %636 = vmatprep.subr.bf16.mxu0 0
  %637 = vmatpush1.bf16.msra.mxu0 %v496
  %638 = vmatprep.subr.bf16.mxu0 0
  %639 = vmatpush1.bf16.msra.mxu0 %v495
  %640 = vmatprep.subr.bf16.mxu0 0
  %641 = vmatpush1.bf16.msra.mxu0 %v494
  %642 = vmatprep.subr.bf16.mxu0 0
  %643 = vmatpush1.bf16.msra.mxu0 %v493
  %644 = vmatprep.subr.bf16.mxu0 0
  %645 = vmatpush1.bf16.msra.mxu0 %v492
  %646 = vmatprep.subr.bf16.mxu0 0
  %647 = vmatpush1.bf16.msra.mxu0 %v491
  %648 = vmatprep.subr.bf16.mxu0 0
  %649 = vmatpush1.bf16.msra.mxu0 %v490
  %650 = vmatprep.subr.bf16.mxu0 0
  %651 = vmatpush2.bf16.msra.mxu0 %v505
  %652 = vmatprep.subr.bf16.mxu0 0
  %653 = vmatpush2.bf16.msra.mxu0 %v504
  %654 = vmatprep.subr.bf16.mxu0 0
  %655 = vmatpush2.bf16.msra.mxu0 %v503
  %656 = vmatprep.subr.bf16.mxu0 0
  %657 = vmatpush2.bf16.msra.mxu0 %v502
  %658 = vmatprep.subr.bf16.mxu0 0
  %659 = vmatpush2.bf16.msra.mxu0 %v501
  %660 = vmatprep.subr.bf16.mxu0 0
  %661 = vmatpush2.bf16.msra.mxu0 %v500
  %662 = vmatprep.subr.bf16.mxu0 0
  %663 = vmatpush2.bf16.msra.mxu0 %v499
  %664 = vmatprep.subr.bf16.mxu0 0
  %665 = vmatpush2.bf16.msra.mxu0 %v498
  %666 = vmatprep.mubr.bf16.mxu0 %v185
  %667 = vmatmul.mubr.bf16.gmra.mxu0 %v184
  %v668 = vpop.f32.mrf.mxu0
  %v669 = vadd.f32 0.0, %v668
  %v670 = vpop.f32.mrf.mxu0
  %v671 = vpop.f32.mrf.mxu0
  %v672 = vpop.f32.mrf.mxu0
  %673 = vdwg.mxu0
  %674 = vmatprep.subr.bf16.mxu0 0
  %675 = vmatpush1.bf16.msra.mxu0 %v513
  %676 = vmatprep.subr.bf16.mxu0 0
  %677 = vmatpush1.bf16.msra.mxu0 %v512
  %678 = vmatprep.subr.bf16.mxu0 0
  %679 = vmatpush1.bf16.msra.mxu0 %v511
  %680 = vmatprep.subr.bf16.mxu0 0
  %681 = vmatpush1.bf16.msra.mxu0 %v510
  %682 = vmatprep.subr.bf16.mxu0 0
  %683 = vmatpush1.bf16.msra.mxu0 %v509
  %684 = vmatprep.subr.bf16.mxu0 0
  %685 = vmatpush1.bf16.msra.mxu0 %v508
  %686 = vmatprep.subr.bf16.mxu0 0
  %687 = vmatpush1.bf16.msra.mxu0 %v507
  %688 = vmatprep.subr.bf16.mxu0 0
  %689 = vmatpush1.bf16.msra.mxu0 %v506
  %690 = vmatprep.subr.bf16.mxu0 0
  %691 = vmatpush2.bf16.msra.mxu0 %v521
  %692 = vmatprep.subr.bf16.mxu0 0
  %693 = vmatpush2.bf16.msra.mxu0 %v520
  %694 = vmatprep.subr.bf16.mxu0 0
  %695 = vmatpush2.bf16.msra.mxu0 %v519
  %696 = vmatprep.subr.bf16.mxu0 0
  %697 = vmatpush2.bf16.msra.mxu0 %v518
  %698 = vmatprep.subr.bf16.mxu0 0
  %699 = vmatpush2.bf16.msra.mxu0 %v517
  %700 = vmatprep.subr.bf16.mxu0 0
  %701 = vmatpush2.bf16.msra.mxu0 %v516
  %702 = vmatprep.subr.bf16.mxu0 0
  %703 = vmatpush2.bf16.msra.mxu0 %v515
  %704 = vmatprep.subr.bf16.mxu0 0
  %705 = vmatpush2.bf16.msra.mxu0 %v514
  %706 = vmatprep.mubr.bf16.mxu0 %v187
  %707 = vmatmul.mubr.bf16.gmra.mxu0 %v186
  %v708 = vpop.f32.mrf.mxu0
  %v709 = vadd.f32 %v669, %v708
  %v710 = vpop.f32.mrf.mxu0
  %v711 = vpop.f32.mrf.mxu0
  %v712 = vpop.f32.mrf.mxu0
  %713 = vdwg.mxu0
  %714 = vmatprep.subr.bf16.mxu0 0
  %715 = vmatpush1.bf16.msra.mxu0 %v529
  %716 = vmatprep.subr.bf16.mxu0 0
  %717 = vmatpush1.bf16.msra.mxu0 %v528
  %718 = vmatprep.subr.bf16.mxu0 0
  %719 = vmatpush1.bf16.msra.mxu0 %v527
  %720 = vmatprep.subr.bf16.mxu0 0
  %721 = vmatpush1.bf16.msra.mxu0 %v526
  %722 = vmatprep.subr.bf16.mxu0 0
  %723 = vmatpush1.bf16.msra.mxu0 %v525
  %724 = vmatprep.subr.bf16.mxu0 0
  %725 = vmatpush1.bf16.msra.mxu0 %v524
  %726 = vmatprep.subr.bf16.mxu0 0
  %727 = vmatpush1.bf16.msra.mxu0 %v523
  %728 = vmatprep.subr.bf16.mxu0 0
  %729 = vmatpush1.bf16.msra.mxu0 %v522
  %730 = vmatprep.subr.bf16.mxu0 0
  %731 = vmatpush2.bf16.msra.mxu0 %v537
  %732 = vmatprep.subr.bf16.mxu0 0
  %733 = vmatpush2.bf16.msra.mxu0 %v536
  %734 = vmatprep.subr.bf16.mxu0 0
  %735 = vmatpush2.bf16.msra.mxu0 %v535
  %736 = vmatprep.subr.bf16.mxu0 0
  %737 = vmatpush2.bf16.msra.mxu0 %v534
  %738 = vmatprep.subr.bf16.mxu0 0
  %739 = vmatpush2.bf16.msra.mxu0 %v533
  %740 = vmatprep.subr.bf16.mxu0 0
  %741 = vmatpush2.bf16.msra.mxu0 %v532
  %742 = vmatprep.subr.bf16.mxu0 0
  %743 = vmatpush2.bf16.msra.mxu0 %v531
  %744 = vmatprep.subr.bf16.mxu0 0
  %745 = vmatpush2.bf16.msra.mxu0 %v530
  %746 = vmatprep.mubr.bf16.mxu0 %v189
  %747 = vmatmul.mubr.bf16.gmra.mxu0 %v188
  %v748 = vpop.f32.mrf.mxu0
  %v749 = vadd.f32 %v709, %v748
  %v750 = vpop.f32.mrf.mxu0
  %v751 = vpop.f32.mrf.mxu0
  %v752 = vpop.f32.mrf.mxu0
  %753 = vdwg.mxu0
  %754 = vmatprep.subr.bf16.mxu0 0
  %755 = vmatpush1.bf16.msra.mxu0 %v545
  %756 = vmatprep.subr.bf16.mxu0 0
  %757 = vmatpush1.bf16.msra.mxu0 %v544
  %758 = vmatprep.subr.bf16.mxu0 0
  %759 = vmatpush1.bf16.msra.mxu0 %v543
  %760 = vmatprep.subr.bf16.mxu0 0
  %761 = vmatpush1.bf16.msra.mxu0 %v542
  %762 = vmatprep.subr.bf16.mxu0 0
  %763 = vmatpush1.bf16.msra.mxu0 %v541
  %764 = vmatprep.subr.bf16.mxu0 0
  %765 = vmatpush1.bf16.msra.mxu0 %v540
  %766 = vmatprep.subr.bf16.mxu0 0
  %767 = vmatpush1.bf16.msra.mxu0 %v539
  %768 = vmatprep.subr.bf16.mxu0 0
  %769 = vmatpush1.bf16.msra.mxu0 %v538
  %770 = vmatprep.subr.bf16.mxu0 0
  %771 = vmatpush2.bf16.msra.mxu0 %v553
  %772 = vmatprep.subr.bf16.mxu0 0
  %773 = vmatpush2.bf16.msra.mxu0 %v552
  %774 = vmatprep.subr.bf16.mxu0 0
  %775 = vmatpush2.bf16.msra.mxu0 %v551
  %776 = vmatprep.subr.bf16.mxu0 0
  %777 = vmatpush2.bf16.msra.mxu0 %v550
  %778 = vmatprep.subr.bf16.mxu0 0
  %779 = vmatpush2.bf16.msra.mxu0 %v549
  %780 = vmatprep.subr.bf16.mxu0 0
  %781 = vmatpush2.bf16.msra.mxu0 %v548
  %782 = vmatprep.subr.bf16.mxu0 0
  %783 = vmatpush2.bf16.msra.mxu0 %v547
  %784 = vmatprep.subr.bf16.mxu0 0
  %785 = vmatpush2.bf16.msra.mxu0 %v546
  %786 = vmatprep.mubr.bf16.mxu0 %v191
  %787 = vmatmul.mubr.bf16.gmra.mxu0 %v190
  %v788 = vpop.f32.mrf.mxu0
  %v789 = vadd.f32 %v749, %v788
  %v790 = vpop.f32.mrf.mxu0
  %v791 = vpop.f32.mrf.mxu0
  %v792 = vpop.f32.mrf.mxu0
  %793 = vdwg.mxu0
  %794 = vmatprep.subr.bf16.mxu0 0
  %795 = vmatpush1.bf16.msra.mxu0 %v561
  %796 = vmatprep.subr.bf16.mxu0 0
  %797 = vmatpush1.bf16.msra.mxu0 %v560
  %798 = vmatprep.subr.bf16.mxu0 0
  %799 = vmatpush1.bf16.msra.mxu0 %v559
  %800 = vmatprep.subr.bf16.mxu0 0
  %801 = vmatpush1.bf16.msra.mxu0 %v558
  %802 = vmatprep.subr.bf16.mxu0 0
  %803 = vmatpush1.bf16.msra.mxu0 %v557
  %804 = vmatprep.subr.bf16.mxu0 0
  %805 = vmatpush1.bf16.msra.mxu0 %v556
  %806 = vmatprep.subr.bf16.mxu0 0
  %807 = vmatpush1.bf16.msra.mxu0 %v555
  %808 = vmatprep.subr.bf16.mxu0 0
  %809 = vmatpush1.bf16.msra.mxu0 %v554
  %810 = vmatprep.subr.bf16.mxu0 0
  %811 = vmatpush2.bf16.msra.mxu0 0
  %812 = vmatprep.subr.bf16.mxu0 0
  %813 = vmatpush2.bf16.msra.mxu0 0
  %814 = vmatprep.subr.bf16.mxu0 0
  %815 = vmatpush2.bf16.msra.mxu0 0
  %816 = vmatprep.subr.bf16.mxu0 0
  %817 = vmatpush2.bf16.msra.mxu0 0
  %818 = vmatprep.subr.bf16.mxu0 0
  %819 = vmatpush2.bf16.msra.mxu0 0
  %820 = vmatprep.subr.bf16.mxu0 0
  %821 = vmatpush2.bf16.msra.mxu0 0
  %822 = vmatprep.subr.bf16.mxu0 0
  %823 = vmatpush2.bf16.msra.mxu0 0
  %824 = vmatprep.subr.bf16.mxu0 0
  %825 = vmatpush2.bf16.msra.mxu0 0
  %826 = vmatprep.mubr.bf16.mxu0 0
  %827 = vmatmul.mubr.bf16.gmra.mxu0 %v192
  %v828 = vpop.f32.mrf.mxu0
  %v829 = vadd.f32 %v789, %v828
  %v830 = vpop.f32.mrf.mxu0
  %v831 = vpop.f32.mrf.mxu0
  %v832 = vpop.f32.mrf.mxu0
  %833 = vdwg.mxu0
  %v834 = vrot.slane %v829, 4
  %v835 = vadd.f32 %v829, %v834
  %v836 = vrot.slane %v835, 2
  %v837 = vadd.f32 %v835, %v836
  %v838 = vrot.slane %v837, 1
  %v839 = vadd.f32 %v837, %v838
  %v840 = vmul.f32 %v829, %v829
  %v841 = vrot.slane %v840, 4
  %v842 = vadd.f32 %v840, %v841
  %v843 = vrot.slane %v842, 2
  %v844 = vadd.f32 %v842, %v843
  %v845 = vrot.slane %v844, 1
  %v846 = vadd.f32 %v844, %v845
  %vm847 = vcmask 1040384
  %v848 = vsel %vm847, %v839, %v846
  %v849 = vld [vmem:[%s4] sm:$0xff]
  %v850 = vld [vmem:[%s4 + $0x8] sm:$0xff]
  %v851 = vld [vmem:[%s4 + $0x10] sm:$0xff]
  %v852 = vld [vmem:[%s4 + $0x18] sm:$0xff]
  %v853 = vld [vmem:[%s4 + $0x20] sm:$0xff]
  %v854 = vld [vmem:[%s4 + $0x28] sm:$0xff]
  %v855 = vld [vmem:[%s4 + $0x30] sm:$0xff]
  %v856 = vld [vmem:[%s4 + $0x38] sm:$0xff]
  %v857 = vld [vmem:[%s4 + $0x40] sm:$0xff]
  %v858 = vld [vmem:[%s4 + $0x48] sm:$0xff]
  %v859 = vld [vmem:[%s4 + $0x50] sm:$0xff]
  %v860 = vld [vmem:[%s4 + $0x58] sm:$0xff]
  %v861 = vld [vmem:[%s4 + $0x60] sm:$0xff]
  %v862 = vld [vmem:[%s4 + $0x68] sm:$0xff]
  %v863 = vld [vmem:[%s4 + $0x70] sm:$0xff]
  %v864 = vld [vmem:[%s4 + $0x78] sm:$0xff]
  %865 = vmatprep.subr.mxu0 0.0
  %866 = vmatpush1.msra.mxu0 %v864
  %867 = vmatprep.subr.mxu0 0.0
  %868 = vmatpush1.msra.mxu0 %v863
  %869 = vmatprep.subr.mxu0 0.0
  %870 = vmatpush1.msra.mxu0 %v862
  %871 = vmatprep.subr.mxu0 0.0
  %872 = vmatpush1.msra.mxu0 %v861
  %873 = vmatprep.subr.mxu0 0.0
  %874 = vmatpush1.msra.mxu0 %v860
  %875 = vmatprep.subr.mxu0 0.0
  %876 = vmatpush1.msra.mxu0 %v859
  %877 = vmatprep.subr.mxu0 0.0
  %878 = vmatpush1.msra.mxu0 %v858
  %879 = vmatprep.subr.mxu0 0.0
  %880 = vmatpush1.msra.mxu0 %v857
  %881 = vmatprep.subr.mxu0 0.0
  %882 = vmatpush1.msra.mxu0 %v856
  %883 = vmatprep.subr.mxu0 0.0
  %884 = vmatpush1.msra.mxu0 %v855
  %885 = vmatprep.subr.mxu0 0.0
  %886 = vmatpush1.msra.mxu0 %v854
  %887 = vmatprep.subr.mxu0 0.0
  %888 = vmatpush1.msra.mxu0 %v853
  %889 = vmatprep.subr.mxu0 0.0
  %890 = vmatpush1.msra.mxu0 %v852
  %891 = vmatprep.subr.mxu0 0.0
  %892 = vmatpush1.msra.mxu0 %v851
  %893 = vmatprep.subr.mxu0 0.0
  %894 = vmatpush1.msra.mxu0 %v850
  %895 = vmatprep.subr.mxu0 0.0
  %896 = vmatpush1.msra.mxu0 %v849
  %897 = vmatprep.subr.mxu0 0.0
  %898 = vmatpush2.msra.mxu0 0.0
  %899 = vmatprep.subr.mxu0 0.0
  %900 = vmatpush2.msra.mxu0 0.0
  %901 = vmatprep.subr.mxu0 0.0
  %902 = vmatpush2.msra.mxu0 0.0
  %903 = vmatprep.subr.mxu0 0.0
  %904 = vmatpush2.msra.mxu0 0.0
  %905 = vmatprep.subr.mxu0 0.0
  %906 = vmatpush2.msra.mxu0 0.0
  %907 = vmatprep.subr.mxu0 0.0
  %908 = vmatpush2.msra.mxu0 0.0
  %909 = vmatprep.subr.mxu0 0.0
  %910 = vmatpush2.msra.mxu0 0.0
  %911 = vmatprep.subr.mxu0 0.0
  %912 = vmatpush2.msra.mxu0 0.0
  %913 = vmatprep.subr.mxu0 0.0
  %914 = vmatpush2.msra.mxu0 0.0
  %915 = vmatprep.subr.mxu0 0.0
  %916 = vmatpush2.msra.mxu0 0.0
  %917 = vmatprep.subr.mxu0 0.0
  %918 = vmatpush2.msra.mxu0 0.0
  %919 = vmatprep.subr.mxu0 0.0
  %920 = vmatpush2.msra.mxu0 0.0
  %921 = vmatprep.subr.mxu0 0.0
  %922 = vmatpush2.msra.mxu0 0.0
  %923 = vmatprep.subr.mxu0 0.0
  %924 = vmatpush2.msra.mxu0 0.0
  %925 = vmatprep.subr.mxu0 0.0
  %926 = vmatpush2.msra.mxu0 0.0
  %927 = vmatprep.subr.mxu0 0.0
  %928 = vmatpush2.msra.mxu0 0.0
  %929 = vmatprep.mubr.f32.mxu0 0.0
  %930 = vmatmul.mubr.f32.gmra.mxu0 %v848
  %v931 = vpop.f32.mrf.mxu0
  %v932 = vadd.f32 0.0, %v931
  %v933 = vpop.f32.mrf.mxu0
  %934 = vdwg.mxu0
  %v935 = vmul.f32 %v932, 0.03125
  %v936 = vmul.f32 %v935, %v935
  %v938 = vrot.slane %v936, 7
  %v940 = vsub.f32 %v935, %v938
  %v941 = vlaneseq
  %v942 = vshrl.u32 %v941, 7
  %v943 = vsub.s32 0, %v942
  %v944 = vrot.slane %v935, %v943
  %v945 = vsub.f32 %v829, %v944
  %v946 = vadd.f32 %v940, 1e-05
  %v947 = vrsqrt.pop %v946
  %v948 = vlaneseq
  %v949 = vshrl.u32 %v948, 7
  %v950 = vsub.s32 1, %v949
  %v951 = vrot.slane %v947, %v950
  %v952 = vmul.f32 %v945, %v951
  %v953 = vld [vmem:[%s2] sm:$0x1]
  %v955 = vlaneseq
  %v956 = vshrl.u32 %v955, 7
  %v957 = vsub.s32 0, %v956
  %v958 = vrot.slane %v953, %v957
  %v960 = vmul.f32 %v952, %v958
  %v961 = vld [vmem:[%s3] sm:$0x1]
  %v963 = vlaneseq
  %v964 = vshrl.u32 %v963, 7
  %v965 = vsub.s32 0, %v964
  %v966 = vrot.slane %v961, %v965
  %v968 = vadd.f32 %v960, %v966
  %969 = vst [vmem:[%s5] sm:$0xff] %v968
  // Predicated region
  $region22: #{zip_unet_forward.18} parent=0 // pred_check
    _
  $region23: #{zip_unet_forward.18} parent=0 // pred_check_branch
    %971 = sbr.rel (0) target = $region25
  $region24: #{zip_unet_forward.18} parent=0 // pred_region
    _
  $region25: #{zip_unet_forward.18} parent=0 // pred_fallthru
    _
  // Predicated region
  $region26: #{zip_unet_forward.18} parent=0 // pred_check
    _
  $region27: #{zip_unet_forward.18} parent=0 // pred_check_branch
    %973 = sbr.rel (0) target = $region29
  $region28: #{zip_unet_forward.18} parent=0 // pred_region
    _
  $region29: #{zip_unet_forward.18} parent=0 // pred_fallthru
    _

// kernel: zip_unet_forward.19
$region0: #{zip_unet_forward.19}
  #allocation0 [shape = 'u32[]', space=smem, size = 0x4, offset = 0x4, fixed_abs, tag = 'smem constant byte address 0x4 - core index']
  #allocation1 [shape = 'u32[144,128]{1,0:T(1,128)}', space=vmem, size = 0x12000, scoped, tag = 'internal scratch']
  %s0 = inlined_call_operand.vmem [shape: bf16[32,640], index: 0, kind: input, shape index: {}]
  %s1 = inlined_call_operand.vmem [shape: bf16[640,128], index: 1, kind: input, shape index: {}]
  %s2 = inlined_call_operand.vmem [shape: f32[1,128], index: 2, kind: input, shape index: {}]
  %s3 = inlined_call_operand.vmem [shape: f32[1,128], index: 3, kind: input, shape index: {}]
  %s4 = inlined_call_operand.vmem [shape: f32[128,128], index: 4, kind: input, shape index: {}]
  %s5 = inlined_call_operand.vmem [shape: f32[32,128], index: 5, kind: output, shape index: {}]
  %s6 = sld [smem:[#allocation0]]
  $region30: #{zip_unet_forward.19} parent=0
    _
  %s8 = ssub.s32 1, %s6
  %s9 = scalar_select 0, %s8, %s6
  // Predicated region
  $region2: #{zip_unet_forward.19} parent=0 // pred_check
    _
  $region3: #{zip_unet_forward.19} parent=0 // pred_check_branch
    %11 = sbr.rel (0) target = $region5
  $region4: #{zip_unet_forward.19} parent=0 // pred_region
    _
  $region5: #{zip_unet_forward.19} parent=0 // pred_fallthru
    _
  // Predicated region
  $region6: #{zip_unet_forward.19} parent=0 // pred_check
    _
  $region7: #{zip_unet_forward.19} parent=0 // pred_check_branch
    %13 = sbr.rel (0) target = $region9
  $region8: #{zip_unet_forward.19} parent=0 // pred_region
    _
  $region9: #{zip_unet_forward.19} parent=0 // pred_fallthru
    _
  // Predicated region
  $region10: #{zip_unet_forward.19} parent=0 // pred_check
    _
  $region11: #{zip_unet_forward.19} parent=0 // pred_check_branch
    %15 = sbr.rel (0) target = $region13
  $region12: #{zip_unet_forward.19} parent=0 // pred_region
    _
  $region13: #{zip_unet_forward.19} parent=0 // pred_fallthru
    _
  // Predicated region
  $region14: #{zip_unet_forward.19} parent=0 // pred_check
    _
  $region15: #{zip_unet_forward.19} parent=0 // pred_check_branch
    %17 = sbr.rel (0) target = $region17
  $region16: #{zip_unet_forward.19} parent=0 // pred_region
    _
  $region17: #{zip_unet_forward.19} parent=0 // pred_fallthru
    _
  // Predicated region
  $region18: #{zip_unet_forward.19} parent=0 // pred_check
    _
  $region19: #{zip_unet_forward.19} parent=0 // pred_check_branch
    %19 = sbr.rel (0) target = $region21
  $region20: #{zip_unet_forward.19} parent=0 // pred_region
    _
  $region21: #{zip_unet_forward.19} parent=0 // pred_fallthru
    _
  %v21 = vld [vmem:[%s0] sm:$0xff]
  %v22 = vld [vmem:[%s0 + $0x8] sm:$0xff]
  %v23 = vld [vmem:[%s0 + $0x10] sm:$0xf]
  %v24 = vld [vmem:[%s0 + $0x14] sm:$0xff]
  %v25 = vld [vmem:[%s0 + $0x1c] sm:$0xff]
  %v26 = vld [vmem:[%s0 + $0x24] sm:$0xf]
  %v27 = vld [vmem:[%s0 + $0x28] sm:$0xff]
  %v28 = vld [vmem:[%s0 + $0x30] sm:$0xff]
  %v29 = vld [vmem:[%s0 + $0x38] sm:$0xf]
  %v30 = vld [vmem:[%s0 + $0x3c] sm:$0xff]
  %v31 = vld [vmem:[%s0 + $0x44] sm:$0xff]
  %v32 = vld [vmem:[%s0 + $0x4c] sm:$0xf]
  %v33 = vld [vmem:[%s1] sm:$0xf]
  %v34 = vld [vmem:[%s1 + $0x4] sm:$0xf]
  %v35 = vld [vmem:[%s1 + $0x8] sm:$0xf]
  %v36 = vld [vmem:[%s1 + $0xc] sm:$0xf]
  %v37 = vld [vmem:[%s1 + $0x10] sm:$0xf]
  %v38 = vld [vmem:[%s1 + $0x14] sm:$0xf]
  %v39 = vld [vmem:[%s1 + $0x18] sm:$0xf]
  %v40 = vld [vmem:[%s1 + $0x1c] sm:$0xf]
  %v41 = vld [vmem:[%s1 + $0x20] sm:$0xf]
  %v42 = vld [vmem:[%s1 + $0x24] sm:$0xf]
  %v43 = vld [vmem:[%s1 + $0x28] sm:$0xf]
  %v44 = vld [vmem:[%s1 + $0x2c] sm:$0xf]
  %v45 = vld [vmem:[%s1 + $0x30] sm:$0xf]
  %v46 = vld [vmem:[%s1 + $0x34] sm:$0xf]
  %v47 = vld [vmem:[%s1 + $0x38] sm:$0xf]
  %v48 = vld [vmem:[%s1 + $0x3c] sm:$0xf]
  %v49 = vld [vmem:[%s1 + $0x40] sm:$0xf]
  %v50 = vld [vmem:[%s1 + $0x44] sm:$0xf]
  %v51 = vld [vmem:[%s1 + $0x48] sm:$0xf]
  %v52 = vld [vmem:[%s1 + $0x4c] sm:$0xf]
  %v53 = vld [vmem:[%s1 + $0x50] sm:$0xf]
  %v54 = vld [vmem:[%s1 + $0x54] sm:$0xf]
  %v55 = vld [vmem:[%s1 + $0x58] sm:$0xf]
  %v56 = vld [vmem:[%s1 + $0x5c] sm:$0xf]
  %v57 = vld [vmem:[%s1 + $0x60] sm:$0xf]
  %v58 = vld [vmem:[%s1 + $0x64] sm:$0xf]
  %v59 = vld [vmem:[%s1 + $0x68] sm:$0xf]
  %v60 = vld [vmem:[%s1 + $0x6c] sm:$0xf]
  %v61 = vld [vmem:[%s1 + $0x70] sm:$0xf]
  %v62 = vld [vmem:[%s1 + $0x74] sm:$0xf]
  %v63 = vld [vmem:[%s1 + $0x78] sm:$0xf]
  %v64 = vld [vmem:[%s1 + $0x7c] sm:$0xf]
  %v65 = vld [vmem:[%s1 + $0x80] sm:$0xf]
  %v66 = vld [vmem:[%s1 + $0x84] sm:$0xf]
  %v67 = vld [vmem:[%s1 + $0x88] sm:$0xf]
  %v68 = vld [vmem:[%s1 + $0x8c] sm:$0xf]
  %v69 = vld [vmem:[%s1 + $0x90] sm:$0xf]
  %v70 = vld [vmem:[%s1 + $0x94] sm:$0xf]
  %v71 = vld [vmem:[%s1 + $0x98] sm:$0xf]
  %v72 = vld [vmem:[%s1 + $0x9c] sm:$0xf]
  %v73 = vld [vmem:[%s1 + $0xa0] sm:$0xf]
  %v74 = vld [vmem:[%s1 + $0xa4] sm:$0xf]
  %v75 = vld [vmem:[%s1 + $0xa8] sm:$0xf]
  %v76 = vld [vmem:[%s1 + $0xac] sm:$0xf]
  %v77 = vld [vmem:[%s1 + $0xb0] sm:$0xf]
  %v78 = vld [vmem:[%s1 + $0xb4] sm:$0xf]
  %v79 = vld [vmem:[%s1 + $0xb8] sm:$0xf]
  %v80 = vld [vmem:[%s1 + $0xbc] sm:$0xf]
  %v81 = vld [vmem:[%s1 + $0xc0] sm:$0xf]
  %v82 = vld [vmem:[%s1 + $0xc4] sm:$0xf]
  %v83 = vld [vmem:[%s1 + $0xc8] sm:$0xf]
  %v84 = vld [vmem:[%s1 + $0xcc] sm:$0xf]
  %v85 = vld [vmem:[%s1 + $0xd0] sm:$0xf]
  %v86 = vld [vmem:[%s1 + $0xd4] sm:$0xf]
  %v87 = vld [vmem:[%s1 + $0xd8] sm:$0xf]
  %v88 = vld [vmem:[%s1 + $0xdc] sm:$0xf]
  %v89 = vld [vmem:[%s1 + $0xe0] sm:$0xf]
  %v90 = vld [vmem:[%s1 + $0xe4] sm:$0xf]
  %v91 = vld [vmem:[%s1 + $0xe8] sm:$0xf]
  %v92 = vld [vmem:[%s1 + $0xec] sm:$0xf]
  %v93 = vld [vmem:[%s1 + $0xf0] sm:$0xf]
  %v94 = vld [vmem:[%s1 + $0xf4] sm:$0xf]
  %v95 = vld [vmem:[%s1 + $0xf8] sm:$0xf]
  %v96 = vld [vmem:[%s1 + $0xfc] sm:$0xf]
  %v97 = vld [vmem:[%s1 + $0x100] sm:$0xf]
  %v98 = vld [vmem:[%s1 + $0x104] sm:$0xf]
  %v99 = vld [vmem:[%s1 + $0x108] sm:$0xf]
  %v100 = vld [vmem:[%s1 + $0x10c] sm:$0xf]
  %v101 = vld [vmem:[%s1 + $0x110] sm:$0xf]
  %v102 = vld [vmem:[%s1 + $0x114] sm:$0xf]
  %v103 = vld [vmem:[%s1 + $0x118] sm:$0xf]
  %v104 = vld [vmem:[%s1 + $0x11c] sm:$0xf]
  %v105 = vld [vmem:[%s1 + $0x120] sm:$0xf]
  %v106 = vld [vmem:[%s1 + $0x124] sm:$0xf]
  %v107 = vld [vmem:[%s1 + $0x128] sm:$0xf]
  %v108 = vld [vmem:[%s1 + $0x12c] sm:$0xf]
  %v109 = vld [vmem:[%s1 + $0x130] sm:$0xf]
  %v110 = vld [vmem:[%s1 + $0x134] sm:$0xf]
  %v111 = vld [vmem:[%s1 + $0x138] sm:$0xf]
  %v112 = vld [vmem:[%s1 + $0x13c] sm:$0xf]
  %v125 = vunpack.c.l.b16 %v21
  %v126 = vunpack.c.h.b16 %v21
  %v127 = vunpack.c.l.b16 %v22
  %v128 = vunpack.c.h.b16 %v22
  %v129 = vunpack.c.l.b16 %v23
  %v130 = vunpack.c.l.b16 %v24
  %v131 = vunpack.c.h.b16 %v24
  %v132 = vunpack.c.l.b16 %v25
  %v133 = vunpack.c.h.b16 %v25
  %v134 = vunpack.c.l.b16 %v26
  %v135 = vunpack.c.l.b16 %v27
  %v136 = vunpack.c.h.b16 %v27
  %v137 = vunpack.c.l.b16 %v28
  %v138 = vunpack.c.h.b16 %v28
  %v139 = vunpack.c.l.b16 %v29
  %v140 = vunpack.c.l.b16 %v30
  %v141 = vunpack.c.h.b16 %v30
  %v142 = vunpack.c.l.b16 %v31
  %v143 = vunpack.c.h.b16 %v31
  %v144 = vunpack.c.l.b16 %v32
  %v145 = vpack.c.b16 %v130, %v125
  %v146 = vpack.c.b16 %v131, %v126
  %v147 = vpack.c.b16 %v132, %v127
  %v148 = vpack.c.b16 %v133, %v128
  %v149 = vpack.c.b16 %v134, %v129
  %v150 = vpack.c.b16 %v140, %v135
  %v151 = vpack.c.b16 %v141, %v136
  %v152 = vpack.c.b16 %v142, %v137
  %v153 = vpack.c.b16 %v143, %v138
  %v154 = vpack.c.b16 %v144, %v139
  %v245 = vunpack.c.l.b16 %v33
  %v246 = vunpack.c.l.b16 %v34
  %v247 = vunpack.c.l.b16 %v35
  %v248 = vunpack.c.l.b16 %v36
  %v249 = vunpack.c.l.b16 %v37
  %v250 = vunpack.c.l.b16 %v38
  %v251 = vunpack.c.l.b16 %v39
  %v252 = vunpack.c.l.b16 %v40
  %v253 = vunpack.c.l.b16 %v41
  %v254 = vunpack.c.l.b16 %v42
  %v255 = vunpack.c.l.b16 %v43
  %v256 = vunpack.c.l.b16 %v44
  %v257 = vunpack.c.l.b16 %v45
  %v258 = vunpack.c.l.b16 %v46
  %v259 = vunpack.c.l.b16 %v47
  %v260 = vunpack.c.l.b16 %v48
  %v261 = vunpack.c.l.b16 %v49
  %v262 = vunpack.c.l.b16 %v50
  %v263 = vunpack.c.l.b16 %v51
  %v264 = vunpack.c.l.b16 %v52
  %v265 = vunpack.c.l.b16 %v53
  %v266 = vunpack.c.l.b16 %v54
  %v267 = vunpack.c.l.b16 %v55
  %v268 = vunpack.c.l.b16 %v56
  %v269 = vunpack.c.l.b16 %v57
  %v270 = vunpack.c.l.b16 %v58
  %v271 = vunpack.c.l.b16 %v59
  %v272 = vunpack.c.l.b16 %v60
  %v273 = vunpack.c.l.b16 %v61
  %v274 = vunpack.c.l.b16 %v62
  %v275 = vunpack.c.l.b16 %v63
  %v276 = vunpack.c.l.b16 %v64
  %v277 = vunpack.c.l.b16 %v65
  %v278 = vunpack.c.l.b16 %v66
  %v279 = vunpack.c.l.b16 %v67
  %v280 = vunpack.c.l.b16 %v68
  %v281 = vunpack.c.l.b16 %v69
  %v282 = vunpack.c.l.b16 %v70
  %v283 = vunpack.c.l.b16 %v71
  %v284 = vunpack.c.l.b16 %v72
  %v285 = vunpack.c.l.b16 %v73
  %v286 = vunpack.c.l.b16 %v74
  %v287 = vunpack.c.l.b16 %v75
  %v288 = vunpack.c.l.b16 %v76
  %v289 = vunpack.c.l.b16 %v77
  %v290 = vunpack.c.l.b16 %v78
  %v291 = vunpack.c.l.b16 %v79
  %v292 = vunpack.c.l.b16 %v80
  %v293 = vunpack.c.l.b16 %v81
  %v294 = vunpack.c.l.b16 %v82
  %v295 = vunpack.c.l.b16 %v83
  %v296 = vunpack.c.l.b16 %v84
  %v297 = vunpack.c.l.b16 %v85
  %v298 = vunpack.c.l.b16 %v86
  %v299 = vunpack.c.l.b16 %v87
  %v300 = vunpack.c.l.b16 %v88
  %v301 = vunpack.c.l.b16 %v89
  %v302 = vunpack.c.l.b16 %v90
  %v303 = vunpack.c.l.b16 %v91
  %v304 = vunpack.c.l.b16 %v92
  %v305 = vunpack.c.l.b16 %v93
  %v306 = vunpack.c.l.b16 %v94
  %v307 = vunpack.c.l.b16 %v95
  %v308 = vunpack.c.l.b16 %v96
  %v309 = vunpack.c.l.b16 %v97
  %v310 = vunpack.c.l.b16 %v98
  %v311 = vunpack.c.l.b16 %v99
  %v312 = vunpack.c.l.b16 %v100
  %v313 = vunpack.c.l.b16 %v101
  %v314 = vunpack.c.l.b16 %v102
  %v315 = vunpack.c.l.b16 %v103
  %v316 = vunpack.c.l.b16 %v104
  %v317 = vunpack.c.l.b16 %v105
  %v318 = vunpack.c.l.b16 %v106
  %v319 = vunpack.c.l.b16 %v107
  %v320 = vunpack.c.l.b16 %v108
  %v321 = vunpack.c.l.b16 %v109
  %v322 = vunpack.c.l.b16 %v110
  %v323 = vunpack.c.l.b16 %v111
  %v324 = vunpack.c.l.b16 %v112
  %v325 = vpack.c.b16 %v246, %v245
  %v326 = vpack.c.b16 %v248, %v247
  %v327 = vpack.c.b16 %v250, %v249
  %v328 = vpack.c.b16 %v252, %v251
  %v329 = vpack.c.b16 %v254, %v253
  %v330 = vpack.c.b16 %v256, %v255
  %v331 = vpack.c.b16 %v258, %v257
  %v332 = vpack.c.b16 %v260, %v259
  %v333 = vpack.c.b16 %v262, %v261
  %v334 = vpack.c.b16 %v264, %v263
  %v335 = vpack.c.b16 %v266, %v265
  %v336 = vpack.c.b16 %v268, %v267
  %v337 = vpack.c.b16 %v270, %v269
  %v338 = vpack.c.b16 %v272, %v271
  %v339 = vpack.c.b16 %v274, %v273
  %v340 = vpack.c.b16 %v276, %v275
  %v341 = vpack.c.b16 %v278, %v277
  %v342 = vpack.c.b16 %v280, %v279
  %v343 = vpack.c.b16 %v282, %v281
  %v344 = vpack.c.b16 %v284, %v283
  %v345 = vpack.c.b16 %v286, %v285
  %v346 = vpack.c.b16 %v288, %v287
  %v347 = vpack.c.b16 %v290, %v289
  %v348 = vpack.c.b16 %v292, %v291
  %v349 = vpack.c.b16 %v294, %v293
  %v350 = vpack.c.b16 %v296, %v295
  %v351 = vpack.c.b16 %v298, %v297
  %v352 = vpack.c.b16 %v300, %v299
  %v353 = vpack.c.b16 %v302, %v301
  %v354 = vpack.c.b16 %v304, %v303
  %v355 = vpack.c.b16 %v306, %v305
  %v356 = vpack.c.b16 %v308, %v307
  %v357 = vpack.c.b16 %v310, %v309
  %v358 = vpack.c.b16 %v312, %v311
  %v359 = vpack.c.b16 %v314, %v313
  %v360 = vpack.c.b16 %v316, %v315
  %v361 = vpack.c.b16 %v318, %v317
  %v362 = vpack.c.b16 %v320, %v319
  %v363 = vpack.c.b16 %v322, %v321
  %v364 = vpack.c.b16 %v324, %v323
  %405 = vmatprep.subr.bf16.mxu0 0
  %406 = vmatpush1.bf16.msra.mxu0 %v332
  %407 = vmatprep.subr.bf16.mxu0 0
  %408 = vmatpush1.bf16.msra.mxu0 %v331
  %409 = vmatprep.subr.bf16.mxu0 0
  %410 = vmatpush1.bf16.msra.mxu0 %v330
  %411 = vmatprep.subr.bf16.mxu0 0
  %412 = vmatpush1.bf16.msra.mxu0 %v329
  %413 = vmatprep.subr.bf16.mxu0 0
  %414 = vmatpush1.bf16.msra.mxu0 %v328
  %415 = vmatprep.subr.bf16.mxu0 0
  %416 = vmatpush1.bf16.msra.mxu0 %v327
  %417 = vmatprep.subr.bf16.mxu0 0
  %418 = vmatpush1.bf16.msra.mxu0 %v326
  %419 = vmatprep.subr.bf16.mxu0 0
  %420 = vmatpush1.bf16.msra.mxu0 %v325
  %421 = vmatprep.subr.bf16.mxu0 0
  %422 = vmatpush2.bf16.msra.mxu0 %v340
  %423 = vmatprep.subr.bf16.mxu0 0
  %424 = vmatpush2.bf16.msra.mxu0 %v339
  %425 = vmatprep.subr.bf16.mxu0 0
  %426 = vmatpush2.bf16.msra.mxu0 %v338
  %427 = vmatprep.subr.bf16.mxu0 0
  %428 = vmatpush2.bf16.msra.mxu0 %v337
  %429 = vmatprep.subr.bf16.mxu0 0
  %430 = vmatpush2.bf16.msra.mxu0 %v336
  %431 = vmatprep.subr.bf16.mxu0 0
  %432 = vmatpush2.bf16.msra.mxu0 %v335
  %433 = vmatprep.subr.bf16.mxu0 0
  %434 = vmatpush2.bf16.msra.mxu0 %v334
  %435 = vmatprep.subr.bf16.mxu0 0
  %436 = vmatpush2.bf16.msra.mxu0 %v333
  %437 = vmatprep.mubr.bf16.mxu0 %v146
  %438 = vmatmul.mubr.bf16.gmra.mxu0 %v145
  %v439 = vpop.f32.mrf.mxu0
  %v440 = vadd.f32 0.0, %v439
  %v441 = vpop.f32.mrf.mxu0
  %v442 = vpop.f32.mrf.mxu0
  %v443 = vadd.f32 0.0, %v442
  %v444 = vpop.f32.mrf.mxu0
  %445 = vmatprep.mubr.bf16.mxu0 %v151
  %446 = vmatmul.mubr.bf16.gmra.mxu0 %v150
  %v447 = vpop.f32.mrf.mxu0
  %v448 = vadd.f32 0.0, %v447
  %v449 = vpop.f32.mrf.mxu0
  %v450 = vpop.f32.mrf.mxu0
  %v451 = vadd.f32 0.0, %v450
  %v452 = vpop.f32.mrf.mxu0
  %453 = vdwg.mxu0
  %454 = vmatprep.subr.bf16.mxu0 0
  %455 = vmatpush1.bf16.msra.mxu0 %v348
  %456 = vmatprep.subr.bf16.mxu0 0
  %457 = vmatpush1.bf16.msra.mxu0 %v347
  %458 = vmatprep.subr.bf16.mxu0 0
  %459 = vmatpush1.bf16.msra.mxu0 %v346
  %460 = vmatprep.subr.bf16.mxu0 0
  %461 = vmatpush1.bf16.msra.mxu0 %v345
  %462 = vmatprep.subr.bf16.mxu0 0
  %463 = vmatpush1.bf16.msra.mxu0 %v344
  %464 = vmatprep.subr.bf16.mxu0 0
  %465 = vmatpush1.bf16.msra.mxu0 %v343
  %466 = vmatprep.subr.bf16.mxu0 0
  %467 = vmatpush1.bf16.msra.mxu0 %v342
  %468 = vmatprep.subr.bf16.mxu0 0
  %469 = vmatpush1.bf16.msra.mxu0 %v341
  %470 = vmatprep.subr.bf16.mxu0 0
  %471 = vmatpush2.bf16.msra.mxu0 %v356
  %472 = vmatprep.subr.bf16.mxu0 0
  %473 = vmatpush2.bf16.msra.mxu0 %v355
  %474 = vmatprep.subr.bf16.mxu0 0
  %475 = vmatpush2.bf16.msra.mxu0 %v354
  %476 = vmatprep.subr.bf16.mxu0 0
  %477 = vmatpush2.bf16.msra.mxu0 %v353
  %478 = vmatprep.subr.bf16.mxu0 0
  %479 = vmatpush2.bf16.msra.mxu0 %v352
  %480 = vmatprep.subr.bf16.mxu0 0
  %481 = vmatpush2.bf16.msra.mxu0 %v351
  %482 = vmatprep.subr.bf16.mxu0 0
  %483 = vmatpush2.bf16.msra.mxu0 %v350
  %484 = vmatprep.subr.bf16.mxu0 0
  %485 = vmatpush2.bf16.msra.mxu0 %v349
  %486 = vmatprep.mubr.bf16.mxu0 %v148
  %487 = vmatmul.mubr.bf16.gmra.mxu0 %v147
  %v488 = vpop.f32.mrf.mxu0
  %v489 = vadd.f32 %v440, %v488
  %v490 = vpop.f32.mrf.mxu0
  %v491 = vpop.f32.mrf.mxu0
  %v492 = vadd.f32 %v443, %v491
  %v493 = vpop.f32.mrf.mxu0
  %494 = vmatprep.mubr.bf16.mxu0 %v153
  %495 = vmatmul.mubr.bf16.gmra.mxu0 %v152
  %v496 = vpop.f32.mrf.mxu0
  %v497 = vadd.f32 %v448, %v496
  %v498 = vpop.f32.mrf.mxu0
  %v499 = vpop.f32.mrf.mxu0
  %v500 = vadd.f32 %v451, %v499
  %v501 = vpop.f32.mrf.mxu0
  %502 = vdwg.mxu0
  %503 = vmatprep.subr.bf16.mxu0 0
  %504 = vmatpush1.bf16.msra.mxu0 %v364
  %505 = vmatprep.subr.bf16.mxu0 0
  %506 = vmatpush1.bf16.msra.mxu0 %v363
  %507 = vmatprep.subr.bf16.mxu0 0
  %508 = vmatpush1.bf16.msra.mxu0 %v362
  %509 = vmatprep.subr.bf16.mxu0 0
  %510 = vmatpush1.bf16.msra.mxu0 %v361
  %511 = vmatprep.subr.bf16.mxu0 0
  %512 = vmatpush1.bf16.msra.mxu0 %v360
  %513 = vmatprep.subr.bf16.mxu0 0
  %514 = vmatpush1.bf16.msra.mxu0 %v359
  %515 = vmatprep.subr.bf16.mxu0 0
  %516 = vmatpush1.bf16.msra.mxu0 %v358
  %517 = vmatprep.subr.bf16.mxu0 0
  %518 = vmatpush1.bf16.msra.mxu0 %v357
  %519 = vmatprep.subr.bf16.mxu0 0
  %520 = vmatpush2.bf16.msra.mxu0 0
  %521 = vmatprep.subr.bf16.mxu0 0
  %522 = vmatpush2.bf16.msra.mxu0 0
  %523 = vmatprep.subr.bf16.mxu0 0
  %524 = vmatpush2.bf16.msra.mxu0 0
  %525 = vmatprep.subr.bf16.mxu0 0
  %526 = vmatpush2.bf16.msra.mxu0 0
  %527 = vmatprep.subr.bf16.mxu0 0
  %528 = vmatpush2.bf16.msra.mxu0 0
  %529 = vmatprep.subr.bf16.mxu0 0
  %530 = vmatpush2.bf16.msra.mxu0 0
  %531 = vmatprep.subr.bf16.mxu0 0
  %532 = vmatpush2.bf16.msra.mxu0 0
  %533 = vmatprep.subr.bf16.mxu0 0
  %534 = vmatpush2.bf16.msra.mxu0 0
  %535 = vmatprep.mubr.bf16.mxu0 0
  %536 = vmatmul.mubr.bf16.gmra.mxu0 %v149
  %v537 = vpop.f32.mrf.mxu0
  %v538 = vadd.f32 %v489, %v537
  %v539 = vpop.f32.mrf.mxu0
  %v540 = vpop.f32.mrf.mxu0
  %v541 = vadd.f32 %v492, %v540
  %v542 = vpop.f32.mrf.mxu0
  %543 = vmatprep.mubr.bf16.mxu0 0
  %544 = vmatmul.mubr.bf16.gmra.mxu0 %v154
  %v545 = vpop.f32.mrf.mxu0
  %v546 = vadd.f32 %v497, %v545
  %v547 = vpop.f32.mrf.mxu0
  %v548 = vpop.f32.mrf.mxu0
  %v549 = vadd.f32 %v500, %v548
  %v550 = vpop.f32.mrf.mxu0
  %551 = vdwg.mxu0
  %v552 = vadd.f32 %v538, %v541
  %v553 = vadd.f32 %v552, %v546
  %v554 = vadd.f32 %v553, %v549
  %v555 = vrot.slane %v554, 4
  %v556 = vadd.f32 %v554, %v555
  %v557 = vrot.slane %v556, 2
  %v558 = vadd.f32 %v556, %v557
  %v559 = vrot.slane %v558, 1
  %v560 = vadd.f32 %v558, %v559
  %v561 = vmul.f32 %v538, %v538
  %v562 = vmul.f32 %v541, %v541
  %v563 = vmul.f32 %v546, %v546
  %v564 = vmul.f32 %v549, %v549
  %v565 = vadd.f32 %v561, %v562
  %v566 = vadd.f32 %v565, %v563
  %v567 = vadd.f32 %v566, %v564
  %v568 = vrot.slane %v567, 4
  %v569 = vadd.f32 %v567, %v568
  %v570 = vrot.slane %v569, 2
  %v571 = vadd.f32 %v569, %v570
  %v572 = vrot.slane %v571, 1
  %v573 = vadd.f32 %v571, %v572
  %vm574 = vcmask 1040384
  %v575 = vsel %vm574, %v560, %v573
  %v576 = vld [vmem:[%s4] sm:$0xff]
  %v577 = vld [vmem:[%s4 + $0x8] sm:$0xff]
  %v578 = vld [vmem:[%s4 + $0x10] sm:$0xff]
  %v579 = vld [vmem:[%s4 + $0x18] sm:$0xff]
  %v580 = vld [vmem:[%s4 + $0x20] sm:$0xff]
  %v581 = vld [vmem:[%s4 + $0x28] sm:$0xff]
  %v582 = vld [vmem:[%s4 + $0x30] sm:$0xff]
  %v583 = vld [vmem:[%s4 + $0x38] sm:$0xff]
  %v584 = vld [vmem:[%s4 + $0x40] sm:$0xff]
  %v585 = vld [vmem:[%s4 + $0x48] sm:$0xff]
  %v586 = vld [vmem:[%s4 + $0x50] sm:$0xff]
  %v587 = vld [vmem:[%s4 + $0x58] sm:$0xff]
  %v588 = vld [vmem:[%s4 + $0x60] sm:$0xff]
  %v589 = vld [vmem:[%s4 + $0x68] sm:$0xff]
  %v590 = vld [vmem:[%s4 + $0x70] sm:$0xff]
  %v591 = vld [vmem:[%s4 + $0x78] sm:$0xff]
  %592 = vmatprep.subr.mxu0 0.0
  %593 = vmatpush1.msra.mxu0 %v591
  %594 = vmatprep.subr.mxu0 0.0
  %595 = vmatpush1.msra.mxu0 %v590
  %596 = vmatprep.subr.mxu0 0.0
  %597 = vmatpush1.msra.mxu0 %v589
  %598 = vmatprep.subr.mxu0 0.0
  %599 = vmatpush1.msra.mxu0 %v588
  %600 = vmatprep.subr.mxu0 0.0
  %601 = vmatpush1.msra.mxu0 %v587
  %602 = vmatprep.subr.mxu0 0.0
  %603 = vmatpush1.msra.mxu0 %v586
  %604 = vmatprep.subr.mxu0 0.0
  %605 = vmatpush1.msra.mxu0 %v585
  %606 = vmatprep.subr.mxu0 0.0
  %607 = vmatpush1.msra.mxu0 %v584
  %608 = vmatprep.subr.mxu0 0.0
  %609 = vmatpush1.msra.mxu0 %v583
  %610 = vmatprep.subr.mxu0 0.0
  %611 = vmatpush1.msra.mxu0 %v582
  %612 = vmatprep.subr.mxu0 0.0
  %613 = vmatpush1.msra.mxu0 %v581
  %614 = vmatprep.subr.mxu0 0.0
  %615 = vmatpush1.msra.mxu0 %v580
  %616 = vmatprep.subr.mxu0 0.0
  %617 = vmatpush1.msra.mxu0 %v579
  %618 = vmatprep.subr.mxu0 0.0
  %619 = vmatpush1.msra.mxu0 %v578
  %620 = vmatprep.subr.mxu0 0.0
  %621 = vmatpush1.msra.mxu0 %v577
  %622 = vmatprep.subr.mxu0 0.0
  %623 = vmatpush1.msra.mxu0 %v576
  %624 = vmatprep.subr.mxu0 0.0
  %625 = vmatpush2.msra.mxu0 0.0
  %626 = vmatprep.subr.mxu0 0.0
  %627 = vmatpush2.msra.mxu0 0.0
  %628 = vmatprep.subr.mxu0 0.0
  %629 = vmatpush2.msra.mxu0 0.0
  %630 = vmatprep.subr.mxu0 0.0
  %631 = vmatpush2.msra.mxu0 0.0
  %632 = vmatprep.subr.mxu0 0.0
  %633 = vmatpush2.msra.mxu0 0.0
  %634 = vmatprep.subr.mxu0 0.0
  %635 = vmatpush2.msra.mxu0 0.0
  %636 = vmatprep.subr.mxu0 0.0
  %637 = vmatpush2.msra.mxu0 0.0
  %638 = vmatprep.subr.mxu0 0.0
  %639 = vmatpush2.msra.mxu0 0.0
  %640 = vmatprep.subr.mxu0 0.0
  %641 = vmatpush2.msra.mxu0 0.0
  %642 = vmatprep.subr.mxu0 0.0
  %643 = vmatpush2.msra.mxu0 0.0
  %644 = vmatprep.subr.mxu0 0.0
  %645 = vmatpush2.msra.mxu0 0.0
  %646 = vmatprep.subr.mxu0 0.0
  %647 = vmatpush2.msra.mxu0 0.0
  %648 = vmatprep.subr.mxu0 0.0
  %649 = vmatpush2.msra.mxu0 0.0
  %650 = vmatprep.subr.mxu0 0.0
  %651 = vmatpush2.msra.mxu0 0.0
  %652 = vmatprep.subr.mxu0 0.0
  %653 = vmatpush2.msra.mxu0 0.0
  %654 = vmatprep.subr.mxu0 0.0
  %655 = vmatpush2.msra.mxu0 0.0
  %656 = vmatprep.mubr.f32.mxu0 0.0
  %657 = vmatmul.mubr.f32.gmra.mxu0 %v575
  %v658 = vpop.f32.mrf.mxu0
  %v659 = vadd.f32 0.0, %v658
  %v660 = vpop.f32.mrf.mxu0
  %661 = vdwg.mxu0
  %v662 = vmul.f32 %v659, 0.0078125
  %v663 = vmul.f32 %v662, %v662
  %v665 = vrot.slane %v663, 7
  %v667 = vsub.f32 %v662, %v665
  %v668 = vlaneseq
  %v669 = vshrl.u32 %v668, 7
  %v670 = vsub.s32 0, %v669
  %v671 = vrot.slane %v662, %v670
  %v672 = vsub.f32 %v538, %v671
  %v673 = vsub.f32 %v541, %v671
  %v674 = vsub.f32 %v546, %v671
  %v675 = vsub.f32 %v549, %v671
  %v676 = vadd.f32 %v667, 1e-05
  %v677 = vrsqrt.pop %v676
  %v678 = vlaneseq
  %v679 = vshrl.u32 %v678, 7
  %v680 = vsub.s32 1, %v679
  %v681 = vrot.slane %v677, %v680
  %v682 = vmul.f32 %v672, %v681
  %v683 = vmul.f32 %v673, %v681
  %v684 = vmul.f32 %v674, %v681
  %v685 = vmul.f32 %v675, %v681
  %v686 = vld [vmem:[%s2] sm:$0x1]
  %v688 = vlaneseq
  %v689 = vshrl.u32 %v688, 7
  %v690 = vsub.s32 0, %v689
  %v691 = vrot.slane %v686, %v690
  %v693 = vmul.f32 %v682, %v691
  %v694 = vmul.f32 %v683, %v691
  %v695 = vmul.f32 %v684, %v691
  %v696 = vmul.f32 %v685, %v691
  %v697 = vld [vmem:[%s3] sm:$0x1]
  %v699 = vlaneseq
  %v700 = vshrl.u32 %v699, 7
  %v701 = vsub.s32 0, %v700
  %v702 = vrot.slane %v697, %v701
  %v704 = vadd.f32 %v693, %v702
  %v705 = vadd.f32 %v694, %v702
  %v706 = vadd.f32 %v695, %v702
  %v707 = vadd.f32 %v696, %v702
  %708 = vst [vmem:[%s5] sm:$0xff] %v704
  %709 = vst [vmem:[%s5 + $0x8] sm:$0xff] %v705
  %710 = vst [vmem:[%s5 + $0x10] sm:$0xff] %v706
  %711 = vst [vmem:[%s5 + $0x18] sm:$0xff] %v707
  // Predicated region
  $region22: #{zip_unet_forward.19} parent=0 // pred_check
    _
  $region23: #{zip_unet_forward.19} parent=0 // pred_check_branch
    %713 = sbr.rel (0) target = $region25
  $region24: #{zip_unet_forward.19} parent=0 // pred_region
    _
  $region25: #{zip_unet_forward.19} parent=0 // pred_fallthru
    _
  // Predicated region
  $region26: #{zip_unet_forward.19} parent=0 // pred_check
    _
  $region27: #{zip_unet_forward.19} parent=0 // pred_check_branch
    %715 = sbr.rel (0) target = $region29
  $region28: #{zip_unet_forward.19} parent=0 // pred_region
    _
  $region29: #{zip_unet_forward.19} parent=0 // pred_fallthru
    _

// kernel: zip_unet_forward.20
$region0: #{zip_unet_forward.20}
  #allocation0 [shape = 'u32[]', space=smem, size = 0x4, offset = 0x4, fixed_abs, tag = 'smem constant byte address 0x4 - core index']
  #allocation1 [shape = 'u32[144,128]{1,0:T(1,128)}', space=vmem, size = 0x12000, scoped, tag = 'internal scratch']
  %s0 = inlined_call_operand.vmem [shape: bf16[128,384], index: 0, kind: input, shape index: {}]
  %s1 = inlined_call_operand.vmem [shape: bf16[384,128], index: 1, kind: input, shape index: {}]
  %s2 = inlined_call_operand.vmem [shape: f32[1,128], index: 2, kind: input, shape index: {}]
  %s3 = inlined_call_operand.vmem [shape: f32[1,128], index: 3, kind: input, shape index: {}]
  %s4 = inlined_call_operand.vmem [shape: f32[128,128], index: 4, kind: input, shape index: {}]
  %s5 = inlined_call_operand.vmem [shape: f32[128,128], index: 5, kind: output, shape index: {}]
  %s6 = sld [smem:[#allocation0]]
  $region30: #{zip_unet_forward.20} parent=0
    _
  %s8 = ssub.s32 1, %s6
  %s9 = scalar_select 0, %s8, %s6
  // Predicated region
  $region2: #{zip_unet_forward.20} parent=0 // pred_check
    _
  $region3: #{zip_unet_forward.20} parent=0 // pred_check_branch
    %11 = sbr.rel (0) target = $region5
  $region4: #{zip_unet_forward.20} parent=0 // pred_region
    _
  $region5: #{zip_unet_forward.20} parent=0 // pred_fallthru
    _
  // Predicated region
  $region6: #{zip_unet_forward.20} parent=0 // pred_check
    _
  $region7: #{zip_unet_forward.20} parent=0 // pred_check_branch
    %13 = sbr.rel (0) target = $region9
  $region8: #{zip_unet_forward.20} parent=0 // pred_region
    _
  $region9: #{zip_unet_forward.20} parent=0 // pred_fallthru
    _
  // Predicated region
  $region10: #{zip_unet_forward.20} parent=0 // pred_check
    _
  $region11: #{zip_unet_forward.20} parent=0 // pred_check_branch
    %15 = sbr.rel (0) target = $region13
  $region12: #{zip_unet_forward.20} parent=0 // pred_region
    _
  $region13: #{zip_unet_forward.20} parent=0 // pred_fallthru
    _
  // Predicated region
  $region14: #{zip_unet_forward.20} parent=0 // pred_check
    _
  $region15: #{zip_unet_forward.20} parent=0 // pred_check_branch
    %17 = sbr.rel (0) target = $region17
  $region16: #{zip_unet_forward.20} parent=0 // pred_region
    _
  $region17: #{zip_unet_forward.20} parent=0 // pred_fallthru
    _
  // Predicated region
  $region18: #{zip_unet_forward.20} parent=0 // pred_check
    _
  $region19: #{zip_unet_forward.20} parent=0 // pred_check_branch
    %19 = sbr.rel (0) target = $region21
  $region20: #{zip_unet_forward.20} parent=0 // pred_region
    _
  $region21: #{zip_unet_forward.20} parent=0 // pred_fallthru
    _
  %v21 = vld [vmem:[%s0] sm:$0xff]
  %v22 = vld [vmem:[%s0 + $0x8] sm:$0xf]
  %v23 = vld [vmem:[%s0 + $0xc] sm:$0xff]
  %v24 = vld [vmem:[%s0 + $0x14] sm:$0xf]
  %v25 = vld [vmem:[%s0 + $0x18] sm:$0xff]
  %v26 = vld [vmem:[%s0 + $0x20] sm:$0xf]
  %v27 = vld [vmem:[%s0 + $0x24] sm:$0xff]
  %v28 = vld [vmem:[%s0 + $0x2c] sm:$0xf]
  %v29 = vld [vmem:[%s0 + $0x30] sm:$0xff]
  %v30 = vld [vmem:[%s0 + $0x38] sm:$0xf]
  %v31 = vld [vmem:[%s0 + $0x3c] sm:$0xff]
  %v32 = vld [vmem:[%s0 + $0x44] sm:$0xf]
  %v33 = vld [vmem:[%s0 + $0x48] sm:$0xff]
  %v34 = vld [vmem:[%s0 + $0x50] sm:$0xf]
  %v35 = vld [vmem:[%s0 + $0x54] sm:$0xff]
  %v36 = vld [vmem:[%s0 + $0x5c] sm:$0xf]
  %v37 = vld [vmem:[%s0 + $0x60] sm:$0xff]
  %v38 = vld [vmem:[%s0 + $0x68] sm:$0xf]
  %v39 = vld [vmem:[%s0 + $0x6c] sm:$0xff]
  %v40 = vld [vmem:[%s0 + $0x74] sm:$0xf]
  %v41 = vld [vmem:[%s0 + $0x78] sm:$0xff]
  %v42 = vld [vmem:[%s0 + $0x80] sm:$0xf]
  %v43 = vld [vmem:[%s0 + $0x84] sm:$0xff]
  %v44 = vld [vmem:[%s0 + $0x8c] sm:$0xf]
  %v45 = vld [vmem:[%s0 + $0x90] sm:$0xff]
  %v46 = vld [vmem:[%s0 + $0x98] sm:$0xf]
  %v47 = vld [vmem:[%s0 + $0x9c] sm:$0xff]
  %v48 = vld [vmem:[%s0 + $0xa4] sm:$0xf]
  %v49 = vld [vmem:[%s0 + $0xa8] sm:$0xff]
  %v50 = vld [vmem:[%s0 + $0xb0] sm:$0xf]
  %v51 = vld [vmem:[%s0 + $0xb4] sm:$0xff]
  %v52 = vld [vmem:[%s0 + $0xbc] sm:$0xf]
  %v53 = vld [vmem:[%s1] sm:$0xf]
  %v54 = vld [vmem:[%s1 + $0x4] sm:$0xf]
  %v55 = vld [vmem:[%s1 + $0x8] sm:$0xf]
  %v56 = vld [vmem:[%s1 + $0xc] sm:$0xf]
  %v57 = vld [vmem:[%s1 + $0x10] sm:$0xf]
  %v58 = vld [vmem:[%s1 + $0x14] sm:$0xf]
  %v59 = vld [vmem:[%s1 + $0x18] sm:$0xf]
  %v60 = vld [vmem:[%s1 + $0x1c] sm:$0xf]
  %v61 = vld [vmem:[%s1 + $0x20] sm:$0xf]
  %v62 = vld [vmem:[%s1 + $0x24] sm:$0xf]
  %v63 = vld [vmem:[%s1 + $0x28] sm:$0xf]
  %v64 = vld [vmem:[%s1 + $0x2c] sm:$0xf]
  %v65 = vld [vmem:[%s1 + $0x30] sm:$0xf]
  %v66 = vld [vmem:[%s1 + $0x34] sm:$0xf]
  %v67 = vld [vmem:[%s1 + $0x38] sm:$0xf]
  %v68 = vld [vmem:[%s1 + $0x3c] sm:$0xf]
  %v69 = vld [vmem:[%s1 + $0x40] sm:$0xf]
  %v70 = vld [vmem:[%s1 + $0x44] sm:$0xf]
  %v71 = vld [vmem:[%s1 + $0x48] sm:$0xf]
  %v72 = vld [vmem:[%s1 + $0x4c] sm:$0xf]
  %v73 = vld [vmem:[%s1 + $0x50] sm:$0xf]
  %v74 = vld [vmem:[%s1 + $0x54] sm:$0xf]
  %v75 = vld [vmem:[%s1 + $0x58] sm:$0xf]
  %v76 = vld [vmem:[%s1 + $0x5c] sm:$0xf]
  %v77 = vld [vmem:[%s1 + $0x60] sm:$0xf]
  %v78 = vld [vmem:[%s1 + $0x64] sm:$0xf]
  %v79 = vld [vmem:[%s1 + $0x68] sm:$0xf]
  %v80 = vld [vmem:[%s1 + $0x6c] sm:$0xf]
  %v81 = vld [vmem:[%s1 + $0x70] sm:$0xf]
  %v82 = vld [vmem:[%s1 + $0x74] sm:$0xf]
  %v83 = vld [vmem:[%s1 + $0x78] sm:$0xf]
  %v84 = vld [vmem:[%s1 + $0x7c] sm:$0xf]
  %v85 = vld [vmem:[%s1 + $0x80] sm:$0xf]
  %v86 = vld [vmem:[%s1 + $0x84] sm:$0xf]
  %v87 = vld [vmem:[%s1 + $0x88] sm:$0xf]
  %v88 = vld [vmem:[%s1 + $0x8c] sm:$0xf]
  %v89 = vld [vmem:[%s1 + $0x90] sm:$0xf]
  %v90 = vld [vmem:[%s1 + $0x94] sm:$0xf]
  %v91 = vld [vmem:[%s1 + $0x98] sm:$0xf]
  %v92 = vld [vmem:[%s1 + $0x9c] sm:$0xf]
  %v93 = vld [vmem:[%s1 + $0xa0] sm:$0xf]
  %v94 = vld [vmem:[%s1 + $0xa4] sm:$0xf]
  %v95 = vld [vmem:[%s1 + $0xa8] sm:$0xf]
  %v96 = vld [vmem:[%s1 + $0xac] sm:$0xf]
  %v97 = vld [vmem:[%s1 + $0xb0] sm:$0xf]
  %v98 = vld [vmem:[%s1 + $0xb4] sm:$0xf]
  %v99 = vld [vmem:[%s1 + $0xb8] sm:$0xf]
  %v100 = vld [vmem:[%s1 + $0xbc] sm:$0xf]
  %v133 = vunpack.c.l.b16 %v21
  %v134 = vunpack.c.h.b16 %v21
  %v135 = vunpack.c.l.b16 %v22
  %v136 = vunpack.c.l.b16 %v23
  %v137 = vunpack.c.h.b16 %v23
  %v138 = vunpack.c.l.b16 %v24
  %v139 = vunpack.c.l.b16 %v25
  %v140 = vunpack.c.h.b16 %v25
  %v141 = vunpack.c.l.b16 %v26
  %v142 = vunpack.c.l.b16 %v27
  %v143 = vunpack.c.h.b16 %v27
  %v144 = vunpack.c.l.b16 %v28
  %v145 = vunpack.c.l.b16 %v29
  %v146 = vunpack.c.h.b16 %v29
  %v147 = vunpack.c.l.b16 %v30
  %v148 = vunpack.c.l.b16 %v31
  %v149 = vunpack.c.h.b16 %v31
  %v150 = vunpack.c.l.b16 %v32
  %v151 = vunpack.c.l.b16 %v33
  %v152 = vunpack.c.h.b16 %v33
  %v153 = vunpack.c.l.b16 %v34
  %v154 = vunpack.c.l.b16 %v35
  %v155 = vunpack.c.h.b16 %v35
  %v156 = vunpack.c.l.b16 %v36
  %v157 = vunpack.c.l.b16 %v37
  %v158 = vunpack.c.h.b16 %v37
  %v159 = vunpack.c.l.b16 %v38
  %v160 = vunpack.c.l.b16 %v39
  %v161 = vunpack.c.h.b16 %v39
  %v162 = vunpack.c.l.b16 %v40
  %v163 = vunpack.c.l.b16 %v41
  %v164 = vunpack.c.h.b16 %v41
  %v165 = vunpack.c.l.b16 %v42
  %v166 = vunpack.c.l.b16 %v43
  %v167 = vunpack.c.h.b16 %v43
  %v168 = vunpack.c.l.b16 %v44
  %v169 = vunpack.c.l.b16 %v45
  %v170 = vunpack.c.h.b16 %v45
  %v171 = vunpack.c.l.b16 %v46
  %v172 = vunpack.c.l.b16 %v47
  %v173 = vunpack.c.h.b16 %v47
  %v174 = vunpack.c.l.b16 %v48
  %v175 = vunpack.c.l.b16 %v49
  %v176 = vunpack.c.h.b16 %v49
  %v177 = vunpack.c.l.b16 %v50
  %v178 = vunpack.c.l.b16 %v51
  %v179 = vunpack.c.h.b16 %v51
  %v180 = vunpack.c.l.b16 %v52
  %v181 = vpack.c.b16 %v136, %v133
  %v182 = vpack.c.b16 %v137, %v134
  %v183 = vpack.c.b16 %v138, %v135
  %v184 = vpack.c.b16 %v142, %v139
  %v185 = vpack.c.b16 %v143, %v140
  %v186 = vpack.c.b16 %v144, %v141
  %v187 = vpack.c.b16 %v148, %v145
  %v188 = vpack.c.b16 %v149, %v146
  %v189 = vpack.c.b16 %v150, %v147
  %v190 = vpack.c.b16 %v154, %v151
  %v191 = vpack.c.b16 %v155, %v152
  %v192 = vpack.c.b16 %v156, %v153
  %v193 = vpack.c.b16 %v160, %v157
  %v194 = vpack.c.b16 %v161, %v158
  %v195 = vpack.c.b16 %v162, %v159
  %v196 = vpack.c.b16 %v166, %v163
  %v197 = vpack.c.b16 %v167, %v164
  %v198 = vpack.c.b16 %v168, %v165
  %v199 = vpack.c.b16 %v172, %v169
  %v200 = vpack.c.b16 %v173, %v170
  %v201 = vpack.c.b16 %v174, %v171
  %v202 = vpack.c.b16 %v178, %v175
  %v203 = vpack.c.b16 %v179, %v176
  %v204 = vpack.c.b16 %v180, %v177
  %v277 = vunpack.c.l.b16 %v53
  %v278 = vunpack.c.l.b16 %v54
  %v279 = vunpack.c.l.b16 %v55
  %v280 = vunpack.c.l.b16 %v56
  %v281 = vunpack.c.l.b16 %v57
  %v282 = vunpack.c.l.b16 %v58
  %v283 = vunpack.c.l.b16 %v59
  %v284 = vunpack.c.l.b16 %v60
  %v285 = vunpack.c.l.b16 %v61
  %v286 = vunpack.c.l.b16 %v62
  %v287 = vunpack.c.l.b16 %v63
  %v288 = vunpack.c.l.b16 %v64
  %v289 = vunpack.c.l.b16 %v65
  %v290 = vunpack.c.l.b16 %v66
  %v291 = vunpack.c.l.b16 %v67
  %v292 = vunpack.c.l.b16 %v68
  %v293 = vunpack.c.l.b16 %v69
  %v294 = vunpack.c.l.b16 %v70
  %v295 = vunpack.c.l.b16 %v71
  %v296 = vunpack.c.l.b16 %v72
  %v297 = vunpack.c.l.b16 %v73
  %v298 = vunpack.c.l.b16 %v74
  %v299 = vunpack.c.l.b16 %v75
  %v300 = vunpack.c.l.b16 %v76
  %v301 = vunpack.c.l.b16 %v77
  %v302 = vunpack.c.l.b16 %v78
  %v303 = vunpack.c.l.b16 %v79
  %v304 = vunpack.c.l.b16 %v80
  %v305 = vunpack.c.l.b16 %v81
  %v306 = vunpack.c.l.b16 %v82
  %v307 = vunpack.c.l.b16 %v83
  %v308 = vunpack.c.l.b16 %v84
  %v309 = vunpack.c.l.b16 %v85
  %v310 = vunpack.c.l.b16 %v86
  %v311 = vunpack.c.l.b16 %v87
  %v312 = vunpack.c.l.b16 %v88
  %v313 = vunpack.c.l.b16 %v89
  %v314 = vunpack.c.l.b16 %v90
  %v315 = vunpack.c.l.b16 %v91
  %v316 = vunpack.c.l.b16 %v92
  %v317 = vunpack.c.l.b16 %v93
  %v318 = vunpack.c.l.b16 %v94
  %v319 = vunpack.c.l.b16 %v95
  %v320 = vunpack.c.l.b16 %v96
  %v321 = vunpack.c.l.b16 %v97
  %v322 = vunpack.c.l.b16 %v98
  %v323 = vunpack.c.l.b16 %v99
  %v324 = vunpack.c.l.b16 %v100
  %v325 = vpack.c.b16 %v278, %v277
  %v326 = vpack.c.b16 %v280, %v279
  %v327 = vpack.c.b16 %v282, %v281
  %v328 = vpack.c.b16 %v284, %v283
  %v329 = vpack.c.b16 %v286, %v285
  %v330 = vpack.c.b16 %v288, %v287
  %v331 = vpack.c.b16 %v290, %v289
  %v332 = vpack.c.b16 %v292, %v291
  %v333 = vpack.c.b16 %v294, %v293
  %v334 = vpack.c.b16 %v296, %v295
  %v335 = vpack.c.b16 %v298, %v297
  %v336 = vpack.c.b16 %v300, %v299
  %v337 = vpack.c.b16 %v302, %v301
  %v338 = vpack.c.b16 %v304, %v303
  %v339 = vpack.c.b16 %v306, %v305
  %v340 = vpack.c.b16 %v308, %v307
  %v341 = vpack.c.b16 %v310, %v309
  %v342 = vpack.c.b16 %v312, %v311
  %v343 = vpack.c.b16 %v314, %v313
  %v344 = vpack.c.b16 %v316, %v315
  %v345 = vpack.c.b16 %v318, %v317
  %v346 = vpack.c.b16 %v320, %v319
  %v347 = vpack.c.b16 %v322, %v321
  %v348 = vpack.c.b16 %v324, %v323
  %373 = vmatprep.subr.bf16.mxu0 0
  %374 = vmatpush1.bf16.msra.mxu0 %v332
  %375 = vmatprep.subr.bf16.mxu0 0
  %376 = vmatpush1.bf16.msra.mxu0 %v331
  %377 = vmatprep.subr.bf16.mxu0 0
  %378 = vmatpush1.bf16.msra.mxu0 %v330
  %379 = vmatprep.subr.bf16.mxu0 0
  %380 = vmatpush1.bf16.msra.mxu0 %v329
  %381 = vmatprep.subr.bf16.mxu0 0
  %382 = vmatpush1.bf16.msra.mxu0 %v328
  %383 = vmatprep.subr.bf16.mxu0 0
  %384 = vmatpush1.bf16.msra.mxu0 %v327
  %385 = vmatprep.subr.bf16.mxu0 0
  %386 = vmatpush1.bf16.msra.mxu0 %v326
  %387 = vmatprep.subr.bf16.mxu0 0
  %388 = vmatpush1.bf16.msra.mxu0 %v325
  %389 = vmatprep.subr.bf16.mxu0 0
  %390 = vmatpush2.bf16.msra.mxu0 %v340
  %391 = vmatprep.subr.bf16.mxu0 0
  %392 = vmatpush2.bf16.msra.mxu0 %v339
  %393 = vmatprep.subr.bf16.mxu0 0
  %394 = vmatpush2.bf16.msra.mxu0 %v338
  %395 = vmatprep.subr.bf16.mxu0 0
  %396 = vmatpush2.bf16.msra.mxu0 %v337
  %397 = vmatprep.subr.bf16.mxu0 0
  %398 = vmatpush2.bf16.msra.mxu0 %v336
  %399 = vmatprep.subr.bf16.mxu0 0
  %400 = vmatpush2.bf16.msra.mxu0 %v335
  %401 = vmatprep.subr.bf16.mxu0 0
  %402 = vmatpush2.bf16.msra.mxu0 %v334
  %403 = vmatprep.subr.bf16.mxu0 0
  %404 = vmatpush2.bf16.msra.mxu0 %v333
  %405 = vmatprep.mubr.bf16.mxu0 %v182
  %406 = vmatmul.mubr.bf16.gmra.mxu0 %v181
  %v407 = vpop.f32.mrf.mxu0
  %v408 = vadd.f32 0.0, %v407
  %v409 = vpop.f32.mrf.mxu0
  %v410 = vpop.f32.mrf.mxu0
  %v411 = vadd.f32 0.0, %v410
  %v412 = vpop.f32.mrf.mxu0
  %413 = vmatprep.mubr.bf16.mxu0 %v185
  %414 = vmatmul.mubr.bf16.gmra.mxu0 %v184
  %v415 = vpop.f32.mrf.mxu0
  %v416 = vadd.f32 0.0, %v415
  %v417 = vpop.f32.mrf.mxu0
  %v418 = vpop.f32.mrf.mxu0
  %v419 = vadd.f32 0.0, %v418
  %v420 = vpop.f32.mrf.mxu0
  %421 = vmatprep.mubr.bf16.mxu0 %v188
  %422 = vmatmul.mubr.bf16.gmra.mxu0 %v187
  %v423 = vpop.f32.mrf.mxu0
  %v424 = vadd.f32 0.0, %v423
  %v425 = vpop.f32.mrf.mxu0
  %v426 = vpop.f32.mrf.mxu0
  %v427 = vadd.f32 0.0, %v426
  %v428 = vpop.f32.mrf.mxu0
  %429 = vmatprep.mubr.bf16.mxu0 %v191
  %430 = vmatmul.mubr.bf16.gmra.mxu0 %v190
  %v431 = vpop.f32.mrf.mxu0
  %v432 = vadd.f32 0.0, %v431
  %v433 = vpop.f32.mrf.mxu0
  %v434 = vpop.f32.mrf.mxu0
  %v435 = vadd.f32 0.0, %v434
  %v436 = vpop.f32.mrf.mxu0
  %437 = vmatprep.mubr.bf16.mxu0 %v194
  %438 = vmatmul.mubr.bf16.gmra.mxu0 %v193
  %v439 = vpop.f32.mrf.mxu0
  %v440 = vadd.f32 0.0, %v439
  %v441 = vpop.f32.mrf.mxu0
  %v442 = vpop.f32.mrf.mxu0
  %v443 = vadd.f32 0.0, %v442
  %v444 = vpop.f32.mrf.mxu0
  %445 = vmatprep.mubr.bf16.mxu0 %v197
  %446 = vmatmul.mubr.bf16.gmra.mxu0 %v196
  %v447 = vpop.f32.mrf.mxu0
  %v448 = vadd.f32 0.0, %v447
  %v449 = vpop.f32.mrf.mxu0
  %v450 = vpop.f32.mrf.mxu0
  %v451 = vadd.f32 0.0, %v450
  %v452 = vpop.f32.mrf.mxu0
  %453 = vmatprep.mubr.bf16.mxu0 %v200
  %454 = vmatmul.mubr.bf16.gmra.mxu0 %v199
  %v455 = vpop.f32.mrf.mxu0
  %v456 = vadd.f32 0.0, %v455
  %v457 = vpop.f32.mrf.mxu0
  %v458 = vpop.f32.mrf.mxu0
  %v459 = vadd.f32 0.0, %v458
  %v460 = vpop.f32.mrf.mxu0
  %461 = vmatprep.mubr.bf16.mxu0 %v203
  %462 = vmatmul.mubr.bf16.gmra.mxu0 %v202
  %v463 = vpop.f32.mrf.mxu0
  %v464 = vadd.f32 0.0, %v463
  %v465 = vpop.f32.mrf.mxu0
  %v466 = vpop.f32.mrf.mxu0
  %v467 = vadd.f32 0.0, %v466
  %v468 = vpop.f32.mrf.mxu0
  %469 = vdwg.mxu0
  %470 = vmatprep.subr.bf16.mxu0 0
  %471 = vmatpush1.bf16.msra.mxu0 %v348
  %472 = vmatprep.subr.bf16.mxu0 0
  %473 = vmatpush1.bf16.msra.mxu0 %v347
  %474 = vmatprep.subr.bf16.mxu0 0
  %475 = vmatpush1.bf16.msra.mxu0 %v346
  %476 = vmatprep.subr.bf16.mxu0 0
  %477 = vmatpush1.bf16.msra.mxu0 %v345
  %478 = vmatprep.subr.bf16.mxu0 0
  %479 = vmatpush1.bf16.msra.mxu0 %v344
  %480 = vmatprep.subr.bf16.mxu0 0
  %481 = vmatpush1.bf16.msra.mxu0 %v343
  %482 = vmatprep.subr.bf16.mxu0 0
  %483 = vmatpush1.bf16.msra.mxu0 %v342
  %484 = vmatprep.subr.bf16.mxu0 0
  %485 = vmatpush1.bf16.msra.mxu0 %v341
  %486 = vmatprep.subr.bf16.mxu0 0
  %487 = vmatpush2.bf16.msra.mxu0 0
  %488 = vmatprep.subr.bf16.mxu0 0
  %489 = vmatpush2.bf16.msra.mxu0 0
  %490 = vmatprep.subr.bf16.mxu0 0
  %491 = vmatpush2.bf16.msra.mxu0 0
  %492 = vmatprep.subr.bf16.mxu0 0
  %493 = vmatpush2.bf16.msra.mxu0 0
  %494 = vmatprep.subr.bf16.mxu0 0
  %495 = vmatpush2.bf16.msra.mxu0 0
  %496 = vmatprep.subr.bf16.mxu0 0
  %497 = vmatpush2.bf16.msra.mxu0 0
  %498 = vmatprep.subr.bf16.mxu0 0
  %499 = vmatpush2.bf16.msra.mxu0 0
  %500 = vmatprep.subr.bf16.mxu0 0
  %501 = vmatpush2.bf16.msra.mxu0 0
  %502 = vmatprep.mubr.bf16.mxu0 0
  %503 = vmatmul.mubr.bf16.gmra.mxu0 %v183
  %v504 = vpop.f32.mrf.mxu0
  %v505 = vadd.f32 %v408, %v504
  %v506 = vpop.f32.mrf.mxu0
  %v507 = vpop.f32.mrf.mxu0
  %v508 = vadd.f32 %v411, %v507
  %v509 = vpop.f32.mrf.mxu0
  %510 = vmatprep.mubr.bf16.mxu0 0
  %511 = vmatmul.mubr.bf16.gmra.mxu0 %v186
  %v512 = vpop.f32.mrf.mxu0
  %v513 = vadd.f32 %v416, %v512
  %v514 = vpop.f32.mrf.mxu0
  %v515 = vpop.f32.mrf.mxu0
  %v516 = vadd.f32 %v419, %v515
  %v517 = vpop.f32.mrf.mxu0
  %518 = vmatprep.mubr.bf16.mxu0 0
  %519 = vmatmul.mubr.bf16.gmra.mxu0 %v189
  %v520 = vpop.f32.mrf.mxu0
  %v521 = vadd.f32 %v424, %v520
  %v522 = vpop.f32.mrf.mxu0
  %v523 = vpop.f32.mrf.mxu0
  %v524 = vadd.f32 %v427, %v523
  %v525 = vpop.f32.mrf.mxu0
  %526 = vmatprep.mubr.bf16.mxu0 0
  %527 = vmatmul.mubr.bf16.gmra.mxu0 %v192
  %v528 = vpop.f32.mrf.mxu0
  %v529 = vadd.f32 %v432, %v528
  %v530 = vpop.f32.mrf.mxu0
  %v531 = vpop.f32.mrf.mxu0
  %v532 = vadd.f32 %v435, %v531
  %v533 = vpop.f32.mrf.mxu0
  %534 = vmatprep.mubr.bf16.mxu0 0
  %535 = vmatmul.mubr.bf16.gmra.mxu0 %v195
  %v536 = vpop.f32.mrf.mxu0
  %v537 = vadd.f32 %v440, %v536
  %v538 = vpop.f32.mrf.mxu0
  %v539 = vpop.f32.mrf.mxu0
  %v540 = vadd.f32 %v443, %v539
  %v541 = vpop.f32.mrf.mxu0
  %542 = vmatprep.mubr.bf16.mxu0 0
  %543 = vmatmul.mubr.bf16.gmra.mxu0 %v198
  %v544 = vpop.f32.mrf.mxu0
  %v545 = vadd.f32 %v448, %v544
  %v546 = vpop.f32.mrf.mxu0
  %v547 = vpop.f32.mrf.mxu0
  %v548 = vadd.f32 %v451, %v547
  %v549 = vpop.f32.mrf.mxu0
  %550 = vmatprep.mubr.bf16.mxu0 0
  %551 = vmatmul.mubr.bf16.gmra.mxu0 %v201
  %v552 = vpop.f32.mrf.mxu0
  %v553 = vadd.f32 %v456, %v552
  %v554 = vpop.f32.mrf.mxu0
  %v555 = vpop.f32.mrf.mxu0
  %v556 = vadd.f32 %v459, %v555
  %v557 = vpop.f32.mrf.mxu0
  %558 = vmatprep.mubr.bf16.mxu0 0
  %559 = vmatmul.mubr.bf16.gmra.mxu0 %v204
  %v560 = vpop.f32.mrf.mxu0
  %v561 = vadd.f32 %v464, %v560
  %v562 = vpop.f32.mrf.mxu0
  %v563 = vpop.f32.mrf.mxu0
  %v564 = vadd.f32 %v467, %v563
  %v565 = vpop.f32.mrf.mxu0
  %566 = vdwg.mxu0
  %v567 = vadd.f32 %v505, %v508
  %v568 = vadd.f32 %v567, %v513
  %v569 = vadd.f32 %v568, %v516
  %v570 = vadd.f32 %v569, %v521
  %v571 = vadd.f32 %v570, %v524
  %v572 = vadd.f32 %v571, %v529
  %v573 = vadd.f32 %v572, %v532
  %v574 = vadd.f32 %v573, %v537
  %v575 = vadd.f32 %v574, %v540
  %v576 = vadd.f32 %v575, %v545
  %v577 = vadd.f32 %v576, %v548
  %v578 = vadd.f32 %v577, %v553
  %v579 = vadd.f32 %v578, %v556
  %v580 = vadd.f32 %v579, %v561
  %v581 = vadd.f32 %v580, %v564
  %v582 = vrot.slane %v581, 4
  %v583 = vadd.f32 %v581, %v582
  %v584 = vrot.slane %v583, 2
  %v585 = vadd.f32 %v583, %v584
  %v586 = vrot.slane %v585, 1
  %v587 = vadd.f32 %v585, %v586
  %v588 = vmul.f32 %v505, %v505
  %v589 = vmul.f32 %v508, %v508
  %v590 = vmul.f32 %v513, %v513
  %v591 = vmul.f32 %v516, %v516
  %v592 = vmul.f32 %v521, %v521
  %v593 = vmul.f32 %v524, %v524
  %v594 = vmul.f32 %v529, %v529
  %v595 = vmul.f32 %v532, %v532
  %v596 = vmul.f32 %v537, %v537
  %v597 = vmul.f32 %v540, %v540
  %v598 = vmul.f32 %v545, %v545
  %v599 = vmul.f32 %v548, %v548
  %v600 = vmul.f32 %v553, %v553
  %v601 = vmul.f32 %v556, %v556
  %v602 = vmul.f32 %v561, %v561
  %v603 = vmul.f32 %v564, %v564
  %v604 = vadd.f32 %v588, %v589
  %v605 = vadd.f32 %v604, %v590
  %v606 = vadd.f32 %v605, %v591
  %v607 = vadd.f32 %v606, %v592
  %v608 = vadd.f32 %v607, %v593
  %v609 = vadd.f32 %v608, %v594
  %v610 = vadd.f32 %v609, %v595
  %v611 = vadd.f32 %v610, %v596
  %v612 = vadd.f32 %v611, %v597
  %v613 = vadd.f32 %v612, %v598
  %v614 = vadd.f32 %v613, %v599
  %v615 = vadd.f32 %v614, %v600
  %v616 = vadd.f32 %v615, %v601
  %v617 = vadd.f32 %v616, %v602
  %v618 = vadd.f32 %v617, %v603
  %v619 = vrot.slane %v618, 4
  %v620 = vadd.f32 %v618, %v619
  %v621 = vrot.slane %v620, 2
  %v622 = vadd.f32 %v620, %v621
  %v623 = vrot.slane %v622, 1
  %v624 = vadd.f32 %v622, %v623
  %vm625 = vcmask 1040384
  %v626 = vsel %vm625, %v587, %v624
  %v627 = vld [vmem:[%s4] sm:$0xff]
  %v628 = vld [vmem:[%s4 + $0x8] sm:$0xff]
  %v629 = vld [vmem:[%s4 + $0x10] sm:$0xff]
  %v630 = vld [vmem:[%s4 + $0x18] sm:$0xff]
  %v631 = vld [vmem:[%s4 + $0x20] sm:$0xff]
  %v632 = vld [vmem:[%s4 + $0x28] sm:$0xff]
  %v633 = vld [vmem:[%s4 + $0x30] sm:$0xff]
  %v634 = vld [vmem:[%s4 + $0x38] sm:$0xff]
  %v635 = vld [vmem:[%s4 + $0x40] sm:$0xff]
  %v636 = vld [vmem:[%s4 + $0x48] sm:$0xff]
  %v637 = vld [vmem:[%s4 + $0x50] sm:$0xff]
  %v638 = vld [vmem:[%s4 + $0x58] sm:$0xff]
  %v639 = vld [vmem:[%s4 + $0x60] sm:$0xff]
  %v640 = vld [vmem:[%s4 + $0x68] sm:$0xff]
  %v641 = vld [vmem:[%s4 + $0x70] sm:$0xff]
  %v642 = vld [vmem:[%s4 + $0x78] sm:$0xff]
  %643 = vmatprep.subr.mxu0 0.0
  %644 = vmatpush1.msra.mxu0 %v642
  %645 = vmatprep.subr.mxu0 0.0
  %646 = vmatpush1.msra.mxu0 %v641
  %647 = vmatprep.subr.mxu0 0.0
  %648 = vmatpush1.msra.mxu0 %v640
  %649 = vmatprep.subr.mxu0 0.0
  %650 = vmatpush1.msra.mxu0 %v639
  %651 = vmatprep.subr.mxu0 0.0
  %652 = vmatpush1.msra.mxu0 %v638
  %653 = vmatprep.subr.mxu0 0.0
  %654 = vmatpush1.msra.mxu0 %v637
  %655 = vmatprep.subr.mxu0 0.0
  %656 = vmatpush1.msra.mxu0 %v636
  %657 = vmatprep.subr.mxu0 0.0
  %658 = vmatpush1.msra.mxu0 %v635
  %659 = vmatprep.subr.mxu0 0.0
  %660 = vmatpush1.msra.mxu0 %v634
  %661 = vmatprep.subr.mxu0 0.0
  %662 = vmatpush1.msra.mxu0 %v633
  %663 = vmatprep.subr.mxu0 0.0
  %664 = vmatpush1.msra.mxu0 %v632
  %665 = vmatprep.subr.mxu0 0.0
  %666 = vmatpush1.msra.mxu0 %v631
  %667 = vmatprep.subr.mxu0 0.0
  %668 = vmatpush1.msra.mxu0 %v630
  %669 = vmatprep.subr.mxu0 0.0
  %670 = vmatpush1.msra.mxu0 %v629
  %671 = vmatprep.subr.mxu0 0.0
  %672 = vmatpush1.msra.mxu0 %v628
  %673 = vmatprep.subr.mxu0 0.0
  %674 = vmatpush1.msra.mxu0 %v627
  %675 = vmatprep.subr.mxu0 0.0
  %676 = vmatpush2.msra.mxu0 0.0
  %677 = vmatprep.subr.mxu0 0.0
  %678 = vmatpush2.msra.mxu0 0.0
  %679 = vmatprep.subr.mxu0 0.0
  %680 = vmatpush2.msra.mxu0 0.0
  %681 = vmatprep.subr.mxu0 0.0
  %682 = vmatpush2.msra.mxu0 0.0
  %683 = vmatprep.subr.mxu0 0.0
  %684 = vmatpush2.msra.mxu0 0.0
  %685 = vmatprep.subr.mxu0 0.0
  %686 = vmatpush2.msra.mxu0 0.0
  %687 = vmatprep.subr.mxu0 0.0
  %688 = vmatpush2.msra.mxu0 0.0
  %689 = vmatprep.subr.mxu0 0.0
  %690 = vmatpush2.msra.mxu0 0.0
  %691 = vmatprep.subr.mxu0 0.0
  %692 = vmatpush2.msra.mxu0 0.0
  %693 = vmatprep.subr.mxu0 0.0
  %694 = vmatpush2.msra.mxu0 0.0
  %695 = vmatprep.subr.mxu0 0.0
  %696 = vmatpush2.msra.mxu0 0.0
  %697 = vmatprep.subr.mxu0 0.0
  %698 = vmatpush2.msra.mxu0 0.0
  %699 = vmatprep.subr.mxu0 0.0
  %700 = vmatpush2.msra.mxu0 0.0
  %701 = vmatprep.subr.mxu0 0.0
  %702 = vmatpush2.msra.mxu0 0.0
  %703 = vmatprep.subr.mxu0 0.0
  %704 = vmatpush2.msra.mxu0 0.0
  %705 = vmatprep.subr.mxu0 0.0
  %706 = vmatpush2.msra.mxu0 0.0
  %707 = vmatprep.mubr.f32.mxu0 0.0
  %708 = vmatmul.mubr.f32.gmra.mxu0 %v626
  %v709 = vpop.f32.mrf.mxu0
  %v710 = vadd.f32 0.0, %v709
  %v711 = vpop.f32.mrf.mxu0
  %712 = vdwg.mxu0
  %v713 = vmul.f32 %v710, 0.001953125
  %v714 = vmul.f32 %v713, %v713
  %v716 = vrot.slane %v714, 7
  %v718 = vsub.f32 %v713, %v716
  %v719 = vlaneseq
  %v720 = vshrl.u32 %v719, 7
  %v721 = vsub.s32 0, %v720
  %v722 = vrot.slane %v713, %v721
  %v723 = vsub.f32 %v505, %v722
  %v724 = vsub.f32 %v508, %v722
  %v725 = vsub.f32 %v513, %v722
  %v726 = vsub.f32 %v516, %v722
  %v727 = vsub.f32 %v521, %v722
  %v728 = vsub.f32 %v524, %v722
  %v729 = vsub.f32 %v529, %v722
  %v730 = vsub.f32 %v532, %v722
  %v731 = vsub.f32 %v537, %v722
  %v732 = vsub.f32 %v540, %v722
  %v733 = vsub.f32 %v545, %v722
  %v734 = vsub.f32 %v548, %v722
  %v735 = vsub.f32 %v553, %v722
  %v736 = vsub.f32 %v556, %v722
  %v737 = vsub.f32 %v561, %v722
  %v738 = vsub.f32 %v564, %v722
  %v739 = vadd.f32 %v718, 1e-05
  %v740 = vrsqrt.pop %v739
  %v741 = vlaneseq
  %v742 = vshrl.u32 %v741, 7
  %v743 = vsub.s32 1, %v742
  %v744 = vrot.slane %v740, %v743
  %v745 = vmul.f32 %v723, %v744
  %v746 = vmul.f32 %v724, %v744
  %v747 = vmul.f32 %v725, %v744
  %v748 = vmul.f32 %v726, %v744
  %v749 = vmul.f32 %v727, %v744
  %v750 = vmul.f32 %v728, %v744
  %v751 = vmul.f32 %v729, %v744
  %v752 = vmul.f32 %v730, %v744
  %v753 = vmul.f32 %v731, %v744
  %v754 = vmul.f32 %v732, %v744
  %v755 = vmul.f32 %v733, %v744
  %v756 = vmul.f32 %v734, %v744
  %v757 = vmul.f32 %v735, %v744
  %v758 = vmul.f32 %v736, %v744
  %v759 = vmul.f32 %v737, %v744
  %v760 = vmul.f32 %v738, %v744
  %v761 = vld [vmem:[%s2] sm:$0x1]
  %v763 = vlaneseq
  %v764 = vshrl.u32 %v763, 7
  %v765 = vsub.s32 0, %v764
  %v766 = vrot.slane %v761, %v765
  %v768 = vmul.f32 %v745, %v766
  %v769 = vmul.f32 %v746, %v766
  %v770 = vmul.f32 %v747, %v766
  %v771 = vmul.f32 %v748, %v766
  %v772 = vmul.f32 %v749, %v766
  %v773 = vmul.f32 %v750, %v766
  %v774 = vmul.f32 %v751, %v766
  %v775 = vmul.f32 %v752, %v766
  %v776 = vmul.f32 %v753, %v766
  %v777 = vmul.f32 %v754, %v766
  %v778 = vmul.f32 %v755, %v766
  %v779 = vmul.f32 %v756, %v766
  %v780 = vmul.f32 %v757, %v766
  %v781 = vmul.f32 %v758, %v766
  %v782 = vmul.f32 %v759, %v766
  %v783 = vmul.f32 %v760, %v766
  %v784 = vld [vmem:[%s3] sm:$0x1]
  %v786 = vlaneseq
  %v787 = vshrl.u32 %v786, 7
  %v788 = vsub.s32 0, %v787
  %v789 = vrot.slane %v784, %v788
  %v791 = vadd.f32 %v768, %v789
  %v792 = vadd.f32 %v769, %v789
  %v793 = vadd.f32 %v770, %v789
  %v794 = vadd.f32 %v771, %v789
  %v795 = vadd.f32 %v772, %v789
  %v796 = vadd.f32 %v773, %v789
  %v797 = vadd.f32 %v774, %v789
  %v798 = vadd.f32 %v775, %v789
  %v799 = vadd.f32 %v776, %v789
  %v800 = vadd.f32 %v777, %v789
  %v801 = vadd.f32 %v778, %v789
  %v802 = vadd.f32 %v779, %v789
  %v803 = vadd.f32 %v780, %v789
  %v804 = vadd.f32 %v781, %v789
  %v805 = vadd.f32 %v782, %v789
  %v806 = vadd.f32 %v783, %v789
  %807 = vst [vmem:[%s5] sm:$0xff] %v791
  %808 = vst [vmem:[%s5 + $0x8] sm:$0xff] %v792
  %809 = vst [vmem:[%s5 + $0x10] sm:$0xff] %v793
  %810 = vst [vmem:[%s5 + $0x18] sm:$0xff] %v794
  %811 = vst [vmem:[%s5 + $0x20] sm:$0xff] %v795
  %812 = vst [vmem:[%s5 + $0x28] sm:$0xff] %v796
  %813 = vst [vmem:[%s5 + $0x30] sm:$0xff] %v797
  %814 = vst [vmem:[%s5 + $0x38] sm:$0xff] %v798
  %815 = vst [vmem:[%s5 + $0x40] sm:$0xff] %v799
  %816 = vst [vmem:[%s5 + $0x48] sm:$0xff] %v800
  %817 = vst [vmem:[%s5 + $0x50] sm:$0xff] %v801
  %818 = vst [vmem:[%s5 + $0x58] sm:$0xff] %v802
  %819 = vst [vmem:[%s5 + $0x60] sm:$0xff] %v803
  %820 = vst [vmem:[%s5 + $0x68] sm:$0xff] %v804
  %821 = vst [vmem:[%s5 + $0x70] sm:$0xff] %v805
  %822 = vst [vmem:[%s5 + $0x78] sm:$0xff] %v806
  // Predicated region
  $region22: #{zip_unet_forward.20} parent=0 // pred_check
    _
  $region23: #{zip_unet_forward.20} parent=0 // pred_check_branch
    %824 = sbr.rel (0) target = $region25
  $region24: #{zip_unet_forward.20} parent=0 // pred_region
    _
  $region25: #{zip_unet_forward.20} parent=0 // pred_fallthru
    _
  // Predicated region
  $region26: #{zip_unet_forward.20} parent=0 // pred_check
    _
  $region27: #{zip_unet_forward.20} parent=0 // pred_check_branch
    %826 = sbr.rel (0) target = $region29
  $region28: #{zip_unet_forward.20} parent=0 // pred_region
    _
  $region29: #{zip_unet_forward.20} parent=0 // pred_fallthru
    _

// kernel: zip_unet_forward.21
$region0: #{zip_unet_forward.21}
  #allocation0 [shape = 'u32[]', space=smem, size = 0x4, offset = 0x4, fixed_abs, tag = 'smem constant byte address 0x4 - core index']
  #allocation1 [shape = 'u32[144,128]{1,0:T(1,128)}', space=vmem, size = 0x12000, scoped, tag = 'internal scratch']
  %s0 = inlined_call_operand.vmem [shape: bf16[512,256], index: 0, kind: input, shape index: {}]
  %s1 = inlined_call_operand.vmem [shape: bf16[256,128], index: 1, kind: input, shape index: {}]
  %s2 = inlined_call_operand.vmem [shape: f32[1,128], index: 2, kind: input, shape index: {}]
  %s3 = inlined_call_operand.vmem [shape: f32[512,128], index: 3, kind: output, shape index: {}]
  %s4 = sld [smem:[#allocation0]]
  $region22: #{zip_unet_forward.21} parent=0
    _
  %s6 = ssub.s32 1, %s4
  %s7 = scalar_select 0, %s6, %s4
  // Predicated region
  $region2: #{zip_unet_forward.21} parent=0 // pred_check
    _
  $region3: #{zip_unet_forward.21} parent=0 // pred_check_branch
    %9 = sbr.rel (0) target = $region5
  $region4: #{zip_unet_forward.21} parent=0 // pred_region
    _
  $region5: #{zip_unet_forward.21} parent=0 // pred_fallthru
    _
  // Predicated region
  $region6: #{zip_unet_forward.21} parent=0 // pred_check
    _
  $region7: #{zip_unet_forward.21} parent=0 // pred_check_branch
    %11 = sbr.rel (0) target = $region9
  $region8: #{zip_unet_forward.21} parent=0 // pred_region
    _
  $region9: #{zip_unet_forward.21} parent=0 // pred_fallthru
    _
  // Predicated region
  $region10: #{zip_unet_forward.21} parent=0 // pred_check
    _
  $region11: #{zip_unet_forward.21} parent=0 // pred_check_branch
    %13 = sbr.rel (0) target = $region13
  $region12: #{zip_unet_forward.21} parent=0 // pred_region
    _
  $region13: #{zip_unet_forward.21} parent=0 // pred_fallthru
    _
  %v15 = vld [vmem:[%s0] sm:$0xff]
  %v16 = vld [vmem:[%s0 + $0x8] sm:$0xff]
  %v17 = vld [vmem:[%s0 + $0x10] sm:$0xff]
  %v18 = vld [vmem:[%s0 + $0x18] sm:$0xff]
  %v19 = vld [vmem:[%s0 + $0x20] sm:$0xff]
  %v20 = vld [vmem:[%s0 + $0x28] sm:$0xff]
  %v21 = vld [vmem:[%s0 + $0x30] sm:$0xff]
  %v22 = vld [vmem:[%s0 + $0x38] sm:$0xff]
  %v23 = vld [vmem:[%s0 + $0x40] sm:$0xff]
  %v24 = vld [vmem:[%s0 + $0x48] sm:$0xff]
  %v25 = vld [vmem:[%s0 + $0x50] sm:$0xff]
  %v26 = vld [vmem:[%s0 + $0x58] sm:$0xff]
  %v27 = vld [vmem:[%s0 + $0x60] sm:$0xff]
  %v28 = vld [vmem:[%s0 + $0x68] sm:$0xff]
  %v29 = vld [vmem:[%s0 + $0x70] sm:$0xff]
  %v30 = vld [vmem:[%s0 + $0x78] sm:$0xff]
  %v31 = vld [vmem:[%s0 + $0x80] sm:$0xff]
  %v32 = vld [vmem:[%s0 + $0x88] sm:$0xff]
  %v33 = vld [vmem:[%s0 + $0x90] sm:$0xff]
  %v34 = vld [vmem:[%s0 + $0x98] sm:$0xff]
  %v35 = vld [vmem:[%s0 + $0xa0] sm:$0xff]
  %v36 = vld [vmem:[%s0 + $0xa8] sm:$0xff]
  %v37 = vld [vmem:[%s0 + $0xb0] sm:$0xff]
  %v38 = vld [vmem:[%s0 + $0xb8] sm:$0xff]
  %v39 = vld [vmem:[%s0 + $0xc0] sm:$0xff]
  %v40 = vld [vmem:[%s0 + $0xc8] sm:$0xff]
  %v41 = vld [vmem:[%s0 + $0xd0] sm:$0xff]
  %v42 = vld [vmem:[%s0 + $0xd8] sm:$0xff]
  %v43 = vld [vmem:[%s0 + $0xe0] sm:$0xff]
  %v44 = vld [vmem:[%s0 + $0xe8] sm:$0xff]
  %v45 = vld [vmem:[%s0 + $0xf0] sm:$0xff]
  %v46 = vld [vmem:[%s0 + $0xf8] sm:$0xff]
  %v47 = vld [vmem:[%s0 + $0x100] sm:$0xff]
  %v48 = vld [vmem:[%s0 + $0x108] sm:$0xff]
  %v49 = vld [vmem:[%s0 + $0x110] sm:$0xff]
  %v50 = vld [vmem:[%s0 + $0x118] sm:$0xff]
  %v51 = vld [vmem:[%s0 + $0x120] sm:$0xff]
  %v52 = vld [vmem:[%s0 + $0x128] sm:$0xff]
  %v53 = vld [vmem:[%s0 + $0x130] sm:$0xff]
  %v54 = vld [vmem:[%s0 + $0x138] sm:$0xff]
  %v55 = vld [vmem:[%s0 + $0x140] sm:$0xff]
  %v56 = vld [vmem:[%s0 + $0x148] sm:$0xff]
  %v57 = vld [vmem:[%s0 + $0x150] sm:$0xff]
  %v58 = vld [vmem:[%s0 + $0x158] sm:$0xff]
  %v59 = vld [vmem:[%s0 + $0x160] sm:$0xff]
  %v60 = vld [vmem:[%s0 + $0x168] sm:$0xff]
  %v61 = vld [vmem:[%s0 + $0x170] sm:$0xff]
  %v62 = vld [vmem:[%s0 + $0x178] sm:$0xff]
  %v63 = vld [vmem:[%s0 + $0x180] sm:$0xff]
  %v64 = vld [vmem:[%s0 + $0x188] sm:$0xff]
  %v65 = vld [vmem:[%s0 + $0x190] sm:$0xff]
  %v66 = vld [vmem:[%s0 + $0x198] sm:$0xff]
  %v67 = vld [vmem:[%s0 + $0x1a0] sm:$0xff]
  %v68 = vld [vmem:[%s0 + $0x1a8] sm:$0xff]
  %v69 = vld [vmem:[%s0 + $0x1b0] sm:$0xff]
  %v70 = vld [vmem:[%s0 + $0x1b8] sm:$0xff]
  %v71 = vld [vmem:[%s0 + $0x1c0] sm:$0xff]
  %v72 = vld [vmem:[%s0 + $0x1c8] sm:$0xff]
  %v73 = vld [vmem:[%s0 + $0x1d0] sm:$0xff]
  %v74 = vld [vmem:[%s0 + $0x1d8] sm:$0xff]
  %v75 = vld [vmem:[%s0 + $0x1e0] sm:$0xff]
  %v76 = vld [vmem:[%s0 + $0x1e8] sm:$0xff]
  %v77 = vld [vmem:[%s0 + $0x1f0] sm:$0xff]
  %v78 = vld [vmem:[%s0 + $0x1f8] sm:$0xff]
  %v79 = vld [vmem:[%s1] sm:$0xf]
  %v80 = vld [vmem:[%s1 + $0x4] sm:$0xf]
  %v81 = vld [vmem:[%s1 + $0x8] sm:$0xf]
  %v82 = vld [vmem:[%s1 + $0xc] sm:$0xf]
  %v83 = vld [vmem:[%s1 + $0x10] sm:$0xf]
  %v84 = vld [vmem:[%s1 + $0x14] sm:$0xf]
  %v85 = vld [vmem:[%s1 + $0x18] sm:$0xf]
  %v86 = vld [vmem:[%s1 + $0x1c] sm:$0xf]
  %v87 = vld [vmem:[%s1 + $0x20] sm:$0xf]
  %v88 = vld [vmem:[%s1 + $0x24] sm:$0xf]
  %v89 = vld [vmem:[%s1 + $0x28] sm:$0xf]
  %v90 = vld [vmem:[%s1 + $0x2c] sm:$0xf]
  %v91 = vld [vmem:[%s1 + $0x30] sm:$0xf]
  %v92 = vld [vmem:[%s1 + $0x34] sm:$0xf]
  %v93 = vld [vmem:[%s1 + $0x38] sm:$0xf]
  %v94 = vld [vmem:[%s1 + $0x3c] sm:$0xf]
  %v95 = vld [vmem:[%s1 + $0x40] sm:$0xf]
  %v96 = vld [vmem:[%s1 + $0x44] sm:$0xf]
  %v97 = vld [vmem:[%s1 + $0x48] sm:$0xf]
  %v98 = vld [vmem:[%s1 + $0x4c] sm:$0xf]
  %v99 = vld [vmem:[%s1 + $0x50] sm:$0xf]
  %v100 = vld [vmem:[%s1 + $0x54] sm:$0xf]
  %v101 = vld [vmem:[%s1 + $0x58] sm:$0xf]
  %v102 = vld [vmem:[%s1 + $0x5c] sm:$0xf]
  %v103 = vld [vmem:[%s1 + $0x60] sm:$0xf]
  %v104 = vld [vmem:[%s1 + $0x64] sm:$0xf]
  %v105 = vld [vmem:[%s1 + $0x68] sm:$0xf]
  %v106 = vld [vmem:[%s1 + $0x6c] sm:$0xf]
  %v107 = vld [vmem:[%s1 + $0x70] sm:$0xf]
  %v108 = vld [vmem:[%s1 + $0x74] sm:$0xf]
  %v109 = vld [vmem:[%s1 + $0x78] sm:$0xf]
  %v110 = vld [vmem:[%s1 + $0x7c] sm:$0xf]
  %v111 = vld [vmem:[%s2] sm:$0x1]
  %v113 = vlaneseq
  %v114 = vshrl.u32 %v113, 7
  %v115 = vsub.s32 0, %v114
  %v116 = vrot.slane %v111, %v115
  %v182 = vunpack.c.l.b16 %v15
  %v183 = vunpack.c.h.b16 %v15
  %v184 = vunpack.c.l.b16 %v16
  %v185 = vunpack.c.h.b16 %v16
  %v186 = vunpack.c.l.b16 %v17
  %v187 = vunpack.c.h.b16 %v17
  %v188 = vunpack.c.l.b16 %v18
  %v189 = vunpack.c.h.b16 %v18
  %v190 = vunpack.c.l.b16 %v19
  %v191 = vunpack.c.h.b16 %v19
  %v192 = vunpack.c.l.b16 %v20
  %v193 = vunpack.c.h.b16 %v20
  %v194 = vunpack.c.l.b16 %v21
  %v195 = vunpack.c.h.b16 %v21
  %v196 = vunpack.c.l.b16 %v22
  %v197 = vunpack.c.h.b16 %v22
  %v198 = vunpack.c.l.b16 %v23
  %v199 = vunpack.c.h.b16 %v23
  %v200 = vunpack.c.l.b16 %v24
  %v201 = vunpack.c.h.b16 %v24
  %v202 = vunpack.c.l.b16 %v25
  %v203 = vunpack.c.h.b16 %v25
  %v204 = vunpack.c.l.b16 %v26
  %v205 = vunpack.c.h.b16 %v26
  %v206 = vunpack.c.l.b16 %v27
  %v207 = vunpack.c.h.b16 %v27
  %v208 = vunpack.c.l.b16 %v28
  %v209 = vunpack.c.h.b16 %v28
  %v210 = vunpack.c.l.b16 %v29
  %v211 = vunpack.c.h.b16 %v29
  %v212 = vunpack.c.l.b16 %v30
  %v213 = vunpack.c.h.b16 %v30
  %v214 = vunpack.c.l.b16 %v31
  %v215 = vunpack.c.h.b16 %v31
  %v216 = vunpack.c.l.b16 %v32
  %v217 = vunpack.c.h.b16 %v32
  %v218 = vunpack.c.l.b16 %v33
  %v219 = vunpack.c.h.b16 %v33
  %v220 = vunpack.c.l.b16 %v34
  %v221 = vunpack.c.h.b16 %v34
  %v222 = vunpack.c.l.b16 %v35
  %v223 = vunpack.c.h.b16 %v35
  %v224 = vunpack.c.l.b16 %v36
  %v225 = vunpack.c.h.b16 %v36
  %v226 = vunpack.c.l.b16 %v37
  %v227 = vunpack.c.h.b16 %v37
  %v228 = vunpack.c.l.b16 %v38
  %v229 = vunpack.c.h.b16 %v38
  %v230 = vunpack.c.l.b16 %v39
  %v231 = vunpack.c.h.b16 %v39
  %v232 = vunpack.c.l.b16 %v40
  %v233 = vunpack.c.h.b16 %v40
  %v234 = vunpack.c.l.b16 %v41
  %v235 = vunpack.c.h.b16 %v41
  %v236 = vunpack.c.l.b16 %v42
  %v237 = vunpack.c.h.b16 %v42
  %v238 = vunpack.c.l.b16 %v43
  %v239 = vunpack.c.h.b16 %v43
  %v240 = vunpack.c.l.b16 %v44
  %v241 = vunpack.c.h.b16 %v44
  %v242 = vunpack.c.l.b16 %v45
  %v243 = vunpack.c.h.b16 %v45
  %v244 = vunpack.c.l.b16 %v46
  %v245 = vunpack.c.h.b16 %v46
  %v246 = vunpack.c.l.b16 %v47
  %v247 = vunpack.c.h.b16 %v47
  %v248 = vunpack.c.l.b16 %v48
  %v249 = vunpack.c.h.b16 %v48
  %v250 = vunpack.c.l.b16 %v49
  %v251 = vunpack.c.h.b16 %v49
  %v252 = vunpack.c.l.b16 %v50
  %v253 = vunpack.c.h.b16 %v50
  %v254 = vunpack.c.l.b16 %v51
  %v255 = vunpack.c.h.b16 %v51
  %v256 = vunpack.c.l.b16 %v52
  %v257 = vunpack.c.h.b16 %v52
  %v258 = vunpack.c.l.b16 %v53
  %v259 = vunpack.c.h.b16 %v53
  %v260 = vunpack.c.l.b16 %v54
  %v261 = vunpack.c.h.b16 %v54
  %v262 = vunpack.c.l.b16 %v55
  %v263 = vunpack.c.h.b16 %v55
  %v264 = vunpack.c.l.b16 %v56
  %v265 = vunpack.c.h.b16 %v56
  %v266 = vunpack.c.l.b16 %v57
  %v267 = vunpack.c.h.b16 %v57
  %v268 = vunpack.c.l.b16 %v58
  %v269 = vunpack.c.h.b16 %v58
  %v270 = vunpack.c.l.b16 %v59
  %v271 = vunpack.c.h.b16 %v59
  %v272 = vunpack.c.l.b16 %v60
  %v273 = vunpack.c.h.b16 %v60
  %v274 = vunpack.c.l.b16 %v61
  %v275 = vunpack.c.h.b16 %v61
  %v276 = vunpack.c.l.b16 %v62
  %v277 = vunpack.c.h.b16 %v62
  %v278 = vunpack.c.l.b16 %v63
  %v279 = vunpack.c.h.b16 %v63
  %v280 = vunpack.c.l.b16 %v64
  %v281 = vunpack.c.h.b16 %v64
  %v282 = vunpack.c.l.b16 %v65
  %v283 = vunpack.c.h.b16 %v65
  %v284 = vunpack.c.l.b16 %v66
  %v285 = vunpack.c.h.b16 %v66
  %v286 = vunpack.c.l.b16 %v67
  %v287 = vunpack.c.h.b16 %v67
  %v288 = vunpack.c.l.b16 %v68
  %v289 = vunpack.c.h.b16 %v68
  %v290 = vunpack.c.l.b16 %v69
  %v291 = vunpack.c.h.b16 %v69
  %v292 = vunpack.c.l.b16 %v70
  %v293 = vunpack.c.h.b16 %v70
  %v294 = vunpack.c.l.b16 %v71
  %v295 = vunpack.c.h.b16 %v71
  %v296 = vunpack.c.l.b16 %v72
  %v297 = vunpack.c.h.b16 %v72
  %v298 = vunpack.c.l.b16 %v73
  %v299 = vunpack.c.h.b16 %v73
  %v300 = vunpack.c.l.b16 %v74
  %v301 = vunpack.c.h.b16 %v74
  %v302 = vunpack.c.l.b16 %v75
  %v303 = vunpack.c.h.b16 %v75
  %v304 = vunpack.c.l.b16 %v76
  %v305 = vunpack.c.h.b16 %v76
  %v306 = vunpack.c.l.b16 %v77
  %v307 = vunpack.c.h.b16 %v77
  %v308 = vunpack.c.l.b16 %v78
  %v309 = vunpack.c.h.b16 %v78
  %v310 = vpack.c.b16 %v184, %v182
  %v311 = vpack.c.b16 %v185, %v183
  %v312 = vpack.c.b16 %v188, %v186
  %v313 = vpack.c.b16 %v189, %v187
  %v314 = vpack.c.b16 %v192, %v190
  %v315 = vpack.c.b16 %v193, %v191
  %v316 = vpack.c.b16 %v196, %v194
  %v317 = vpack.c.b16 %v197, %v195
  %v318 = vpack.c.b16 %v200, %v198
  %v319 = vpack.c.b16 %v201, %v199
  %v320 = vpack.c.b16 %v204, %v202
  %v321 = vpack.c.b16 %v205, %v203
  %v322 = vpack.c.b16 %v208, %v206
  %v323 = vpack.c.b16 %v209, %v207
  %v324 = vpack.c.b16 %v212, %v210
  %v325 = vpack.c.b16 %v213, %v211
  %v326 = vpack.c.b16 %v216, %v214
  %v327 = vpack.c.b16 %v217, %v215
  %v328 = vpack.c.b16 %v220, %v218
  %v329 = vpack.c.b16 %v221, %v219
  %v330 = vpack.c.b16 %v224, %v222
  %v331 = vpack.c.b16 %v225, %v223
  %v332 = vpack.c.b16 %v228, %v226
  %v333 = vpack.c.b16 %v229, %v227
  %v334 = vpack.c.b16 %v232, %v230
  %v335 = vpack.c.b16 %v233, %v231
  %v336 = vpack.c.b16 %v236, %v234
  %v337 = vpack.c.b16 %v237, %v235
  %v338 = vpack.c.b16 %v240, %v238
  %v339 = vpack.c.b16 %v241, %v239
  %v340 = vpack.c.b16 %v244, %v242
  %v341 = vpack.c.b16 %v245, %v243
  %v342 = vpack.c.b16 %v248, %v246
  %v343 = vpack.c.b16 %v249, %v247
  %v344 = vpack.c.b16 %v252, %v250
  %v345 = vpack.c.b16 %v253, %v251
  %v346 = vpack.c.b16 %v256, %v254
  %v347 = vpack.c.b16 %v257, %v255
  %v348 = vpack.c.b16 %v260, %v258
  %v349 = vpack.c.b16 %v261, %v259
  %v350 = vpack.c.b16 %v264, %v262
  %v351 = vpack.c.b16 %v265, %v263
  %v352 = vpack.c.b16 %v268, %v266
  %v353 = vpack.c.b16 %v269, %v267
  %v354 = vpack.c.b16 %v272, %v270
  %v355 = vpack.c.b16 %v273, %v271
  %v356 = vpack.c.b16 %v276, %v274
  %v357 = vpack.c.b16 %v277, %v275
  %v358 = vpack.c.b16 %v280, %v278
  %v359 = vpack.c.b16 %v281, %v279
  %v360 = vpack.c.b16 %v284, %v282
  %v361 = vpack.c.b16 %v285, %v283
  %v362 = vpack.c.b16 %v288, %v286
  %v363 = vpack.c.b16 %v289, %v287
  %v364 = vpack.c.b16 %v292, %v290
  %v365 = vpack.c.b16 %v293, %v291
  %v366 = vpack.c.b16 %v296, %v294
  %v367 = vpack.c.b16 %v297, %v295
  %v368 = vpack.c.b16 %v300, %v298
  %v369 = vpack.c.b16 %v301, %v299
  %v370 = vpack.c.b16 %v304, %v302
  %v371 = vpack.c.b16 %v305, %v303
  %v372 = vpack.c.b16 %v308, %v306
  %v373 = vpack.c.b16 %v309, %v307
  %v470 = vunpack.c.l.b16 %v79
  %v471 = vunpack.c.l.b16 %v80
  %v472 = vunpack.c.l.b16 %v81
  %v473 = vunpack.c.l.b16 %v82
  %v474 = vunpack.c.l.b16 %v83
  %v475 = vunpack.c.l.b16 %v84
  %v476 = vunpack.c.l.b16 %v85
  %v477 = vunpack.c.l.b16 %v86
  %v478 = vunpack.c.l.b16 %v87
  %v479 = vunpack.c.l.b16 %v88
  %v480 = vunpack.c.l.b16 %v89
  %v481 = vunpack.c.l.b16 %v90
  %v482 = vunpack.c.l.b16 %v91
  %v483 = vunpack.c.l.b16 %v92
  %v484 = vunpack.c.l.b16 %v93
  %v485 = vunpack.c.l.b16 %v94
  %v486 = vunpack.c.l.b16 %v95
  %v487 = vunpack.c.l.b16 %v96
  %v488 = vunpack.c.l.b16 %v97
  %v489 = vunpack.c.l.b16 %v98
  %v490 = vunpack.c.l.b16 %v99
  %v491 = vunpack.c.l.b16 %v100
  %v492 = vunpack.c.l.b16 %v101
  %v493 = vunpack.c.l.b16 %v102
  %v494 = vunpack.c.l.b16 %v103
  %v495 = vunpack.c.l.b16 %v104
  %v496 = vunpack.c.l.b16 %v105
  %v497 = vunpack.c.l.b16 %v106
  %v498 = vunpack.c.l.b16 %v107
  %v499 = vunpack.c.l.b16 %v108
  %v500 = vunpack.c.l.b16 %v109
  %v501 = vunpack.c.l.b16 %v110
  %v502 = vpack.c.b16 %v471, %v470
  %v503 = vpack.c.b16 %v473, %v472
  %v504 = vpack.c.b16 %v475, %v474
  %v505 = vpack.c.b16 %v477, %v476
  %v506 = vpack.c.b16 %v479, %v478
  %v507 = vpack.c.b16 %v481, %v480
  %v508 = vpack.c.b16 %v483, %v482
  %v509 = vpack.c.b16 %v485, %v484
  %v510 = vpack.c.b16 %v487, %v486
  %v511 = vpack.c.b16 %v489, %v488
  %v512 = vpack.c.b16 %v491, %v490
  %v513 = vpack.c.b16 %v493, %v492
  %v514 = vpack.c.b16 %v495, %v494
  %v515 = vpack.c.b16 %v497, %v496
  %v516 = vpack.c.b16 %v499, %v498
  %v517 = vpack.c.b16 %v501, %v500
  %534 = vmatprep.subr.bf16.mxu0 0
  %535 = vmatpush1.bf16.msra.mxu0 %v509
  %536 = vmatprep.subr.bf16.mxu0 0
  %537 = vmatpush1.bf16.msra.mxu0 %v508
  %538 = vmatprep.subr.bf16.mxu0 0
  %539 = vmatpush1.bf16.msra.mxu0 %v507
  %540 = vmatprep.subr.bf16.mxu0 0
  %541 = vmatpush1.bf16.msra.mxu0 %v506
  %542 = vmatprep.subr.bf16.mxu0 0
  %543 = vmatpush1.bf16.msra.mxu0 %v505
  %544 = vmatprep.subr.bf16.mxu0 0
  %545 = vmatpush1.bf16.msra.mxu0 %v504
  %546 = vmatprep.subr.bf16.mxu0 0
  %547 = vmatpush1.bf16.msra.mxu0 %v503
  %548 = vmatprep.subr.bf16.mxu0 0
  %549 = vmatpush1.bf16.msra.mxu0 %v502
  %550 = vmatprep.subr.bf16.mxu0 0
  %551 = vmatpush2.bf16.msra.mxu0 %v517
  %552 = vmatprep.subr.bf16.mxu0 0
  %553 = vmatpush2.bf16.msra.mxu0 %v516
  %554 = vmatprep.subr.bf16.mxu0 0
  %555 = vmatpush2.bf16.msra.mxu0 %v515
  %556 = vmatprep.subr.bf16.mxu0 0
  %557 = vmatpush2.bf16.msra.mxu0 %v514
  %558 = vmatprep.subr.bf16.mxu0 0
  %559 = vmatpush2.bf16.msra.mxu0 %v513
  %560 = vmatprep.subr.bf16.mxu0 0
  %561 = vmatpush2.bf16.msra.mxu0 %v512
  %562 = vmatprep.subr.bf16.mxu0 0
  %563 = vmatpush2.bf16.msra.mxu0 %v511
  %564 = vmatprep.subr.bf16.mxu0 0
  %565 = vmatpush2.bf16.msra.mxu0 %v510
  %566 = vmatprep.mubr.bf16.mxu0 %v311
  %567 = vmatmul.mubr.bf16.gmra.mxu0 %v310
  %v568 = vpop.f32.mrf.mxu0
  %v569 = vadd.f32 %v116, %v568
  %v570 = vpop.f32.mrf.mxu0
  %v571 = vpop.f32.mrf.mxu0
  %v572 = vadd.f32 %v116, %v571
  %v573 = vpop.f32.mrf.mxu0
  %574 = vmatprep.mubr.bf16.mxu0 %v313
  %575 = vmatmul.mubr.bf16.gmra.mxu0 %v312
  %v576 = vpop.f32.mrf.mxu0
  %v577 = vadd.f32 %v116, %v576
  %v578 = vpop.f32.mrf.mxu0
  %v579 = vpop.f32.mrf.mxu0
  %v580 = vadd.f32 %v116, %v579
  %v581 = vpop.f32.mrf.mxu0
  %582 = vmatprep.mubr.bf16.mxu0 %v315
  %583 = vmatmul.mubr.bf16.gmra.mxu0 %v314
  %v584 = vpop.f32.mrf.mxu0
  %v585 = vadd.f32 %v116, %v584
  %v586 = vpop.f32.mrf.mxu0
  %v587 = vpop.f32.mrf.mxu0
  %v588 = vadd.f32 %v116, %v587
  %v589 = vpop.f32.mrf.mxu0
  %590 = vmatprep.mubr.bf16.mxu0 %v317
  %591 = vmatmul.mubr.bf16.gmra.mxu0 %v316
  %v592 = vpop.f32.mrf.mxu0
  %v593 = vadd.f32 %v116, %v592
  %v594 = vpop.f32.mrf.mxu0
  %v595 = vpop.f32.mrf.mxu0
  %v596 = vadd.f32 %v116, %v595
  %v597 = vpop.f32.mrf.mxu0
  %598 = vmatprep.mubr.bf16.mxu0 %v319
  %599 = vmatmul.mubr.bf16.gmra.mxu0 %v318
  %v600 = vpop.f32.mrf.mxu0
  %v601 = vadd.f32 %v116, %v600
  %v602 = vpop.f32.mrf.mxu0
  %v603 = vpop.f32.mrf.mxu0
  %v604 = vadd.f32 %v116, %v603
  %v605 = vpop.f32.mrf.mxu0
  %606 = vmatprep.mubr.bf16.mxu0 %v321
  %607 = vmatmul.mubr.bf16.gmra.mxu0 %v320
  %v608 = vpop.f32.mrf.mxu0
  %v609 = vadd.f32 %v116, %v608
  %v610 = vpop.f32.mrf.mxu0
  %v611 = vpop.f32.mrf.mxu0
  %v612 = vadd.f32 %v116, %v611
  %v613 = vpop.f32.mrf.mxu0
  %614 = vmatprep.mubr.bf16.mxu0 %v323
  %615 = vmatmul.mubr.bf16.gmra.mxu0 %v322
  %v616 = vpop.f32.mrf.mxu0
  %v617 = vadd.f32 %v116, %v616
  %v618 = vpop.f32.mrf.mxu0
  %v619 = vpop.f32.mrf.mxu0
  %v620 = vadd.f32 %v116, %v619
  %v621 = vpop.f32.mrf.mxu0
  %622 = vmatprep.mubr.bf16.mxu0 %v325
  %623 = vmatmul.mubr.bf16.gmra.mxu0 %v324
  %v624 = vpop.f32.mrf.mxu0
  %v625 = vadd.f32 %v116, %v624
  %v626 = vpop.f32.mrf.mxu0
  %v627 = vpop.f32.mrf.mxu0
  %v628 = vadd.f32 %v116, %v627
  %v629 = vpop.f32.mrf.mxu0
  %630 = vmatprep.mubr.bf16.mxu0 %v327
  %631 = vmatmul.mubr.bf16.gmra.mxu0 %v326
  %v632 = vpop.f32.mrf.mxu0
  %v633 = vadd.f32 %v116, %v632
  %v634 = vpop.f32.mrf.mxu0
  %v635 = vpop.f32.mrf.mxu0
  %v636 = vadd.f32 %v116, %v635
  %v637 = vpop.f32.mrf.mxu0
  %638 = vmatprep.mubr.bf16.mxu0 %v329
  %639 = vmatmul.mubr.bf16.gmra.mxu0 %v328
  %v640 = vpop.f32.mrf.mxu0
  %v641 = vadd.f32 %v116, %v640
  %v642 = vpop.f32.mrf.mxu0
  %v643 = vpop.f32.mrf.mxu0
  %v644 = vadd.f32 %v116, %v643
  %v645 = vpop.f32.mrf.mxu0
  %646 = vmatprep.mubr.bf16.mxu0 %v331
  %647 = vmatmul.mubr.bf16.gmra.mxu0 %v330
  %v648 = vpop.f32.mrf.mxu0
  %v649 = vadd.f32 %v116, %v648
  %v650 = vpop.f32.mrf.mxu0
  %v651 = vpop.f32.mrf.mxu0
  %v652 = vadd.f32 %v116, %v651
  %v653 = vpop.f32.mrf.mxu0
  %654 = vmatprep.mubr.bf16.mxu0 %v333
  %655 = vmatmul.mubr.bf16.gmra.mxu0 %v332
  %v656 = vpop.f32.mrf.mxu0
  %v657 = vadd.f32 %v116, %v656
  %v658 = vpop.f32.mrf.mxu0
  %v659 = vpop.f32.mrf.mxu0
  %v660 = vadd.f32 %v116, %v659
  %v661 = vpop.f32.mrf.mxu0
  %662 = vmatprep.mubr.bf16.mxu0 %v335
  %663 = vmatmul.mubr.bf16.gmra.mxu0 %v334
  %v664 = vpop.f32.mrf.mxu0
  %v665 = vadd.f32 %v116, %v664
  %v666 = vpop.f32.mrf.mxu0
  %v667 = vpop.f32.mrf.mxu0
  %v668 = vadd.f32 %v116, %v667
  %v669 = vpop.f32.mrf.mxu0
  %670 = vmatprep.mubr.bf16.mxu0 %v337
  %671 = vmatmul.mubr.bf16.gmra.mxu0 %v336
  %v672 = vpop.f32.mrf.mxu0
  %v673 = vadd.f32 %v116, %v672
  %v674 = vpop.f32.mrf.mxu0
  %v675 = vpop.f32.mrf.mxu0
  %v676 = vadd.f32 %v116, %v675
  %v677 = vpop.f32.mrf.mxu0
  %678 = vmatprep.mubr.bf16.mxu0 %v339
  %679 = vmatmul.mubr.bf16.gmra.mxu0 %v338
  %v680 = vpop.f32.mrf.mxu0
  %v681 = vadd.f32 %v116, %v680
  %v682 = vpop.f32.mrf.mxu0
  %v683 = vpop.f32.mrf.mxu0
  %v684 = vadd.f32 %v116, %v683
  %v685 = vpop.f32.mrf.mxu0
  %686 = vmatprep.mubr.bf16.mxu0 %v341
  %687 = vmatmul.mubr.bf16.gmra.mxu0 %v340
  %v688 = vpop.f32.mrf.mxu0
  %v689 = vadd.f32 %v116, %v688
  %v690 = vpop.f32.mrf.mxu0
  %v691 = vpop.f32.mrf.mxu0
  %v692 = vadd.f32 %v116, %v691
  %v693 = vpop.f32.mrf.mxu0
  %694 = vmatprep.mubr.bf16.mxu0 %v343
  %695 = vmatmul.mubr.bf16.gmra.mxu0 %v342
  %v696 = vpop.f32.mrf.mxu0
  %v697 = vadd.f32 %v116, %v696
  %v698 = vpop.f32.mrf.mxu0
  %v699 = vpop.f32.mrf.mxu0
  %v700 = vadd.f32 %v116, %v699
  %v701 = vpop.f32.mrf.mxu0
  %702 = vmatprep.mubr.bf16.mxu0 %v345
  %703 = vmatmul.mubr.bf16.gmra.mxu0 %v344
  %v704 = vpop.f32.mrf.mxu0
  %v705 = vadd.f32 %v116, %v704
  %v706 = vpop.f32.mrf.mxu0
  %v707 = vpop.f32.mrf.mxu0
  %v708 = vadd.f32 %v116, %v707
  %v709 = vpop.f32.mrf.mxu0
  %710 = vmatprep.mubr.bf16.mxu0 %v347
  %711 = vmatmul.mubr.bf16.gmra.mxu0 %v346
  %v712 = vpop.f32.mrf.mxu0
  %v713 = vadd.f32 %v116, %v712
  %v714 = vpop.f32.mrf.mxu0
  %v715 = vpop.f32.mrf.mxu0
  %v716 = vadd.f32 %v116, %v715
  %v717 = vpop.f32.mrf.mxu0
  %718 = vmatprep.mubr.bf16.mxu0 %v349
  %719 = vmatmul.mubr.bf16.gmra.mxu0 %v348
  %v720 = vpop.f32.mrf.mxu0
  %v721 = vadd.f32 %v116, %v720
  %v722 = vpop.f32.mrf.mxu0
  %v723 = vpop.f32.mrf.mxu0
  %v724 = vadd.f32 %v116, %v723
  %v725 = vpop.f32.mrf.mxu0
  %726 = vmatprep.mubr.bf16.mxu0 %v351
  %727 = vmatmul.mubr.bf16.gmra.mxu0 %v350
  %v728 = vpop.f32.mrf.mxu0
  %v729 = vadd.f32 %v116, %v728
  %v730 = vpop.f32.mrf.mxu0
  %v731 = vpop.f32.mrf.mxu0
  %v732 = vadd.f32 %v116, %v731
  %v733 = vpop.f32.mrf.mxu0
  %734 = vmatprep.mubr.bf16.mxu0 %v353
  %735 = vmatmul.mubr.bf16.gmra.mxu0 %v352
  %v736 = vpop.f32.mrf.mxu0
  %v737 = vadd.f32 %v116, %v736
  %v738 = vpop.f32.mrf.mxu0
  %v739 = vpop.f32.mrf.mxu0
  %v740 = vadd.f32 %v116, %v739
  %v741 = vpop.f32.mrf.mxu0
  %742 = vmatprep.mubr.bf16.mxu0 %v355
  %743 = vmatmul.mubr.bf16.gmra.mxu0 %v354
  %v744 = vpop.f32.mrf.mxu0
  %v745 = vadd.f32 %v116, %v744
  %v746 = vpop.f32.mrf.mxu0
  %v747 = vpop.f32.mrf.mxu0
  %v748 = vadd.f32 %v116, %v747
  %v749 = vpop.f32.mrf.mxu0
  %750 = vmatprep.mubr.bf16.mxu0 %v357
  %751 = vmatmul.mubr.bf16.gmra.mxu0 %v356
  %v752 = vpop.f32.mrf.mxu0
  %v753 = vadd.f32 %v116, %v752
  %v754 = vpop.f32.mrf.mxu0
  %v755 = vpop.f32.mrf.mxu0
  %v756 = vadd.f32 %v116, %v755
  %v757 = vpop.f32.mrf.mxu0
  %758 = vmatprep.mubr.bf16.mxu0 %v359
  %759 = vmatmul.mubr.bf16.gmra.mxu0 %v358
  %v760 = vpop.f32.mrf.mxu0
  %v761 = vadd.f32 %v116, %v760
  %v762 = vpop.f32.mrf.mxu0
  %v763 = vpop.f32.mrf.mxu0
  %v764 = vadd.f32 %v116, %v763
  %v765 = vpop.f32.mrf.mxu0
  %766 = vmatprep.mubr.bf16.mxu0 %v361
  %767 = vmatmul.mubr.bf16.gmra.mxu0 %v360
  %v768 = vpop.f32.mrf.mxu0
  %v769 = vadd.f32 %v116, %v768
  %v770 = vpop.f32.mrf.mxu0
  %v771 = vpop.f32.mrf.mxu0
  %v772 = vadd.f32 %v116, %v771
  %v773 = vpop.f32.mrf.mxu0
  %774 = vmatprep.mubr.bf16.mxu0 %v363
  %775 = vmatmul.mubr.bf16.gmra.mxu0 %v362
  %v776 = vpop.f32.mrf.mxu0
  %v777 = vadd.f32 %v116, %v776
  %v778 = vpop.f32.mrf.mxu0
  %v779 = vpop.f32.mrf.mxu0
  %v780 = vadd.f32 %v116, %v779
  %v781 = vpop.f32.mrf.mxu0
  %782 = vmatprep.mubr.bf16.mxu0 %v365
  %783 = vmatmul.mubr.bf16.gmra.mxu0 %v364
  %v784 = vpop.f32.mrf.mxu0
  %v785 = vadd.f32 %v116, %v784
  %v786 = vpop.f32.mrf.mxu0
  %v787 = vpop.f32.mrf.mxu0
  %v788 = vadd.f32 %v116, %v787
  %v789 = vpop.f32.mrf.mxu0
  %790 = vmatprep.mubr.bf16.mxu0 %v367
  %791 = vmatmul.mubr.bf16.gmra.mxu0 %v366
  %v792 = vpop.f32.mrf.mxu0
  %v793 = vadd.f32 %v116, %v792
  %v794 = vpop.f32.mrf.mxu0
  %v795 = vpop.f32.mrf.mxu0
  %v796 = vadd.f32 %v116, %v795
  %v797 = vpop.f32.mrf.mxu0
  %798 = vmatprep.mubr.bf16.mxu0 %v369
  %799 = vmatmul.mubr.bf16.gmra.mxu0 %v368
  %v800 = vpop.f32.mrf.mxu0
  %v801 = vadd.f32 %v116, %v800
  %v802 = vpop.f32.mrf.mxu0
  %v803 = vpop.f32.mrf.mxu0
  %v804 = vadd.f32 %v116, %v803
  %v805 = vpop.f32.mrf.mxu0
  %806 = vmatprep.mubr.bf16.mxu0 %v371
  %807 = vmatmul.mubr.bf16.gmra.mxu0 %v370
  %v808 = vpop.f32.mrf.mxu0
  %v809 = vadd.f32 %v116, %v808
  %v810 = vpop.f32.mrf.mxu0
  %v811 = vpop.f32.mrf.mxu0
  %v812 = vadd.f32 %v116, %v811
  %v813 = vpop.f32.mrf.mxu0
  %814 = vmatprep.mubr.bf16.mxu0 %v373
  %815 = vmatmul.mubr.bf16.gmra.mxu0 %v372
  %v816 = vpop.f32.mrf.mxu0
  %v817 = vadd.f32 %v116, %v816
  %v818 = vpop.f32.mrf.mxu0
  %v819 = vpop.f32.mrf.mxu0
  %v820 = vadd.f32 %v116, %v819
  %v821 = vpop.f32.mrf.mxu0
  %822 = vdwg.mxu0
  %v823 = vtanh.pop %v569
  %v824 = vtanh.pop %v572
  %v825 = vtanh.pop %v577
  %v826 = vtanh.pop %v580
  %v827 = vtanh.pop %v585
  %v828 = vtanh.pop %v588
  %v829 = vtanh.pop %v593
  %v830 = vtanh.pop %v596
  %v831 = vtanh.pop %v601
  %v832 = vtanh.pop %v604
  %v833 = vtanh.pop %v609
  %v834 = vtanh.pop %v612
  %v835 = vtanh.pop %v617
  %v836 = vtanh.pop %v620
  %v837 = vtanh.pop %v625
  %v838 = vtanh.pop %v628
  %v839 = vtanh.pop %v633
  %v840 = vtanh.pop %v636
  %v841 = vtanh.pop %v641
  %v842 = vtanh.pop %v644
  %v843 = vtanh.pop %v649
  %v844 = vtanh.pop %v652
  %v845 = vtanh.pop %v657
  %v846 = vtanh.pop %v660
  %v847 = vtanh.pop %v665
  %v848 = vtanh.pop %v668
  %v849 = vtanh.pop %v673
  %v850 = vtanh.pop %v676
  %v851 = vtanh.pop %v681
  %v852 = vtanh.pop %v684
  %v853 = vtanh.pop %v689
  %v854 = vtanh.pop %v692
  %v855 = vtanh.pop %v697
  %v856 = vtanh.pop %v700
  %v857 = vtanh.pop %v705
  %v858 = vtanh.pop %v708
  %v859 = vtanh.pop %v713
  %v860 = vtanh.pop %v716
  %v861 = vtanh.pop %v721
  %v862 = vtanh.pop %v724
  %v863 = vtanh.pop %v729
  %v864 = vtanh.pop %v732
  %v865 = vtanh.pop %v737
  %v866 = vtanh.pop %v740
  %v867 = vtanh.pop %v745
  %v868 = vtanh.pop %v748
  %v869 = vtanh.pop %v753
  %v870 = vtanh.pop %v756
  %v871 = vtanh.pop %v761
  %v872 = vtanh.pop %v764
  %v873 = vtanh.pop %v769
  %v874 = vtanh.pop %v772
  %v875 = vtanh.pop %v777
  %v876 = vtanh.pop %v780
  %v877 = vtanh.pop %v785
  %v878 = vtanh.pop %v788
  %v879 = vtanh.pop %v793
  %v880 = vtanh.pop %v796
  %v881 = vtanh.pop %v801
  %v882 = vtanh.pop %v804
  %v883 = vtanh.pop %v809
  %v884 = vtanh.pop %v812
  %v885 = vtanh.pop %v817
  %v886 = vtanh.pop %v820
  %887 = vst [vmem:[%s3] sm:$0xff] %v823
  %888 = vst [vmem:[%s3 + $0x8] sm:$0xff] %v824
  %889 = vst [vmem:[%s3 + $0x10] sm:$0xff] %v825
  %890 = vst [vmem:[%s3 + $0x18] sm:$0xff] %v826
  %891 = vst [vmem:[%s3 + $0x20] sm:$0xff] %v827
  %892 = vst [vmem:[%s3 + $0x28] sm:$0xff] %v828
  %893 = vst [vmem:[%s3 + $0x30] sm:$0xff] %v829
  %894 = vst [vmem:[%s3 + $0x38] sm:$0xff] %v830
  %895 = vst [vmem:[%s3 + $0x40] sm:$0xff] %v831
  %896 = vst [vmem:[%s3 + $0x48] sm:$0xff] %v832
  %897 = vst [vmem:[%s3 + $0x50] sm:$0xff] %v833
  %898 = vst [vmem:[%s3 + $0x58] sm:$0xff] %v834
  %899 = vst [vmem:[%s3 + $0x60] sm:$0xff] %v835
  %900 = vst [vmem:[%s3 + $0x68] sm:$0xff] %v836
  %901 = vst [vmem:[%s3 + $0x70] sm:$0xff] %v837
  %902 = vst [vmem:[%s3 + $0x78] sm:$0xff] %v838
  %903 = vst [vmem:[%s3 + $0x80] sm:$0xff] %v839
  %904 = vst [vmem:[%s3 + $0x88] sm:$0xff] %v840
  %905 = vst [vmem:[%s3 + $0x90] sm:$0xff] %v841
  %906 = vst [vmem:[%s3 + $0x98] sm:$0xff] %v842
  %907 = vst [vmem:[%s3 + $0xa0] sm:$0xff] %v843
  %908 = vst [vmem:[%s3 + $0xa8] sm:$0xff] %v844
  %909 = vst [vmem:[%s3 + $0xb0] sm:$0xff] %v845
  %910 = vst [vmem:[%s3 + $0xb8] sm:$0xff] %v846
  %911 = vst [vmem:[%s3 + $0xc0] sm:$0xff] %v847
  %912 = vst [vmem:[%s3 + $0xc8] sm:$0xff] %v848
  %913 = vst [vmem:[%s3 + $0xd0] sm:$0xff] %v849
  %914 = vst [vmem:[%s3 + $0xd8] sm:$0xff] %v850
  %915 = vst [vmem:[%s3 + $0xe0] sm:$0xff] %v851
  %916 = vst [vmem:[%s3 + $0xe8] sm:$0xff] %v852
  %917 = vst [vmem:[%s3 + $0xf0] sm:$0xff] %v853
  %918 = vst [vmem:[%s3 + $0xf8] sm:$0xff] %v854
  %919 = vst [vmem:[%s3 + $0x100] sm:$0xff] %v855
  %920 = vst [vmem:[%s3 + $0x108] sm:$0xff] %v856
  %921 = vst [vmem:[%s3 + $0x110] sm:$0xff] %v857
  %922 = vst [vmem:[%s3 + $0x118] sm:$0xff] %v858
  %923 = vst [vmem:[%s3 + $0x120] sm:$0xff] %v859
  %924 = vst [vmem:[%s3 + $0x128] sm:$0xff] %v860
  %925 = vst [vmem:[%s3 + $0x130] sm:$0xff] %v861
  %926 = vst [vmem:[%s3 + $0x138] sm:$0xff] %v862
  %927 = vst [vmem:[%s3 + $0x140] sm:$0xff] %v863
  %928 = vst [vmem:[%s3 + $0x148] sm:$0xff] %v864
  %929 = vst [vmem:[%s3 + $0x150] sm:$0xff] %v865
  %930 = vst [vmem:[%s3 + $0x158] sm:$0xff] %v866
  %931 = vst [vmem:[%s3 + $0x160] sm:$0xff] %v867
  %932 = vst [vmem:[%s3 + $0x168] sm:$0xff] %v868
  %933 = vst [vmem:[%s3 + $0x170] sm:$0xff] %v869
  %934 = vst [vmem:[%s3 + $0x178] sm:$0xff] %v870
  %935 = vst [vmem:[%s3 + $0x180] sm:$0xff] %v871
  %936 = vst [vmem:[%s3 + $0x188] sm:$0xff] %v872
  %937 = vst [vmem:[%s3 + $0x190] sm:$0xff] %v873
  %938 = vst [vmem:[%s3 + $0x198] sm:$0xff] %v874
  %939 = vst [vmem:[%s3 + $0x1a0] sm:$0xff] %v875
  %940 = vst [vmem:[%s3 + $0x1a8] sm:$0xff] %v876
  %941 = vst [vmem:[%s3 + $0x1b0] sm:$0xff] %v877
  %942 = vst [vmem:[%s3 + $0x1b8] sm:$0xff] %v878
  %943 = vst [vmem:[%s3 + $0x1c0] sm:$0xff] %v879
  %944 = vst [vmem:[%s3 + $0x1c8] sm:$0xff] %v880
  %945 = vst [vmem:[%s3 + $0x1d0] sm:$0xff] %v881
  %946 = vst [vmem:[%s3 + $0x1d8] sm:$0xff] %v882
  %947 = vst [vmem:[%s3 + $0x1e0] sm:$0xff] %v883
  %948 = vst [vmem:[%s3 + $0x1e8] sm:$0xff] %v884
  %949 = vst [vmem:[%s3 + $0x1f0] sm:$0xff] %v885
  %950 = vst [vmem:[%s3 + $0x1f8] sm:$0xff] %v886
  // Predicated region
  $region14: #{zip_unet_forward.21} parent=0 // pred_check
    _
  $region15: #{zip_unet_forward.21} parent=0 // pred_check_branch
    %952 = sbr.rel (0) target = $region17
  $region16: #{zip_unet_forward.21} parent=0 // pred_region
    _
  $region17: #{zip_unet_forward.21} parent=0 // pred_fallthru
    _
  // Predicated region
  $region18: #{zip_unet_forward.21} parent=0 // pred_check
    _
  $region19: #{zip_unet_forward.21} parent=0 // pred_check_branch
    %954 = sbr.rel (0) target = $region21
  $region20: #{zip_unet_forward.21} parent=0 // pred_region
    _
  $region21: #{zip_unet_forward.21} parent=0 // pred_fallthru
    _

</llo_original>
